<compile_context>
chip_gen: v6e
topology: v6e:2x2x1
jax: 0.10.0
libtpu: 0.0.40
codegen_flags: <defaults>
</compile_context>

<pallas_src>
import jax
import jax.numpy as jnp
from jax.experimental import pallas as pl
from jax.experimental.pallas import tpu as pltpu

EPS = 1e-5


def _fused_kernel(x_ref, w_ref, g1_ref, b1_ref, g2_ref, b2_ref, o_ref):
    # x_ref : [Cin, P]   f32  (channels on sublanes, batch*spatial on lanes)
    # w_ref : [Cout, Cin] bf16 (torch [Cout, Cin, 1, 1] squeezed -- no transpose needed)
    # g1/b1 : [Cin, 1]   f32
    # g2/b2 : [Cout, 1]  f32
    # o_ref : [Cout, P]  f32
    x = x_ref[...]
    p = x.shape[1]
    inv_p = 1.0 / float(p)

    # --- BatchNorm2d #1 (batch stats over P), folded into one per-channel affine ---
    mean1 = jnp.sum(x, axis=1, keepdims=True) * inv_p            # [Cin, 1]
    xc = x - mean1
    var1 = jnp.sum(xc * xc, axis=1, keepdims=True) * inv_p       # biased variance
    a1 = g1_ref[...] * jax.lax.rsqrt(var1 + EPS)                 # [Cin, 1]
    c1 = b1_ref[...] - a1 * mean1                                # [Cin, 1]
    # single elementwise pass: BN1 affine + ReLU
    y = jnp.maximum(a1 * x + c1, 0.0)                            # [Cin, P]

    # --- 1x1 conv == W @ Y on the MXU (bf16 operands, f32 accumulate) ---
    z = jnp.dot(w_ref[...], y.astype(jnp.bfloat16),
                preferred_element_type=jnp.float32)              # [Cout, P]

    # --- BatchNorm2d #2 (batch stats), folded affine + ReLU ---
    mean2 = jnp.sum(z, axis=1, keepdims=True) * inv_p            # [Cout, 1]
    zc = z - mean2
    var2 = jnp.sum(zc * zc, axis=1, keepdims=True) * inv_p
    a2 = g2_ref[...] * jax.lax.rsqrt(var2 + EPS)
    c2 = b2_ref[...] - a2 * mean2
    o_ref[...] = jnp.maximum(a2 * z + c2, 0.0).astype(o_ref.dtype)


def prepare_params(conv_w, gamma1, beta1, gamma2, beta2):
    """One-time parameter prep, hoisted out of the per-call path."""
    cout, cin = conv_w.shape[0], conv_w.shape[1]
    w = conv_w.reshape(cout, cin).astype(jnp.bfloat16)           # [Cout, Cin] bf16
    g1 = gamma1.reshape(cin, 1).astype(jnp.float32)
    b1 = beta1.reshape(cin, 1).astype(jnp.float32)
    g2 = gamma2.reshape(cout, 1).astype(jnp.float32)
    b2 = beta2.reshape(cout, 1).astype(jnp.float32)
    return w, g1, b1, g2, b2


@jax.jit
def bn_relu_conv1x1_bn_relu(x_nchw, w, g1, b1, g2, b2):
    """x_nchw: [N, Cin, H, W] f32; w: [Cout, Cin] bf16; g*/b*: [C, 1] f32."""
    n, cin, h, wd = x_nchw.shape
    cout = w.shape[0]
    p = n * h * wd

    # NCHW -> [Cin, P].  For N == 1 this is a pure reshape (no data movement).
    if n == 1:
        x2d = x_nchw.reshape(cin, p)
    else:
        x2d = jnp.transpose(x_nchw, (1, 0, 2, 3)).reshape(cin, p)

    cost = pl.CostEstimate(
        flops=2 * p * cin * cout,
        transcendentals=0,
        bytes_accessed=p * cin * 4 + cout * cin * 2 + 2 * (cin + cout) * 4 + p * cout * 4,
    )

    vmem = pl.BlockSpec(memory_space=pltpu.MemorySpace.VMEM)
    out2d = pl.pallas_call(
        _fused_kernel,
        out_shape=jax.ShapeDtypeStruct((cout, p), jnp.float32),
        in_specs=[vmem] * 6,
        out_specs=vmem,
        cost_estimate=cost,
    )(x2d, w, g1, b1, g2, b2)

    # [Cout, P] -> NCHW (pure reshape when N == 1)
    if n == 1:
        return out2d.reshape(1, cout, h, wd)
    return jnp.transpose(out2d.reshape(cout, n, h, wd), (1, 0, 2, 3))


def _reference(x_nchw, gamma1, beta1, conv_w, gamma2, beta2, matmul_dtype=jnp.float32):
    """Pure-JAX reference reproducing the PyTorch training-mode forward."""
    def bn(x, g, b):
        mean = jnp.mean(x, axis=(0, 2, 3), keepdims=True)
        var = jnp.mean((x - mean) ** 2, axis=(0, 2, 3), keepdims=True)
        return (x - mean) * jax.lax.rsqrt(var + EPS) * g[None, :, None, None] \
            + b[None, :, None, None]

    y = jnp.maximum(bn(x_nchw, gamma1, beta1), 0.0)
    z = jax.lax.conv_general_dilated(
        y.astype(matmul_dtype), conv_w.astype(matmul_dtype),
        window_strides=(1, 1), padding="VALID",
        dimension_numbers=("NCHW", "OIHW", "NCHW"),
        preferred_element_type=jnp.float32)
    return jnp.maximum(bn(z, gamma2, beta2), 0.0)


if __name__ == "__main__":
    N, CIN, H, W = 1, 1392, 7, 7     # shapes from the PyTorch module spec
    COUT = 192

    key = jax.random.PRNGKey(0)
    kx, kw, kg1, kb1, kg2, kb2 = jax.random.split(key, 6)

    x = jax.random.normal(kx, (N, CIN, H, W), dtype=jnp.float32)
    conv_w = jax.random.normal(kw, (COUT, CIN, 1, 1), dtype=jnp.float32) * 0.02
    gamma1 = 1.0 + 0.1 * jax.random.normal(kg1, (CIN,), dtype=jnp.float32)
    beta1 = 0.1 * jax.random.normal(kb1, (CIN,), dtype=jnp.float32)
    gamma2 = 1.0 + 0.1 * jax.random.normal(kg2, (COUT,), dtype=jnp.float32)
    beta2 = 0.1 * jax.random.normal(kb2, (COUT,), dtype=jnp.float32)

    w, g1, b1, g2, b2 = prepare_params(conv_w, gamma1, beta1, gamma2, beta2)

    out = bn_relu_conv1x1_bn_relu(x, w, g1, b1, g2, b2)
    out = jax.block_until_ready(out)
    assert out.shape == (N, COUT, H, W), out.shape

    # Check 1 (tight): reference with the same bf16-operand / f32-accumulate matmul.
    ref_bf16 = _reference(x, gamma1, beta1, conv_w, gamma2, beta2,
                          matmul_dtype=jnp.bfloat16)
    assert jnp.allclose(out, ref_bf16, atol=5e-3, rtol=5e-3), \
        float(jnp.max(jnp.abs(out - ref_bf16)))

    # Check 2 (loose): full-f32 PyTorch-semantics reference; slack accounts for the
    # bf16 MXU operands (K = 1392 accumulated in f32).
    ref_f32 = _reference(x, gamma1, beta1, conv_w, gamma2, beta2,
                         matmul_dtype=jnp.float32)
    assert jnp.allclose(out, ref_f32, atol=3e-2, rtol=3e-2), \
        float(jnp.max(jnp.abs(out - ref_f32)))

    print("KERNEL_OK")
</pallas_src>

<mosaic_0001>
module attributes {stable_mosaic.version = 11 : i64} {
  func.func @_fused_kernel(%arg0: memref<1392x49xf32, #tpu.memory_space<vmem>>, %arg1: memref<192x1392xbf16, #tpu.memory_space<vmem>>, %arg2: memref<1392x1xf32, #tpu.memory_space<vmem>>, %arg3: memref<1392x1xf32, #tpu.memory_space<vmem>>, %arg4: memref<192x1xf32, #tpu.memory_space<vmem>>, %arg5: memref<192x1xf32, #tpu.memory_space<vmem>>, %arg6: memref<192x49xf32, #tpu.memory_space<vmem>>) attributes {dimension_semantics = [], scalar_prefetch = 0 : i64, scratch_operands = 0 : i64, tpu.core_type = #tpu.core_type<tc>} {
    %c0 = arith.constant 0 : index
    %c0_0 = arith.constant 0 : index
    %0 = vector.load %arg0[%c0, %c0_0] : memref<1392x49xf32, #tpu.memory_space<vmem>>, vector<1392x49xf32>
    %cst = arith.constant dense<0.000000e+00> : vector<1392xf32>
    %1 = vector.multi_reduction <add>, %0, %cst [1] : vector<1392x49xf32> to vector<1392xf32>
    %2 = vector.shape_cast %1 : vector<1392xf32> to vector<1392x1xf32>
    %cst_1 = arith.constant 0.0204081628 : f32
    %3 = vector.broadcast %cst_1 : f32 to vector<1392x1xf32>
    %4 = arith.mulf %2, %3 : vector<1392x1xf32>
    %5 = vector.broadcast %4 : vector<1392x1xf32> to vector<1392x49xf32>
    %6 = arith.subf %0, %5 : vector<1392x49xf32>
    %7 = arith.mulf %6, %6 : vector<1392x49xf32>
    %cst_2 = arith.constant dense<0.000000e+00> : vector<1392xf32>
    %8 = vector.multi_reduction <add>, %7, %cst_2 [1] : vector<1392x49xf32> to vector<1392xf32>
    %9 = vector.shape_cast %8 : vector<1392xf32> to vector<1392x1xf32>
    %cst_3 = arith.constant 0.0204081628 : f32
    %10 = vector.broadcast %cst_3 : f32 to vector<1392x1xf32>
    %11 = arith.mulf %9, %10 : vector<1392x1xf32>
    %c0_4 = arith.constant 0 : index
    %c0_5 = arith.constant 0 : index
    %12 = vector.load %arg2[%c0_4, %c0_5] : memref<1392x1xf32, #tpu.memory_space<vmem>>, vector<1392x1xf32>
    %cst_6 = arith.constant 9.99999974E-6 : f32
    %13 = vector.broadcast %cst_6 : f32 to vector<1392x1xf32>
    %14 = arith.addf %11, %13 : vector<1392x1xf32>
    %15 = math.rsqrt %14 : vector<1392x1xf32>
    %16 = arith.mulf %12, %15 : vector<1392x1xf32>
    %c0_7 = arith.constant 0 : index
    %c0_8 = arith.constant 0 : index
    %17 = vector.load %arg3[%c0_7, %c0_8] : memref<1392x1xf32, #tpu.memory_space<vmem>>, vector<1392x1xf32>
    %18 = arith.mulf %16, %4 : vector<1392x1xf32>
    %19 = arith.subf %17, %18 : vector<1392x1xf32>
    %20 = vector.broadcast %16 : vector<1392x1xf32> to vector<1392x49xf32>
    %21 = arith.mulf %20, %0 : vector<1392x49xf32>
    %22 = vector.broadcast %19 : vector<1392x1xf32> to vector<1392x49xf32>
    %23 = arith.addf %21, %22 : vector<1392x49xf32>
    %cst_9 = arith.constant 0.000000e+00 : f32
    %24 = vector.broadcast %cst_9 : f32 to vector<1392x49xf32>
    %25 = arith.maximumf %23, %24 : vector<1392x49xf32>
    %c0_10 = arith.constant 0 : index
    %c0_11 = arith.constant 0 : index
    %26 = vector.load %arg1[%c0_10, %c0_11] : memref<192x1392xbf16, #tpu.memory_space<vmem>>, vector<192x1392xbf16>
    %27 = arith.truncf %25 : vector<1392x49xf32> to vector<1392x49xbf16>
    %cst_12 = arith.constant dense<0.000000e+00> : vector<192x49xf32>
    %28 = tpu.matmul %26, %27, %cst_12 {dimension_numbers = #tpu.dot_dimension_numbers<[1], [0], [0], [1], [0, 0, 1, 1], [], []>} : vector<192x1392xbf16>, vector<1392x49xbf16>, vector<192x49xf32> -> vector<192x49xf32>
    %cst_13 = arith.constant dense<0.000000e+00> : vector<192xf32>
    %29 = vector.multi_reduction <add>, %28, %cst_13 [1] : vector<192x49xf32> to vector<192xf32>
    %30 = vector.shape_cast %29 : vector<192xf32> to vector<192x1xf32>
    %cst_14 = arith.constant 0.0204081628 : f32
    %31 = vector.broadcast %cst_14 : f32 to vector<192x1xf32>
    %32 = arith.mulf %30, %31 : vector<192x1xf32>
    %33 = vector.broadcast %32 : vector<192x1xf32> to vector<192x49xf32>
    %34 = arith.subf %28, %33 : vector<192x49xf32>
    %35 = arith.mulf %34, %34 : vector<192x49xf32>
    %cst_15 = arith.constant dense<0.000000e+00> : vector<192xf32>
    %36 = vector.multi_reduction <add>, %35, %cst_15 [1] : vector<192x49xf32> to vector<192xf32>
    %37 = vector.shape_cast %36 : vector<192xf32> to vector<192x1xf32>
    %cst_16 = arith.constant 0.0204081628 : f32
    %38 = vector.broadcast %cst_16 : f32 to vector<192x1xf32>
    %39 = arith.mulf %37, %38 : vector<192x1xf32>
    %c0_17 = arith.constant 0 : index
    %c0_18 = arith.constant 0 : index
    %40 = vector.load %arg4[%c0_17, %c0_18] : memref<192x1xf32, #tpu.memory_space<vmem>>, vector<192x1xf32>
    %cst_19 = arith.constant 9.99999974E-6 : f32
    %41 = vector.broadcast %cst_19 : f32 to vector<192x1xf32>
    %42 = arith.addf %39, %41 : vector<192x1xf32>
    %43 = math.rsqrt %42 : vector<192x1xf32>
    %44 = arith.mulf %40, %43 : vector<192x1xf32>
    %c0_20 = arith.constant 0 : index
    %c0_21 = arith.constant 0 : index
    %45 = vector.load %arg5[%c0_20, %c0_21] : memref<192x1xf32, #tpu.memory_space<vmem>>, vector<192x1xf32>
    %46 = arith.mulf %44, %32 : vector<192x1xf32>
    %47 = arith.subf %45, %46 : vector<192x1xf32>
    %48 = vector.broadcast %44 : vector<192x1xf32> to vector<192x49xf32>
    %49 = arith.mulf %48, %28 : vector<192x49xf32>
    %50 = vector.broadcast %47 : vector<192x1xf32> to vector<192x49xf32>
    %51 = arith.addf %49, %50 : vector<192x49xf32>
    %cst_22 = arith.constant 0.000000e+00 : f32
    %52 = vector.broadcast %cst_22 : f32 to vector<192x49xf32>
    %53 = arith.maximumf %51, %52 : vector<192x49xf32>
    %c0_23 = arith.constant 0 : index
    %c0_24 = arith.constant 0 : index
    %54 = vector.load %arg6[%c0_23, %c0_24] : memref<192x49xf32, #tpu.memory_space<vmem>>, vector<192x49xf32>
    tpu.vector_store %arg6[%c0_23, %c0_24], %53 {strides = array<i32>} : memref<192x49xf32, #tpu.memory_space<vmem>>, vector<192x49xf32>,
    return
  }
}

</mosaic_0001>

<llo_original>
// kernel: bn_relu_conv1x1_bn_relu.1
$region0: #{bn_relu_conv1x1_bn_relu.1}
  #allocation0 [shape = 'u32[]', space=smem, size = 0x4, offset = 0x4, fixed_abs, tag = 'smem constant byte address 0x4 - core index']
  #allocation1 [shape = 'u32[144,128]{1,0:T(1,128)}', space=vmem, size = 0x12000, scoped, tag = 'internal scratch']
  %s0 = inlined_call_operand.vmem [shape: f32[1392,49], index: 0, kind: input, shape index: {}]
  %s1 = inlined_call_operand.vmem [shape: bf16[192,1392], index: 1, kind: input, shape index: {}]
  %s2 = inlined_call_operand.vmem [shape: f32[1392,1], index: 2, kind: input, shape index: {}]
  %s3 = inlined_call_operand.vmem [shape: f32[1392,1], index: 3, kind: input, shape index: {}]
  %s4 = inlined_call_operand.vmem [shape: f32[192,1], index: 4, kind: input, shape index: {}]
  %s5 = inlined_call_operand.vmem [shape: f32[192,1], index: 5, kind: input, shape index: {}]
  %s6 = inlined_call_operand.vmem [shape: f32[192,49], index: 6, kind: output, shape index: {}]
  %s7 = sld [smem:[#allocation0]]
  $region34: #{bn_relu_conv1x1_bn_relu.1} parent=0
    _
  %s9 = ssub.s32 1, %s7
  %s10 = scalar_select 0, %s9, %s7
  // Predicated region
  $region2: #{bn_relu_conv1x1_bn_relu.1} parent=0 // pred_check
    _
  $region3: #{bn_relu_conv1x1_bn_relu.1} parent=0 // pred_check_branch
    %12 = sbr.rel (0) target = $region5
  $region4: #{bn_relu_conv1x1_bn_relu.1} parent=0 // pred_region
    _
  $region5: #{bn_relu_conv1x1_bn_relu.1} parent=0 // pred_fallthru
    _
  // Predicated region
  $region6: #{bn_relu_conv1x1_bn_relu.1} parent=0 // pred_check
    _
  $region7: #{bn_relu_conv1x1_bn_relu.1} parent=0 // pred_check_branch
    %14 = sbr.rel (0) target = $region9
  $region8: #{bn_relu_conv1x1_bn_relu.1} parent=0 // pred_region
    _
  $region9: #{bn_relu_conv1x1_bn_relu.1} parent=0 // pred_fallthru
    _
  // Predicated region
  $region10: #{bn_relu_conv1x1_bn_relu.1} parent=0 // pred_check
    _
  $region11: #{bn_relu_conv1x1_bn_relu.1} parent=0 // pred_check_branch
    %16 = sbr.rel (0) target = $region13
  $region12: #{bn_relu_conv1x1_bn_relu.1} parent=0 // pred_region
    _
  $region13: #{bn_relu_conv1x1_bn_relu.1} parent=0 // pred_fallthru
    _
  // Predicated region
  $region14: #{bn_relu_conv1x1_bn_relu.1} parent=0 // pred_check
    _
  $region15: #{bn_relu_conv1x1_bn_relu.1} parent=0 // pred_check_branch
    %18 = sbr.rel (0) target = $region17
  $region16: #{bn_relu_conv1x1_bn_relu.1} parent=0 // pred_region
    _
  $region17: #{bn_relu_conv1x1_bn_relu.1} parent=0 // pred_fallthru
    _
  // Predicated region
  $region18: #{bn_relu_conv1x1_bn_relu.1} parent=0 // pred_check
    _
  $region19: #{bn_relu_conv1x1_bn_relu.1} parent=0 // pred_check_branch
    %20 = sbr.rel (0) target = $region21
  $region20: #{bn_relu_conv1x1_bn_relu.1} parent=0 // pred_region
    _
  $region21: #{bn_relu_conv1x1_bn_relu.1} parent=0 // pred_fallthru
    _
  // Predicated region
  $region22: #{bn_relu_conv1x1_bn_relu.1} parent=0 // pred_check
    _
  $region23: #{bn_relu_conv1x1_bn_relu.1} parent=0 // pred_check_branch
    %22 = sbr.rel (0) target = $region25
  $region24: #{bn_relu_conv1x1_bn_relu.1} parent=0 // pred_region
    _
  $region25: #{bn_relu_conv1x1_bn_relu.1} parent=0 // pred_fallthru
    _
  %v24 = vld [vmem:[%s0] sm:$0xff]
  %v25 = vld [vmem:[%s0 + $0x8] sm:$0xff]
  %v26 = vld [vmem:[%s0 + $0x10] sm:$0xff]
  %v27 = vld [vmem:[%s0 + $0x18] sm:$0xff]
  %v28 = vld [vmem:[%s0 + $0x20] sm:$0xff]
  %v29 = vld [vmem:[%s0 + $0x28] sm:$0xff]
  %v30 = vld [vmem:[%s0 + $0x30] sm:$0xff]
  %v31 = vld [vmem:[%s0 + $0x38] sm:$0xff]
  %v32 = vld [vmem:[%s0 + $0x40] sm:$0xff]
  %v33 = vld [vmem:[%s0 + $0x48] sm:$0xff]
  %v34 = vld [vmem:[%s0 + $0x50] sm:$0xff]
  %v35 = vld [vmem:[%s0 + $0x58] sm:$0xff]
  %v36 = vld [vmem:[%s0 + $0x60] sm:$0xff]
  %v37 = vld [vmem:[%s0 + $0x68] sm:$0xff]
  %v38 = vld [vmem:[%s0 + $0x70] sm:$0xff]
  %v39 = vld [vmem:[%s0 + $0x78] sm:$0xff]
  %v40 = vld [vmem:[%s0 + $0x80] sm:$0xff]
  %v41 = vld [vmem:[%s0 + $0x88] sm:$0xff]
  %v42 = vld [vmem:[%s0 + $0x90] sm:$0xff]
  %v43 = vld [vmem:[%s0 + $0x98] sm:$0xff]
  %v44 = vld [vmem:[%s0 + $0xa0] sm:$0xff]
  %v45 = vld [vmem:[%s0 + $0xa8] sm:$0xff]
  %v46 = vld [vmem:[%s0 + $0xb0] sm:$0xff]
  %v47 = vld [vmem:[%s0 + $0xb8] sm:$0xff]
  %v48 = vld [vmem:[%s0 + $0xc0] sm:$0xff]
  %v49 = vld [vmem:[%s0 + $0xc8] sm:$0xff]
  %v50 = vld [vmem:[%s0 + $0xd0] sm:$0xff]
  %v51 = vld [vmem:[%s0 + $0xd8] sm:$0xff]
  %v52 = vld [vmem:[%s0 + $0xe0] sm:$0xff]
  %v53 = vld [vmem:[%s0 + $0xe8] sm:$0xff]
  %v54 = vld [vmem:[%s0 + $0xf0] sm:$0xff]
  %v55 = vld [vmem:[%s0 + $0xf8] sm:$0xff]
  %v56 = vld [vmem:[%s0 + $0x100] sm:$0xff]
  %v57 = vld [vmem:[%s0 + $0x108] sm:$0xff]
  %v58 = vld [vmem:[%s0 + $0x110] sm:$0xff]
  %v59 = vld [vmem:[%s0 + $0x118] sm:$0xff]
  %v60 = vld [vmem:[%s0 + $0x120] sm:$0xff]
  %v61 = vld [vmem:[%s0 + $0x128] sm:$0xff]
  %v62 = vld [vmem:[%s0 + $0x130] sm:$0xff]
  %v63 = vld [vmem:[%s0 + $0x138] sm:$0xff]
  %v64 = vld [vmem:[%s0 + $0x140] sm:$0xff]
  %v65 = vld [vmem:[%s0 + $0x148] sm:$0xff]
  %v66 = vld [vmem:[%s0 + $0x150] sm:$0xff]
  %v67 = vld [vmem:[%s0 + $0x158] sm:$0xff]
  %v68 = vld [vmem:[%s0 + $0x160] sm:$0xff]
  %v69 = vld [vmem:[%s0 + $0x168] sm:$0xff]
  %v70 = vld [vmem:[%s0 + $0x170] sm:$0xff]
  %v71 = vld [vmem:[%s0 + $0x178] sm:$0xff]
  %v72 = vld [vmem:[%s0 + $0x180] sm:$0xff]
  %v73 = vld [vmem:[%s0 + $0x188] sm:$0xff]
  %v74 = vld [vmem:[%s0 + $0x190] sm:$0xff]
  %v75 = vld [vmem:[%s0 + $0x198] sm:$0xff]
  %v76 = vld [vmem:[%s0 + $0x1a0] sm:$0xff]
  %v77 = vld [vmem:[%s0 + $0x1a8] sm:$0xff]
  %v78 = vld [vmem:[%s0 + $0x1b0] sm:$0xff]
  %v79 = vld [vmem:[%s0 + $0x1b8] sm:$0xff]
  %v80 = vld [vmem:[%s0 + $0x1c0] sm:$0xff]
  %v81 = vld [vmem:[%s0 + $0x1c8] sm:$0xff]
  %v82 = vld [vmem:[%s0 + $0x1d0] sm:$0xff]
  %v83 = vld [vmem:[%s0 + $0x1d8] sm:$0xff]
  %v84 = vld [vmem:[%s0 + $0x1e0] sm:$0xff]
  %v85 = vld [vmem:[%s0 + $0x1e8] sm:$0xff]
  %v86 = vld [vmem:[%s0 + $0x1f0] sm:$0xff]
  %v87 = vld [vmem:[%s0 + $0x1f8] sm:$0xff]
  %v88 = vld [vmem:[%s0 + $0x200] sm:$0xff]
  %v89 = vld [vmem:[%s0 + $0x208] sm:$0xff]
  %v90 = vld [vmem:[%s0 + $0x210] sm:$0xff]
  %v91 = vld [vmem:[%s0 + $0x218] sm:$0xff]
  %v92 = vld [vmem:[%s0 + $0x220] sm:$0xff]
  %v93 = vld [vmem:[%s0 + $0x228] sm:$0xff]
  %v94 = vld [vmem:[%s0 + $0x230] sm:$0xff]
  %v95 = vld [vmem:[%s0 + $0x238] sm:$0xff]
  %v96 = vld [vmem:[%s0 + $0x240] sm:$0xff]
  %v97 = vld [vmem:[%s0 + $0x248] sm:$0xff]
  %v98 = vld [vmem:[%s0 + $0x250] sm:$0xff]
  %v99 = vld [vmem:[%s0 + $0x258] sm:$0xff]
  %v100 = vld [vmem:[%s0 + $0x260] sm:$0xff]
  %v101 = vld [vmem:[%s0 + $0x268] sm:$0xff]
  %v102 = vld [vmem:[%s0 + $0x270] sm:$0xff]
  %v103 = vld [vmem:[%s0 + $0x278] sm:$0xff]
  %v104 = vld [vmem:[%s0 + $0x280] sm:$0xff]
  %v105 = vld [vmem:[%s0 + $0x288] sm:$0xff]
  %v106 = vld [vmem:[%s0 + $0x290] sm:$0xff]
  %v107 = vld [vmem:[%s0 + $0x298] sm:$0xff]
  %v108 = vld [vmem:[%s0 + $0x2a0] sm:$0xff]
  %v109 = vld [vmem:[%s0 + $0x2a8] sm:$0xff]
  %v110 = vld [vmem:[%s0 + $0x2b0] sm:$0xff]
  %v111 = vld [vmem:[%s0 + $0x2b8] sm:$0xff]
  %v112 = vld [vmem:[%s0 + $0x2c0] sm:$0xff]
  %v113 = vld [vmem:[%s0 + $0x2c8] sm:$0xff]
  %v114 = vld [vmem:[%s0 + $0x2d0] sm:$0xff]
  %v115 = vld [vmem:[%s0 + $0x2d8] sm:$0xff]
  %v116 = vld [vmem:[%s0 + $0x2e0] sm:$0xff]
  %v117 = vld [vmem:[%s0 + $0x2e8] sm:$0xff]
  %v118 = vld [vmem:[%s0 + $0x2f0] sm:$0xff]
  %v119 = vld [vmem:[%s0 + $0x2f8] sm:$0xff]
  %v120 = vld [vmem:[%s0 + $0x300] sm:$0xff]
  %v121 = vld [vmem:[%s0 + $0x308] sm:$0xff]
  %v122 = vld [vmem:[%s0 + $0x310] sm:$0xff]
  %v123 = vld [vmem:[%s0 + $0x318] sm:$0xff]
  %v124 = vld [vmem:[%s0 + $0x320] sm:$0xff]
  %v125 = vld [vmem:[%s0 + $0x328] sm:$0xff]
  %v126 = vld [vmem:[%s0 + $0x330] sm:$0xff]
  %v127 = vld [vmem:[%s0 + $0x338] sm:$0xff]
  %v128 = vld [vmem:[%s0 + $0x340] sm:$0xff]
  %v129 = vld [vmem:[%s0 + $0x348] sm:$0xff]
  %v130 = vld [vmem:[%s0 + $0x350] sm:$0xff]
  %v131 = vld [vmem:[%s0 + $0x358] sm:$0xff]
  %v132 = vld [vmem:[%s0 + $0x360] sm:$0xff]
  %v133 = vld [vmem:[%s0 + $0x368] sm:$0xff]
  %v134 = vld [vmem:[%s0 + $0x370] sm:$0xff]
  %v135 = vld [vmem:[%s0 + $0x378] sm:$0xff]
  %v136 = vld [vmem:[%s0 + $0x380] sm:$0xff]
  %v137 = vld [vmem:[%s0 + $0x388] sm:$0xff]
  %v138 = vld [vmem:[%s0 + $0x390] sm:$0xff]
  %v139 = vld [vmem:[%s0 + $0x398] sm:$0xff]
  %v140 = vld [vmem:[%s0 + $0x3a0] sm:$0xff]
  %v141 = vld [vmem:[%s0 + $0x3a8] sm:$0xff]
  %v142 = vld [vmem:[%s0 + $0x3b0] sm:$0xff]
  %v143 = vld [vmem:[%s0 + $0x3b8] sm:$0xff]
  %v144 = vld [vmem:[%s0 + $0x3c0] sm:$0xff]
  %v145 = vld [vmem:[%s0 + $0x3c8] sm:$0xff]
  %v146 = vld [vmem:[%s0 + $0x3d0] sm:$0xff]
  %v147 = vld [vmem:[%s0 + $0x3d8] sm:$0xff]
  %v148 = vld [vmem:[%s0 + $0x3e0] sm:$0xff]
  %v149 = vld [vmem:[%s0 + $0x3e8] sm:$0xff]
  %v150 = vld [vmem:[%s0 + $0x3f0] sm:$0xff]
  %v151 = vld [vmem:[%s0 + $0x3f8] sm:$0xff]
  %v152 = vld [vmem:[%s0 + $0x400] sm:$0xff]
  %v153 = vld [vmem:[%s0 + $0x408] sm:$0xff]
  %v154 = vld [vmem:[%s0 + $0x410] sm:$0xff]
  %v155 = vld [vmem:[%s0 + $0x418] sm:$0xff]
  %v156 = vld [vmem:[%s0 + $0x420] sm:$0xff]
  %v157 = vld [vmem:[%s0 + $0x428] sm:$0xff]
  %v158 = vld [vmem:[%s0 + $0x430] sm:$0xff]
  %v159 = vld [vmem:[%s0 + $0x438] sm:$0xff]
  %v160 = vld [vmem:[%s0 + $0x440] sm:$0xff]
  %v161 = vld [vmem:[%s0 + $0x448] sm:$0xff]
  %v162 = vld [vmem:[%s0 + $0x450] sm:$0xff]
  %v163 = vld [vmem:[%s0 + $0x458] sm:$0xff]
  %v164 = vld [vmem:[%s0 + $0x460] sm:$0xff]
  %v165 = vld [vmem:[%s0 + $0x468] sm:$0xff]
  %v166 = vld [vmem:[%s0 + $0x470] sm:$0xff]
  %v167 = vld [vmem:[%s0 + $0x478] sm:$0xff]
  %v168 = vld [vmem:[%s0 + $0x480] sm:$0xff]
  %v169 = vld [vmem:[%s0 + $0x488] sm:$0xff]
  %v170 = vld [vmem:[%s0 + $0x490] sm:$0xff]
  %v171 = vld [vmem:[%s0 + $0x498] sm:$0xff]
  %v172 = vld [vmem:[%s0 + $0x4a0] sm:$0xff]
  %v173 = vld [vmem:[%s0 + $0x4a8] sm:$0xff]
  %v174 = vld [vmem:[%s0 + $0x4b0] sm:$0xff]
  %v175 = vld [vmem:[%s0 + $0x4b8] sm:$0xff]
  %v176 = vld [vmem:[%s0 + $0x4c0] sm:$0xff]
  %v177 = vld [vmem:[%s0 + $0x4c8] sm:$0xff]
  %v178 = vld [vmem:[%s0 + $0x4d0] sm:$0xff]
  %v179 = vld [vmem:[%s0 + $0x4d8] sm:$0xff]
  %v180 = vld [vmem:[%s0 + $0x4e0] sm:$0xff]
  %v181 = vld [vmem:[%s0 + $0x4e8] sm:$0xff]
  %v182 = vld [vmem:[%s0 + $0x4f0] sm:$0xff]
  %v183 = vld [vmem:[%s0 + $0x4f8] sm:$0xff]
  %v184 = vld [vmem:[%s0 + $0x500] sm:$0xff]
  %v185 = vld [vmem:[%s0 + $0x508] sm:$0xff]
  %v186 = vld [vmem:[%s0 + $0x510] sm:$0xff]
  %v187 = vld [vmem:[%s0 + $0x518] sm:$0xff]
  %v188 = vld [vmem:[%s0 + $0x520] sm:$0xff]
  %v189 = vld [vmem:[%s0 + $0x528] sm:$0xff]
  %v190 = vld [vmem:[%s0 + $0x530] sm:$0xff]
  %v191 = vld [vmem:[%s0 + $0x538] sm:$0xff]
  %v192 = vld [vmem:[%s0 + $0x540] sm:$0xff]
  %v193 = vld [vmem:[%s0 + $0x548] sm:$0xff]
  %v194 = vld [vmem:[%s0 + $0x550] sm:$0xff]
  %v195 = vld [vmem:[%s0 + $0x558] sm:$0xff]
  %v196 = vld [vmem:[%s0 + $0x560] sm:$0xff]
  %v197 = vld [vmem:[%s0 + $0x568] sm:$0xff]
  %vm198 = vcmask 400384
  %v199 = vsel %vm198, %v24, 0.0
  %200 = vadd.xlane.f32.xlu0 %v199
  %v201 = vpop.xlane.xlu0 %200
  %v202 = vsel %vm198, %v25, 0.0
  %203 = vadd.xlane.f32.xlu0 %v202
  %v204 = vpop.xlane.xlu0 %203
  %v205 = vsel %vm198, %v26, 0.0
  %206 = vadd.xlane.f32.xlu0 %v205
  %v207 = vpop.xlane.xlu0 %206
  %v208 = vsel %vm198, %v27, 0.0
  %209 = vadd.xlane.f32.xlu0 %v208
  %v210 = vpop.xlane.xlu0 %209
  %v211 = vsel %vm198, %v28, 0.0
  %212 = vadd.xlane.f32.xlu0 %v211
  %v213 = vpop.xlane.xlu0 %212
  %v214 = vsel %vm198, %v29, 0.0
  %215 = vadd.xlane.f32.xlu0 %v214
  %v216 = vpop.xlane.xlu0 %215
  %v217 = vsel %vm198, %v30, 0.0
  %218 = vadd.xlane.f32.xlu0 %v217
  %v219 = vpop.xlane.xlu0 %218
  %v220 = vsel %vm198, %v31, 0.0
  %221 = vadd.xlane.f32.xlu0 %v220
  %v222 = vpop.xlane.xlu0 %221
  %v223 = vsel %vm198, %v32, 0.0
  %224 = vadd.xlane.f32.xlu0 %v223
  %v225 = vpop.xlane.xlu0 %224
  %v226 = vsel %vm198, %v33, 0.0
  %227 = vadd.xlane.f32.xlu0 %v226
  %v228 = vpop.xlane.xlu0 %227
  %v229 = vsel %vm198, %v34, 0.0
  %230 = vadd.xlane.f32.xlu0 %v229
  %v231 = vpop.xlane.xlu0 %230
  %v232 = vsel %vm198, %v35, 0.0
  %233 = vadd.xlane.f32.xlu0 %v232
  %v234 = vpop.xlane.xlu0 %233
  %v235 = vsel %vm198, %v36, 0.0
  %236 = vadd.xlane.f32.xlu0 %v235
  %v237 = vpop.xlane.xlu0 %236
  %v238 = vsel %vm198, %v37, 0.0
  %239 = vadd.xlane.f32.xlu0 %v238
  %v240 = vpop.xlane.xlu0 %239
  %v241 = vsel %vm198, %v38, 0.0
  %242 = vadd.xlane.f32.xlu0 %v241
  %v243 = vpop.xlane.xlu0 %242
  %v244 = vsel %vm198, %v39, 0.0
  %245 = vadd.xlane.f32.xlu0 %v244
  %v246 = vpop.xlane.xlu0 %245
  %v247 = vsel %vm198, %v40, 0.0
  %248 = vadd.xlane.f32.xlu0 %v247
  %v249 = vpop.xlane.xlu0 %248
  %v250 = vsel %vm198, %v41, 0.0
  %251 = vadd.xlane.f32.xlu0 %v250
  %v252 = vpop.xlane.xlu0 %251
  %v253 = vsel %vm198, %v42, 0.0
  %254 = vadd.xlane.f32.xlu0 %v253
  %v255 = vpop.xlane.xlu0 %254
  %v256 = vsel %vm198, %v43, 0.0
  %257 = vadd.xlane.f32.xlu0 %v256
  %v258 = vpop.xlane.xlu0 %257
  %v259 = vsel %vm198, %v44, 0.0
  %260 = vadd.xlane.f32.xlu0 %v259
  %v261 = vpop.xlane.xlu0 %260
  %v262 = vsel %vm198, %v45, 0.0
  %263 = vadd.xlane.f32.xlu0 %v262
  %v264 = vpop.xlane.xlu0 %263
  %v265 = vsel %vm198, %v46, 0.0
  %266 = vadd.xlane.f32.xlu0 %v265
  %v267 = vpop.xlane.xlu0 %266
  %v268 = vsel %vm198, %v47, 0.0
  %269 = vadd.xlane.f32.xlu0 %v268
  %v270 = vpop.xlane.xlu0 %269
  %v271 = vsel %vm198, %v48, 0.0
  %272 = vadd.xlane.f32.xlu0 %v271
  %v273 = vpop.xlane.xlu0 %272
  %v274 = vsel %vm198, %v49, 0.0
  %275 = vadd.xlane.f32.xlu0 %v274
  %v276 = vpop.xlane.xlu0 %275
  %v277 = vsel %vm198, %v50, 0.0
  %278 = vadd.xlane.f32.xlu0 %v277
  %v279 = vpop.xlane.xlu0 %278
  %v280 = vsel %vm198, %v51, 0.0
  %281 = vadd.xlane.f32.xlu0 %v280
  %v282 = vpop.xlane.xlu0 %281
  %v283 = vsel %vm198, %v52, 0.0
  %284 = vadd.xlane.f32.xlu0 %v283
  %v285 = vpop.xlane.xlu0 %284
  %v286 = vsel %vm198, %v53, 0.0
  %287 = vadd.xlane.f32.xlu0 %v286
  %v288 = vpop.xlane.xlu0 %287
  %v289 = vsel %vm198, %v54, 0.0
  %290 = vadd.xlane.f32.xlu0 %v289
  %v291 = vpop.xlane.xlu0 %290
  %v292 = vsel %vm198, %v55, 0.0
  %293 = vadd.xlane.f32.xlu0 %v292
  %v294 = vpop.xlane.xlu0 %293
  %v295 = vsel %vm198, %v56, 0.0
  %296 = vadd.xlane.f32.xlu0 %v295
  %v297 = vpop.xlane.xlu0 %296
  %v298 = vsel %vm198, %v57, 0.0
  %299 = vadd.xlane.f32.xlu0 %v298
  %v300 = vpop.xlane.xlu0 %299
  %v301 = vsel %vm198, %v58, 0.0
  %302 = vadd.xlane.f32.xlu0 %v301
  %v303 = vpop.xlane.xlu0 %302
  %v304 = vsel %vm198, %v59, 0.0
  %305 = vadd.xlane.f32.xlu0 %v304
  %v306 = vpop.xlane.xlu0 %305
  %v307 = vsel %vm198, %v60, 0.0
  %308 = vadd.xlane.f32.xlu0 %v307
  %v309 = vpop.xlane.xlu0 %308
  %v310 = vsel %vm198, %v61, 0.0
  %311 = vadd.xlane.f32.xlu0 %v310
  %v312 = vpop.xlane.xlu0 %311
  %v313 = vsel %vm198, %v62, 0.0
  %314 = vadd.xlane.f32.xlu0 %v313
  %v315 = vpop.xlane.xlu0 %314
  %v316 = vsel %vm198, %v63, 0.0
  %317 = vadd.xlane.f32.xlu0 %v316
  %v318 = vpop.xlane.xlu0 %317
  %v319 = vsel %vm198, %v64, 0.0
  %320 = vadd.xlane.f32.xlu0 %v319
  %v321 = vpop.xlane.xlu0 %320
  %v322 = vsel %vm198, %v65, 0.0
  %323 = vadd.xlane.f32.xlu0 %v322
  %v324 = vpop.xlane.xlu0 %323
  %v325 = vsel %vm198, %v66, 0.0
  %326 = vadd.xlane.f32.xlu0 %v325
  %v327 = vpop.xlane.xlu0 %326
  %v328 = vsel %vm198, %v67, 0.0
  %329 = vadd.xlane.f32.xlu0 %v328
  %v330 = vpop.xlane.xlu0 %329
  %v331 = vsel %vm198, %v68, 0.0
  %332 = vadd.xlane.f32.xlu0 %v331
  %v333 = vpop.xlane.xlu0 %332
  %v334 = vsel %vm198, %v69, 0.0
  %335 = vadd.xlane.f32.xlu0 %v334
  %v336 = vpop.xlane.xlu0 %335
  %v337 = vsel %vm198, %v70, 0.0
  %338 = vadd.xlane.f32.xlu0 %v337
  %v339 = vpop.xlane.xlu0 %338
  %v340 = vsel %vm198, %v71, 0.0
  %341 = vadd.xlane.f32.xlu0 %v340
  %v342 = vpop.xlane.xlu0 %341
  %v343 = vsel %vm198, %v72, 0.0
  %344 = vadd.xlane.f32.xlu0 %v343
  %v345 = vpop.xlane.xlu0 %344
  %v346 = vsel %vm198, %v73, 0.0
  %347 = vadd.xlane.f32.xlu0 %v346
  %v348 = vpop.xlane.xlu0 %347
  %v349 = vsel %vm198, %v74, 0.0
  %350 = vadd.xlane.f32.xlu0 %v349
  %v351 = vpop.xlane.xlu0 %350
  %v352 = vsel %vm198, %v75, 0.0
  %353 = vadd.xlane.f32.xlu0 %v352
  %v354 = vpop.xlane.xlu0 %353
  %v355 = vsel %vm198, %v76, 0.0
  %356 = vadd.xlane.f32.xlu0 %v355
  %v357 = vpop.xlane.xlu0 %356
  %v358 = vsel %vm198, %v77, 0.0
  %359 = vadd.xlane.f32.xlu0 %v358
  %v360 = vpop.xlane.xlu0 %359
  %v361 = vsel %vm198, %v78, 0.0
  %362 = vadd.xlane.f32.xlu0 %v361
  %v363 = vpop.xlane.xlu0 %362
  %v364 = vsel %vm198, %v79, 0.0
  %365 = vadd.xlane.f32.xlu0 %v364
  %v366 = vpop.xlane.xlu0 %365
  %v367 = vsel %vm198, %v80, 0.0
  %368 = vadd.xlane.f32.xlu0 %v367
  %v369 = vpop.xlane.xlu0 %368
  %v370 = vsel %vm198, %v81, 0.0
  %371 = vadd.xlane.f32.xlu0 %v370
  %v372 = vpop.xlane.xlu0 %371
  %v373 = vsel %vm198, %v82, 0.0
  %374 = vadd.xlane.f32.xlu0 %v373
  %v375 = vpop.xlane.xlu0 %374
  %v376 = vsel %vm198, %v83, 0.0
  %377 = vadd.xlane.f32.xlu0 %v376
  %v378 = vpop.xlane.xlu0 %377
  %v379 = vsel %vm198, %v84, 0.0
  %380 = vadd.xlane.f32.xlu0 %v379
  %v381 = vpop.xlane.xlu0 %380
  %v382 = vsel %vm198, %v85, 0.0
  %383 = vadd.xlane.f32.xlu0 %v382
  %v384 = vpop.xlane.xlu0 %383
  %v385 = vsel %vm198, %v86, 0.0
  %386 = vadd.xlane.f32.xlu0 %v385
  %v387 = vpop.xlane.xlu0 %386
  %v388 = vsel %vm198, %v87, 0.0
  %389 = vadd.xlane.f32.xlu0 %v388
  %v390 = vpop.xlane.xlu0 %389
  %v391 = vsel %vm198, %v88, 0.0
  %392 = vadd.xlane.f32.xlu0 %v391
  %v393 = vpop.xlane.xlu0 %392
  %v394 = vsel %vm198, %v89, 0.0
  %395 = vadd.xlane.f32.xlu0 %v394
  %v396 = vpop.xlane.xlu0 %395
  %v397 = vsel %vm198, %v90, 0.0
  %398 = vadd.xlane.f32.xlu0 %v397
  %v399 = vpop.xlane.xlu0 %398
  %v400 = vsel %vm198, %v91, 0.0
  %401 = vadd.xlane.f32.xlu0 %v400
  %v402 = vpop.xlane.xlu0 %401
  %v403 = vsel %vm198, %v92, 0.0
  %404 = vadd.xlane.f32.xlu0 %v403
  %v405 = vpop.xlane.xlu0 %404
  %v406 = vsel %vm198, %v93, 0.0
  %407 = vadd.xlane.f32.xlu0 %v406
  %v408 = vpop.xlane.xlu0 %407
  %v409 = vsel %vm198, %v94, 0.0
  %410 = vadd.xlane.f32.xlu0 %v409
  %v411 = vpop.xlane.xlu0 %410
  %v412 = vsel %vm198, %v95, 0.0
  %413 = vadd.xlane.f32.xlu0 %v412
  %v414 = vpop.xlane.xlu0 %413
  %v415 = vsel %vm198, %v96, 0.0
  %416 = vadd.xlane.f32.xlu0 %v415
  %v417 = vpop.xlane.xlu0 %416
  %v418 = vsel %vm198, %v97, 0.0
  %419 = vadd.xlane.f32.xlu0 %v418
  %v420 = vpop.xlane.xlu0 %419
  %v421 = vsel %vm198, %v98, 0.0
  %422 = vadd.xlane.f32.xlu0 %v421
  %v423 = vpop.xlane.xlu0 %422
  %v424 = vsel %vm198, %v99, 0.0
  %425 = vadd.xlane.f32.xlu0 %v424
  %v426 = vpop.xlane.xlu0 %425
  %v427 = vsel %vm198, %v100, 0.0
  %428 = vadd.xlane.f32.xlu0 %v427
  %v429 = vpop.xlane.xlu0 %428
  %v430 = vsel %vm198, %v101, 0.0
  %431 = vadd.xlane.f32.xlu0 %v430
  %v432 = vpop.xlane.xlu0 %431
  %v433 = vsel %vm198, %v102, 0.0
  %434 = vadd.xlane.f32.xlu0 %v433
  %v435 = vpop.xlane.xlu0 %434
  %v436 = vsel %vm198, %v103, 0.0
  %437 = vadd.xlane.f32.xlu0 %v436
  %v438 = vpop.xlane.xlu0 %437
  %v439 = vsel %vm198, %v104, 0.0
  %440 = vadd.xlane.f32.xlu0 %v439
  %v441 = vpop.xlane.xlu0 %440
  %v442 = vsel %vm198, %v105, 0.0
  %443 = vadd.xlane.f32.xlu0 %v442
  %v444 = vpop.xlane.xlu0 %443
  %v445 = vsel %vm198, %v106, 0.0
  %446 = vadd.xlane.f32.xlu0 %v445
  %v447 = vpop.xlane.xlu0 %446
  %v448 = vsel %vm198, %v107, 0.0
  %449 = vadd.xlane.f32.xlu0 %v448
  %v450 = vpop.xlane.xlu0 %449
  %v451 = vsel %vm198, %v108, 0.0
  %452 = vadd.xlane.f32.xlu0 %v451
  %v453 = vpop.xlane.xlu0 %452
  %v454 = vsel %vm198, %v109, 0.0
  %455 = vadd.xlane.f32.xlu0 %v454
  %v456 = vpop.xlane.xlu0 %455
  %v457 = vsel %vm198, %v110, 0.0
  %458 = vadd.xlane.f32.xlu0 %v457
  %v459 = vpop.xlane.xlu0 %458
  %v460 = vsel %vm198, %v111, 0.0
  %461 = vadd.xlane.f32.xlu0 %v460
  %v462 = vpop.xlane.xlu0 %461
  %v463 = vsel %vm198, %v112, 0.0
  %464 = vadd.xlane.f32.xlu0 %v463
  %v465 = vpop.xlane.xlu0 %464
  %v466 = vsel %vm198, %v113, 0.0
  %467 = vadd.xlane.f32.xlu0 %v466
  %v468 = vpop.xlane.xlu0 %467
  %v469 = vsel %vm198, %v114, 0.0
  %470 = vadd.xlane.f32.xlu0 %v469
  %v471 = vpop.xlane.xlu0 %470
  %v472 = vsel %vm198, %v115, 0.0
  %473 = vadd.xlane.f32.xlu0 %v472
  %v474 = vpop.xlane.xlu0 %473
  %v475 = vsel %vm198, %v116, 0.0
  %476 = vadd.xlane.f32.xlu0 %v475
  %v477 = vpop.xlane.xlu0 %476
  %v478 = vsel %vm198, %v117, 0.0
  %479 = vadd.xlane.f32.xlu0 %v478
  %v480 = vpop.xlane.xlu0 %479
  %v481 = vsel %vm198, %v118, 0.0
  %482 = vadd.xlane.f32.xlu0 %v481
  %v483 = vpop.xlane.xlu0 %482
  %v484 = vsel %vm198, %v119, 0.0
  %485 = vadd.xlane.f32.xlu0 %v484
  %v486 = vpop.xlane.xlu0 %485
  %v487 = vsel %vm198, %v120, 0.0
  %488 = vadd.xlane.f32.xlu0 %v487
  %v489 = vpop.xlane.xlu0 %488
  %v490 = vsel %vm198, %v121, 0.0
  %491 = vadd.xlane.f32.xlu0 %v490
  %v492 = vpop.xlane.xlu0 %491
  %v493 = vsel %vm198, %v122, 0.0
  %494 = vadd.xlane.f32.xlu0 %v493
  %v495 = vpop.xlane.xlu0 %494
  %v496 = vsel %vm198, %v123, 0.0
  %497 = vadd.xlane.f32.xlu0 %v496
  %v498 = vpop.xlane.xlu0 %497
  %v499 = vsel %vm198, %v124, 0.0
  %500 = vadd.xlane.f32.xlu0 %v499
  %v501 = vpop.xlane.xlu0 %500
  %v502 = vsel %vm198, %v125, 0.0
  %503 = vadd.xlane.f32.xlu0 %v502
  %v504 = vpop.xlane.xlu0 %503
  %v505 = vsel %vm198, %v126, 0.0
  %506 = vadd.xlane.f32.xlu0 %v505
  %v507 = vpop.xlane.xlu0 %506
  %v508 = vsel %vm198, %v127, 0.0
  %509 = vadd.xlane.f32.xlu0 %v508
  %v510 = vpop.xlane.xlu0 %509
  %v511 = vsel %vm198, %v128, 0.0
  %512 = vadd.xlane.f32.xlu0 %v511
  %v513 = vpop.xlane.xlu0 %512
  %v514 = vsel %vm198, %v129, 0.0
  %515 = vadd.xlane.f32.xlu0 %v514
  %v516 = vpop.xlane.xlu0 %515
  %v517 = vsel %vm198, %v130, 0.0
  %518 = vadd.xlane.f32.xlu0 %v517
  %v519 = vpop.xlane.xlu0 %518
  %v520 = vsel %vm198, %v131, 0.0
  %521 = vadd.xlane.f32.xlu0 %v520
  %v522 = vpop.xlane.xlu0 %521
  %v523 = vsel %vm198, %v132, 0.0
  %524 = vadd.xlane.f32.xlu0 %v523
  %v525 = vpop.xlane.xlu0 %524
  %v526 = vsel %vm198, %v133, 0.0
  %527 = vadd.xlane.f32.xlu0 %v526
  %v528 = vpop.xlane.xlu0 %527
  %v529 = vsel %vm198, %v134, 0.0
  %530 = vadd.xlane.f32.xlu0 %v529
  %v531 = vpop.xlane.xlu0 %530
  %v532 = vsel %vm198, %v135, 0.0
  %533 = vadd.xlane.f32.xlu0 %v532
  %v534 = vpop.xlane.xlu0 %533
  %v535 = vsel %vm198, %v136, 0.0
  %536 = vadd.xlane.f32.xlu0 %v535
  %v537 = vpop.xlane.xlu0 %536
  %v538 = vsel %vm198, %v137, 0.0
  %539 = vadd.xlane.f32.xlu0 %v538
  %v540 = vpop.xlane.xlu0 %539
  %v541 = vsel %vm198, %v138, 0.0
  %542 = vadd.xlane.f32.xlu0 %v541
  %v543 = vpop.xlane.xlu0 %542
  %v544 = vsel %vm198, %v139, 0.0
  %545 = vadd.xlane.f32.xlu0 %v544
  %v546 = vpop.xlane.xlu0 %545
  %v547 = vsel %vm198, %v140, 0.0
  %548 = vadd.xlane.f32.xlu0 %v547
  %v549 = vpop.xlane.xlu0 %548
  %v550 = vsel %vm198, %v141, 0.0
  %551 = vadd.xlane.f32.xlu0 %v550
  %v552 = vpop.xlane.xlu0 %551
  %v553 = vsel %vm198, %v142, 0.0
  %554 = vadd.xlane.f32.xlu0 %v553
  %v555 = vpop.xlane.xlu0 %554
  %v556 = vsel %vm198, %v143, 0.0
  %557 = vadd.xlane.f32.xlu0 %v556
  %v558 = vpop.xlane.xlu0 %557
  %v559 = vsel %vm198, %v144, 0.0
  %560 = vadd.xlane.f32.xlu0 %v559
  %v561 = vpop.xlane.xlu0 %560
  %v562 = vsel %vm198, %v145, 0.0
  %563 = vadd.xlane.f32.xlu0 %v562
  %v564 = vpop.xlane.xlu0 %563
  %v565 = vsel %vm198, %v146, 0.0
  %566 = vadd.xlane.f32.xlu0 %v565
  %v567 = vpop.xlane.xlu0 %566
  %v568 = vsel %vm198, %v147, 0.0
  %569 = vadd.xlane.f32.xlu0 %v568
  %v570 = vpop.xlane.xlu0 %569
  %v571 = vsel %vm198, %v148, 0.0
  %572 = vadd.xlane.f32.xlu0 %v571
  %v573 = vpop.xlane.xlu0 %572
  %v574 = vsel %vm198, %v149, 0.0
  %575 = vadd.xlane.f32.xlu0 %v574
  %v576 = vpop.xlane.xlu0 %575
  %v577 = vsel %vm198, %v150, 0.0
  %578 = vadd.xlane.f32.xlu0 %v577
  %v579 = vpop.xlane.xlu0 %578
  %v580 = vsel %vm198, %v151, 0.0
  %581 = vadd.xlane.f32.xlu0 %v580
  %v582 = vpop.xlane.xlu0 %581
  %v583 = vsel %vm198, %v152, 0.0
  %584 = vadd.xlane.f32.xlu0 %v583
  %v585 = vpop.xlane.xlu0 %584
  %v586 = vsel %vm198, %v153, 0.0
  %587 = vadd.xlane.f32.xlu0 %v586
  %v588 = vpop.xlane.xlu0 %587
  %v589 = vsel %vm198, %v154, 0.0
  %590 = vadd.xlane.f32.xlu0 %v589
  %v591 = vpop.xlane.xlu0 %590
  %v592 = vsel %vm198, %v155, 0.0
  %593 = vadd.xlane.f32.xlu0 %v592
  %v594 = vpop.xlane.xlu0 %593
  %v595 = vsel %vm198, %v156, 0.0
  %596 = vadd.xlane.f32.xlu0 %v595
  %v597 = vpop.xlane.xlu0 %596
  %v598 = vsel %vm198, %v157, 0.0
  %599 = vadd.xlane.f32.xlu0 %v598
  %v600 = vpop.xlane.xlu0 %599
  %v601 = vsel %vm198, %v158, 0.0
  %602 = vadd.xlane.f32.xlu0 %v601
  %v603 = vpop.xlane.xlu0 %602
  %v604 = vsel %vm198, %v159, 0.0
  %605 = vadd.xlane.f32.xlu0 %v604
  %v606 = vpop.xlane.xlu0 %605
  %v607 = vsel %vm198, %v160, 0.0
  %608 = vadd.xlane.f32.xlu0 %v607
  %v609 = vpop.xlane.xlu0 %608
  %v610 = vsel %vm198, %v161, 0.0
  %611 = vadd.xlane.f32.xlu0 %v610
  %v612 = vpop.xlane.xlu0 %611
  %v613 = vsel %vm198, %v162, 0.0
  %614 = vadd.xlane.f32.xlu0 %v613
  %v615 = vpop.xlane.xlu0 %614
  %v616 = vsel %vm198, %v163, 0.0
  %617 = vadd.xlane.f32.xlu0 %v616
  %v618 = vpop.xlane.xlu0 %617
  %v619 = vsel %vm198, %v164, 0.0
  %620 = vadd.xlane.f32.xlu0 %v619
  %v621 = vpop.xlane.xlu0 %620
  %v622 = vsel %vm198, %v165, 0.0
  %623 = vadd.xlane.f32.xlu0 %v622
  %v624 = vpop.xlane.xlu0 %623
  %v625 = vsel %vm198, %v166, 0.0
  %626 = vadd.xlane.f32.xlu0 %v625
  %v627 = vpop.xlane.xlu0 %626
  %v628 = vsel %vm198, %v167, 0.0
  %629 = vadd.xlane.f32.xlu0 %v628
  %v630 = vpop.xlane.xlu0 %629
  %v631 = vsel %vm198, %v168, 0.0
  %632 = vadd.xlane.f32.xlu0 %v631
  %v633 = vpop.xlane.xlu0 %632
  %v634 = vsel %vm198, %v169, 0.0
  %635 = vadd.xlane.f32.xlu0 %v634
  %v636 = vpop.xlane.xlu0 %635
  %v637 = vsel %vm198, %v170, 0.0
  %638 = vadd.xlane.f32.xlu0 %v637
  %v639 = vpop.xlane.xlu0 %638
  %v640 = vsel %vm198, %v171, 0.0
  %641 = vadd.xlane.f32.xlu0 %v640
  %v642 = vpop.xlane.xlu0 %641
  %v643 = vsel %vm198, %v172, 0.0
  %644 = vadd.xlane.f32.xlu0 %v643
  %v645 = vpop.xlane.xlu0 %644
  %v646 = vsel %vm198, %v173, 0.0
  %647 = vadd.xlane.f32.xlu0 %v646
  %v648 = vpop.xlane.xlu0 %647
  %v649 = vsel %vm198, %v174, 0.0
  %650 = vadd.xlane.f32.xlu0 %v649
  %v651 = vpop.xlane.xlu0 %650
  %v652 = vsel %vm198, %v175, 0.0
  %653 = vadd.xlane.f32.xlu0 %v652
  %v654 = vpop.xlane.xlu0 %653
  %v655 = vsel %vm198, %v176, 0.0
  %656 = vadd.xlane.f32.xlu0 %v655
  %v657 = vpop.xlane.xlu0 %656
  %v658 = vsel %vm198, %v177, 0.0
  %659 = vadd.xlane.f32.xlu0 %v658
  %v660 = vpop.xlane.xlu0 %659
  %v661 = vsel %vm198, %v178, 0.0
  %662 = vadd.xlane.f32.xlu0 %v661
  %v663 = vpop.xlane.xlu0 %662
  %v664 = vsel %vm198, %v179, 0.0
  %665 = vadd.xlane.f32.xlu0 %v664
  %v666 = vpop.xlane.xlu0 %665
  %v667 = vsel %vm198, %v180, 0.0
  %668 = vadd.xlane.f32.xlu0 %v667
  %v669 = vpop.xlane.xlu0 %668
  %v670 = vsel %vm198, %v181, 0.0
  %671 = vadd.xlane.f32.xlu0 %v670
  %v672 = vpop.xlane.xlu0 %671
  %v673 = vsel %vm198, %v182, 0.0
  %674 = vadd.xlane.f32.xlu0 %v673
  %v675 = vpop.xlane.xlu0 %674
  %v676 = vsel %vm198, %v183, 0.0
  %677 = vadd.xlane.f32.xlu0 %v676
  %v678 = vpop.xlane.xlu0 %677
  %v679 = vsel %vm198, %v184, 0.0
  %680 = vadd.xlane.f32.xlu0 %v679
  %v681 = vpop.xlane.xlu0 %680
  %v682 = vsel %vm198, %v185, 0.0
  %683 = vadd.xlane.f32.xlu0 %v682
  %v684 = vpop.xlane.xlu0 %683
  %v685 = vsel %vm198, %v186, 0.0
  %686 = vadd.xlane.f32.xlu0 %v685
  %v687 = vpop.xlane.xlu0 %686
  %v688 = vsel %vm198, %v187, 0.0
  %689 = vadd.xlane.f32.xlu0 %v688
  %v690 = vpop.xlane.xlu0 %689
  %v691 = vsel %vm198, %v188, 0.0
  %692 = vadd.xlane.f32.xlu0 %v691
  %v693 = vpop.xlane.xlu0 %692
  %v694 = vsel %vm198, %v189, 0.0
  %695 = vadd.xlane.f32.xlu0 %v694
  %v696 = vpop.xlane.xlu0 %695
  %v697 = vsel %vm198, %v190, 0.0
  %698 = vadd.xlane.f32.xlu0 %v697
  %v699 = vpop.xlane.xlu0 %698
  %v700 = vsel %vm198, %v191, 0.0
  %701 = vadd.xlane.f32.xlu0 %v700
  %v702 = vpop.xlane.xlu0 %701
  %v703 = vsel %vm198, %v192, 0.0
  %704 = vadd.xlane.f32.xlu0 %v703
  %v705 = vpop.xlane.xlu0 %704
  %v706 = vsel %vm198, %v193, 0.0
  %707 = vadd.xlane.f32.xlu0 %v706
  %v708 = vpop.xlane.xlu0 %707
  %v709 = vsel %vm198, %v194, 0.0
  %710 = vadd.xlane.f32.xlu0 %v709
  %v711 = vpop.xlane.xlu0 %710
  %v712 = vsel %vm198, %v195, 0.0
  %713 = vadd.xlane.f32.xlu0 %v712
  %v714 = vpop.xlane.xlu0 %713
  %v715 = vsel %vm198, %v196, 0.0
  %716 = vadd.xlane.f32.xlu0 %v715
  %v717 = vpop.xlane.xlu0 %716
  %v718 = vsel %vm198, %v197, 0.0
  %719 = vadd.xlane.f32.xlu0 %v718
  %v720 = vpop.xlane.xlu0 %719
  %v721 = vmul.f32 %v201, 0.020408163
  %v722 = vmul.f32 %v204, 0.020408163
  %v723 = vmul.f32 %v207, 0.020408163
  %v724 = vmul.f32 %v210, 0.020408163
  %v725 = vmul.f32 %v213, 0.020408163
  %v726 = vmul.f32 %v216, 0.020408163
  %v727 = vmul.f32 %v219, 0.020408163
  %v728 = vmul.f32 %v222, 0.020408163
  %v729 = vmul.f32 %v225, 0.020408163
  %v730 = vmul.f32 %v228, 0.020408163
  %v731 = vmul.f32 %v231, 0.020408163
  %v732 = vmul.f32 %v234, 0.020408163
  %v733 = vmul.f32 %v237, 0.020408163
  %v734 = vmul.f32 %v240, 0.020408163
  %v735 = vmul.f32 %v243, 0.020408163
  %v736 = vmul.f32 %v246, 0.020408163
  %v737 = vmul.f32 %v249, 0.020408163
  %v738 = vmul.f32 %v252, 0.020408163
  %v739 = vmul.f32 %v255, 0.020408163
  %v740 = vmul.f32 %v258, 0.020408163
  %v741 = vmul.f32 %v261, 0.020408163
  %v742 = vmul.f32 %v264, 0.020408163
  %v743 = vmul.f32 %v267, 0.020408163
  %v744 = vmul.f32 %v270, 0.020408163
  %v745 = vmul.f32 %v273, 0.020408163
  %v746 = vmul.f32 %v276, 0.020408163
  %v747 = vmul.f32 %v279, 0.020408163
  %v748 = vmul.f32 %v282, 0.020408163
  %v749 = vmul.f32 %v285, 0.020408163
  %v750 = vmul.f32 %v288, 0.020408163
  %v751 = vmul.f32 %v291, 0.020408163
  %v752 = vmul.f32 %v294, 0.020408163
  %v753 = vmul.f32 %v297, 0.020408163
  %v754 = vmul.f32 %v300, 0.020408163
  %v755 = vmul.f32 %v303, 0.020408163
  %v756 = vmul.f32 %v306, 0.020408163
  %v757 = vmul.f32 %v309, 0.020408163
  %v758 = vmul.f32 %v312, 0.020408163
  %v759 = vmul.f32 %v315, 0.020408163
  %v760 = vmul.f32 %v318, 0.020408163
  %v761 = vmul.f32 %v321, 0.020408163
  %v762 = vmul.f32 %v324, 0.020408163
  %v763 = vmul.f32 %v327, 0.020408163
  %v764 = vmul.f32 %v330, 0.020408163
  %v765 = vmul.f32 %v333, 0.020408163
  %v766 = vmul.f32 %v336, 0.020408163
  %v767 = vmul.f32 %v339, 0.020408163
  %v768 = vmul.f32 %v342, 0.020408163
  %v769 = vmul.f32 %v345, 0.020408163
  %v770 = vmul.f32 %v348, 0.020408163
  %v771 = vmul.f32 %v351, 0.020408163
  %v772 = vmul.f32 %v354, 0.020408163
  %v773 = vmul.f32 %v357, 0.020408163
  %v774 = vmul.f32 %v360, 0.020408163
  %v775 = vmul.f32 %v363, 0.020408163
  %v776 = vmul.f32 %v366, 0.020408163
  %v777 = vmul.f32 %v369, 0.020408163
  %v778 = vmul.f32 %v372, 0.020408163
  %v779 = vmul.f32 %v375, 0.020408163
  %v780 = vmul.f32 %v378, 0.020408163
  %v781 = vmul.f32 %v381, 0.020408163
  %v782 = vmul.f32 %v384, 0.020408163
  %v783 = vmul.f32 %v387, 0.020408163
  %v784 = vmul.f32 %v390, 0.020408163
  %v785 = vmul.f32 %v393, 0.020408163
  %v786 = vmul.f32 %v396, 0.020408163
  %v787 = vmul.f32 %v399, 0.020408163
  %v788 = vmul.f32 %v402, 0.020408163
  %v789 = vmul.f32 %v405, 0.020408163
  %v790 = vmul.f32 %v408, 0.020408163
  %v791 = vmul.f32 %v411, 0.020408163
  %v792 = vmul.f32 %v414, 0.020408163
  %v793 = vmul.f32 %v417, 0.020408163
  %v794 = vmul.f32 %v420, 0.020408163
  %v795 = vmul.f32 %v423, 0.020408163
  %v796 = vmul.f32 %v426, 0.020408163
  %v797 = vmul.f32 %v429, 0.020408163
  %v798 = vmul.f32 %v432, 0.020408163
  %v799 = vmul.f32 %v435, 0.020408163
  %v800 = vmul.f32 %v438, 0.020408163
  %v801 = vmul.f32 %v441, 0.020408163
  %v802 = vmul.f32 %v444, 0.020408163
  %v803 = vmul.f32 %v447, 0.020408163
  %v804 = vmul.f32 %v450, 0.020408163
  %v805 = vmul.f32 %v453, 0.020408163
  %v806 = vmul.f32 %v456, 0.020408163
  %v807 = vmul.f32 %v459, 0.020408163
  %v808 = vmul.f32 %v462, 0.020408163
  %v809 = vmul.f32 %v465, 0.020408163
  %v810 = vmul.f32 %v468, 0.020408163
  %v811 = vmul.f32 %v471, 0.020408163
  %v812 = vmul.f32 %v474, 0.020408163
  %v813 = vmul.f32 %v477, 0.020408163
  %v814 = vmul.f32 %v480, 0.020408163
  %v815 = vmul.f32 %v483, 0.020408163
  %v816 = vmul.f32 %v486, 0.020408163
  %v817 = vmul.f32 %v489, 0.020408163
  %v818 = vmul.f32 %v492, 0.020408163
  %v819 = vmul.f32 %v495, 0.020408163
  %v820 = vmul.f32 %v498, 0.020408163
  %v821 = vmul.f32 %v501, 0.020408163
  %v822 = vmul.f32 %v504, 0.020408163
  %v823 = vmul.f32 %v507, 0.020408163
  %v824 = vmul.f32 %v510, 0.020408163
  %v825 = vmul.f32 %v513, 0.020408163
  %v826 = vmul.f32 %v516, 0.020408163
  %v827 = vmul.f32 %v519, 0.020408163
  %v828 = vmul.f32 %v522, 0.020408163
  %v829 = vmul.f32 %v525, 0.020408163
  %v830 = vmul.f32 %v528, 0.020408163
  %v831 = vmul.f32 %v531, 0.020408163
  %v832 = vmul.f32 %v534, 0.020408163
  %v833 = vmul.f32 %v537, 0.020408163
  %v834 = vmul.f32 %v540, 0.020408163
  %v835 = vmul.f32 %v543, 0.020408163
  %v836 = vmul.f32 %v546, 0.020408163
  %v837 = vmul.f32 %v549, 0.020408163
  %v838 = vmul.f32 %v552, 0.020408163
  %v839 = vmul.f32 %v555, 0.020408163
  %v840 = vmul.f32 %v558, 0.020408163
  %v841 = vmul.f32 %v561, 0.020408163
  %v842 = vmul.f32 %v564, 0.020408163
  %v843 = vmul.f32 %v567, 0.020408163
  %v844 = vmul.f32 %v570, 0.020408163
  %v845 = vmul.f32 %v573, 0.020408163
  %v846 = vmul.f32 %v576, 0.020408163
  %v847 = vmul.f32 %v579, 0.020408163
  %v848 = vmul.f32 %v582, 0.020408163
  %v849 = vmul.f32 %v585, 0.020408163
  %v850 = vmul.f32 %v588, 0.020408163
  %v851 = vmul.f32 %v591, 0.020408163
  %v852 = vmul.f32 %v594, 0.020408163
  %v853 = vmul.f32 %v597, 0.020408163
  %v854 = vmul.f32 %v600, 0.020408163
  %v855 = vmul.f32 %v603, 0.020408163
  %v856 = vmul.f32 %v606, 0.020408163
  %v857 = vmul.f32 %v609, 0.020408163
  %v858 = vmul.f32 %v612, 0.020408163
  %v859 = vmul.f32 %v615, 0.020408163
  %v860 = vmul.f32 %v618, 0.020408163
  %v861 = vmul.f32 %v621, 0.020408163
  %v862 = vmul.f32 %v624, 0.020408163
  %v863 = vmul.f32 %v627, 0.020408163
  %v864 = vmul.f32 %v630, 0.020408163
  %v865 = vmul.f32 %v633, 0.020408163
  %v866 = vmul.f32 %v636, 0.020408163
  %v867 = vmul.f32 %v639, 0.020408163
  %v868 = vmul.f32 %v642, 0.020408163
  %v869 = vmul.f32 %v645, 0.020408163
  %v870 = vmul.f32 %v648, 0.020408163
  %v871 = vmul.f32 %v651, 0.020408163
  %v872 = vmul.f32 %v654, 0.020408163
  %v873 = vmul.f32 %v657, 0.020408163
  %v874 = vmul.f32 %v660, 0.020408163
  %v875 = vmul.f32 %v663, 0.020408163
  %v876 = vmul.f32 %v666, 0.020408163
  %v877 = vmul.f32 %v669, 0.020408163
  %v878 = vmul.f32 %v672, 0.020408163
  %v879 = vmul.f32 %v675, 0.020408163
  %v880 = vmul.f32 %v678, 0.020408163
  %v881 = vmul.f32 %v681, 0.020408163
  %v882 = vmul.f32 %v684, 0.020408163
  %v883 = vmul.f32 %v687, 0.020408163
  %v884 = vmul.f32 %v690, 0.020408163
  %v885 = vmul.f32 %v693, 0.020408163
  %v886 = vmul.f32 %v696, 0.020408163
  %v887 = vmul.f32 %v699, 0.020408163
  %v888 = vmul.f32 %v702, 0.020408163
  %v889 = vmul.f32 %v705, 0.020408163
  %v890 = vmul.f32 %v708, 0.020408163
  %v891 = vmul.f32 %v711, 0.020408163
  %v892 = vmul.f32 %v714, 0.020408163
  %v893 = vmul.f32 %v717, 0.020408163
  %v894 = vmul.f32 %v720, 0.020408163
  %v895 = vsub.f32 %v24, %v721
  %v896 = vsub.f32 %v25, %v722
  %v897 = vsub.f32 %v26, %v723
  %v898 = vsub.f32 %v27, %v724
  %v899 = vsub.f32 %v28, %v725
  %v900 = vsub.f32 %v29, %v726
  %v901 = vsub.f32 %v30, %v727
  %v902 = vsub.f32 %v31, %v728
  %v903 = vsub.f32 %v32, %v729
  %v904 = vsub.f32 %v33, %v730
  %v905 = vsub.f32 %v34, %v731
  %v906 = vsub.f32 %v35, %v732
  %v907 = vsub.f32 %v36, %v733
  %v908 = vsub.f32 %v37, %v734
  %v909 = vsub.f32 %v38, %v735
  %v910 = vsub.f32 %v39, %v736
  %v911 = vsub.f32 %v40, %v737
  %v912 = vsub.f32 %v41, %v738
  %v913 = vsub.f32 %v42, %v739
  %v914 = vsub.f32 %v43, %v740
  %v915 = vsub.f32 %v44, %v741
  %v916 = vsub.f32 %v45, %v742
  %v917 = vsub.f32 %v46, %v743
  %v918 = vsub.f32 %v47, %v744
  %v919 = vsub.f32 %v48, %v745
  %v920 = vsub.f32 %v49, %v746
  %v921 = vsub.f32 %v50, %v747
  %v922 = vsub.f32 %v51, %v748
  %v923 = vsub.f32 %v52, %v749
  %v924 = vsub.f32 %v53, %v750
  %v925 = vsub.f32 %v54, %v751
  %v926 = vsub.f32 %v55, %v752
  %v927 = vsub.f32 %v56, %v753
  %v928 = vsub.f32 %v57, %v754
  %v929 = vsub.f32 %v58, %v755
  %v930 = vsub.f32 %v59, %v756
  %v931 = vsub.f32 %v60, %v757
  %v932 = vsub.f32 %v61, %v758
  %v933 = vsub.f32 %v62, %v759
  %v934 = vsub.f32 %v63, %v760
  %v935 = vsub.f32 %v64, %v761
  %v936 = vsub.f32 %v65, %v762
  %v937 = vsub.f32 %v66, %v763
  %v938 = vsub.f32 %v67, %v764
  %v939 = vsub.f32 %v68, %v765
  %v940 = vsub.f32 %v69, %v766
  %v941 = vsub.f32 %v70, %v767
  %v942 = vsub.f32 %v71, %v768
  %v943 = vsub.f32 %v72, %v769
  %v944 = vsub.f32 %v73, %v770
  %v945 = vsub.f32 %v74, %v771
  %v946 = vsub.f32 %v75, %v772
  %v947 = vsub.f32 %v76, %v773
  %v948 = vsub.f32 %v77, %v774
  %v949 = vsub.f32 %v78, %v775
  %v950 = vsub.f32 %v79, %v776
  %v951 = vsub.f32 %v80, %v777
  %v952 = vsub.f32 %v81, %v778
  %v953 = vsub.f32 %v82, %v779
  %v954 = vsub.f32 %v83, %v780
  %v955 = vsub.f32 %v84, %v781
  %v956 = vsub.f32 %v85, %v782
  %v957 = vsub.f32 %v86, %v783
  %v958 = vsub.f32 %v87, %v784
  %v959 = vsub.f32 %v88, %v785
  %v960 = vsub.f32 %v89, %v786
  %v961 = vsub.f32 %v90, %v787
  %v962 = vsub.f32 %v91, %v788
  %v963 = vsub.f32 %v92, %v789
  %v964 = vsub.f32 %v93, %v790
  %v965 = vsub.f32 %v94, %v791
  %v966 = vsub.f32 %v95, %v792
  %v967 = vsub.f32 %v96, %v793
  %v968 = vsub.f32 %v97, %v794
  %v969 = vsub.f32 %v98, %v795
  %v970 = vsub.f32 %v99, %v796
  %v971 = vsub.f32 %v100, %v797
  %v972 = vsub.f32 %v101, %v798
  %v973 = vsub.f32 %v102, %v799
  %v974 = vsub.f32 %v103, %v800
  %v975 = vsub.f32 %v104, %v801
  %v976 = vsub.f32 %v105, %v802
  %v977 = vsub.f32 %v106, %v803
  %v978 = vsub.f32 %v107, %v804
  %v979 = vsub.f32 %v108, %v805
  %v980 = vsub.f32 %v109, %v806
  %v981 = vsub.f32 %v110, %v807
  %v982 = vsub.f32 %v111, %v808
  %v983 = vsub.f32 %v112, %v809
  %v984 = vsub.f32 %v113, %v810
  %v985 = vsub.f32 %v114, %v811
  %v986 = vsub.f32 %v115, %v812
  %v987 = vsub.f32 %v116, %v813
  %v988 = vsub.f32 %v117, %v814
  %v989 = vsub.f32 %v118, %v815
  %v990 = vsub.f32 %v119, %v816
  %v991 = vsub.f32 %v120, %v817
  %v992 = vsub.f32 %v121, %v818
  %v993 = vsub.f32 %v122, %v819
  %v994 = vsub.f32 %v123, %v820
  %v995 = vsub.f32 %v124, %v821
  %v996 = vsub.f32 %v125, %v822
  %v997 = vsub.f32 %v126, %v823
  %v998 = vsub.f32 %v127, %v824
  %v999 = vsub.f32 %v128, %v825
  %v1000 = vsub.f32 %v129, %v826
  %v1001 = vsub.f32 %v130, %v827
  %v1002 = vsub.f32 %v131, %v828
  %v1003 = vsub.f32 %v132, %v829
  %v1004 = vsub.f32 %v133, %v830
  %v1005 = vsub.f32 %v134, %v831
  %v1006 = vsub.f32 %v135, %v832
  %v1007 = vsub.f32 %v136, %v833
  %v1008 = vsub.f32 %v137, %v834
  %v1009 = vsub.f32 %v138, %v835
  %v1010 = vsub.f32 %v139, %v836
  %v1011 = vsub.f32 %v140, %v837
  %v1012 = vsub.f32 %v141, %v838
  %v1013 = vsub.f32 %v142, %v839
  %v1014 = vsub.f32 %v143, %v840
  %v1015 = vsub.f32 %v144, %v841
  %v1016 = vsub.f32 %v145, %v842
  %v1017 = vsub.f32 %v146, %v843
  %v1018 = vsub.f32 %v147, %v844
  %v1019 = vsub.f32 %v148, %v845
  %v1020 = vsub.f32 %v149, %v846
  %v1021 = vsub.f32 %v150, %v847
  %v1022 = vsub.f32 %v151, %v848
  %v1023 = vsub.f32 %v152, %v849
  %v1024 = vsub.f32 %v153, %v850
  %v1025 = vsub.f32 %v154, %v851
  %v1026 = vsub.f32 %v155, %v852
  %v1027 = vsub.f32 %v156, %v853
  %v1028 = vsub.f32 %v157, %v854
  %v1029 = vsub.f32 %v158, %v855
  %v1030 = vsub.f32 %v159, %v856
  %v1031 = vsub.f32 %v160, %v857
  %v1032 = vsub.f32 %v161, %v858
  %v1033 = vsub.f32 %v162, %v859
  %v1034 = vsub.f32 %v163, %v860
  %v1035 = vsub.f32 %v164, %v861
  %v1036 = vsub.f32 %v165, %v862
  %v1037 = vsub.f32 %v166, %v863
  %v1038 = vsub.f32 %v167, %v864
  %v1039 = vsub.f32 %v168, %v865
  %v1040 = vsub.f32 %v169, %v866
  %v1041 = vsub.f32 %v170, %v867
  %v1042 = vsub.f32 %v171, %v868
  %v1043 = vsub.f32 %v172, %v869
  %v1044 = vsub.f32 %v173, %v870
  %v1045 = vsub.f32 %v174, %v871
  %v1046 = vsub.f32 %v175, %v872
  %v1047 = vsub.f32 %v176, %v873
  %v1048 = vsub.f32 %v177, %v874
  %v1049 = vsub.f32 %v178, %v875
  %v1050 = vsub.f32 %v179, %v876
  %v1051 = vsub.f32 %v180, %v877
  %v1052 = vsub.f32 %v181, %v878
  %v1053 = vsub.f32 %v182, %v879
  %v1054 = vsub.f32 %v183, %v880
  %v1055 = vsub.f32 %v184, %v881
  %v1056 = vsub.f32 %v185, %v882
  %v1057 = vsub.f32 %v186, %v883
  %v1058 = vsub.f32 %v187, %v884
  %v1059 = vsub.f32 %v188, %v885
  %v1060 = vsub.f32 %v189, %v886
  %v1061 = vsub.f32 %v190, %v887
  %v1062 = vsub.f32 %v191, %v888
  %v1063 = vsub.f32 %v192, %v889
  %v1064 = vsub.f32 %v193, %v890
  %v1065 = vsub.f32 %v194, %v891
  %v1066 = vsub.f32 %v195, %v892
  %v1067 = vsub.f32 %v196, %v893
  %v1068 = vsub.f32 %v197, %v894
  %v1069 = vmul.f32 %v895, %v895
  %v1070 = vmul.f32 %v896, %v896
  %v1071 = vmul.f32 %v897, %v897
  %v1072 = vmul.f32 %v898, %v898
  %v1073 = vmul.f32 %v899, %v899
  %v1074 = vmul.f32 %v900, %v900
  %v1075 = vmul.f32 %v901, %v901
  %v1076 = vmul.f32 %v902, %v902
  %v1077 = vmul.f32 %v903, %v903
  %v1078 = vmul.f32 %v904, %v904
  %v1079 = vmul.f32 %v905, %v905
  %v1080 = vmul.f32 %v906, %v906
  %v1081 = vmul.f32 %v907, %v907
  %v1082 = vmul.f32 %v908, %v908
  %v1083 = vmul.f32 %v909, %v909
  %v1084 = vmul.f32 %v910, %v910
  %v1085 = vmul.f32 %v911, %v911
  %v1086 = vmul.f32 %v912, %v912
  %v1087 = vmul.f32 %v913, %v913
  %v1088 = vmul.f32 %v914, %v914
  %v1089 = vmul.f32 %v915, %v915
  %v1090 = vmul.f32 %v916, %v916
  %v1091 = vmul.f32 %v917, %v917
  %v1092 = vmul.f32 %v918, %v918
  %v1093 = vmul.f32 %v919, %v919
  %v1094 = vmul.f32 %v920, %v920
  %v1095 = vmul.f32 %v921, %v921
  %v1096 = vmul.f32 %v922, %v922
  %v1097 = vmul.f32 %v923, %v923
  %v1098 = vmul.f32 %v924, %v924
  %v1099 = vmul.f32 %v925, %v925
  %v1100 = vmul.f32 %v926, %v926
  %v1101 = vmul.f32 %v927, %v927
  %v1102 = vmul.f32 %v928, %v928
  %v1103 = vmul.f32 %v929, %v929
  %v1104 = vmul.f32 %v930, %v930
  %v1105 = vmul.f32 %v931, %v931
  %v1106 = vmul.f32 %v932, %v932
  %v1107 = vmul.f32 %v933, %v933
  %v1108 = vmul.f32 %v934, %v934
  %v1109 = vmul.f32 %v935, %v935
  %v1110 = vmul.f32 %v936, %v936
  %v1111 = vmul.f32 %v937, %v937
  %v1112 = vmul.f32 %v938, %v938
  %v1113 = vmul.f32 %v939, %v939
  %v1114 = vmul.f32 %v940, %v940
  %v1115 = vmul.f32 %v941, %v941
  %v1116 = vmul.f32 %v942, %v942
  %v1117 = vmul.f32 %v943, %v943
  %v1118 = vmul.f32 %v944, %v944
  %v1119 = vmul.f32 %v945, %v945
  %v1120 = vmul.f32 %v946, %v946
  %v1121 = vmul.f32 %v947, %v947
  %v1122 = vmul.f32 %v948, %v948
  %v1123 = vmul.f32 %v949, %v949
  %v1124 = vmul.f32 %v950, %v950
  %v1125 = vmul.f32 %v951, %v951
  %v1126 = vmul.f32 %v952, %v952
  %v1127 = vmul.f32 %v953, %v953
  %v1128 = vmul.f32 %v954, %v954
  %v1129 = vmul.f32 %v955, %v955
  %v1130 = vmul.f32 %v956, %v956
  %v1131 = vmul.f32 %v957, %v957
  %v1132 = vmul.f32 %v958, %v958
  %v1133 = vmul.f32 %v959, %v959
  %v1134 = vmul.f32 %v960, %v960
  %v1135 = vmul.f32 %v961, %v961
  %v1136 = vmul.f32 %v962, %v962
  %v1137 = vmul.f32 %v963, %v963
  %v1138 = vmul.f32 %v964, %v964
  %v1139 = vmul.f32 %v965, %v965
  %v1140 = vmul.f32 %v966, %v966
  %v1141 = vmul.f32 %v967, %v967
  %v1142 = vmul.f32 %v968, %v968
  %v1143 = vmul.f32 %v969, %v969
  %v1144 = vmul.f32 %v970, %v970
  %v1145 = vmul.f32 %v971, %v971
  %v1146 = vmul.f32 %v972, %v972
  %v1147 = vmul.f32 %v973, %v973
  %v1148 = vmul.f32 %v974, %v974
  %v1149 = vmul.f32 %v975, %v975
  %v1150 = vmul.f32 %v976, %v976
  %v1151 = vmul.f32 %v977, %v977
  %v1152 = vmul.f32 %v978, %v978
  %v1153 = vmul.f32 %v979, %v979
  %v1154 = vmul.f32 %v980, %v980
  %v1155 = vmul.f32 %v981, %v981
  %v1156 = vmul.f32 %v982, %v982
  %v1157 = vmul.f32 %v983, %v983
  %v1158 = vmul.f32 %v984, %v984
  %v1159 = vmul.f32 %v985, %v985
  %v1160 = vmul.f32 %v986, %v986
  %v1161 = vmul.f32 %v987, %v987
  %v1162 = vmul.f32 %v988, %v988
  %v1163 = vmul.f32 %v989, %v989
  %v1164 = vmul.f32 %v990, %v990
  %v1165 = vmul.f32 %v991, %v991
  %v1166 = vmul.f32 %v992, %v992
  %v1167 = vmul.f32 %v993, %v993
  %v1168 = vmul.f32 %v994, %v994
  %v1169 = vmul.f32 %v995, %v995
  %v1170 = vmul.f32 %v996, %v996
  %v1171 = vmul.f32 %v997, %v997
  %v1172 = vmul.f32 %v998, %v998
  %v1173 = vmul.f32 %v999, %v999
  %v1174 = vmul.f32 %v1000, %v1000
  %v1175 = vmul.f32 %v1001, %v1001
  %v1176 = vmul.f32 %v1002, %v1002
  %v1177 = vmul.f32 %v1003, %v1003
  %v1178 = vmul.f32 %v1004, %v1004
  %v1179 = vmul.f32 %v1005, %v1005
  %v1180 = vmul.f32 %v1006, %v1006
  %v1181 = vmul.f32 %v1007, %v1007
  %v1182 = vmul.f32 %v1008, %v1008
  %v1183 = vmul.f32 %v1009, %v1009
  %v1184 = vmul.f32 %v1010, %v1010
  %v1185 = vmul.f32 %v1011, %v1011
  %v1186 = vmul.f32 %v1012, %v1012
  %v1187 = vmul.f32 %v1013, %v1013
  %v1188 = vmul.f32 %v1014, %v1014
  %v1189 = vmul.f32 %v1015, %v1015
  %v1190 = vmul.f32 %v1016, %v1016
  %v1191 = vmul.f32 %v1017, %v1017
  %v1192 = vmul.f32 %v1018, %v1018
  %v1193 = vmul.f32 %v1019, %v1019
  %v1194 = vmul.f32 %v1020, %v1020
  %v1195 = vmul.f32 %v1021, %v1021
  %v1196 = vmul.f32 %v1022, %v1022
  %v1197 = vmul.f32 %v1023, %v1023
  %v1198 = vmul.f32 %v1024, %v1024
  %v1199 = vmul.f32 %v1025, %v1025
  %v1200 = vmul.f32 %v1026, %v1026
  %v1201 = vmul.f32 %v1027, %v1027
  %v1202 = vmul.f32 %v1028, %v1028
  %v1203 = vmul.f32 %v1029, %v1029
  %v1204 = vmul.f32 %v1030, %v1030
  %v1205 = vmul.f32 %v1031, %v1031
  %v1206 = vmul.f32 %v1032, %v1032
  %v1207 = vmul.f32 %v1033, %v1033
  %v1208 = vmul.f32 %v1034, %v1034
  %v1209 = vmul.f32 %v1035, %v1035
  %v1210 = vmul.f32 %v1036, %v1036
  %v1211 = vmul.f32 %v1037, %v1037
  %v1212 = vmul.f32 %v1038, %v1038
  %v1213 = vmul.f32 %v1039, %v1039
  %v1214 = vmul.f32 %v1040, %v1040
  %v1215 = vmul.f32 %v1041, %v1041
  %v1216 = vmul.f32 %v1042, %v1042
  %v1217 = vmul.f32 %v1043, %v1043
  %v1218 = vmul.f32 %v1044, %v1044
  %v1219 = vmul.f32 %v1045, %v1045
  %v1220 = vmul.f32 %v1046, %v1046
  %v1221 = vmul.f32 %v1047, %v1047
  %v1222 = vmul.f32 %v1048, %v1048
  %v1223 = vmul.f32 %v1049, %v1049
  %v1224 = vmul.f32 %v1050, %v1050
  %v1225 = vmul.f32 %v1051, %v1051
  %v1226 = vmul.f32 %v1052, %v1052
  %v1227 = vmul.f32 %v1053, %v1053
  %v1228 = vmul.f32 %v1054, %v1054
  %v1229 = vmul.f32 %v1055, %v1055
  %v1230 = vmul.f32 %v1056, %v1056
  %v1231 = vmul.f32 %v1057, %v1057
  %v1232 = vmul.f32 %v1058, %v1058
  %v1233 = vmul.f32 %v1059, %v1059
  %v1234 = vmul.f32 %v1060, %v1060
  %v1235 = vmul.f32 %v1061, %v1061
  %v1236 = vmul.f32 %v1062, %v1062
  %v1237 = vmul.f32 %v1063, %v1063
  %v1238 = vmul.f32 %v1064, %v1064
  %v1239 = vmul.f32 %v1065, %v1065
  %v1240 = vmul.f32 %v1066, %v1066
  %v1241 = vmul.f32 %v1067, %v1067
  %v1242 = vmul.f32 %v1068, %v1068
  %v1243 = vsel %vm198, %v1069, 0.0
  %1244 = vadd.xlane.f32.xlu0 %v1243
  %v1245 = vpop.xlane.xlu0 %1244
  %v1246 = vsel %vm198, %v1070, 0.0
  %1247 = vadd.xlane.f32.xlu0 %v1246
  %v1248 = vpop.xlane.xlu0 %1247
  %v1249 = vsel %vm198, %v1071, 0.0
  %1250 = vadd.xlane.f32.xlu0 %v1249
  %v1251 = vpop.xlane.xlu0 %1250
  %v1252 = vsel %vm198, %v1072, 0.0
  %1253 = vadd.xlane.f32.xlu0 %v1252
  %v1254 = vpop.xlane.xlu0 %1253
  %v1255 = vsel %vm198, %v1073, 0.0
  %1256 = vadd.xlane.f32.xlu0 %v1255
  %v1257 = vpop.xlane.xlu0 %1256
  %v1258 = vsel %vm198, %v1074, 0.0
  %1259 = vadd.xlane.f32.xlu0 %v1258
  %v1260 = vpop.xlane.xlu0 %1259
  %v1261 = vsel %vm198, %v1075, 0.0
  %1262 = vadd.xlane.f32.xlu0 %v1261
  %v1263 = vpop.xlane.xlu0 %1262
  %v1264 = vsel %vm198, %v1076, 0.0
  %1265 = vadd.xlane.f32.xlu0 %v1264
  %v1266 = vpop.xlane.xlu0 %1265
  %v1267 = vsel %vm198, %v1077, 0.0
  %1268 = vadd.xlane.f32.xlu0 %v1267
  %v1269 = vpop.xlane.xlu0 %1268
  %v1270 = vsel %vm198, %v1078, 0.0
  %1271 = vadd.xlane.f32.xlu0 %v1270
  %v1272 = vpop.xlane.xlu0 %1271
  %v1273 = vsel %vm198, %v1079, 0.0
  %1274 = vadd.xlane.f32.xlu0 %v1273
  %v1275 = vpop.xlane.xlu0 %1274
  %v1276 = vsel %vm198, %v1080, 0.0
  %1277 = vadd.xlane.f32.xlu0 %v1276
  %v1278 = vpop.xlane.xlu0 %1277
  %v1279 = vsel %vm198, %v1081, 0.0
  %1280 = vadd.xlane.f32.xlu0 %v1279
  %v1281 = vpop.xlane.xlu0 %1280
  %v1282 = vsel %vm198, %v1082, 0.0
  %1283 = vadd.xlane.f32.xlu0 %v1282
  %v1284 = vpop.xlane.xlu0 %1283
  %v1285 = vsel %vm198, %v1083, 0.0
  %1286 = vadd.xlane.f32.xlu0 %v1285
  %v1287 = vpop.xlane.xlu0 %1286
  %v1288 = vsel %vm198, %v1084, 0.0
  %1289 = vadd.xlane.f32.xlu0 %v1288
  %v1290 = vpop.xlane.xlu0 %1289
  %v1291 = vsel %vm198, %v1085, 0.0
  %1292 = vadd.xlane.f32.xlu0 %v1291
  %v1293 = vpop.xlane.xlu0 %1292
  %v1294 = vsel %vm198, %v1086, 0.0
  %1295 = vadd.xlane.f32.xlu0 %v1294
  %v1296 = vpop.xlane.xlu0 %1295
  %v1297 = vsel %vm198, %v1087, 0.0
  %1298 = vadd.xlane.f32.xlu0 %v1297
  %v1299 = vpop.xlane.xlu0 %1298
  %v1300 = vsel %vm198, %v1088, 0.0
  %1301 = vadd.xlane.f32.xlu0 %v1300
  %v1302 = vpop.xlane.xlu0 %1301
  %v1303 = vsel %vm198, %v1089, 0.0
  %1304 = vadd.xlane.f32.xlu0 %v1303
  %v1305 = vpop.xlane.xlu0 %1304
  %v1306 = vsel %vm198, %v1090, 0.0
  %1307 = vadd.xlane.f32.xlu0 %v1306
  %v1308 = vpop.xlane.xlu0 %1307
  %v1309 = vsel %vm198, %v1091, 0.0
  %1310 = vadd.xlane.f32.xlu0 %v1309
  %v1311 = vpop.xlane.xlu0 %1310
  %v1312 = vsel %vm198, %v1092, 0.0
  %1313 = vadd.xlane.f32.xlu0 %v1312
  %v1314 = vpop.xlane.xlu0 %1313
  %v1315 = vsel %vm198, %v1093, 0.0
  %1316 = vadd.xlane.f32.xlu0 %v1315
  %v1317 = vpop.xlane.xlu0 %1316
  %v1318 = vsel %vm198, %v1094, 0.0
  %1319 = vadd.xlane.f32.xlu0 %v1318
  %v1320 = vpop.xlane.xlu0 %1319
  %v1321 = vsel %vm198, %v1095, 0.0
  %1322 = vadd.xlane.f32.xlu0 %v1321
  %v1323 = vpop.xlane.xlu0 %1322
  %v1324 = vsel %vm198, %v1096, 0.0
  %1325 = vadd.xlane.f32.xlu0 %v1324
  %v1326 = vpop.xlane.xlu0 %1325
  %v1327 = vsel %vm198, %v1097, 0.0
  %1328 = vadd.xlane.f32.xlu0 %v1327
  %v1329 = vpop.xlane.xlu0 %1328
  %v1330 = vsel %vm198, %v1098, 0.0
  %1331 = vadd.xlane.f32.xlu0 %v1330
  %v1332 = vpop.xlane.xlu0 %1331
  %v1333 = vsel %vm198, %v1099, 0.0
  %1334 = vadd.xlane.f32.xlu0 %v1333
  %v1335 = vpop.xlane.xlu0 %1334
  %v1336 = vsel %vm198, %v1100, 0.0
  %1337 = vadd.xlane.f32.xlu0 %v1336
  %v1338 = vpop.xlane.xlu0 %1337
  %v1339 = vsel %vm198, %v1101, 0.0
  %1340 = vadd.xlane.f32.xlu0 %v1339
  %v1341 = vpop.xlane.xlu0 %1340
  %v1342 = vsel %vm198, %v1102, 0.0
  %1343 = vadd.xlane.f32.xlu0 %v1342
  %v1344 = vpop.xlane.xlu0 %1343
  %v1345 = vsel %vm198, %v1103, 0.0
  %1346 = vadd.xlane.f32.xlu0 %v1345
  %v1347 = vpop.xlane.xlu0 %1346
  %v1348 = vsel %vm198, %v1104, 0.0
  %1349 = vadd.xlane.f32.xlu0 %v1348
  %v1350 = vpop.xlane.xlu0 %1349
  %v1351 = vsel %vm198, %v1105, 0.0
  %1352 = vadd.xlane.f32.xlu0 %v1351
  %v1353 = vpop.xlane.xlu0 %1352
  %v1354 = vsel %vm198, %v1106, 0.0
  %1355 = vadd.xlane.f32.xlu0 %v1354
  %v1356 = vpop.xlane.xlu0 %1355
  %v1357 = vsel %vm198, %v1107, 0.0
  %1358 = vadd.xlane.f32.xlu0 %v1357
  %v1359 = vpop.xlane.xlu0 %1358
  %v1360 = vsel %vm198, %v1108, 0.0
  %1361 = vadd.xlane.f32.xlu0 %v1360
  %v1362 = vpop.xlane.xlu0 %1361
  %v1363 = vsel %vm198, %v1109, 0.0
  %1364 = vadd.xlane.f32.xlu0 %v1363
  %v1365 = vpop.xlane.xlu0 %1364
  %v1366 = vsel %vm198, %v1110, 0.0
  %1367 = vadd.xlane.f32.xlu0 %v1366
  %v1368 = vpop.xlane.xlu0 %1367
  %v1369 = vsel %vm198, %v1111, 0.0
  %1370 = vadd.xlane.f32.xlu0 %v1369
  %v1371 = vpop.xlane.xlu0 %1370
  %v1372 = vsel %vm198, %v1112, 0.0
  %1373 = vadd.xlane.f32.xlu0 %v1372
  %v1374 = vpop.xlane.xlu0 %1373
  %v1375 = vsel %vm198, %v1113, 0.0
  %1376 = vadd.xlane.f32.xlu0 %v1375
  %v1377 = vpop.xlane.xlu0 %1376
  %v1378 = vsel %vm198, %v1114, 0.0
  %1379 = vadd.xlane.f32.xlu0 %v1378
  %v1380 = vpop.xlane.xlu0 %1379
  %v1381 = vsel %vm198, %v1115, 0.0
  %1382 = vadd.xlane.f32.xlu0 %v1381
  %v1383 = vpop.xlane.xlu0 %1382
  %v1384 = vsel %vm198, %v1116, 0.0
  %1385 = vadd.xlane.f32.xlu0 %v1384
  %v1386 = vpop.xlane.xlu0 %1385
  %v1387 = vsel %vm198, %v1117, 0.0
  %1388 = vadd.xlane.f32.xlu0 %v1387
  %v1389 = vpop.xlane.xlu0 %1388
  %v1390 = vsel %vm198, %v1118, 0.0
  %1391 = vadd.xlane.f32.xlu0 %v1390
  %v1392 = vpop.xlane.xlu0 %1391
  %v1393 = vsel %vm198, %v1119, 0.0
  %1394 = vadd.xlane.f32.xlu0 %v1393
  %v1395 = vpop.xlane.xlu0 %1394
  %v1396 = vsel %vm198, %v1120, 0.0
  %1397 = vadd.xlane.f32.xlu0 %v1396
  %v1398 = vpop.xlane.xlu0 %1397
  %v1399 = vsel %vm198, %v1121, 0.0
  %1400 = vadd.xlane.f32.xlu0 %v1399
  %v1401 = vpop.xlane.xlu0 %1400
  %v1402 = vsel %vm198, %v1122, 0.0
  %1403 = vadd.xlane.f32.xlu0 %v1402
  %v1404 = vpop.xlane.xlu0 %1403
  %v1405 = vsel %vm198, %v1123, 0.0
  %1406 = vadd.xlane.f32.xlu0 %v1405
  %v1407 = vpop.xlane.xlu0 %1406
  %v1408 = vsel %vm198, %v1124, 0.0
  %1409 = vadd.xlane.f32.xlu0 %v1408
  %v1410 = vpop.xlane.xlu0 %1409
  %v1411 = vsel %vm198, %v1125, 0.0
  %1412 = vadd.xlane.f32.xlu0 %v1411
  %v1413 = vpop.xlane.xlu0 %1412
  %v1414 = vsel %vm198, %v1126, 0.0
  %1415 = vadd.xlane.f32.xlu0 %v1414
  %v1416 = vpop.xlane.xlu0 %1415
  %v1417 = vsel %vm198, %v1127, 0.0
  %1418 = vadd.xlane.f32.xlu0 %v1417
  %v1419 = vpop.xlane.xlu0 %1418
  %v1420 = vsel %vm198, %v1128, 0.0
  %1421 = vadd.xlane.f32.xlu0 %v1420
  %v1422 = vpop.xlane.xlu0 %1421
  %v1423 = vsel %vm198, %v1129, 0.0
  %1424 = vadd.xlane.f32.xlu0 %v1423
  %v1425 = vpop.xlane.xlu0 %1424
  %v1426 = vsel %vm198, %v1130, 0.0
  %1427 = vadd.xlane.f32.xlu0 %v1426
  %v1428 = vpop.xlane.xlu0 %1427
  %v1429 = vsel %vm198, %v1131, 0.0
  %1430 = vadd.xlane.f32.xlu0 %v1429
  %v1431 = vpop.xlane.xlu0 %1430
  %v1432 = vsel %vm198, %v1132, 0.0
  %1433 = vadd.xlane.f32.xlu0 %v1432
  %v1434 = vpop.xlane.xlu0 %1433
  %v1435 = vsel %vm198, %v1133, 0.0
  %1436 = vadd.xlane.f32.xlu0 %v1435
  %v1437 = vpop.xlane.xlu0 %1436
  %v1438 = vsel %vm198, %v1134, 0.0
  %1439 = vadd.xlane.f32.xlu0 %v1438
  %v1440 = vpop.xlane.xlu0 %1439
  %v1441 = vsel %vm198, %v1135, 0.0
  %1442 = vadd.xlane.f32.xlu0 %v1441
  %v1443 = vpop.xlane.xlu0 %1442
  %v1444 = vsel %vm198, %v1136, 0.0
  %1445 = vadd.xlane.f32.xlu0 %v1444
  %v1446 = vpop.xlane.xlu0 %1445
  %v1447 = vsel %vm198, %v1137, 0.0
  %1448 = vadd.xlane.f32.xlu0 %v1447
  %v1449 = vpop.xlane.xlu0 %1448
  %v1450 = vsel %vm198, %v1138, 0.0
  %1451 = vadd.xlane.f32.xlu0 %v1450
  %v1452 = vpop.xlane.xlu0 %1451
  %v1453 = vsel %vm198, %v1139, 0.0
  %1454 = vadd.xlane.f32.xlu0 %v1453
  %v1455 = vpop.xlane.xlu0 %1454
  %v1456 = vsel %vm198, %v1140, 0.0
  %1457 = vadd.xlane.f32.xlu0 %v1456
  %v1458 = vpop.xlane.xlu0 %1457
  %v1459 = vsel %vm198, %v1141, 0.0
  %1460 = vadd.xlane.f32.xlu0 %v1459
  %v1461 = vpop.xlane.xlu0 %1460
  %v1462 = vsel %vm198, %v1142, 0.0
  %1463 = vadd.xlane.f32.xlu0 %v1462
  %v1464 = vpop.xlane.xlu0 %1463
  %v1465 = vsel %vm198, %v1143, 0.0
  %1466 = vadd.xlane.f32.xlu0 %v1465
  %v1467 = vpop.xlane.xlu0 %1466
  %v1468 = vsel %vm198, %v1144, 0.0
  %1469 = vadd.xlane.f32.xlu0 %v1468
  %v1470 = vpop.xlane.xlu0 %1469
  %v1471 = vsel %vm198, %v1145, 0.0
  %1472 = vadd.xlane.f32.xlu0 %v1471
  %v1473 = vpop.xlane.xlu0 %1472
  %v1474 = vsel %vm198, %v1146, 0.0
  %1475 = vadd.xlane.f32.xlu0 %v1474
  %v1476 = vpop.xlane.xlu0 %1475
  %v1477 = vsel %vm198, %v1147, 0.0
  %1478 = vadd.xlane.f32.xlu0 %v1477
  %v1479 = vpop.xlane.xlu0 %1478
  %v1480 = vsel %vm198, %v1148, 0.0
  %1481 = vadd.xlane.f32.xlu0 %v1480
  %v1482 = vpop.xlane.xlu0 %1481
  %v1483 = vsel %vm198, %v1149, 0.0
  %1484 = vadd.xlane.f32.xlu0 %v1483
  %v1485 = vpop.xlane.xlu0 %1484
  %v1486 = vsel %vm198, %v1150, 0.0
  %1487 = vadd.xlane.f32.xlu0 %v1486
  %v1488 = vpop.xlane.xlu0 %1487
  %v1489 = vsel %vm198, %v1151, 0.0
  %1490 = vadd.xlane.f32.xlu0 %v1489
  %v1491 = vpop.xlane.xlu0 %1490
  %v1492 = vsel %vm198, %v1152, 0.0
  %1493 = vadd.xlane.f32.xlu0 %v1492
  %v1494 = vpop.xlane.xlu0 %1493
  %v1495 = vsel %vm198, %v1153, 0.0
  %1496 = vadd.xlane.f32.xlu0 %v1495
  %v1497 = vpop.xlane.xlu0 %1496
  %v1498 = vsel %vm198, %v1154, 0.0
  %1499 = vadd.xlane.f32.xlu0 %v1498
  %v1500 = vpop.xlane.xlu0 %1499
  %v1501 = vsel %vm198, %v1155, 0.0
  %1502 = vadd.xlane.f32.xlu0 %v1501
  %v1503 = vpop.xlane.xlu0 %1502
  %v1504 = vsel %vm198, %v1156, 0.0
  %1505 = vadd.xlane.f32.xlu0 %v1504
  %v1506 = vpop.xlane.xlu0 %1505
  %v1507 = vsel %vm198, %v1157, 0.0
  %1508 = vadd.xlane.f32.xlu0 %v1507
  %v1509 = vpop.xlane.xlu0 %1508
  %v1510 = vsel %vm198, %v1158, 0.0
  %1511 = vadd.xlane.f32.xlu0 %v1510
  %v1512 = vpop.xlane.xlu0 %1511
  %v1513 = vsel %vm198, %v1159, 0.0
  %1514 = vadd.xlane.f32.xlu0 %v1513
  %v1515 = vpop.xlane.xlu0 %1514
  %v1516 = vsel %vm198, %v1160, 0.0
  %1517 = vadd.xlane.f32.xlu0 %v1516
  %v1518 = vpop.xlane.xlu0 %1517
  %v1519 = vsel %vm198, %v1161, 0.0
  %1520 = vadd.xlane.f32.xlu0 %v1519
  %v1521 = vpop.xlane.xlu0 %1520
  %v1522 = vsel %vm198, %v1162, 0.0
  %1523 = vadd.xlane.f32.xlu0 %v1522
  %v1524 = vpop.xlane.xlu0 %1523
  %v1525 = vsel %vm198, %v1163, 0.0
  %1526 = vadd.xlane.f32.xlu0 %v1525
  %v1527 = vpop.xlane.xlu0 %1526
  %v1528 = vsel %vm198, %v1164, 0.0
  %1529 = vadd.xlane.f32.xlu0 %v1528
  %v1530 = vpop.xlane.xlu0 %1529
  %v1531 = vsel %vm198, %v1165, 0.0
  %1532 = vadd.xlane.f32.xlu0 %v1531
  %v1533 = vpop.xlane.xlu0 %1532
  %v1534 = vsel %vm198, %v1166, 0.0
  %1535 = vadd.xlane.f32.xlu0 %v1534
  %v1536 = vpop.xlane.xlu0 %1535
  %v1537 = vsel %vm198, %v1167, 0.0
  %1538 = vadd.xlane.f32.xlu0 %v1537
  %v1539 = vpop.xlane.xlu0 %1538
  %v1540 = vsel %vm198, %v1168, 0.0
  %1541 = vadd.xlane.f32.xlu0 %v1540
  %v1542 = vpop.xlane.xlu0 %1541
  %v1543 = vsel %vm198, %v1169, 0.0
  %1544 = vadd.xlane.f32.xlu0 %v1543
  %v1545 = vpop.xlane.xlu0 %1544
  %v1546 = vsel %vm198, %v1170, 0.0
  %1547 = vadd.xlane.f32.xlu0 %v1546
  %v1548 = vpop.xlane.xlu0 %1547
  %v1549 = vsel %vm198, %v1171, 0.0
  %1550 = vadd.xlane.f32.xlu0 %v1549
  %v1551 = vpop.xlane.xlu0 %1550
  %v1552 = vsel %vm198, %v1172, 0.0
  %1553 = vadd.xlane.f32.xlu0 %v1552
  %v1554 = vpop.xlane.xlu0 %1553
  %v1555 = vsel %vm198, %v1173, 0.0
  %1556 = vadd.xlane.f32.xlu0 %v1555
  %v1557 = vpop.xlane.xlu0 %1556
  %v1558 = vsel %vm198, %v1174, 0.0
  %1559 = vadd.xlane.f32.xlu0 %v1558
  %v1560 = vpop.xlane.xlu0 %1559
  %v1561 = vsel %vm198, %v1175, 0.0
  %1562 = vadd.xlane.f32.xlu0 %v1561
  %v1563 = vpop.xlane.xlu0 %1562
  %v1564 = vsel %vm198, %v1176, 0.0
  %1565 = vadd.xlane.f32.xlu0 %v1564
  %v1566 = vpop.xlane.xlu0 %1565
  %v1567 = vsel %vm198, %v1177, 0.0
  %1568 = vadd.xlane.f32.xlu0 %v1567
  %v1569 = vpop.xlane.xlu0 %1568
  %v1570 = vsel %vm198, %v1178, 0.0
  %1571 = vadd.xlane.f32.xlu0 %v1570
  %v1572 = vpop.xlane.xlu0 %1571
  %v1573 = vsel %vm198, %v1179, 0.0
  %1574 = vadd.xlane.f32.xlu0 %v1573
  %v1575 = vpop.xlane.xlu0 %1574
  %v1576 = vsel %vm198, %v1180, 0.0
  %1577 = vadd.xlane.f32.xlu0 %v1576
  %v1578 = vpop.xlane.xlu0 %1577
  %v1579 = vsel %vm198, %v1181, 0.0
  %1580 = vadd.xlane.f32.xlu0 %v1579
  %v1581 = vpop.xlane.xlu0 %1580
  %v1582 = vsel %vm198, %v1182, 0.0
  %1583 = vadd.xlane.f32.xlu0 %v1582
  %v1584 = vpop.xlane.xlu0 %1583
  %v1585 = vsel %vm198, %v1183, 0.0
  %1586 = vadd.xlane.f32.xlu0 %v1585
  %v1587 = vpop.xlane.xlu0 %1586
  %v1588 = vsel %vm198, %v1184, 0.0
  %1589 = vadd.xlane.f32.xlu0 %v1588
  %v1590 = vpop.xlane.xlu0 %1589
  %v1591 = vsel %vm198, %v1185, 0.0
  %1592 = vadd.xlane.f32.xlu0 %v1591
  %v1593 = vpop.xlane.xlu0 %1592
  %v1594 = vsel %vm198, %v1186, 0.0
  %1595 = vadd.xlane.f32.xlu0 %v1594
  %v1596 = vpop.xlane.xlu0 %1595
  %v1597 = vsel %vm198, %v1187, 0.0
  %1598 = vadd.xlane.f32.xlu0 %v1597
  %v1599 = vpop.xlane.xlu0 %1598
  %v1600 = vsel %vm198, %v1188, 0.0
  %1601 = vadd.xlane.f32.xlu0 %v1600
  %v1602 = vpop.xlane.xlu0 %1601
  %v1603 = vsel %vm198, %v1189, 0.0
  %1604 = vadd.xlane.f32.xlu0 %v1603
  %v1605 = vpop.xlane.xlu0 %1604
  %v1606 = vsel %vm198, %v1190, 0.0
  %1607 = vadd.xlane.f32.xlu0 %v1606
  %v1608 = vpop.xlane.xlu0 %1607
  %v1609 = vsel %vm198, %v1191, 0.0
  %1610 = vadd.xlane.f32.xlu0 %v1609
  %v1611 = vpop.xlane.xlu0 %1610
  %v1612 = vsel %vm198, %v1192, 0.0
  %1613 = vadd.xlane.f32.xlu0 %v1612
  %v1614 = vpop.xlane.xlu0 %1613
  %v1615 = vsel %vm198, %v1193, 0.0
  %1616 = vadd.xlane.f32.xlu0 %v1615
  %v1617 = vpop.xlane.xlu0 %1616
  %v1618 = vsel %vm198, %v1194, 0.0
  %1619 = vadd.xlane.f32.xlu0 %v1618
  %v1620 = vpop.xlane.xlu0 %1619
  %v1621 = vsel %vm198, %v1195, 0.0
  %1622 = vadd.xlane.f32.xlu0 %v1621
  %v1623 = vpop.xlane.xlu0 %1622
  %v1624 = vsel %vm198, %v1196, 0.0
  %1625 = vadd.xlane.f32.xlu0 %v1624
  %v1626 = vpop.xlane.xlu0 %1625
  %v1627 = vsel %vm198, %v1197, 0.0
  %1628 = vadd.xlane.f32.xlu0 %v1627
  %v1629 = vpop.xlane.xlu0 %1628
  %v1630 = vsel %vm198, %v1198, 0.0
  %1631 = vadd.xlane.f32.xlu0 %v1630
  %v1632 = vpop.xlane.xlu0 %1631
  %v1633 = vsel %vm198, %v1199, 0.0
  %1634 = vadd.xlane.f32.xlu0 %v1633
  %v1635 = vpop.xlane.xlu0 %1634
  %v1636 = vsel %vm198, %v1200, 0.0
  %1637 = vadd.xlane.f32.xlu0 %v1636
  %v1638 = vpop.xlane.xlu0 %1637
  %v1639 = vsel %vm198, %v1201, 0.0
  %1640 = vadd.xlane.f32.xlu0 %v1639
  %v1641 = vpop.xlane.xlu0 %1640
  %v1642 = vsel %vm198, %v1202, 0.0
  %1643 = vadd.xlane.f32.xlu0 %v1642
  %v1644 = vpop.xlane.xlu0 %1643
  %v1645 = vsel %vm198, %v1203, 0.0
  %1646 = vadd.xlane.f32.xlu0 %v1645
  %v1647 = vpop.xlane.xlu0 %1646
  %v1648 = vsel %vm198, %v1204, 0.0
  %1649 = vadd.xlane.f32.xlu0 %v1648
  %v1650 = vpop.xlane.xlu0 %1649
  %v1651 = vsel %vm198, %v1205, 0.0
  %1652 = vadd.xlane.f32.xlu0 %v1651
  %v1653 = vpop.xlane.xlu0 %1652
  %v1654 = vsel %vm198, %v1206, 0.0
  %1655 = vadd.xlane.f32.xlu0 %v1654
  %v1656 = vpop.xlane.xlu0 %1655
  %v1657 = vsel %vm198, %v1207, 0.0
  %1658 = vadd.xlane.f32.xlu0 %v1657
  %v1659 = vpop.xlane.xlu0 %1658
  %v1660 = vsel %vm198, %v1208, 0.0
  %1661 = vadd.xlane.f32.xlu0 %v1660
  %v1662 = vpop.xlane.xlu0 %1661
  %v1663 = vsel %vm198, %v1209, 0.0
  %1664 = vadd.xlane.f32.xlu0 %v1663
  %v1665 = vpop.xlane.xlu0 %1664
  %v1666 = vsel %vm198, %v1210, 0.0
  %1667 = vadd.xlane.f32.xlu0 %v1666
  %v1668 = vpop.xlane.xlu0 %1667
  %v1669 = vsel %vm198, %v1211, 0.0
  %1670 = vadd.xlane.f32.xlu0 %v1669
  %v1671 = vpop.xlane.xlu0 %1670
  %v1672 = vsel %vm198, %v1212, 0.0
  %1673 = vadd.xlane.f32.xlu0 %v1672
  %v1674 = vpop.xlane.xlu0 %1673
  %v1675 = vsel %vm198, %v1213, 0.0
  %1676 = vadd.xlane.f32.xlu0 %v1675
  %v1677 = vpop.xlane.xlu0 %1676
  %v1678 = vsel %vm198, %v1214, 0.0
  %1679 = vadd.xlane.f32.xlu0 %v1678
  %v1680 = vpop.xlane.xlu0 %1679
  %v1681 = vsel %vm198, %v1215, 0.0
  %1682 = vadd.xlane.f32.xlu0 %v1681
  %v1683 = vpop.xlane.xlu0 %1682
  %v1684 = vsel %vm198, %v1216, 0.0
  %1685 = vadd.xlane.f32.xlu0 %v1684
  %v1686 = vpop.xlane.xlu0 %1685
  %v1687 = vsel %vm198, %v1217, 0.0
  %1688 = vadd.xlane.f32.xlu0 %v1687
  %v1689 = vpop.xlane.xlu0 %1688
  %v1690 = vsel %vm198, %v1218, 0.0
  %1691 = vadd.xlane.f32.xlu0 %v1690
  %v1692 = vpop.xlane.xlu0 %1691
  %v1693 = vsel %vm198, %v1219, 0.0
  %1694 = vadd.xlane.f32.xlu0 %v1693
  %v1695 = vpop.xlane.xlu0 %1694
  %v1696 = vsel %vm198, %v1220, 0.0
  %1697 = vadd.xlane.f32.xlu0 %v1696
  %v1698 = vpop.xlane.xlu0 %1697
  %v1699 = vsel %vm198, %v1221, 0.0
  %1700 = vadd.xlane.f32.xlu0 %v1699
  %v1701 = vpop.xlane.xlu0 %1700
  %v1702 = vsel %vm198, %v1222, 0.0
  %1703 = vadd.xlane.f32.xlu0 %v1702
  %v1704 = vpop.xlane.xlu0 %1703
  %v1705 = vsel %vm198, %v1223, 0.0
  %1706 = vadd.xlane.f32.xlu0 %v1705
  %v1707 = vpop.xlane.xlu0 %1706
  %v1708 = vsel %vm198, %v1224, 0.0
  %1709 = vadd.xlane.f32.xlu0 %v1708
  %v1710 = vpop.xlane.xlu0 %1709
  %v1711 = vsel %vm198, %v1225, 0.0
  %1712 = vadd.xlane.f32.xlu0 %v1711
  %v1713 = vpop.xlane.xlu0 %1712
  %v1714 = vsel %vm198, %v1226, 0.0
  %1715 = vadd.xlane.f32.xlu0 %v1714
  %v1716 = vpop.xlane.xlu0 %1715
  %v1717 = vsel %vm198, %v1227, 0.0
  %1718 = vadd.xlane.f32.xlu0 %v1717
  %v1719 = vpop.xlane.xlu0 %1718
  %v1720 = vsel %vm198, %v1228, 0.0
  %1721 = vadd.xlane.f32.xlu0 %v1720
  %v1722 = vpop.xlane.xlu0 %1721
  %v1723 = vsel %vm198, %v1229, 0.0
  %1724 = vadd.xlane.f32.xlu0 %v1723
  %v1725 = vpop.xlane.xlu0 %1724
  %v1726 = vsel %vm198, %v1230, 0.0
  %1727 = vadd.xlane.f32.xlu0 %v1726
  %v1728 = vpop.xlane.xlu0 %1727
  %v1729 = vsel %vm198, %v1231, 0.0
  %1730 = vadd.xlane.f32.xlu0 %v1729
  %v1731 = vpop.xlane.xlu0 %1730
  %v1732 = vsel %vm198, %v1232, 0.0
  %1733 = vadd.xlane.f32.xlu0 %v1732
  %v1734 = vpop.xlane.xlu0 %1733
  %v1735 = vsel %vm198, %v1233, 0.0
  %1736 = vadd.xlane.f32.xlu0 %v1735
  %v1737 = vpop.xlane.xlu0 %1736
  %v1738 = vsel %vm198, %v1234, 0.0
  %1739 = vadd.xlane.f32.xlu0 %v1738
  %v1740 = vpop.xlane.xlu0 %1739
  %v1741 = vsel %vm198, %v1235, 0.0
  %1742 = vadd.xlane.f32.xlu0 %v1741
  %v1743 = vpop.xlane.xlu0 %1742
  %v1744 = vsel %vm198, %v1236, 0.0
  %1745 = vadd.xlane.f32.xlu0 %v1744
  %v1746 = vpop.xlane.xlu0 %1745
  %v1747 = vsel %vm198, %v1237, 0.0
  %1748 = vadd.xlane.f32.xlu0 %v1747
  %v1749 = vpop.xlane.xlu0 %1748
  %v1750 = vsel %vm198, %v1238, 0.0
  %1751 = vadd.xlane.f32.xlu0 %v1750
  %v1752 = vpop.xlane.xlu0 %1751
  %v1753 = vsel %vm198, %v1239, 0.0
  %1754 = vadd.xlane.f32.xlu0 %v1753
  %v1755 = vpop.xlane.xlu0 %1754
  %v1756 = vsel %vm198, %v1240, 0.0
  %1757 = vadd.xlane.f32.xlu0 %v1756
  %v1758 = vpop.xlane.xlu0 %1757
  %v1759 = vsel %vm198, %v1241, 0.0
  %1760 = vadd.xlane.f32.xlu0 %v1759
  %v1761 = vpop.xlane.xlu0 %1760
  %v1762 = vsel %vm198, %v1242, 0.0
  %1763 = vadd.xlane.f32.xlu0 %v1762
  %v1764 = vpop.xlane.xlu0 %1763
  %v1765 = vmul.f32 %v1245, 0.020408163
  %v1766 = vmul.f32 %v1248, 0.020408163
  %v1767 = vmul.f32 %v1251, 0.020408163
  %v1768 = vmul.f32 %v1254, 0.020408163
  %v1769 = vmul.f32 %v1257, 0.020408163
  %v1770 = vmul.f32 %v1260, 0.020408163
  %v1771 = vmul.f32 %v1263, 0.020408163
  %v1772 = vmul.f32 %v1266, 0.020408163
  %v1773 = vmul.f32 %v1269, 0.020408163
  %v1774 = vmul.f32 %v1272, 0.020408163
  %v1775 = vmul.f32 %v1275, 0.020408163
  %v1776 = vmul.f32 %v1278, 0.020408163
  %v1777 = vmul.f32 %v1281, 0.020408163
  %v1778 = vmul.f32 %v1284, 0.020408163
  %v1779 = vmul.f32 %v1287, 0.020408163
  %v1780 = vmul.f32 %v1290, 0.020408163
  %v1781 = vmul.f32 %v1293, 0.020408163
  %v1782 = vmul.f32 %v1296, 0.020408163
  %v1783 = vmul.f32 %v1299, 0.020408163
  %v1784 = vmul.f32 %v1302, 0.020408163
  %v1785 = vmul.f32 %v1305, 0.020408163
  %v1786 = vmul.f32 %v1308, 0.020408163
  %v1787 = vmul.f32 %v1311, 0.020408163
  %v1788 = vmul.f32 %v1314, 0.020408163
  %v1789 = vmul.f32 %v1317, 0.020408163
  %v1790 = vmul.f32 %v1320, 0.020408163
  %v1791 = vmul.f32 %v1323, 0.020408163
  %v1792 = vmul.f32 %v1326, 0.020408163
  %v1793 = vmul.f32 %v1329, 0.020408163
  %v1794 = vmul.f32 %v1332, 0.020408163
  %v1795 = vmul.f32 %v1335, 0.020408163
  %v1796 = vmul.f32 %v1338, 0.020408163
  %v1797 = vmul.f32 %v1341, 0.020408163
  %v1798 = vmul.f32 %v1344, 0.020408163
  %v1799 = vmul.f32 %v1347, 0.020408163
  %v1800 = vmul.f32 %v1350, 0.020408163
  %v1801 = vmul.f32 %v1353, 0.020408163
  %v1802 = vmul.f32 %v1356, 0.020408163
  %v1803 = vmul.f32 %v1359, 0.020408163
  %v1804 = vmul.f32 %v1362, 0.020408163
  %v1805 = vmul.f32 %v1365, 0.020408163
  %v1806 = vmul.f32 %v1368, 0.020408163
  %v1807 = vmul.f32 %v1371, 0.020408163
  %v1808 = vmul.f32 %v1374, 0.020408163
  %v1809 = vmul.f32 %v1377, 0.020408163
  %v1810 = vmul.f32 %v1380, 0.020408163
  %v1811 = vmul.f32 %v1383, 0.020408163
  %v1812 = vmul.f32 %v1386, 0.020408163
  %v1813 = vmul.f32 %v1389, 0.020408163
  %v1814 = vmul.f32 %v1392, 0.020408163
  %v1815 = vmul.f32 %v1395, 0.020408163
  %v1816 = vmul.f32 %v1398, 0.020408163
  %v1817 = vmul.f32 %v1401, 0.020408163
  %v1818 = vmul.f32 %v1404, 0.020408163
  %v1819 = vmul.f32 %v1407, 0.020408163
  %v1820 = vmul.f32 %v1410, 0.020408163
  %v1821 = vmul.f32 %v1413, 0.020408163
  %v1822 = vmul.f32 %v1416, 0.020408163
  %v1823 = vmul.f32 %v1419, 0.020408163
  %v1824 = vmul.f32 %v1422, 0.020408163
  %v1825 = vmul.f32 %v1425, 0.020408163
  %v1826 = vmul.f32 %v1428, 0.020408163
  %v1827 = vmul.f32 %v1431, 0.020408163
  %v1828 = vmul.f32 %v1434, 0.020408163
  %v1829 = vmul.f32 %v1437, 0.020408163
  %v1830 = vmul.f32 %v1440, 0.020408163
  %v1831 = vmul.f32 %v1443, 0.020408163
  %v1832 = vmul.f32 %v1446, 0.020408163
  %v1833 = vmul.f32 %v1449, 0.020408163
  %v1834 = vmul.f32 %v1452, 0.020408163
  %v1835 = vmul.f32 %v1455, 0.020408163
  %v1836 = vmul.f32 %v1458, 0.020408163
  %v1837 = vmul.f32 %v1461, 0.020408163
  %v1838 = vmul.f32 %v1464, 0.020408163
  %v1839 = vmul.f32 %v1467, 0.020408163
  %v1840 = vmul.f32 %v1470, 0.020408163
  %v1841 = vmul.f32 %v1473, 0.020408163
  %v1842 = vmul.f32 %v1476, 0.020408163
  %v1843 = vmul.f32 %v1479, 0.020408163
  %v1844 = vmul.f32 %v1482, 0.020408163
  %v1845 = vmul.f32 %v1485, 0.020408163
  %v1846 = vmul.f32 %v1488, 0.020408163
  %v1847 = vmul.f32 %v1491, 0.020408163
  %v1848 = vmul.f32 %v1494, 0.020408163
  %v1849 = vmul.f32 %v1497, 0.020408163
  %v1850 = vmul.f32 %v1500, 0.020408163
  %v1851 = vmul.f32 %v1503, 0.020408163
  %v1852 = vmul.f32 %v1506, 0.020408163
  %v1853 = vmul.f32 %v1509, 0.020408163
  %v1854 = vmul.f32 %v1512, 0.020408163
  %v1855 = vmul.f32 %v1515, 0.020408163
  %v1856 = vmul.f32 %v1518, 0.020408163
  %v1857 = vmul.f32 %v1521, 0.020408163
  %v1858 = vmul.f32 %v1524, 0.020408163
  %v1859 = vmul.f32 %v1527, 0.020408163
  %v1860 = vmul.f32 %v1530, 0.020408163
  %v1861 = vmul.f32 %v1533, 0.020408163
  %v1862 = vmul.f32 %v1536, 0.020408163
  %v1863 = vmul.f32 %v1539, 0.020408163
  %v1864 = vmul.f32 %v1542, 0.020408163
  %v1865 = vmul.f32 %v1545, 0.020408163
  %v1866 = vmul.f32 %v1548, 0.020408163
  %v1867 = vmul.f32 %v1551, 0.020408163
  %v1868 = vmul.f32 %v1554, 0.020408163
  %v1869 = vmul.f32 %v1557, 0.020408163
  %v1870 = vmul.f32 %v1560, 0.020408163
  %v1871 = vmul.f32 %v1563, 0.020408163
  %v1872 = vmul.f32 %v1566, 0.020408163
  %v1873 = vmul.f32 %v1569, 0.020408163
  %v1874 = vmul.f32 %v1572, 0.020408163
  %v1875 = vmul.f32 %v1575, 0.020408163
  %v1876 = vmul.f32 %v1578, 0.020408163
  %v1877 = vmul.f32 %v1581, 0.020408163
  %v1878 = vmul.f32 %v1584, 0.020408163
  %v1879 = vmul.f32 %v1587, 0.020408163
  %v1880 = vmul.f32 %v1590, 0.020408163
  %v1881 = vmul.f32 %v1593, 0.020408163
  %v1882 = vmul.f32 %v1596, 0.020408163
  %v1883 = vmul.f32 %v1599, 0.020408163
  %v1884 = vmul.f32 %v1602, 0.020408163
  %v1885 = vmul.f32 %v1605, 0.020408163
  %v1886 = vmul.f32 %v1608, 0.020408163
  %v1887 = vmul.f32 %v1611, 0.020408163
  %v1888 = vmul.f32 %v1614, 0.020408163
  %v1889 = vmul.f32 %v1617, 0.020408163
  %v1890 = vmul.f32 %v1620, 0.020408163
  %v1891 = vmul.f32 %v1623, 0.020408163
  %v1892 = vmul.f32 %v1626, 0.020408163
  %v1893 = vmul.f32 %v1629, 0.020408163
  %v1894 = vmul.f32 %v1632, 0.020408163
  %v1895 = vmul.f32 %v1635, 0.020408163
  %v1896 = vmul.f32 %v1638, 0.020408163
  %v1897 = vmul.f32 %v1641, 0.020408163
  %v1898 = vmul.f32 %v1644, 0.020408163
  %v1899 = vmul.f32 %v1647, 0.020408163
  %v1900 = vmul.f32 %v1650, 0.020408163
  %v1901 = vmul.f32 %v1653, 0.020408163
  %v1902 = vmul.f32 %v1656, 0.020408163
  %v1903 = vmul.f32 %v1659, 0.020408163
  %v1904 = vmul.f32 %v1662, 0.020408163
  %v1905 = vmul.f32 %v1665, 0.020408163
  %v1906 = vmul.f32 %v1668, 0.020408163
  %v1907 = vmul.f32 %v1671, 0.020408163
  %v1908 = vmul.f32 %v1674, 0.020408163
  %v1909 = vmul.f32 %v1677, 0.020408163
  %v1910 = vmul.f32 %v1680, 0.020408163
  %v1911 = vmul.f32 %v1683, 0.020408163
  %v1912 = vmul.f32 %v1686, 0.020408163
  %v1913 = vmul.f32 %v1689, 0.020408163
  %v1914 = vmul.f32 %v1692, 0.020408163
  %v1915 = vmul.f32 %v1695, 0.020408163
  %v1916 = vmul.f32 %v1698, 0.020408163
  %v1917 = vmul.f32 %v1701, 0.020408163
  %v1918 = vmul.f32 %v1704, 0.020408163
  %v1919 = vmul.f32 %v1707, 0.020408163
  %v1920 = vmul.f32 %v1710, 0.020408163
  %v1921 = vmul.f32 %v1713, 0.020408163
  %v1922 = vmul.f32 %v1716, 0.020408163
  %v1923 = vmul.f32 %v1719, 0.020408163
  %v1924 = vmul.f32 %v1722, 0.020408163
  %v1925 = vmul.f32 %v1725, 0.020408163
  %v1926 = vmul.f32 %v1728, 0.020408163
  %v1927 = vmul.f32 %v1731, 0.020408163
  %v1928 = vmul.f32 %v1734, 0.020408163
  %v1929 = vmul.f32 %v1737, 0.020408163
  %v1930 = vmul.f32 %v1740, 0.020408163
  %v1931 = vmul.f32 %v1743, 0.020408163
  %v1932 = vmul.f32 %v1746, 0.020408163
  %v1933 = vmul.f32 %v1749, 0.020408163
  %v1934 = vmul.f32 %v1752, 0.020408163
  %v1935 = vmul.f32 %v1755, 0.020408163
  %v1936 = vmul.f32 %v1758, 0.020408163
  %v1937 = vmul.f32 %v1761, 0.020408163
  %v1938 = vmul.f32 %v1764, 0.020408163
  %v1939 = vld [vmem:[%s2] sm:$0xff]
  %v1940 = vld [vmem:[%s2 + $0x8] sm:$0xff]
  %v1941 = vld [vmem:[%s2 + $0x10] sm:$0xff]
  %v1942 = vld [vmem:[%s2 + $0x18] sm:$0xff]
  %v1943 = vld [vmem:[%s2 + $0x20] sm:$0xff]
  %v1944 = vld [vmem:[%s2 + $0x28] sm:$0xff]
  %v1945 = vld [vmem:[%s2 + $0x30] sm:$0xff]
  %v1946 = vld [vmem:[%s2 + $0x38] sm:$0xff]
  %v1947 = vld [vmem:[%s2 + $0x40] sm:$0xff]
  %v1948 = vld [vmem:[%s2 + $0x48] sm:$0xff]
  %v1949 = vld [vmem:[%s2 + $0x50] sm:$0xff]
  %v1950 = vld [vmem:[%s2 + $0x58] sm:$0xff]
  %v1951 = vld [vmem:[%s2 + $0x60] sm:$0xff]
  %v1952 = vld [vmem:[%s2 + $0x68] sm:$0xff]
  %v1953 = vld [vmem:[%s2 + $0x70] sm:$0xff]
  %v1954 = vld [vmem:[%s2 + $0x78] sm:$0xff]
  %v1955 = vld [vmem:[%s2 + $0x80] sm:$0xff]
  %v1956 = vld [vmem:[%s2 + $0x88] sm:$0xff]
  %v1957 = vld [vmem:[%s2 + $0x90] sm:$0xff]
  %v1958 = vld [vmem:[%s2 + $0x98] sm:$0xff]
  %v1959 = vld [vmem:[%s2 + $0xa0] sm:$0xff]
  %v1960 = vld [vmem:[%s2 + $0xa8] sm:$0xff]
  %v1961 = vld [vmem:[%s2 + $0xb0] sm:$0xff]
  %v1962 = vld [vmem:[%s2 + $0xb8] sm:$0xff]
  %v1963 = vld [vmem:[%s2 + $0xc0] sm:$0xff]
  %v1964 = vld [vmem:[%s2 + $0xc8] sm:$0xff]
  %v1965 = vld [vmem:[%s2 + $0xd0] sm:$0xff]
  %v1966 = vld [vmem:[%s2 + $0xd8] sm:$0xff]
  %v1967 = vld [vmem:[%s2 + $0xe0] sm:$0xff]
  %v1968 = vld [vmem:[%s2 + $0xe8] sm:$0xff]
  %v1969 = vld [vmem:[%s2 + $0xf0] sm:$0xff]
  %v1970 = vld [vmem:[%s2 + $0xf8] sm:$0xff]
  %v1971 = vld [vmem:[%s2 + $0x100] sm:$0xff]
  %v1972 = vld [vmem:[%s2 + $0x108] sm:$0xff]
  %v1973 = vld [vmem:[%s2 + $0x110] sm:$0xff]
  %v1974 = vld [vmem:[%s2 + $0x118] sm:$0xff]
  %v1975 = vld [vmem:[%s2 + $0x120] sm:$0xff]
  %v1976 = vld [vmem:[%s2 + $0x128] sm:$0xff]
  %v1977 = vld [vmem:[%s2 + $0x130] sm:$0xff]
  %v1978 = vld [vmem:[%s2 + $0x138] sm:$0xff]
  %v1979 = vld [vmem:[%s2 + $0x140] sm:$0xff]
  %v1980 = vld [vmem:[%s2 + $0x148] sm:$0xff]
  %v1981 = vld [vmem:[%s2 + $0x150] sm:$0xff]
  %v1982 = vld [vmem:[%s2 + $0x158] sm:$0xff]
  %v1983 = vld [vmem:[%s2 + $0x160] sm:$0xff]
  %v1984 = vld [vmem:[%s2 + $0x168] sm:$0xff]
  %v1985 = vld [vmem:[%s2 + $0x170] sm:$0xff]
  %v1986 = vld [vmem:[%s2 + $0x178] sm:$0xff]
  %v1987 = vld [vmem:[%s2 + $0x180] sm:$0xff]
  %v1988 = vld [vmem:[%s2 + $0x188] sm:$0xff]
  %v1989 = vld [vmem:[%s2 + $0x190] sm:$0xff]
  %v1990 = vld [vmem:[%s2 + $0x198] sm:$0xff]
  %v1991 = vld [vmem:[%s2 + $0x1a0] sm:$0xff]
  %v1992 = vld [vmem:[%s2 + $0x1a8] sm:$0xff]
  %v1993 = vld [vmem:[%s2 + $0x1b0] sm:$0xff]
  %v1994 = vld [vmem:[%s2 + $0x1b8] sm:$0xff]
  %v1995 = vld [vmem:[%s2 + $0x1c0] sm:$0xff]
  %v1996 = vld [vmem:[%s2 + $0x1c8] sm:$0xff]
  %v1997 = vld [vmem:[%s2 + $0x1d0] sm:$0xff]
  %v1998 = vld [vmem:[%s2 + $0x1d8] sm:$0xff]
  %v1999 = vld [vmem:[%s2 + $0x1e0] sm:$0xff]
  %v2000 = vld [vmem:[%s2 + $0x1e8] sm:$0xff]
  %v2001 = vld [vmem:[%s2 + $0x1f0] sm:$0xff]
  %v2002 = vld [vmem:[%s2 + $0x1f8] sm:$0xff]
  %v2003 = vld [vmem:[%s2 + $0x200] sm:$0xff]
  %v2004 = vld [vmem:[%s2 + $0x208] sm:$0xff]
  %v2005 = vld [vmem:[%s2 + $0x210] sm:$0xff]
  %v2006 = vld [vmem:[%s2 + $0x218] sm:$0xff]
  %v2007 = vld [vmem:[%s2 + $0x220] sm:$0xff]
  %v2008 = vld [vmem:[%s2 + $0x228] sm:$0xff]
  %v2009 = vld [vmem:[%s2 + $0x230] sm:$0xff]
  %v2010 = vld [vmem:[%s2 + $0x238] sm:$0xff]
  %v2011 = vld [vmem:[%s2 + $0x240] sm:$0xff]
  %v2012 = vld [vmem:[%s2 + $0x248] sm:$0xff]
  %v2013 = vld [vmem:[%s2 + $0x250] sm:$0xff]
  %v2014 = vld [vmem:[%s2 + $0x258] sm:$0xff]
  %v2015 = vld [vmem:[%s2 + $0x260] sm:$0xff]
  %v2016 = vld [vmem:[%s2 + $0x268] sm:$0xff]
  %v2017 = vld [vmem:[%s2 + $0x270] sm:$0xff]
  %v2018 = vld [vmem:[%s2 + $0x278] sm:$0xff]
  %v2019 = vld [vmem:[%s2 + $0x280] sm:$0xff]
  %v2020 = vld [vmem:[%s2 + $0x288] sm:$0xff]
  %v2021 = vld [vmem:[%s2 + $0x290] sm:$0xff]
  %v2022 = vld [vmem:[%s2 + $0x298] sm:$0xff]
  %v2023 = vld [vmem:[%s2 + $0x2a0] sm:$0xff]
  %v2024 = vld [vmem:[%s2 + $0x2a8] sm:$0xff]
  %v2025 = vld [vmem:[%s2 + $0x2b0] sm:$0xff]
  %v2026 = vld [vmem:[%s2 + $0x2b8] sm:$0xff]
  %v2027 = vld [vmem:[%s2 + $0x2c0] sm:$0xff]
  %v2028 = vld [vmem:[%s2 + $0x2c8] sm:$0xff]
  %v2029 = vld [vmem:[%s2 + $0x2d0] sm:$0xff]
  %v2030 = vld [vmem:[%s2 + $0x2d8] sm:$0xff]
  %v2031 = vld [vmem:[%s2 + $0x2e0] sm:$0xff]
  %v2032 = vld [vmem:[%s2 + $0x2e8] sm:$0xff]
  %v2033 = vld [vmem:[%s2 + $0x2f0] sm:$0xff]
  %v2034 = vld [vmem:[%s2 + $0x2f8] sm:$0xff]
  %v2035 = vld [vmem:[%s2 + $0x300] sm:$0xff]
  %v2036 = vld [vmem:[%s2 + $0x308] sm:$0xff]
  %v2037 = vld [vmem:[%s2 + $0x310] sm:$0xff]
  %v2038 = vld [vmem:[%s2 + $0x318] sm:$0xff]
  %v2039 = vld [vmem:[%s2 + $0x320] sm:$0xff]
  %v2040 = vld [vmem:[%s2 + $0x328] sm:$0xff]
  %v2041 = vld [vmem:[%s2 + $0x330] sm:$0xff]
  %v2042 = vld [vmem:[%s2 + $0x338] sm:$0xff]
  %v2043 = vld [vmem:[%s2 + $0x340] sm:$0xff]
  %v2044 = vld [vmem:[%s2 + $0x348] sm:$0xff]
  %v2045 = vld [vmem:[%s2 + $0x350] sm:$0xff]
  %v2046 = vld [vmem:[%s2 + $0x358] sm:$0xff]
  %v2047 = vld [vmem:[%s2 + $0x360] sm:$0xff]
  %v2048 = vld [vmem:[%s2 + $0x368] sm:$0xff]
  %v2049 = vld [vmem:[%s2 + $0x370] sm:$0xff]
  %v2050 = vld [vmem:[%s2 + $0x378] sm:$0xff]
  %v2051 = vld [vmem:[%s2 + $0x380] sm:$0xff]
  %v2052 = vld [vmem:[%s2 + $0x388] sm:$0xff]
  %v2053 = vld [vmem:[%s2 + $0x390] sm:$0xff]
  %v2054 = vld [vmem:[%s2 + $0x398] sm:$0xff]
  %v2055 = vld [vmem:[%s2 + $0x3a0] sm:$0xff]
  %v2056 = vld [vmem:[%s2 + $0x3a8] sm:$0xff]
  %v2057 = vld [vmem:[%s2 + $0x3b0] sm:$0xff]
  %v2058 = vld [vmem:[%s2 + $0x3b8] sm:$0xff]
  %v2059 = vld [vmem:[%s2 + $0x3c0] sm:$0xff]
  %v2060 = vld [vmem:[%s2 + $0x3c8] sm:$0xff]
  %v2061 = vld [vmem:[%s2 + $0x3d0] sm:$0xff]
  %v2062 = vld [vmem:[%s2 + $0x3d8] sm:$0xff]
  %v2063 = vld [vmem:[%s2 + $0x3e0] sm:$0xff]
  %v2064 = vld [vmem:[%s2 + $0x3e8] sm:$0xff]
  %v2065 = vld [vmem:[%s2 + $0x3f0] sm:$0xff]
  %v2066 = vld [vmem:[%s2 + $0x3f8] sm:$0xff]
  %v2067 = vld [vmem:[%s2 + $0x400] sm:$0xff]
  %v2068 = vld [vmem:[%s2 + $0x408] sm:$0xff]
  %v2069 = vld [vmem:[%s2 + $0x410] sm:$0xff]
  %v2070 = vld [vmem:[%s2 + $0x418] sm:$0xff]
  %v2071 = vld [vmem:[%s2 + $0x420] sm:$0xff]
  %v2072 = vld [vmem:[%s2 + $0x428] sm:$0xff]
  %v2073 = vld [vmem:[%s2 + $0x430] sm:$0xff]
  %v2074 = vld [vmem:[%s2 + $0x438] sm:$0xff]
  %v2075 = vld [vmem:[%s2 + $0x440] sm:$0xff]
  %v2076 = vld [vmem:[%s2 + $0x448] sm:$0xff]
  %v2077 = vld [vmem:[%s2 + $0x450] sm:$0xff]
  %v2078 = vld [vmem:[%s2 + $0x458] sm:$0xff]
  %v2079 = vld [vmem:[%s2 + $0x460] sm:$0xff]
  %v2080 = vld [vmem:[%s2 + $0x468] sm:$0xff]
  %v2081 = vld [vmem:[%s2 + $0x470] sm:$0xff]
  %v2082 = vld [vmem:[%s2 + $0x478] sm:$0xff]
  %v2083 = vld [vmem:[%s2 + $0x480] sm:$0xff]
  %v2084 = vld [vmem:[%s2 + $0x488] sm:$0xff]
  %v2085 = vld [vmem:[%s2 + $0x490] sm:$0xff]
  %v2086 = vld [vmem:[%s2 + $0x498] sm:$0xff]
  %v2087 = vld [vmem:[%s2 + $0x4a0] sm:$0xff]
  %v2088 = vld [vmem:[%s2 + $0x4a8] sm:$0xff]
  %v2089 = vld [vmem:[%s2 + $0x4b0] sm:$0xff]
  %v2090 = vld [vmem:[%s2 + $0x4b8] sm:$0xff]
  %v2091 = vld [vmem:[%s2 + $0x4c0] sm:$0xff]
  %v2092 = vld [vmem:[%s2 + $0x4c8] sm:$0xff]
  %v2093 = vld [vmem:[%s2 + $0x4d0] sm:$0xff]
  %v2094 = vld [vmem:[%s2 + $0x4d8] sm:$0xff]
  %v2095 = vld [vmem:[%s2 + $0x4e0] sm:$0xff]
  %v2096 = vld [vmem:[%s2 + $0x4e8] sm:$0xff]
  %v2097 = vld [vmem:[%s2 + $0x4f0] sm:$0xff]
  %v2098 = vld [vmem:[%s2 + $0x4f8] sm:$0xff]
  %v2099 = vld [vmem:[%s2 + $0x500] sm:$0xff]
  %v2100 = vld [vmem:[%s2 + $0x508] sm:$0xff]
  %v2101 = vld [vmem:[%s2 + $0x510] sm:$0xff]
  %v2102 = vld [vmem:[%s2 + $0x518] sm:$0xff]
  %v2103 = vld [vmem:[%s2 + $0x520] sm:$0xff]
  %v2104 = vld [vmem:[%s2 + $0x528] sm:$0xff]
  %v2105 = vld [vmem:[%s2 + $0x530] sm:$0xff]
  %v2106 = vld [vmem:[%s2 + $0x538] sm:$0xff]
  %v2107 = vld [vmem:[%s2 + $0x540] sm:$0xff]
  %v2108 = vld [vmem:[%s2 + $0x548] sm:$0xff]
  %v2109 = vld [vmem:[%s2 + $0x550] sm:$0xff]
  %v2110 = vld [vmem:[%s2 + $0x558] sm:$0xff]
  %v2111 = vld [vmem:[%s2 + $0x560] sm:$0xff]
  %v2112 = vld [vmem:[%s2 + $0x568] sm:$0xff]
  %v2113 = vadd.f32 %v1765, 1e-05
  %v2114 = vadd.f32 %v1766, 1e-05
  %v2115 = vadd.f32 %v1767, 1e-05
  %v2116 = vadd.f32 %v1768, 1e-05
  %v2117 = vadd.f32 %v1769, 1e-05
  %v2118 = vadd.f32 %v1770, 1e-05
  %v2119 = vadd.f32 %v1771, 1e-05
  %v2120 = vadd.f32 %v1772, 1e-05
  %v2121 = vadd.f32 %v1773, 1e-05
  %v2122 = vadd.f32 %v1774, 1e-05
  %v2123 = vadd.f32 %v1775, 1e-05
  %v2124 = vadd.f32 %v1776, 1e-05
  %v2125 = vadd.f32 %v1777, 1e-05
  %v2126 = vadd.f32 %v1778, 1e-05
  %v2127 = vadd.f32 %v1779, 1e-05
  %v2128 = vadd.f32 %v1780, 1e-05
  %v2129 = vadd.f32 %v1781, 1e-05
  %v2130 = vadd.f32 %v1782, 1e-05
  %v2131 = vadd.f32 %v1783, 1e-05
  %v2132 = vadd.f32 %v1784, 1e-05
  %v2133 = vadd.f32 %v1785, 1e-05
  %v2134 = vadd.f32 %v1786, 1e-05
  %v2135 = vadd.f32 %v1787, 1e-05
  %v2136 = vadd.f32 %v1788, 1e-05
  %v2137 = vadd.f32 %v1789, 1e-05
  %v2138 = vadd.f32 %v1790, 1e-05
  %v2139 = vadd.f32 %v1791, 1e-05
  %v2140 = vadd.f32 %v1792, 1e-05
  %v2141 = vadd.f32 %v1793, 1e-05
  %v2142 = vadd.f32 %v1794, 1e-05
  %v2143 = vadd.f32 %v1795, 1e-05
  %v2144 = vadd.f32 %v1796, 1e-05
  %v2145 = vadd.f32 %v1797, 1e-05
  %v2146 = vadd.f32 %v1798, 1e-05
  %v2147 = vadd.f32 %v1799, 1e-05
  %v2148 = vadd.f32 %v1800, 1e-05
  %v2149 = vadd.f32 %v1801, 1e-05
  %v2150 = vadd.f32 %v1802, 1e-05
  %v2151 = vadd.f32 %v1803, 1e-05
  %v2152 = vadd.f32 %v1804, 1e-05
  %v2153 = vadd.f32 %v1805, 1e-05
  %v2154 = vadd.f32 %v1806, 1e-05
  %v2155 = vadd.f32 %v1807, 1e-05
  %v2156 = vadd.f32 %v1808, 1e-05
  %v2157 = vadd.f32 %v1809, 1e-05
  %v2158 = vadd.f32 %v1810, 1e-05
  %v2159 = vadd.f32 %v1811, 1e-05
  %v2160 = vadd.f32 %v1812, 1e-05
  %v2161 = vadd.f32 %v1813, 1e-05
  %v2162 = vadd.f32 %v1814, 1e-05
  %v2163 = vadd.f32 %v1815, 1e-05
  %v2164 = vadd.f32 %v1816, 1e-05
  %v2165 = vadd.f32 %v1817, 1e-05
  %v2166 = vadd.f32 %v1818, 1e-05
  %v2167 = vadd.f32 %v1819, 1e-05
  %v2168 = vadd.f32 %v1820, 1e-05
  %v2169 = vadd.f32 %v1821, 1e-05
  %v2170 = vadd.f32 %v1822, 1e-05
  %v2171 = vadd.f32 %v1823, 1e-05
  %v2172 = vadd.f32 %v1824, 1e-05
  %v2173 = vadd.f32 %v1825, 1e-05
  %v2174 = vadd.f32 %v1826, 1e-05
  %v2175 = vadd.f32 %v1827, 1e-05
  %v2176 = vadd.f32 %v1828, 1e-05
  %v2177 = vadd.f32 %v1829, 1e-05
  %v2178 = vadd.f32 %v1830, 1e-05
  %v2179 = vadd.f32 %v1831, 1e-05
  %v2180 = vadd.f32 %v1832, 1e-05
  %v2181 = vadd.f32 %v1833, 1e-05
  %v2182 = vadd.f32 %v1834, 1e-05
  %v2183 = vadd.f32 %v1835, 1e-05
  %v2184 = vadd.f32 %v1836, 1e-05
  %v2185 = vadd.f32 %v1837, 1e-05
  %v2186 = vadd.f32 %v1838, 1e-05
  %v2187 = vadd.f32 %v1839, 1e-05
  %v2188 = vadd.f32 %v1840, 1e-05
  %v2189 = vadd.f32 %v1841, 1e-05
  %v2190 = vadd.f32 %v1842, 1e-05
  %v2191 = vadd.f32 %v1843, 1e-05
  %v2192 = vadd.f32 %v1844, 1e-05
  %v2193 = vadd.f32 %v1845, 1e-05
  %v2194 = vadd.f32 %v1846, 1e-05
  %v2195 = vadd.f32 %v1847, 1e-05
  %v2196 = vadd.f32 %v1848, 1e-05
  %v2197 = vadd.f32 %v1849, 1e-05
  %v2198 = vadd.f32 %v1850, 1e-05
  %v2199 = vadd.f32 %v1851, 1e-05
  %v2200 = vadd.f32 %v1852, 1e-05
  %v2201 = vadd.f32 %v1853, 1e-05
  %v2202 = vadd.f32 %v1854, 1e-05
  %v2203 = vadd.f32 %v1855, 1e-05
  %v2204 = vadd.f32 %v1856, 1e-05
  %v2205 = vadd.f32 %v1857, 1e-05
  %v2206 = vadd.f32 %v1858, 1e-05
  %v2207 = vadd.f32 %v1859, 1e-05
  %v2208 = vadd.f32 %v1860, 1e-05
  %v2209 = vadd.f32 %v1861, 1e-05
  %v2210 = vadd.f32 %v1862, 1e-05
  %v2211 = vadd.f32 %v1863, 1e-05
  %v2212 = vadd.f32 %v1864, 1e-05
  %v2213 = vadd.f32 %v1865, 1e-05
  %v2214 = vadd.f32 %v1866, 1e-05
  %v2215 = vadd.f32 %v1867, 1e-05
  %v2216 = vadd.f32 %v1868, 1e-05
  %v2217 = vadd.f32 %v1869, 1e-05
  %v2218 = vadd.f32 %v1870, 1e-05
  %v2219 = vadd.f32 %v1871, 1e-05
  %v2220 = vadd.f32 %v1872, 1e-05
  %v2221 = vadd.f32 %v1873, 1e-05
  %v2222 = vadd.f32 %v1874, 1e-05
  %v2223 = vadd.f32 %v1875, 1e-05
  %v2224 = vadd.f32 %v1876, 1e-05
  %v2225 = vadd.f32 %v1877, 1e-05
  %v2226 = vadd.f32 %v1878, 1e-05
  %v2227 = vadd.f32 %v1879, 1e-05
  %v2228 = vadd.f32 %v1880, 1e-05
  %v2229 = vadd.f32 %v1881, 1e-05
  %v2230 = vadd.f32 %v1882, 1e-05
  %v2231 = vadd.f32 %v1883, 1e-05
  %v2232 = vadd.f32 %v1884, 1e-05
  %v2233 = vadd.f32 %v1885, 1e-05
  %v2234 = vadd.f32 %v1886, 1e-05
  %v2235 = vadd.f32 %v1887, 1e-05
  %v2236 = vadd.f32 %v1888, 1e-05
  %v2237 = vadd.f32 %v1889, 1e-05
  %v2238 = vadd.f32 %v1890, 1e-05
  %v2239 = vadd.f32 %v1891, 1e-05
  %v2240 = vadd.f32 %v1892, 1e-05
  %v2241 = vadd.f32 %v1893, 1e-05
  %v2242 = vadd.f32 %v1894, 1e-05
  %v2243 = vadd.f32 %v1895, 1e-05
  %v2244 = vadd.f32 %v1896, 1e-05
  %v2245 = vadd.f32 %v1897, 1e-05
  %v2246 = vadd.f32 %v1898, 1e-05
  %v2247 = vadd.f32 %v1899, 1e-05
  %v2248 = vadd.f32 %v1900, 1e-05
  %v2249 = vadd.f32 %v1901, 1e-05
  %v2250 = vadd.f32 %v1902, 1e-05
  %v2251 = vadd.f32 %v1903, 1e-05
  %v2252 = vadd.f32 %v1904, 1e-05
  %v2253 = vadd.f32 %v1905, 1e-05
  %v2254 = vadd.f32 %v1906, 1e-05
  %v2255 = vadd.f32 %v1907, 1e-05
  %v2256 = vadd.f32 %v1908, 1e-05
  %v2257 = vadd.f32 %v1909, 1e-05
  %v2258 = vadd.f32 %v1910, 1e-05
  %v2259 = vadd.f32 %v1911, 1e-05
  %v2260 = vadd.f32 %v1912, 1e-05
  %v2261 = vadd.f32 %v1913, 1e-05
  %v2262 = vadd.f32 %v1914, 1e-05
  %v2263 = vadd.f32 %v1915, 1e-05
  %v2264 = vadd.f32 %v1916, 1e-05
  %v2265 = vadd.f32 %v1917, 1e-05
  %v2266 = vadd.f32 %v1918, 1e-05
  %v2267 = vadd.f32 %v1919, 1e-05
  %v2268 = vadd.f32 %v1920, 1e-05
  %v2269 = vadd.f32 %v1921, 1e-05
  %v2270 = vadd.f32 %v1922, 1e-05
  %v2271 = vadd.f32 %v1923, 1e-05
  %v2272 = vadd.f32 %v1924, 1e-05
  %v2273 = vadd.f32 %v1925, 1e-05
  %v2274 = vadd.f32 %v1926, 1e-05
  %v2275 = vadd.f32 %v1927, 1e-05
  %v2276 = vadd.f32 %v1928, 1e-05
  %v2277 = vadd.f32 %v1929, 1e-05
  %v2278 = vadd.f32 %v1930, 1e-05
  %v2279 = vadd.f32 %v1931, 1e-05
  %v2280 = vadd.f32 %v1932, 1e-05
  %v2281 = vadd.f32 %v1933, 1e-05
  %v2282 = vadd.f32 %v1934, 1e-05
  %v2283 = vadd.f32 %v1935, 1e-05
  %v2284 = vadd.f32 %v1936, 1e-05
  %v2285 = vadd.f32 %v1937, 1e-05
  %v2286 = vadd.f32 %v1938, 1e-05
  %v2287 = vrsqrt.pop %v2113
  %v2288 = vrsqrt.pop %v2114
  %v2289 = vrsqrt.pop %v2115
  %v2290 = vrsqrt.pop %v2116
  %v2291 = vrsqrt.pop %v2117
  %v2292 = vrsqrt.pop %v2118
  %v2293 = vrsqrt.pop %v2119
  %v2294 = vrsqrt.pop %v2120
  %v2295 = vrsqrt.pop %v2121
  %v2296 = vrsqrt.pop %v2122
  %v2297 = vrsqrt.pop %v2123
  %v2298 = vrsqrt.pop %v2124
  %v2299 = vrsqrt.pop %v2125
  %v2300 = vrsqrt.pop %v2126
  %v2301 = vrsqrt.pop %v2127
  %v2302 = vrsqrt.pop %v2128
  %v2303 = vrsqrt.pop %v2129
  %v2304 = vrsqrt.pop %v2130
  %v2305 = vrsqrt.pop %v2131
  %v2306 = vrsqrt.pop %v2132
  %v2307 = vrsqrt.pop %v2133
  %v2308 = vrsqrt.pop %v2134
  %v2309 = vrsqrt.pop %v2135
  %v2310 = vrsqrt.pop %v2136
  %v2311 = vrsqrt.pop %v2137
  %v2312 = vrsqrt.pop %v2138
  %v2313 = vrsqrt.pop %v2139
  %v2314 = vrsqrt.pop %v2140
  %v2315 = vrsqrt.pop %v2141
  %v2316 = vrsqrt.pop %v2142
  %v2317 = vrsqrt.pop %v2143
  %v2318 = vrsqrt.pop %v2144
  %v2319 = vrsqrt.pop %v2145
  %v2320 = vrsqrt.pop %v2146
  %v2321 = vrsqrt.pop %v2147
  %v2322 = vrsqrt.pop %v2148
  %v2323 = vrsqrt.pop %v2149
  %v2324 = vrsqrt.pop %v2150
  %v2325 = vrsqrt.pop %v2151
  %v2326 = vrsqrt.pop %v2152
  %v2327 = vrsqrt.pop %v2153
  %v2328 = vrsqrt.pop %v2154
  %v2329 = vrsqrt.pop %v2155
  %v2330 = vrsqrt.pop %v2156
  %v2331 = vrsqrt.pop %v2157
  %v2332 = vrsqrt.pop %v2158
  %v2333 = vrsqrt.pop %v2159
  %v2334 = vrsqrt.pop %v2160
  %v2335 = vrsqrt.pop %v2161
  %v2336 = vrsqrt.pop %v2162
  %v2337 = vrsqrt.pop %v2163
  %v2338 = vrsqrt.pop %v2164
  %v2339 = vrsqrt.pop %v2165
  %v2340 = vrsqrt.pop %v2166
  %v2341 = vrsqrt.pop %v2167
  %v2342 = vrsqrt.pop %v2168
  %v2343 = vrsqrt.pop %v2169
  %v2344 = vrsqrt.pop %v2170
  %v2345 = vrsqrt.pop %v2171
  %v2346 = vrsqrt.pop %v2172
  %v2347 = vrsqrt.pop %v2173
  %v2348 = vrsqrt.pop %v2174
  %v2349 = vrsqrt.pop %v2175
  %v2350 = vrsqrt.pop %v2176
  %v2351 = vrsqrt.pop %v2177
  %v2352 = vrsqrt.pop %v2178
  %v2353 = vrsqrt.pop %v2179
  %v2354 = vrsqrt.pop %v2180
  %v2355 = vrsqrt.pop %v2181
  %v2356 = vrsqrt.pop %v2182
  %v2357 = vrsqrt.pop %v2183
  %v2358 = vrsqrt.pop %v2184
  %v2359 = vrsqrt.pop %v2185
  %v2360 = vrsqrt.pop %v2186
  %v2361 = vrsqrt.pop %v2187
  %v2362 = vrsqrt.pop %v2188
  %v2363 = vrsqrt.pop %v2189
  %v2364 = vrsqrt.pop %v2190
  %v2365 = vrsqrt.pop %v2191
  %v2366 = vrsqrt.pop %v2192
  %v2367 = vrsqrt.pop %v2193
  %v2368 = vrsqrt.pop %v2194
  %v2369 = vrsqrt.pop %v2195
  %v2370 = vrsqrt.pop %v2196
  %v2371 = vrsqrt.pop %v2197
  %v2372 = vrsqrt.pop %v2198
  %v2373 = vrsqrt.pop %v2199
  %v2374 = vrsqrt.pop %v2200
  %v2375 = vrsqrt.pop %v2201
  %v2376 = vrsqrt.pop %v2202
  %v2377 = vrsqrt.pop %v2203
  %v2378 = vrsqrt.pop %v2204
  %v2379 = vrsqrt.pop %v2205
  %v2380 = vrsqrt.pop %v2206
  %v2381 = vrsqrt.pop %v2207
  %v2382 = vrsqrt.pop %v2208
  %v2383 = vrsqrt.pop %v2209
  %v2384 = vrsqrt.pop %v2210
  %v2385 = vrsqrt.pop %v2211
  %v2386 = vrsqrt.pop %v2212
  %v2387 = vrsqrt.pop %v2213
  %v2388 = vrsqrt.pop %v2214
  %v2389 = vrsqrt.pop %v2215
  %v2390 = vrsqrt.pop %v2216
  %v2391 = vrsqrt.pop %v2217
  %v2392 = vrsqrt.pop %v2218
  %v2393 = vrsqrt.pop %v2219
  %v2394 = vrsqrt.pop %v2220
  %v2395 = vrsqrt.pop %v2221
  %v2396 = vrsqrt.pop %v2222
  %v2397 = vrsqrt.pop %v2223
  %v2398 = vrsqrt.pop %v2224
  %v2399 = vrsqrt.pop %v2225
  %v2400 = vrsqrt.pop %v2226
  %v2401 = vrsqrt.pop %v2227
  %v2402 = vrsqrt.pop %v2228
  %v2403 = vrsqrt.pop %v2229
  %v2404 = vrsqrt.pop %v2230
  %v2405 = vrsqrt.pop %v2231
  %v2406 = vrsqrt.pop %v2232
  %v2407 = vrsqrt.pop %v2233
  %v2408 = vrsqrt.pop %v2234
  %v2409 = vrsqrt.pop %v2235
  %v2410 = vrsqrt.pop %v2236
  %v2411 = vrsqrt.pop %v2237
  %v2412 = vrsqrt.pop %v2238
  %v2413 = vrsqrt.pop %v2239
  %v2414 = vrsqrt.pop %v2240
  %v2415 = vrsqrt.pop %v2241
  %v2416 = vrsqrt.pop %v2242
  %v2417 = vrsqrt.pop %v2243
  %v2418 = vrsqrt.pop %v2244
  %v2419 = vrsqrt.pop %v2245
  %v2420 = vrsqrt.pop %v2246
  %v2421 = vrsqrt.pop %v2247
  %v2422 = vrsqrt.pop %v2248
  %v2423 = vrsqrt.pop %v2249
  %v2424 = vrsqrt.pop %v2250
  %v2425 = vrsqrt.pop %v2251
  %v2426 = vrsqrt.pop %v2252
  %v2427 = vrsqrt.pop %v2253
  %v2428 = vrsqrt.pop %v2254
  %v2429 = vrsqrt.pop %v2255
  %v2430 = vrsqrt.pop %v2256
  %v2431 = vrsqrt.pop %v2257
  %v2432 = vrsqrt.pop %v2258
  %v2433 = vrsqrt.pop %v2259
  %v2434 = vrsqrt.pop %v2260
  %v2435 = vrsqrt.pop %v2261
  %v2436 = vrsqrt.pop %v2262
  %v2437 = vrsqrt.pop %v2263
  %v2438 = vrsqrt.pop %v2264
  %v2439 = vrsqrt.pop %v2265
  %v2440 = vrsqrt.pop %v2266
  %v2441 = vrsqrt.pop %v2267
  %v2442 = vrsqrt.pop %v2268
  %v2443 = vrsqrt.pop %v2269
  %v2444 = vrsqrt.pop %v2270
  %v2445 = vrsqrt.pop %v2271
  %v2446 = vrsqrt.pop %v2272
  %v2447 = vrsqrt.pop %v2273
  %v2448 = vrsqrt.pop %v2274
  %v2449 = vrsqrt.pop %v2275
  %v2450 = vrsqrt.pop %v2276
  %v2451 = vrsqrt.pop %v2277
  %v2452 = vrsqrt.pop %v2278
  %v2453 = vrsqrt.pop %v2279
  %v2454 = vrsqrt.pop %v2280
  %v2455 = vrsqrt.pop %v2281
  %v2456 = vrsqrt.pop %v2282
  %v2457 = vrsqrt.pop %v2283
  %v2458 = vrsqrt.pop %v2284
  %v2459 = vrsqrt.pop %v2285
  %v2460 = vrsqrt.pop %v2286
  %v2461 = vmul.f32 %v1939, %v2287
  %v2462 = vmul.f32 %v1940, %v2288
  %v2463 = vmul.f32 %v1941, %v2289
  %v2464 = vmul.f32 %v1942, %v2290
  %v2465 = vmul.f32 %v1943, %v2291
  %v2466 = vmul.f32 %v1944, %v2292
  %v2467 = vmul.f32 %v1945, %v2293
  %v2468 = vmul.f32 %v1946, %v2294
  %v2469 = vmul.f32 %v1947, %v2295
  %v2470 = vmul.f32 %v1948, %v2296
  %v2471 = vmul.f32 %v1949, %v2297
  %v2472 = vmul.f32 %v1950, %v2298
  %v2473 = vmul.f32 %v1951, %v2299
  %v2474 = vmul.f32 %v1952, %v2300
  %v2475 = vmul.f32 %v1953, %v2301
  %v2476 = vmul.f32 %v1954, %v2302
  %v2477 = vmul.f32 %v1955, %v2303
  %v2478 = vmul.f32 %v1956, %v2304
  %v2479 = vmul.f32 %v1957, %v2305
  %v2480 = vmul.f32 %v1958, %v2306
  %v2481 = vmul.f32 %v1959, %v2307
  %v2482 = vmul.f32 %v1960, %v2308
  %v2483 = vmul.f32 %v1961, %v2309
  %v2484 = vmul.f32 %v1962, %v2310
  %v2485 = vmul.f32 %v1963, %v2311
  %v2486 = vmul.f32 %v1964, %v2312
  %v2487 = vmul.f32 %v1965, %v2313
  %v2488 = vmul.f32 %v1966, %v2314
  %v2489 = vmul.f32 %v1967, %v2315
  %v2490 = vmul.f32 %v1968, %v2316
  %v2491 = vmul.f32 %v1969, %v2317
  %v2492 = vmul.f32 %v1970, %v2318
  %v2493 = vmul.f32 %v1971, %v2319
  %v2494 = vmul.f32 %v1972, %v2320
  %v2495 = vmul.f32 %v1973, %v2321
  %v2496 = vmul.f32 %v1974, %v2322
  %v2497 = vmul.f32 %v1975, %v2323
  %v2498 = vmul.f32 %v1976, %v2324
  %v2499 = vmul.f32 %v1977, %v2325
  %v2500 = vmul.f32 %v1978, %v2326
  %v2501 = vmul.f32 %v1979, %v2327
  %v2502 = vmul.f32 %v1980, %v2328
  %v2503 = vmul.f32 %v1981, %v2329
  %v2504 = vmul.f32 %v1982, %v2330
  %v2505 = vmul.f32 %v1983, %v2331
  %v2506 = vmul.f32 %v1984, %v2332
  %v2507 = vmul.f32 %v1985, %v2333
  %v2508 = vmul.f32 %v1986, %v2334
  %v2509 = vmul.f32 %v1987, %v2335
  %v2510 = vmul.f32 %v1988, %v2336
  %v2511 = vmul.f32 %v1989, %v2337
  %v2512 = vmul.f32 %v1990, %v2338
  %v2513 = vmul.f32 %v1991, %v2339
  %v2514 = vmul.f32 %v1992, %v2340
  %v2515 = vmul.f32 %v1993, %v2341
  %v2516 = vmul.f32 %v1994, %v2342
  %v2517 = vmul.f32 %v1995, %v2343
  %v2518 = vmul.f32 %v1996, %v2344
  %v2519 = vmul.f32 %v1997, %v2345
  %v2520 = vmul.f32 %v1998, %v2346
  %v2521 = vmul.f32 %v1999, %v2347
  %v2522 = vmul.f32 %v2000, %v2348
  %v2523 = vmul.f32 %v2001, %v2349
  %v2524 = vmul.f32 %v2002, %v2350
  %v2525 = vmul.f32 %v2003, %v2351
  %v2526 = vmul.f32 %v2004, %v2352
  %v2527 = vmul.f32 %v2005, %v2353
  %v2528 = vmul.f32 %v2006, %v2354
  %v2529 = vmul.f32 %v2007, %v2355
  %v2530 = vmul.f32 %v2008, %v2356
  %v2531 = vmul.f32 %v2009, %v2357
  %v2532 = vmul.f32 %v2010, %v2358
  %v2533 = vmul.f32 %v2011, %v2359
  %v2534 = vmul.f32 %v2012, %v2360
  %v2535 = vmul.f32 %v2013, %v2361
  %v2536 = vmul.f32 %v2014, %v2362
  %v2537 = vmul.f32 %v2015, %v2363
  %v2538 = vmul.f32 %v2016, %v2364
  %v2539 = vmul.f32 %v2017, %v2365
  %v2540 = vmul.f32 %v2018, %v2366
  %v2541 = vmul.f32 %v2019, %v2367
  %v2542 = vmul.f32 %v2020, %v2368
  %v2543 = vmul.f32 %v2021, %v2369
  %v2544 = vmul.f32 %v2022, %v2370
  %v2545 = vmul.f32 %v2023, %v2371
  %v2546 = vmul.f32 %v2024, %v2372
  %v2547 = vmul.f32 %v2025, %v2373
  %v2548 = vmul.f32 %v2026, %v2374
  %v2549 = vmul.f32 %v2027, %v2375
  %v2550 = vmul.f32 %v2028, %v2376
  %v2551 = vmul.f32 %v2029, %v2377
  %v2552 = vmul.f32 %v2030, %v2378
  %v2553 = vmul.f32 %v2031, %v2379
  %v2554 = vmul.f32 %v2032, %v2380
  %v2555 = vmul.f32 %v2033, %v2381
  %v2556 = vmul.f32 %v2034, %v2382
  %v2557 = vmul.f32 %v2035, %v2383
  %v2558 = vmul.f32 %v2036, %v2384
  %v2559 = vmul.f32 %v2037, %v2385
  %v2560 = vmul.f32 %v2038, %v2386
  %v2561 = vmul.f32 %v2039, %v2387
  %v2562 = vmul.f32 %v2040, %v2388
  %v2563 = vmul.f32 %v2041, %v2389
  %v2564 = vmul.f32 %v2042, %v2390
  %v2565 = vmul.f32 %v2043, %v2391
  %v2566 = vmul.f32 %v2044, %v2392
  %v2567 = vmul.f32 %v2045, %v2393
  %v2568 = vmul.f32 %v2046, %v2394
  %v2569 = vmul.f32 %v2047, %v2395
  %v2570 = vmul.f32 %v2048, %v2396
  %v2571 = vmul.f32 %v2049, %v2397
  %v2572 = vmul.f32 %v2050, %v2398
  %v2573 = vmul.f32 %v2051, %v2399
  %v2574 = vmul.f32 %v2052, %v2400
  %v2575 = vmul.f32 %v2053, %v2401
  %v2576 = vmul.f32 %v2054, %v2402
  %v2577 = vmul.f32 %v2055, %v2403
  %v2578 = vmul.f32 %v2056, %v2404
  %v2579 = vmul.f32 %v2057, %v2405
  %v2580 = vmul.f32 %v2058, %v2406
  %v2581 = vmul.f32 %v2059, %v2407
  %v2582 = vmul.f32 %v2060, %v2408
  %v2583 = vmul.f32 %v2061, %v2409
  %v2584 = vmul.f32 %v2062, %v2410
  %v2585 = vmul.f32 %v2063, %v2411
  %v2586 = vmul.f32 %v2064, %v2412
  %v2587 = vmul.f32 %v2065, %v2413
  %v2588 = vmul.f32 %v2066, %v2414
  %v2589 = vmul.f32 %v2067, %v2415
  %v2590 = vmul.f32 %v2068, %v2416
  %v2591 = vmul.f32 %v2069, %v2417
  %v2592 = vmul.f32 %v2070, %v2418
  %v2593 = vmul.f32 %v2071, %v2419
  %v2594 = vmul.f32 %v2072, %v2420
  %v2595 = vmul.f32 %v2073, %v2421
  %v2596 = vmul.f32 %v2074, %v2422
  %v2597 = vmul.f32 %v2075, %v2423
  %v2598 = vmul.f32 %v2076, %v2424
  %v2599 = vmul.f32 %v2077, %v2425
  %v2600 = vmul.f32 %v2078, %v2426
  %v2601 = vmul.f32 %v2079, %v2427
  %v2602 = vmul.f32 %v2080, %v2428
  %v2603 = vmul.f32 %v2081, %v2429
  %v2604 = vmul.f32 %v2082, %v2430
  %v2605 = vmul.f32 %v2083, %v2431
  %v2606 = vmul.f32 %v2084, %v2432
  %v2607 = vmul.f32 %v2085, %v2433
  %v2608 = vmul.f32 %v2086, %v2434
  %v2609 = vmul.f32 %v2087, %v2435
  %v2610 = vmul.f32 %v2088, %v2436
  %v2611 = vmul.f32 %v2089, %v2437
  %v2612 = vmul.f32 %v2090, %v2438
  %v2613 = vmul.f32 %v2091, %v2439
  %v2614 = vmul.f32 %v2092, %v2440
  %v2615 = vmul.f32 %v2093, %v2441
  %v2616 = vmul.f32 %v2094, %v2442
  %v2617 = vmul.f32 %v2095, %v2443
  %v2618 = vmul.f32 %v2096, %v2444
  %v2619 = vmul.f32 %v2097, %v2445
  %v2620 = vmul.f32 %v2098, %v2446
  %v2621 = vmul.f32 %v2099, %v2447
  %v2622 = vmul.f32 %v2100, %v2448
  %v2623 = vmul.f32 %v2101, %v2449
  %v2624 = vmul.f32 %v2102, %v2450
  %v2625 = vmul.f32 %v2103, %v2451
  %v2626 = vmul.f32 %v2104, %v2452
  %v2627 = vmul.f32 %v2105, %v2453
  %v2628 = vmul.f32 %v2106, %v2454
  %v2629 = vmul.f32 %v2107, %v2455
  %v2630 = vmul.f32 %v2108, %v2456
  %v2631 = vmul.f32 %v2109, %v2457
  %v2632 = vmul.f32 %v2110, %v2458
  %v2633 = vmul.f32 %v2111, %v2459
  %v2634 = vmul.f32 %v2112, %v2460
  %v2635 = vld [vmem:[%s3] sm:$0xff]
  %v2636 = vld [vmem:[%s3 + $0x8] sm:$0xff]
  %v2637 = vld [vmem:[%s3 + $0x10] sm:$0xff]
  %v2638 = vld [vmem:[%s3 + $0x18] sm:$0xff]
  %v2639 = vld [vmem:[%s3 + $0x20] sm:$0xff]
  %v2640 = vld [vmem:[%s3 + $0x28] sm:$0xff]
  %v2641 = vld [vmem:[%s3 + $0x30] sm:$0xff]
  %v2642 = vld [vmem:[%s3 + $0x38] sm:$0xff]
  %v2643 = vld [vmem:[%s3 + $0x40] sm:$0xff]
  %v2644 = vld [vmem:[%s3 + $0x48] sm:$0xff]
  %v2645 = vld [vmem:[%s3 + $0x50] sm:$0xff]
  %v2646 = vld [vmem:[%s3 + $0x58] sm:$0xff]
  %v2647 = vld [vmem:[%s3 + $0x60] sm:$0xff]
  %v2648 = vld [vmem:[%s3 + $0x68] sm:$0xff]
  %v2649 = vld [vmem:[%s3 + $0x70] sm:$0xff]
  %v2650 = vld [vmem:[%s3 + $0x78] sm:$0xff]
  %v2651 = vld [vmem:[%s3 + $0x80] sm:$0xff]
  %v2652 = vld [vmem:[%s3 + $0x88] sm:$0xff]
  %v2653 = vld [vmem:[%s3 + $0x90] sm:$0xff]
  %v2654 = vld [vmem:[%s3 + $0x98] sm:$0xff]
  %v2655 = vld [vmem:[%s3 + $0xa0] sm:$0xff]
  %v2656 = vld [vmem:[%s3 + $0xa8] sm:$0xff]
  %v2657 = vld [vmem:[%s3 + $0xb0] sm:$0xff]
  %v2658 = vld [vmem:[%s3 + $0xb8] sm:$0xff]
  %v2659 = vld [vmem:[%s3 + $0xc0] sm:$0xff]
  %v2660 = vld [vmem:[%s3 + $0xc8] sm:$0xff]
  %v2661 = vld [vmem:[%s3 + $0xd0] sm:$0xff]
  %v2662 = vld [vmem:[%s3 + $0xd8] sm:$0xff]
  %v2663 = vld [vmem:[%s3 + $0xe0] sm:$0xff]
  %v2664 = vld [vmem:[%s3 + $0xe8] sm:$0xff]
  %v2665 = vld [vmem:[%s3 + $0xf0] sm:$0xff]
  %v2666 = vld [vmem:[%s3 + $0xf8] sm:$0xff]
  %v2667 = vld [vmem:[%s3 + $0x100] sm:$0xff]
  %v2668 = vld [vmem:[%s3 + $0x108] sm:$0xff]
  %v2669 = vld [vmem:[%s3 + $0x110] sm:$0xff]
  %v2670 = vld [vmem:[%s3 + $0x118] sm:$0xff]
  %v2671 = vld [vmem:[%s3 + $0x120] sm:$0xff]
  %v2672 = vld [vmem:[%s3 + $0x128] sm:$0xff]
  %v2673 = vld [vmem:[%s3 + $0x130] sm:$0xff]
  %v2674 = vld [vmem:[%s3 + $0x138] sm:$0xff]
  %v2675 = vld [vmem:[%s3 + $0x140] sm:$0xff]
  %v2676 = vld [vmem:[%s3 + $0x148] sm:$0xff]
  %v2677 = vld [vmem:[%s3 + $0x150] sm:$0xff]
  %v2678 = vld [vmem:[%s3 + $0x158] sm:$0xff]
  %v2679 = vld [vmem:[%s3 + $0x160] sm:$0xff]
  %v2680 = vld [vmem:[%s3 + $0x168] sm:$0xff]
  %v2681 = vld [vmem:[%s3 + $0x170] sm:$0xff]
  %v2682 = vld [vmem:[%s3 + $0x178] sm:$0xff]
  %v2683 = vld [vmem:[%s3 + $0x180] sm:$0xff]
  %v2684 = vld [vmem:[%s3 + $0x188] sm:$0xff]
  %v2685 = vld [vmem:[%s3 + $0x190] sm:$0xff]
  %v2686 = vld [vmem:[%s3 + $0x198] sm:$0xff]
  %v2687 = vld [vmem:[%s3 + $0x1a0] sm:$0xff]
  %v2688 = vld [vmem:[%s3 + $0x1a8] sm:$0xff]
  %v2689 = vld [vmem:[%s3 + $0x1b0] sm:$0xff]
  %v2690 = vld [vmem:[%s3 + $0x1b8] sm:$0xff]
  %v2691 = vld [vmem:[%s3 + $0x1c0] sm:$0xff]
  %v2692 = vld [vmem:[%s3 + $0x1c8] sm:$0xff]
  %v2693 = vld [vmem:[%s3 + $0x1d0] sm:$0xff]
  %v2694 = vld [vmem:[%s3 + $0x1d8] sm:$0xff]
  %v2695 = vld [vmem:[%s3 + $0x1e0] sm:$0xff]
  %v2696 = vld [vmem:[%s3 + $0x1e8] sm:$0xff]
  %v2697 = vld [vmem:[%s3 + $0x1f0] sm:$0xff]
  %v2698 = vld [vmem:[%s3 + $0x1f8] sm:$0xff]
  %v2699 = vld [vmem:[%s3 + $0x200] sm:$0xff]
  %v2700 = vld [vmem:[%s3 + $0x208] sm:$0xff]
  %v2701 = vld [vmem:[%s3 + $0x210] sm:$0xff]
  %v2702 = vld [vmem:[%s3 + $0x218] sm:$0xff]
  %v2703 = vld [vmem:[%s3 + $0x220] sm:$0xff]
  %v2704 = vld [vmem:[%s3 + $0x228] sm:$0xff]
  %v2705 = vld [vmem:[%s3 + $0x230] sm:$0xff]
  %v2706 = vld [vmem:[%s3 + $0x238] sm:$0xff]
  %v2707 = vld [vmem:[%s3 + $0x240] sm:$0xff]
  %v2708 = vld [vmem:[%s3 + $0x248] sm:$0xff]
  %v2709 = vld [vmem:[%s3 + $0x250] sm:$0xff]
  %v2710 = vld [vmem:[%s3 + $0x258] sm:$0xff]
  %v2711 = vld [vmem:[%s3 + $0x260] sm:$0xff]
  %v2712 = vld [vmem:[%s3 + $0x268] sm:$0xff]
  %v2713 = vld [vmem:[%s3 + $0x270] sm:$0xff]
  %v2714 = vld [vmem:[%s3 + $0x278] sm:$0xff]
  %v2715 = vld [vmem:[%s3 + $0x280] sm:$0xff]
  %v2716 = vld [vmem:[%s3 + $0x288] sm:$0xff]
  %v2717 = vld [vmem:[%s3 + $0x290] sm:$0xff]
  %v2718 = vld [vmem:[%s3 + $0x298] sm:$0xff]
  %v2719 = vld [vmem:[%s3 + $0x2a0] sm:$0xff]
  %v2720 = vld [vmem:[%s3 + $0x2a8] sm:$0xff]
  %v2721 = vld [vmem:[%s3 + $0x2b0] sm:$0xff]
  %v2722 = vld [vmem:[%s3 + $0x2b8] sm:$0xff]
  %v2723 = vld [vmem:[%s3 + $0x2c0] sm:$0xff]
  %v2724 = vld [vmem:[%s3 + $0x2c8] sm:$0xff]
  %v2725 = vld [vmem:[%s3 + $0x2d0] sm:$0xff]
  %v2726 = vld [vmem:[%s3 + $0x2d8] sm:$0xff]
  %v2727 = vld [vmem:[%s3 + $0x2e0] sm:$0xff]
  %v2728 = vld [vmem:[%s3 + $0x2e8] sm:$0xff]
  %v2729 = vld [vmem:[%s3 + $0x2f0] sm:$0xff]
  %v2730 = vld [vmem:[%s3 + $0x2f8] sm:$0xff]
  %v2731 = vld [vmem:[%s3 + $0x300] sm:$0xff]
  %v2732 = vld [vmem:[%s3 + $0x308] sm:$0xff]
  %v2733 = vld [vmem:[%s3 + $0x310] sm:$0xff]
  %v2734 = vld [vmem:[%s3 + $0x318] sm:$0xff]
  %v2735 = vld [vmem:[%s3 + $0x320] sm:$0xff]
  %v2736 = vld [vmem:[%s3 + $0x328] sm:$0xff]
  %v2737 = vld [vmem:[%s3 + $0x330] sm:$0xff]
  %v2738 = vld [vmem:[%s3 + $0x338] sm:$0xff]
  %v2739 = vld [vmem:[%s3 + $0x340] sm:$0xff]
  %v2740 = vld [vmem:[%s3 + $0x348] sm:$0xff]
  %v2741 = vld [vmem:[%s3 + $0x350] sm:$0xff]
  %v2742 = vld [vmem:[%s3 + $0x358] sm:$0xff]
  %v2743 = vld [vmem:[%s3 + $0x360] sm:$0xff]
  %v2744 = vld [vmem:[%s3 + $0x368] sm:$0xff]
  %v2745 = vld [vmem:[%s3 + $0x370] sm:$0xff]
  %v2746 = vld [vmem:[%s3 + $0x378] sm:$0xff]
  %v2747 = vld [vmem:[%s3 + $0x380] sm:$0xff]
  %v2748 = vld [vmem:[%s3 + $0x388] sm:$0xff]
  %v2749 = vld [vmem:[%s3 + $0x390] sm:$0xff]
  %v2750 = vld [vmem:[%s3 + $0x398] sm:$0xff]
  %v2751 = vld [vmem:[%s3 + $0x3a0] sm:$0xff]
  %v2752 = vld [vmem:[%s3 + $0x3a8] sm:$0xff]
  %v2753 = vld [vmem:[%s3 + $0x3b0] sm:$0xff]
  %v2754 = vld [vmem:[%s3 + $0x3b8] sm:$0xff]
  %v2755 = vld [vmem:[%s3 + $0x3c0] sm:$0xff]
  %v2756 = vld [vmem:[%s3 + $0x3c8] sm:$0xff]
  %v2757 = vld [vmem:[%s3 + $0x3d0] sm:$0xff]
  %v2758 = vld [vmem:[%s3 + $0x3d8] sm:$0xff]
  %v2759 = vld [vmem:[%s3 + $0x3e0] sm:$0xff]
  %v2760 = vld [vmem:[%s3 + $0x3e8] sm:$0xff]
  %v2761 = vld [vmem:[%s3 + $0x3f0] sm:$0xff]
  %v2762 = vld [vmem:[%s3 + $0x3f8] sm:$0xff]
  %v2763 = vld [vmem:[%s3 + $0x400] sm:$0xff]
  %v2764 = vld [vmem:[%s3 + $0x408] sm:$0xff]
  %v2765 = vld [vmem:[%s3 + $0x410] sm:$0xff]
  %v2766 = vld [vmem:[%s3 + $0x418] sm:$0xff]
  %v2767 = vld [vmem:[%s3 + $0x420] sm:$0xff]
  %v2768 = vld [vmem:[%s3 + $0x428] sm:$0xff]
  %v2769 = vld [vmem:[%s3 + $0x430] sm:$0xff]
  %v2770 = vld [vmem:[%s3 + $0x438] sm:$0xff]
  %v2771 = vld [vmem:[%s3 + $0x440] sm:$0xff]
  %v2772 = vld [vmem:[%s3 + $0x448] sm:$0xff]
  %v2773 = vld [vmem:[%s3 + $0x450] sm:$0xff]
  %v2774 = vld [vmem:[%s3 + $0x458] sm:$0xff]
  %v2775 = vld [vmem:[%s3 + $0x460] sm:$0xff]
  %v2776 = vld [vmem:[%s3 + $0x468] sm:$0xff]
  %v2777 = vld [vmem:[%s3 + $0x470] sm:$0xff]
  %v2778 = vld [vmem:[%s3 + $0x478] sm:$0xff]
  %v2779 = vld [vmem:[%s3 + $0x480] sm:$0xff]
  %v2780 = vld [vmem:[%s3 + $0x488] sm:$0xff]
  %v2781 = vld [vmem:[%s3 + $0x490] sm:$0xff]
  %v2782 = vld [vmem:[%s3 + $0x498] sm:$0xff]
  %v2783 = vld [vmem:[%s3 + $0x4a0] sm:$0xff]
  %v2784 = vld [vmem:[%s3 + $0x4a8] sm:$0xff]
  %v2785 = vld [vmem:[%s3 + $0x4b0] sm:$0xff]
  %v2786 = vld [vmem:[%s3 + $0x4b8] sm:$0xff]
  %v2787 = vld [vmem:[%s3 + $0x4c0] sm:$0xff]
  %v2788 = vld [vmem:[%s3 + $0x4c8] sm:$0xff]
  %v2789 = vld [vmem:[%s3 + $0x4d0] sm:$0xff]
  %v2790 = vld [vmem:[%s3 + $0x4d8] sm:$0xff]
  %v2791 = vld [vmem:[%s3 + $0x4e0] sm:$0xff]
  %v2792 = vld [vmem:[%s3 + $0x4e8] sm:$0xff]
  %v2793 = vld [vmem:[%s3 + $0x4f0] sm:$0xff]
  %v2794 = vld [vmem:[%s3 + $0x4f8] sm:$0xff]
  %v2795 = vld [vmem:[%s3 + $0x500] sm:$0xff]
  %v2796 = vld [vmem:[%s3 + $0x508] sm:$0xff]
  %v2797 = vld [vmem:[%s3 + $0x510] sm:$0xff]
  %v2798 = vld [vmem:[%s3 + $0x518] sm:$0xff]
  %v2799 = vld [vmem:[%s3 + $0x520] sm:$0xff]
  %v2800 = vld [vmem:[%s3 + $0x528] sm:$0xff]
  %v2801 = vld [vmem:[%s3 + $0x530] sm:$0xff]
  %v2802 = vld [vmem:[%s3 + $0x538] sm:$0xff]
  %v2803 = vld [vmem:[%s3 + $0x540] sm:$0xff]
  %v2804 = vld [vmem:[%s3 + $0x548] sm:$0xff]
  %v2805 = vld [vmem:[%s3 + $0x550] sm:$0xff]
  %v2806 = vld [vmem:[%s3 + $0x558] sm:$0xff]
  %v2807 = vld [vmem:[%s3 + $0x560] sm:$0xff]
  %v2808 = vld [vmem:[%s3 + $0x568] sm:$0xff]
  %v2809 = vmul.f32 %v2461, %v721
  %v2810 = vmul.f32 %v2462, %v722
  %v2811 = vmul.f32 %v2463, %v723
  %v2812 = vmul.f32 %v2464, %v724
  %v2813 = vmul.f32 %v2465, %v725
  %v2814 = vmul.f32 %v2466, %v726
  %v2815 = vmul.f32 %v2467, %v727
  %v2816 = vmul.f32 %v2468, %v728
  %v2817 = vmul.f32 %v2469, %v729
  %v2818 = vmul.f32 %v2470, %v730
  %v2819 = vmul.f32 %v2471, %v731
  %v2820 = vmul.f32 %v2472, %v732
  %v2821 = vmul.f32 %v2473, %v733
  %v2822 = vmul.f32 %v2474, %v734
  %v2823 = vmul.f32 %v2475, %v735
  %v2824 = vmul.f32 %v2476, %v736
  %v2825 = vmul.f32 %v2477, %v737
  %v2826 = vmul.f32 %v2478, %v738
  %v2827 = vmul.f32 %v2479, %v739
  %v2828 = vmul.f32 %v2480, %v740
  %v2829 = vmul.f32 %v2481, %v741
  %v2830 = vmul.f32 %v2482, %v742
  %v2831 = vmul.f32 %v2483, %v743
  %v2832 = vmul.f32 %v2484, %v744
  %v2833 = vmul.f32 %v2485, %v745
  %v2834 = vmul.f32 %v2486, %v746
  %v2835 = vmul.f32 %v2487, %v747
  %v2836 = vmul.f32 %v2488, %v748
  %v2837 = vmul.f32 %v2489, %v749
  %v2838 = vmul.f32 %v2490, %v750
  %v2839 = vmul.f32 %v2491, %v751
  %v2840 = vmul.f32 %v2492, %v752
  %v2841 = vmul.f32 %v2493, %v753
  %v2842 = vmul.f32 %v2494, %v754
  %v2843 = vmul.f32 %v2495, %v755
  %v2844 = vmul.f32 %v2496, %v756
  %v2845 = vmul.f32 %v2497, %v757
  %v2846 = vmul.f32 %v2498, %v758
  %v2847 = vmul.f32 %v2499, %v759
  %v2848 = vmul.f32 %v2500, %v760
  %v2849 = vmul.f32 %v2501, %v761
  %v2850 = vmul.f32 %v2502, %v762
  %v2851 = vmul.f32 %v2503, %v763
  %v2852 = vmul.f32 %v2504, %v764
  %v2853 = vmul.f32 %v2505, %v765
  %v2854 = vmul.f32 %v2506, %v766
  %v2855 = vmul.f32 %v2507, %v767
  %v2856 = vmul.f32 %v2508, %v768
  %v2857 = vmul.f32 %v2509, %v769
  %v2858 = vmul.f32 %v2510, %v770
  %v2859 = vmul.f32 %v2511, %v771
  %v2860 = vmul.f32 %v2512, %v772
  %v2861 = vmul.f32 %v2513, %v773
  %v2862 = vmul.f32 %v2514, %v774
  %v2863 = vmul.f32 %v2515, %v775
  %v2864 = vmul.f32 %v2516, %v776
  %v2865 = vmul.f32 %v2517, %v777
  %v2866 = vmul.f32 %v2518, %v778
  %v2867 = vmul.f32 %v2519, %v779
  %v2868 = vmul.f32 %v2520, %v780
  %v2869 = vmul.f32 %v2521, %v781
  %v2870 = vmul.f32 %v2522, %v782
  %v2871 = vmul.f32 %v2523, %v783
  %v2872 = vmul.f32 %v2524, %v784
  %v2873 = vmul.f32 %v2525, %v785
  %v2874 = vmul.f32 %v2526, %v786
  %v2875 = vmul.f32 %v2527, %v787
  %v2876 = vmul.f32 %v2528, %v788
  %v2877 = vmul.f32 %v2529, %v789
  %v2878 = vmul.f32 %v2530, %v790
  %v2879 = vmul.f32 %v2531, %v791
  %v2880 = vmul.f32 %v2532, %v792
  %v2881 = vmul.f32 %v2533, %v793
  %v2882 = vmul.f32 %v2534, %v794
  %v2883 = vmul.f32 %v2535, %v795
  %v2884 = vmul.f32 %v2536, %v796
  %v2885 = vmul.f32 %v2537, %v797
  %v2886 = vmul.f32 %v2538, %v798
  %v2887 = vmul.f32 %v2539, %v799
  %v2888 = vmul.f32 %v2540, %v800
  %v2889 = vmul.f32 %v2541, %v801
  %v2890 = vmul.f32 %v2542, %v802
  %v2891 = vmul.f32 %v2543, %v803
  %v2892 = vmul.f32 %v2544, %v804
  %v2893 = vmul.f32 %v2545, %v805
  %v2894 = vmul.f32 %v2546, %v806
  %v2895 = vmul.f32 %v2547, %v807
  %v2896 = vmul.f32 %v2548, %v808
  %v2897 = vmul.f32 %v2549, %v809
  %v2898 = vmul.f32 %v2550, %v810
  %v2899 = vmul.f32 %v2551, %v811
  %v2900 = vmul.f32 %v2552, %v812
  %v2901 = vmul.f32 %v2553, %v813
  %v2902 = vmul.f32 %v2554, %v814
  %v2903 = vmul.f32 %v2555, %v815
  %v2904 = vmul.f32 %v2556, %v816
  %v2905 = vmul.f32 %v2557, %v817
  %v2906 = vmul.f32 %v2558, %v818
  %v2907 = vmul.f32 %v2559, %v819
  %v2908 = vmul.f32 %v2560, %v820
  %v2909 = vmul.f32 %v2561, %v821
  %v2910 = vmul.f32 %v2562, %v822
  %v2911 = vmul.f32 %v2563, %v823
  %v2912 = vmul.f32 %v2564, %v824
  %v2913 = vmul.f32 %v2565, %v825
  %v2914 = vmul.f32 %v2566, %v826
  %v2915 = vmul.f32 %v2567, %v827
  %v2916 = vmul.f32 %v2568, %v828
  %v2917 = vmul.f32 %v2569, %v829
  %v2918 = vmul.f32 %v2570, %v830
  %v2919 = vmul.f32 %v2571, %v831
  %v2920 = vmul.f32 %v2572, %v832
  %v2921 = vmul.f32 %v2573, %v833
  %v2922 = vmul.f32 %v2574, %v834
  %v2923 = vmul.f32 %v2575, %v835
  %v2924 = vmul.f32 %v2576, %v836
  %v2925 = vmul.f32 %v2577, %v837
  %v2926 = vmul.f32 %v2578, %v838
  %v2927 = vmul.f32 %v2579, %v839
  %v2928 = vmul.f32 %v2580, %v840
  %v2929 = vmul.f32 %v2581, %v841
  %v2930 = vmul.f32 %v2582, %v842
  %v2931 = vmul.f32 %v2583, %v843
  %v2932 = vmul.f32 %v2584, %v844
  %v2933 = vmul.f32 %v2585, %v845
  %v2934 = vmul.f32 %v2586, %v846
  %v2935 = vmul.f32 %v2587, %v847
  %v2936 = vmul.f32 %v2588, %v848
  %v2937 = vmul.f32 %v2589, %v849
  %v2938 = vmul.f32 %v2590, %v850
  %v2939 = vmul.f32 %v2591, %v851
  %v2940 = vmul.f32 %v2592, %v852
  %v2941 = vmul.f32 %v2593, %v853
  %v2942 = vmul.f32 %v2594, %v854
  %v2943 = vmul.f32 %v2595, %v855
  %v2944 = vmul.f32 %v2596, %v856
  %v2945 = vmul.f32 %v2597, %v857
  %v2946 = vmul.f32 %v2598, %v858
  %v2947 = vmul.f32 %v2599, %v859
  %v2948 = vmul.f32 %v2600, %v860
  %v2949 = vmul.f32 %v2601, %v861
  %v2950 = vmul.f32 %v2602, %v862
  %v2951 = vmul.f32 %v2603, %v863
  %v2952 = vmul.f32 %v2604, %v864
  %v2953 = vmul.f32 %v2605, %v865
  %v2954 = vmul.f32 %v2606, %v866
  %v2955 = vmul.f32 %v2607, %v867
  %v2956 = vmul.f32 %v2608, %v868
  %v2957 = vmul.f32 %v2609, %v869
  %v2958 = vmul.f32 %v2610, %v870
  %v2959 = vmul.f32 %v2611, %v871
  %v2960 = vmul.f32 %v2612, %v872
  %v2961 = vmul.f32 %v2613, %v873
  %v2962 = vmul.f32 %v2614, %v874
  %v2963 = vmul.f32 %v2615, %v875
  %v2964 = vmul.f32 %v2616, %v876
  %v2965 = vmul.f32 %v2617, %v877
  %v2966 = vmul.f32 %v2618, %v878
  %v2967 = vmul.f32 %v2619, %v879
  %v2968 = vmul.f32 %v2620, %v880
  %v2969 = vmul.f32 %v2621, %v881
  %v2970 = vmul.f32 %v2622, %v882
  %v2971 = vmul.f32 %v2623, %v883
  %v2972 = vmul.f32 %v2624, %v884
  %v2973 = vmul.f32 %v2625, %v885
  %v2974 = vmul.f32 %v2626, %v886
  %v2975 = vmul.f32 %v2627, %v887
  %v2976 = vmul.f32 %v2628, %v888
  %v2977 = vmul.f32 %v2629, %v889
  %v2978 = vmul.f32 %v2630, %v890
  %v2979 = vmul.f32 %v2631, %v891
  %v2980 = vmul.f32 %v2632, %v892
  %v2981 = vmul.f32 %v2633, %v893
  %v2982 = vmul.f32 %v2634, %v894
  %v2983 = vsub.f32 %v2635, %v2809
  %v2984 = vsub.f32 %v2636, %v2810
  %v2985 = vsub.f32 %v2637, %v2811
  %v2986 = vsub.f32 %v2638, %v2812
  %v2987 = vsub.f32 %v2639, %v2813
  %v2988 = vsub.f32 %v2640, %v2814
  %v2989 = vsub.f32 %v2641, %v2815
  %v2990 = vsub.f32 %v2642, %v2816
  %v2991 = vsub.f32 %v2643, %v2817
  %v2992 = vsub.f32 %v2644, %v2818
  %v2993 = vsub.f32 %v2645, %v2819
  %v2994 = vsub.f32 %v2646, %v2820
  %v2995 = vsub.f32 %v2647, %v2821
  %v2996 = vsub.f32 %v2648, %v2822
  %v2997 = vsub.f32 %v2649, %v2823
  %v2998 = vsub.f32 %v2650, %v2824
  %v2999 = vsub.f32 %v2651, %v2825
  %v3000 = vsub.f32 %v2652, %v2826
  %v3001 = vsub.f32 %v2653, %v2827
  %v3002 = vsub.f32 %v2654, %v2828
  %v3003 = vsub.f32 %v2655, %v2829
  %v3004 = vsub.f32 %v2656, %v2830
  %v3005 = vsub.f32 %v2657, %v2831
  %v3006 = vsub.f32 %v2658, %v2832
  %v3007 = vsub.f32 %v2659, %v2833
  %v3008 = vsub.f32 %v2660, %v2834
  %v3009 = vsub.f32 %v2661, %v2835
  %v3010 = vsub.f32 %v2662, %v2836
  %v3011 = vsub.f32 %v2663, %v2837
  %v3012 = vsub.f32 %v2664, %v2838
  %v3013 = vsub.f32 %v2665, %v2839
  %v3014 = vsub.f32 %v2666, %v2840
  %v3015 = vsub.f32 %v2667, %v2841
  %v3016 = vsub.f32 %v2668, %v2842
  %v3017 = vsub.f32 %v2669, %v2843
  %v3018 = vsub.f32 %v2670, %v2844
  %v3019 = vsub.f32 %v2671, %v2845
  %v3020 = vsub.f32 %v2672, %v2846
  %v3021 = vsub.f32 %v2673, %v2847
  %v3022 = vsub.f32 %v2674, %v2848
  %v3023 = vsub.f32 %v2675, %v2849
  %v3024 = vsub.f32 %v2676, %v2850
  %v3025 = vsub.f32 %v2677, %v2851
  %v3026 = vsub.f32 %v2678, %v2852
  %v3027 = vsub.f32 %v2679, %v2853
  %v3028 = vsub.f32 %v2680, %v2854
  %v3029 = vsub.f32 %v2681, %v2855
  %v3030 = vsub.f32 %v2682, %v2856
  %v3031 = vsub.f32 %v2683, %v2857
  %v3032 = vsub.f32 %v2684, %v2858
  %v3033 = vsub.f32 %v2685, %v2859
  %v3034 = vsub.f32 %v2686, %v2860
  %v3035 = vsub.f32 %v2687, %v2861
  %v3036 = vsub.f32 %v2688, %v2862
  %v3037 = vsub.f32 %v2689, %v2863
  %v3038 = vsub.f32 %v2690, %v2864
  %v3039 = vsub.f32 %v2691, %v2865
  %v3040 = vsub.f32 %v2692, %v2866
  %v3041 = vsub.f32 %v2693, %v2867
  %v3042 = vsub.f32 %v2694, %v2868
  %v3043 = vsub.f32 %v2695, %v2869
  %v3044 = vsub.f32 %v2696, %v2870
  %v3045 = vsub.f32 %v2697, %v2871
  %v3046 = vsub.f32 %v2698, %v2872
  %v3047 = vsub.f32 %v2699, %v2873
  %v3048 = vsub.f32 %v2700, %v2874
  %v3049 = vsub.f32 %v2701, %v2875
  %v3050 = vsub.f32 %v2702, %v2876
  %v3051 = vsub.f32 %v2703, %v2877
  %v3052 = vsub.f32 %v2704, %v2878
  %v3053 = vsub.f32 %v2705, %v2879
  %v3054 = vsub.f32 %v2706, %v2880
  %v3055 = vsub.f32 %v2707, %v2881
  %v3056 = vsub.f32 %v2708, %v2882
  %v3057 = vsub.f32 %v2709, %v2883
  %v3058 = vsub.f32 %v2710, %v2884
  %v3059 = vsub.f32 %v2711, %v2885
  %v3060 = vsub.f32 %v2712, %v2886
  %v3061 = vsub.f32 %v2713, %v2887
  %v3062 = vsub.f32 %v2714, %v2888
  %v3063 = vsub.f32 %v2715, %v2889
  %v3064 = vsub.f32 %v2716, %v2890
  %v3065 = vsub.f32 %v2717, %v2891
  %v3066 = vsub.f32 %v2718, %v2892
  %v3067 = vsub.f32 %v2719, %v2893
  %v3068 = vsub.f32 %v2720, %v2894
  %v3069 = vsub.f32 %v2721, %v2895
  %v3070 = vsub.f32 %v2722, %v2896
  %v3071 = vsub.f32 %v2723, %v2897
  %v3072 = vsub.f32 %v2724, %v2898
  %v3073 = vsub.f32 %v2725, %v2899
  %v3074 = vsub.f32 %v2726, %v2900
  %v3075 = vsub.f32 %v2727, %v2901
  %v3076 = vsub.f32 %v2728, %v2902
  %v3077 = vsub.f32 %v2729, %v2903
  %v3078 = vsub.f32 %v2730, %v2904
  %v3079 = vsub.f32 %v2731, %v2905
  %v3080 = vsub.f32 %v2732, %v2906
  %v3081 = vsub.f32 %v2733, %v2907
  %v3082 = vsub.f32 %v2734, %v2908
  %v3083 = vsub.f32 %v2735, %v2909
  %v3084 = vsub.f32 %v2736, %v2910
  %v3085 = vsub.f32 %v2737, %v2911
  %v3086 = vsub.f32 %v2738, %v2912
  %v3087 = vsub.f32 %v2739, %v2913
  %v3088 = vsub.f32 %v2740, %v2914
  %v3089 = vsub.f32 %v2741, %v2915
  %v3090 = vsub.f32 %v2742, %v2916
  %v3091 = vsub.f32 %v2743, %v2917
  %v3092 = vsub.f32 %v2744, %v2918
  %v3093 = vsub.f32 %v2745, %v2919
  %v3094 = vsub.f32 %v2746, %v2920
  %v3095 = vsub.f32 %v2747, %v2921
  %v3096 = vsub.f32 %v2748, %v2922
  %v3097 = vsub.f32 %v2749, %v2923
  %v3098 = vsub.f32 %v2750, %v2924
  %v3099 = vsub.f32 %v2751, %v2925
  %v3100 = vsub.f32 %v2752, %v2926
  %v3101 = vsub.f32 %v2753, %v2927
  %v3102 = vsub.f32 %v2754, %v2928
  %v3103 = vsub.f32 %v2755, %v2929
  %v3104 = vsub.f32 %v2756, %v2930
  %v3105 = vsub.f32 %v2757, %v2931
  %v3106 = vsub.f32 %v2758, %v2932
  %v3107 = vsub.f32 %v2759, %v2933
  %v3108 = vsub.f32 %v2760, %v2934
  %v3109 = vsub.f32 %v2761, %v2935
  %v3110 = vsub.f32 %v2762, %v2936
  %v3111 = vsub.f32 %v2763, %v2937
  %v3112 = vsub.f32 %v2764, %v2938
  %v3113 = vsub.f32 %v2765, %v2939
  %v3114 = vsub.f32 %v2766, %v2940
  %v3115 = vsub.f32 %v2767, %v2941
  %v3116 = vsub.f32 %v2768, %v2942
  %v3117 = vsub.f32 %v2769, %v2943
  %v3118 = vsub.f32 %v2770, %v2944
  %v3119 = vsub.f32 %v2771, %v2945
  %v3120 = vsub.f32 %v2772, %v2946
  %v3121 = vsub.f32 %v2773, %v2947
  %v3122 = vsub.f32 %v2774, %v2948
  %v3123 = vsub.f32 %v2775, %v2949
  %v3124 = vsub.f32 %v2776, %v2950
  %v3125 = vsub.f32 %v2777, %v2951
  %v3126 = vsub.f32 %v2778, %v2952
  %v3127 = vsub.f32 %v2779, %v2953
  %v3128 = vsub.f32 %v2780, %v2954
  %v3129 = vsub.f32 %v2781, %v2955
  %v3130 = vsub.f32 %v2782, %v2956
  %v3131 = vsub.f32 %v2783, %v2957
  %v3132 = vsub.f32 %v2784, %v2958
  %v3133 = vsub.f32 %v2785, %v2959
  %v3134 = vsub.f32 %v2786, %v2960
  %v3135 = vsub.f32 %v2787, %v2961
  %v3136 = vsub.f32 %v2788, %v2962
  %v3137 = vsub.f32 %v2789, %v2963
  %v3138 = vsub.f32 %v2790, %v2964
  %v3139 = vsub.f32 %v2791, %v2965
  %v3140 = vsub.f32 %v2792, %v2966
  %v3141 = vsub.f32 %v2793, %v2967
  %v3142 = vsub.f32 %v2794, %v2968
  %v3143 = vsub.f32 %v2795, %v2969
  %v3144 = vsub.f32 %v2796, %v2970
  %v3145 = vsub.f32 %v2797, %v2971
  %v3146 = vsub.f32 %v2798, %v2972
  %v3147 = vsub.f32 %v2799, %v2973
  %v3148 = vsub.f32 %v2800, %v2974
  %v3149 = vsub.f32 %v2801, %v2975
  %v3150 = vsub.f32 %v2802, %v2976
  %v3151 = vsub.f32 %v2803, %v2977
  %v3152 = vsub.f32 %v2804, %v2978
  %v3153 = vsub.f32 %v2805, %v2979
  %v3154 = vsub.f32 %v2806, %v2980
  %v3155 = vsub.f32 %v2807, %v2981
  %v3156 = vsub.f32 %v2808, %v2982
  %3158 = vset.pattern.permute.xlu0 0
  %3159 = vperm.xlu0 %3158, %v2461
  %v3160 = vpop.permute.xlu0 %3159
  %3163 = vset.pattern.permute.xlu0 0
  %3164 = vperm.xlu0 %3163, %v2462
  %v3165 = vpop.permute.xlu0 %3164
  %3168 = vset.pattern.permute.xlu0 0
  %3169 = vperm.xlu0 %3168, %v2463
  %v3170 = vpop.permute.xlu0 %3169
  %3173 = vset.pattern.permute.xlu0 0
  %3174 = vperm.xlu0 %3173, %v2464
  %v3175 = vpop.permute.xlu0 %3174
  %3178 = vset.pattern.permute.xlu0 0
  %3179 = vperm.xlu0 %3178, %v2465
  %v3180 = vpop.permute.xlu0 %3179
  %3183 = vset.pattern.permute.xlu0 0
  %3184 = vperm.xlu0 %3183, %v2466
  %v3185 = vpop.permute.xlu0 %3184
  %3188 = vset.pattern.permute.xlu0 0
  %3189 = vperm.xlu0 %3188, %v2467
  %v3190 = vpop.permute.xlu0 %3189
  %3193 = vset.pattern.permute.xlu0 0
  %3194 = vperm.xlu0 %3193, %v2468
  %v3195 = vpop.permute.xlu0 %3194
  %3198 = vset.pattern.permute.xlu0 0
  %3199 = vperm.xlu0 %3198, %v2469
  %v3200 = vpop.permute.xlu0 %3199
  %3203 = vset.pattern.permute.xlu0 0
  %3204 = vperm.xlu0 %3203, %v2470
  %v3205 = vpop.permute.xlu0 %3204
  %3208 = vset.pattern.permute.xlu0 0
  %3209 = vperm.xlu0 %3208, %v2471
  %v3210 = vpop.permute.xlu0 %3209
  %3213 = vset.pattern.permute.xlu0 0
  %3214 = vperm.xlu0 %3213, %v2472
  %v3215 = vpop.permute.xlu0 %3214
  %3218 = vset.pattern.permute.xlu0 0
  %3219 = vperm.xlu0 %3218, %v2473
  %v3220 = vpop.permute.xlu0 %3219
  %3223 = vset.pattern.permute.xlu0 0
  %3224 = vperm.xlu0 %3223, %v2474
  %v3225 = vpop.permute.xlu0 %3224
  %3228 = vset.pattern.permute.xlu0 0
  %3229 = vperm.xlu0 %3228, %v2475
  %v3230 = vpop.permute.xlu0 %3229
  %3233 = vset.pattern.permute.xlu0 0
  %3234 = vperm.xlu0 %3233, %v2476
  %v3235 = vpop.permute.xlu0 %3234
  %3238 = vset.pattern.permute.xlu0 0
  %3239 = vperm.xlu0 %3238, %v2477
  %v3240 = vpop.permute.xlu0 %3239
  %3243 = vset.pattern.permute.xlu0 0
  %3244 = vperm.xlu0 %3243, %v2478
  %v3245 = vpop.permute.xlu0 %3244
  %3248 = vset.pattern.permute.xlu0 0
  %3249 = vperm.xlu0 %3248, %v2479
  %v3250 = vpop.permute.xlu0 %3249
  %3253 = vset.pattern.permute.xlu0 0
  %3254 = vperm.xlu0 %3253, %v2480
  %v3255 = vpop.permute.xlu0 %3254
  %3258 = vset.pattern.permute.xlu0 0
  %3259 = vperm.xlu0 %3258, %v2481
  %v3260 = vpop.permute.xlu0 %3259
  %3263 = vset.pattern.permute.xlu0 0
  %3264 = vperm.xlu0 %3263, %v2482
  %v3265 = vpop.permute.xlu0 %3264
  %3268 = vset.pattern.permute.xlu0 0
  %3269 = vperm.xlu0 %3268, %v2483
  %v3270 = vpop.permute.xlu0 %3269
  %3273 = vset.pattern.permute.xlu0 0
  %3274 = vperm.xlu0 %3273, %v2484
  %v3275 = vpop.permute.xlu0 %3274
  %3278 = vset.pattern.permute.xlu0 0
  %3279 = vperm.xlu0 %3278, %v2485
  %v3280 = vpop.permute.xlu0 %3279
  %3283 = vset.pattern.permute.xlu0 0
  %3284 = vperm.xlu0 %3283, %v2486
  %v3285 = vpop.permute.xlu0 %3284
  %3288 = vset.pattern.permute.xlu0 0
  %3289 = vperm.xlu0 %3288, %v2487
  %v3290 = vpop.permute.xlu0 %3289
  %3293 = vset.pattern.permute.xlu0 0
  %3294 = vperm.xlu0 %3293, %v2488
  %v3295 = vpop.permute.xlu0 %3294
  %3298 = vset.pattern.permute.xlu0 0
  %3299 = vperm.xlu0 %3298, %v2489
  %v3300 = vpop.permute.xlu0 %3299
  %3303 = vset.pattern.permute.xlu0 0
  %3304 = vperm.xlu0 %3303, %v2490
  %v3305 = vpop.permute.xlu0 %3304
  %3308 = vset.pattern.permute.xlu0 0
  %3309 = vperm.xlu0 %3308, %v2491
  %v3310 = vpop.permute.xlu0 %3309
  %3313 = vset.pattern.permute.xlu0 0
  %3314 = vperm.xlu0 %3313, %v2492
  %v3315 = vpop.permute.xlu0 %3314
  %3318 = vset.pattern.permute.xlu0 0
  %3319 = vperm.xlu0 %3318, %v2493
  %v3320 = vpop.permute.xlu0 %3319
  %3323 = vset.pattern.permute.xlu0 0
  %3324 = vperm.xlu0 %3323, %v2494
  %v3325 = vpop.permute.xlu0 %3324
  %3328 = vset.pattern.permute.xlu0 0
  %3329 = vperm.xlu0 %3328, %v2495
  %v3330 = vpop.permute.xlu0 %3329
  %3333 = vset.pattern.permute.xlu0 0
  %3334 = vperm.xlu0 %3333, %v2496
  %v3335 = vpop.permute.xlu0 %3334
  %3338 = vset.pattern.permute.xlu0 0
  %3339 = vperm.xlu0 %3338, %v2497
  %v3340 = vpop.permute.xlu0 %3339
  %3343 = vset.pattern.permute.xlu0 0
  %3344 = vperm.xlu0 %3343, %v2498
  %v3345 = vpop.permute.xlu0 %3344
  %3348 = vset.pattern.permute.xlu0 0
  %3349 = vperm.xlu0 %3348, %v2499
  %v3350 = vpop.permute.xlu0 %3349
  %3353 = vset.pattern.permute.xlu0 0
  %3354 = vperm.xlu0 %3353, %v2500
  %v3355 = vpop.permute.xlu0 %3354
  %3358 = vset.pattern.permute.xlu0 0
  %3359 = vperm.xlu0 %3358, %v2501
  %v3360 = vpop.permute.xlu0 %3359
  %3363 = vset.pattern.permute.xlu0 0
  %3364 = vperm.xlu0 %3363, %v2502
  %v3365 = vpop.permute.xlu0 %3364
  %3368 = vset.pattern.permute.xlu0 0
  %3369 = vperm.xlu0 %3368, %v2503
  %v3370 = vpop.permute.xlu0 %3369
  %3373 = vset.pattern.permute.xlu0 0
  %3374 = vperm.xlu0 %3373, %v2504
  %v3375 = vpop.permute.xlu0 %3374
  %3378 = vset.pattern.permute.xlu0 0
  %3379 = vperm.xlu0 %3378, %v2505
  %v3380 = vpop.permute.xlu0 %3379
  %3383 = vset.pattern.permute.xlu0 0
  %3384 = vperm.xlu0 %3383, %v2506
  %v3385 = vpop.permute.xlu0 %3384
  %3388 = vset.pattern.permute.xlu0 0
  %3389 = vperm.xlu0 %3388, %v2507
  %v3390 = vpop.permute.xlu0 %3389
  %3393 = vset.pattern.permute.xlu0 0
  %3394 = vperm.xlu0 %3393, %v2508
  %v3395 = vpop.permute.xlu0 %3394
  %3398 = vset.pattern.permute.xlu0 0
  %3399 = vperm.xlu0 %3398, %v2509
  %v3400 = vpop.permute.xlu0 %3399
  %3403 = vset.pattern.permute.xlu0 0
  %3404 = vperm.xlu0 %3403, %v2510
  %v3405 = vpop.permute.xlu0 %3404
  %3408 = vset.pattern.permute.xlu0 0
  %3409 = vperm.xlu0 %3408, %v2511
  %v3410 = vpop.permute.xlu0 %3409
  %3413 = vset.pattern.permute.xlu0 0
  %3414 = vperm.xlu0 %3413, %v2512
  %v3415 = vpop.permute.xlu0 %3414
  %3418 = vset.pattern.permute.xlu0 0
  %3419 = vperm.xlu0 %3418, %v2513
  %v3420 = vpop.permute.xlu0 %3419
  %3423 = vset.pattern.permute.xlu0 0
  %3424 = vperm.xlu0 %3423, %v2514
  %v3425 = vpop.permute.xlu0 %3424
  %3428 = vset.pattern.permute.xlu0 0
  %3429 = vperm.xlu0 %3428, %v2515
  %v3430 = vpop.permute.xlu0 %3429
  %3433 = vset.pattern.permute.xlu0 0
  %3434 = vperm.xlu0 %3433, %v2516
  %v3435 = vpop.permute.xlu0 %3434
  %3438 = vset.pattern.permute.xlu0 0
  %3439 = vperm.xlu0 %3438, %v2517
  %v3440 = vpop.permute.xlu0 %3439
  %3443 = vset.pattern.permute.xlu0 0
  %3444 = vperm.xlu0 %3443, %v2518
  %v3445 = vpop.permute.xlu0 %3444
  %3448 = vset.pattern.permute.xlu0 0
  %3449 = vperm.xlu0 %3448, %v2519
  %v3450 = vpop.permute.xlu0 %3449
  %3453 = vset.pattern.permute.xlu0 0
  %3454 = vperm.xlu0 %3453, %v2520
  %v3455 = vpop.permute.xlu0 %3454
  %3458 = vset.pattern.permute.xlu0 0
  %3459 = vperm.xlu0 %3458, %v2521
  %v3460 = vpop.permute.xlu0 %3459
  %3463 = vset.pattern.permute.xlu0 0
  %3464 = vperm.xlu0 %3463, %v2522
  %v3465 = vpop.permute.xlu0 %3464
  %3468 = vset.pattern.permute.xlu0 0
  %3469 = vperm.xlu0 %3468, %v2523
  %v3470 = vpop.permute.xlu0 %3469
  %3473 = vset.pattern.permute.xlu0 0
  %3474 = vperm.xlu0 %3473, %v2524
  %v3475 = vpop.permute.xlu0 %3474
  %3478 = vset.pattern.permute.xlu0 0
  %3479 = vperm.xlu0 %3478, %v2525
  %v3480 = vpop.permute.xlu0 %3479
  %3483 = vset.pattern.permute.xlu0 0
  %3484 = vperm.xlu0 %3483, %v2526
  %v3485 = vpop.permute.xlu0 %3484
  %3488 = vset.pattern.permute.xlu0 0
  %3489 = vperm.xlu0 %3488, %v2527
  %v3490 = vpop.permute.xlu0 %3489
  %3493 = vset.pattern.permute.xlu0 0
  %3494 = vperm.xlu0 %3493, %v2528
  %v3495 = vpop.permute.xlu0 %3494
  %3498 = vset.pattern.permute.xlu0 0
  %3499 = vperm.xlu0 %3498, %v2529
  %v3500 = vpop.permute.xlu0 %3499
  %3503 = vset.pattern.permute.xlu0 0
  %3504 = vperm.xlu0 %3503, %v2530
  %v3505 = vpop.permute.xlu0 %3504
  %3508 = vset.pattern.permute.xlu0 0
  %3509 = vperm.xlu0 %3508, %v2531
  %v3510 = vpop.permute.xlu0 %3509
  %3513 = vset.pattern.permute.xlu0 0
  %3514 = vperm.xlu0 %3513, %v2532
  %v3515 = vpop.permute.xlu0 %3514
  %3518 = vset.pattern.permute.xlu0 0
  %3519 = vperm.xlu0 %3518, %v2533
  %v3520 = vpop.permute.xlu0 %3519
  %3523 = vset.pattern.permute.xlu0 0
  %3524 = vperm.xlu0 %3523, %v2534
  %v3525 = vpop.permute.xlu0 %3524
  %3528 = vset.pattern.permute.xlu0 0
  %3529 = vperm.xlu0 %3528, %v2535
  %v3530 = vpop.permute.xlu0 %3529
  %3533 = vset.pattern.permute.xlu0 0
  %3534 = vperm.xlu0 %3533, %v2536
  %v3535 = vpop.permute.xlu0 %3534
  %3538 = vset.pattern.permute.xlu0 0
  %3539 = vperm.xlu0 %3538, %v2537
  %v3540 = vpop.permute.xlu0 %3539
  %3543 = vset.pattern.permute.xlu0 0
  %3544 = vperm.xlu0 %3543, %v2538
  %v3545 = vpop.permute.xlu0 %3544
  %3548 = vset.pattern.permute.xlu0 0
  %3549 = vperm.xlu0 %3548, %v2539
  %v3550 = vpop.permute.xlu0 %3549
  %3553 = vset.pattern.permute.xlu0 0
  %3554 = vperm.xlu0 %3553, %v2540
  %v3555 = vpop.permute.xlu0 %3554
  %3558 = vset.pattern.permute.xlu0 0
  %3559 = vperm.xlu0 %3558, %v2541
  %v3560 = vpop.permute.xlu0 %3559
  %3563 = vset.pattern.permute.xlu0 0
  %3564 = vperm.xlu0 %3563, %v2542
  %v3565 = vpop.permute.xlu0 %3564
  %3568 = vset.pattern.permute.xlu0 0
  %3569 = vperm.xlu0 %3568, %v2543
  %v3570 = vpop.permute.xlu0 %3569
  %3573 = vset.pattern.permute.xlu0 0
  %3574 = vperm.xlu0 %3573, %v2544
  %v3575 = vpop.permute.xlu0 %3574
  %3578 = vset.pattern.permute.xlu0 0
  %3579 = vperm.xlu0 %3578, %v2545
  %v3580 = vpop.permute.xlu0 %3579
  %3583 = vset.pattern.permute.xlu0 0
  %3584 = vperm.xlu0 %3583, %v2546
  %v3585 = vpop.permute.xlu0 %3584
  %3588 = vset.pattern.permute.xlu0 0
  %3589 = vperm.xlu0 %3588, %v2547
  %v3590 = vpop.permute.xlu0 %3589
  %3593 = vset.pattern.permute.xlu0 0
  %3594 = vperm.xlu0 %3593, %v2548
  %v3595 = vpop.permute.xlu0 %3594
  %3598 = vset.pattern.permute.xlu0 0
  %3599 = vperm.xlu0 %3598, %v2549
  %v3600 = vpop.permute.xlu0 %3599
  %3603 = vset.pattern.permute.xlu0 0
  %3604 = vperm.xlu0 %3603, %v2550
  %v3605 = vpop.permute.xlu0 %3604
  %3608 = vset.pattern.permute.xlu0 0
  %3609 = vperm.xlu0 %3608, %v2551
  %v3610 = vpop.permute.xlu0 %3609
  %3613 = vset.pattern.permute.xlu0 0
  %3614 = vperm.xlu0 %3613, %v2552
  %v3615 = vpop.permute.xlu0 %3614
  %3618 = vset.pattern.permute.xlu0 0
  %3619 = vperm.xlu0 %3618, %v2553
  %v3620 = vpop.permute.xlu0 %3619
  %3623 = vset.pattern.permute.xlu0 0
  %3624 = vperm.xlu0 %3623, %v2554
  %v3625 = vpop.permute.xlu0 %3624
  %3628 = vset.pattern.permute.xlu0 0
  %3629 = vperm.xlu0 %3628, %v2555
  %v3630 = vpop.permute.xlu0 %3629
  %3633 = vset.pattern.permute.xlu0 0
  %3634 = vperm.xlu0 %3633, %v2556
  %v3635 = vpop.permute.xlu0 %3634
  %3638 = vset.pattern.permute.xlu0 0
  %3639 = vperm.xlu0 %3638, %v2557
  %v3640 = vpop.permute.xlu0 %3639
  %3643 = vset.pattern.permute.xlu0 0
  %3644 = vperm.xlu0 %3643, %v2558
  %v3645 = vpop.permute.xlu0 %3644
  %3648 = vset.pattern.permute.xlu0 0
  %3649 = vperm.xlu0 %3648, %v2559
  %v3650 = vpop.permute.xlu0 %3649
  %3653 = vset.pattern.permute.xlu0 0
  %3654 = vperm.xlu0 %3653, %v2560
  %v3655 = vpop.permute.xlu0 %3654
  %3658 = vset.pattern.permute.xlu0 0
  %3659 = vperm.xlu0 %3658, %v2561
  %v3660 = vpop.permute.xlu0 %3659
  %3663 = vset.pattern.permute.xlu0 0
  %3664 = vperm.xlu0 %3663, %v2562
  %v3665 = vpop.permute.xlu0 %3664
  %3668 = vset.pattern.permute.xlu0 0
  %3669 = vperm.xlu0 %3668, %v2563
  %v3670 = vpop.permute.xlu0 %3669
  %3673 = vset.pattern.permute.xlu0 0
  %3674 = vperm.xlu0 %3673, %v2564
  %v3675 = vpop.permute.xlu0 %3674
  %3678 = vset.pattern.permute.xlu0 0
  %3679 = vperm.xlu0 %3678, %v2565
  %v3680 = vpop.permute.xlu0 %3679
  %3683 = vset.pattern.permute.xlu0 0
  %3684 = vperm.xlu0 %3683, %v2566
  %v3685 = vpop.permute.xlu0 %3684
  %3688 = vset.pattern.permute.xlu0 0
  %3689 = vperm.xlu0 %3688, %v2567
  %v3690 = vpop.permute.xlu0 %3689
  %3693 = vset.pattern.permute.xlu0 0
  %3694 = vperm.xlu0 %3693, %v2568
  %v3695 = vpop.permute.xlu0 %3694
  %3698 = vset.pattern.permute.xlu0 0
  %3699 = vperm.xlu0 %3698, %v2569
  %v3700 = vpop.permute.xlu0 %3699
  %3703 = vset.pattern.permute.xlu0 0
  %3704 = vperm.xlu0 %3703, %v2570
  %v3705 = vpop.permute.xlu0 %3704
  %3708 = vset.pattern.permute.xlu0 0
  %3709 = vperm.xlu0 %3708, %v2571
  %v3710 = vpop.permute.xlu0 %3709
  %3713 = vset.pattern.permute.xlu0 0
  %3714 = vperm.xlu0 %3713, %v2572
  %v3715 = vpop.permute.xlu0 %3714
  %3718 = vset.pattern.permute.xlu0 0
  %3719 = vperm.xlu0 %3718, %v2573
  %v3720 = vpop.permute.xlu0 %3719
  %3723 = vset.pattern.permute.xlu0 0
  %3724 = vperm.xlu0 %3723, %v2574
  %v3725 = vpop.permute.xlu0 %3724
  %3728 = vset.pattern.permute.xlu0 0
  %3729 = vperm.xlu0 %3728, %v2575
  %v3730 = vpop.permute.xlu0 %3729
  %3733 = vset.pattern.permute.xlu0 0
  %3734 = vperm.xlu0 %3733, %v2576
  %v3735 = vpop.permute.xlu0 %3734
  %3738 = vset.pattern.permute.xlu0 0
  %3739 = vperm.xlu0 %3738, %v2577
  %v3740 = vpop.permute.xlu0 %3739
  %3743 = vset.pattern.permute.xlu0 0
  %3744 = vperm.xlu0 %3743, %v2578
  %v3745 = vpop.permute.xlu0 %3744
  %3748 = vset.pattern.permute.xlu0 0
  %3749 = vperm.xlu0 %3748, %v2579
  %v3750 = vpop.permute.xlu0 %3749
  %3753 = vset.pattern.permute.xlu0 0
  %3754 = vperm.xlu0 %3753, %v2580
  %v3755 = vpop.permute.xlu0 %3754
  %3758 = vset.pattern.permute.xlu0 0
  %3759 = vperm.xlu0 %3758, %v2581
  %v3760 = vpop.permute.xlu0 %3759
  %3763 = vset.pattern.permute.xlu0 0
  %3764 = vperm.xlu0 %3763, %v2582
  %v3765 = vpop.permute.xlu0 %3764
  %3768 = vset.pattern.permute.xlu0 0
  %3769 = vperm.xlu0 %3768, %v2583
  %v3770 = vpop.permute.xlu0 %3769
  %3773 = vset.pattern.permute.xlu0 0
  %3774 = vperm.xlu0 %3773, %v2584
  %v3775 = vpop.permute.xlu0 %3774
  %3778 = vset.pattern.permute.xlu0 0
  %3779 = vperm.xlu0 %3778, %v2585
  %v3780 = vpop.permute.xlu0 %3779
  %3783 = vset.pattern.permute.xlu0 0
  %3784 = vperm.xlu0 %3783, %v2586
  %v3785 = vpop.permute.xlu0 %3784
  %3788 = vset.pattern.permute.xlu0 0
  %3789 = vperm.xlu0 %3788, %v2587
  %v3790 = vpop.permute.xlu0 %3789
  %3793 = vset.pattern.permute.xlu0 0
  %3794 = vperm.xlu0 %3793, %v2588
  %v3795 = vpop.permute.xlu0 %3794
  %3798 = vset.pattern.permute.xlu0 0
  %3799 = vperm.xlu0 %3798, %v2589
  %v3800 = vpop.permute.xlu0 %3799
  %3803 = vset.pattern.permute.xlu0 0
  %3804 = vperm.xlu0 %3803, %v2590
  %v3805 = vpop.permute.xlu0 %3804
  %3808 = vset.pattern.permute.xlu0 0
  %3809 = vperm.xlu0 %3808, %v2591
  %v3810 = vpop.permute.xlu0 %3809
  %3813 = vset.pattern.permute.xlu0 0
  %3814 = vperm.xlu0 %3813, %v2592
  %v3815 = vpop.permute.xlu0 %3814
  %3818 = vset.pattern.permute.xlu0 0
  %3819 = vperm.xlu0 %3818, %v2593
  %v3820 = vpop.permute.xlu0 %3819
  %3823 = vset.pattern.permute.xlu0 0
  %3824 = vperm.xlu0 %3823, %v2594
  %v3825 = vpop.permute.xlu0 %3824
  %3828 = vset.pattern.permute.xlu0 0
  %3829 = vperm.xlu0 %3828, %v2595
  %v3830 = vpop.permute.xlu0 %3829
  %3833 = vset.pattern.permute.xlu0 0
  %3834 = vperm.xlu0 %3833, %v2596
  %v3835 = vpop.permute.xlu0 %3834
  %3838 = vset.pattern.permute.xlu0 0
  %3839 = vperm.xlu0 %3838, %v2597
  %v3840 = vpop.permute.xlu0 %3839
  %3843 = vset.pattern.permute.xlu0 0
  %3844 = vperm.xlu0 %3843, %v2598
  %v3845 = vpop.permute.xlu0 %3844
  %3848 = vset.pattern.permute.xlu0 0
  %3849 = vperm.xlu0 %3848, %v2599
  %v3850 = vpop.permute.xlu0 %3849
  %3853 = vset.pattern.permute.xlu0 0
  %3854 = vperm.xlu0 %3853, %v2600
  %v3855 = vpop.permute.xlu0 %3854
  %3858 = vset.pattern.permute.xlu0 0
  %3859 = vperm.xlu0 %3858, %v2601
  %v3860 = vpop.permute.xlu0 %3859
  %3863 = vset.pattern.permute.xlu0 0
  %3864 = vperm.xlu0 %3863, %v2602
  %v3865 = vpop.permute.xlu0 %3864
  %3868 = vset.pattern.permute.xlu0 0
  %3869 = vperm.xlu0 %3868, %v2603
  %v3870 = vpop.permute.xlu0 %3869
  %3873 = vset.pattern.permute.xlu0 0
  %3874 = vperm.xlu0 %3873, %v2604
  %v3875 = vpop.permute.xlu0 %3874
  %3878 = vset.pattern.permute.xlu0 0
  %3879 = vperm.xlu0 %3878, %v2605
  %v3880 = vpop.permute.xlu0 %3879
  %3883 = vset.pattern.permute.xlu0 0
  %3884 = vperm.xlu0 %3883, %v2606
  %v3885 = vpop.permute.xlu0 %3884
  %3888 = vset.pattern.permute.xlu0 0
  %3889 = vperm.xlu0 %3888, %v2607
  %v3890 = vpop.permute.xlu0 %3889
  %3893 = vset.pattern.permute.xlu0 0
  %3894 = vperm.xlu0 %3893, %v2608
  %v3895 = vpop.permute.xlu0 %3894
  %3898 = vset.pattern.permute.xlu0 0
  %3899 = vperm.xlu0 %3898, %v2609
  %v3900 = vpop.permute.xlu0 %3899
  %3903 = vset.pattern.permute.xlu0 0
  %3904 = vperm.xlu0 %3903, %v2610
  %v3905 = vpop.permute.xlu0 %3904
  %3908 = vset.pattern.permute.xlu0 0
  %3909 = vperm.xlu0 %3908, %v2611
  %v3910 = vpop.permute.xlu0 %3909
  %3913 = vset.pattern.permute.xlu0 0
  %3914 = vperm.xlu0 %3913, %v2612
  %v3915 = vpop.permute.xlu0 %3914
  %3918 = vset.pattern.permute.xlu0 0
  %3919 = vperm.xlu0 %3918, %v2613
  %v3920 = vpop.permute.xlu0 %3919
  %3923 = vset.pattern.permute.xlu0 0
  %3924 = vperm.xlu0 %3923, %v2614
  %v3925 = vpop.permute.xlu0 %3924
  %3928 = vset.pattern.permute.xlu0 0
  %3929 = vperm.xlu0 %3928, %v2615
  %v3930 = vpop.permute.xlu0 %3929
  %3933 = vset.pattern.permute.xlu0 0
  %3934 = vperm.xlu0 %3933, %v2616
  %v3935 = vpop.permute.xlu0 %3934
  %3938 = vset.pattern.permute.xlu0 0
  %3939 = vperm.xlu0 %3938, %v2617
  %v3940 = vpop.permute.xlu0 %3939
  %3943 = vset.pattern.permute.xlu0 0
  %3944 = vperm.xlu0 %3943, %v2618
  %v3945 = vpop.permute.xlu0 %3944
  %3948 = vset.pattern.permute.xlu0 0
  %3949 = vperm.xlu0 %3948, %v2619
  %v3950 = vpop.permute.xlu0 %3949
  %3953 = vset.pattern.permute.xlu0 0
  %3954 = vperm.xlu0 %3953, %v2620
  %v3955 = vpop.permute.xlu0 %3954
  %3958 = vset.pattern.permute.xlu0 0
  %3959 = vperm.xlu0 %3958, %v2621
  %v3960 = vpop.permute.xlu0 %3959
  %3963 = vset.pattern.permute.xlu0 0
  %3964 = vperm.xlu0 %3963, %v2622
  %v3965 = vpop.permute.xlu0 %3964
  %3968 = vset.pattern.permute.xlu0 0
  %3969 = vperm.xlu0 %3968, %v2623
  %v3970 = vpop.permute.xlu0 %3969
  %3973 = vset.pattern.permute.xlu0 0
  %3974 = vperm.xlu0 %3973, %v2624
  %v3975 = vpop.permute.xlu0 %3974
  %3978 = vset.pattern.permute.xlu0 0
  %3979 = vperm.xlu0 %3978, %v2625
  %v3980 = vpop.permute.xlu0 %3979
  %3983 = vset.pattern.permute.xlu0 0
  %3984 = vperm.xlu0 %3983, %v2626
  %v3985 = vpop.permute.xlu0 %3984
  %3988 = vset.pattern.permute.xlu0 0
  %3989 = vperm.xlu0 %3988, %v2627
  %v3990 = vpop.permute.xlu0 %3989
  %3993 = vset.pattern.permute.xlu0 0
  %3994 = vperm.xlu0 %3993, %v2628
  %v3995 = vpop.permute.xlu0 %3994
  %3998 = vset.pattern.permute.xlu0 0
  %3999 = vperm.xlu0 %3998, %v2629
  %v4000 = vpop.permute.xlu0 %3999
  %4003 = vset.pattern.permute.xlu0 0
  %4004 = vperm.xlu0 %4003, %v2630
  %v4005 = vpop.permute.xlu0 %4004
  %4008 = vset.pattern.permute.xlu0 0
  %4009 = vperm.xlu0 %4008, %v2631
  %v4010 = vpop.permute.xlu0 %4009
  %4013 = vset.pattern.permute.xlu0 0
  %4014 = vperm.xlu0 %4013, %v2632
  %v4015 = vpop.permute.xlu0 %4014
  %4018 = vset.pattern.permute.xlu0 0
  %4019 = vperm.xlu0 %4018, %v2633
  %v4020 = vpop.permute.xlu0 %4019
  %4023 = vset.pattern.permute.xlu0 0
  %4024 = vperm.xlu0 %4023, %v2634
  %v4025 = vpop.permute.xlu0 %4024
  %v4027 = vmul.f32 %v3160, %v24
  %v4028 = vmul.f32 %v3165, %v25
  %v4029 = vmul.f32 %v3170, %v26
  %v4030 = vmul.f32 %v3175, %v27
  %v4031 = vmul.f32 %v3180, %v28
  %v4032 = vmul.f32 %v3185, %v29
  %v4033 = vmul.f32 %v3190, %v30
  %v4034 = vmul.f32 %v3195, %v31
  %v4035 = vmul.f32 %v3200, %v32
  %v4036 = vmul.f32 %v3205, %v33
  %v4037 = vmul.f32 %v3210, %v34
  %v4038 = vmul.f32 %v3215, %v35
  %v4039 = vmul.f32 %v3220, %v36
  %v4040 = vmul.f32 %v3225, %v37
  %v4041 = vmul.f32 %v3230, %v38
  %v4042 = vmul.f32 %v3235, %v39
  %v4043 = vmul.f32 %v3240, %v40
  %v4044 = vmul.f32 %v3245, %v41
  %v4045 = vmul.f32 %v3250, %v42
  %v4046 = vmul.f32 %v3255, %v43
  %v4047 = vmul.f32 %v3260, %v44
  %v4048 = vmul.f32 %v3265, %v45
  %v4049 = vmul.f32 %v3270, %v46
  %v4050 = vmul.f32 %v3275, %v47
  %v4051 = vmul.f32 %v3280, %v48
  %v4052 = vmul.f32 %v3285, %v49
  %v4053 = vmul.f32 %v3290, %v50
  %v4054 = vmul.f32 %v3295, %v51
  %v4055 = vmul.f32 %v3300, %v52
  %v4056 = vmul.f32 %v3305, %v53
  %v4057 = vmul.f32 %v3310, %v54
  %v4058 = vmul.f32 %v3315, %v55
  %v4059 = vmul.f32 %v3320, %v56
  %v4060 = vmul.f32 %v3325, %v57
  %v4061 = vmul.f32 %v3330, %v58
  %v4062 = vmul.f32 %v3335, %v59
  %v4063 = vmul.f32 %v3340, %v60
  %v4064 = vmul.f32 %v3345, %v61
  %v4065 = vmul.f32 %v3350, %v62
  %v4066 = vmul.f32 %v3355, %v63
  %v4067 = vmul.f32 %v3360, %v64
  %v4068 = vmul.f32 %v3365, %v65
  %v4069 = vmul.f32 %v3370, %v66
  %v4070 = vmul.f32 %v3375, %v67
  %v4071 = vmul.f32 %v3380, %v68
  %v4072 = vmul.f32 %v3385, %v69
  %v4073 = vmul.f32 %v3390, %v70
  %v4074 = vmul.f32 %v3395, %v71
  %v4075 = vmul.f32 %v3400, %v72
  %v4076 = vmul.f32 %v3405, %v73
  %v4077 = vmul.f32 %v3410, %v74
  %v4078 = vmul.f32 %v3415, %v75
  %v4079 = vmul.f32 %v3420, %v76
  %v4080 = vmul.f32 %v3425, %v77
  %v4081 = vmul.f32 %v3430, %v78
  %v4082 = vmul.f32 %v3435, %v79
  %v4083 = vmul.f32 %v3440, %v80
  %v4084 = vmul.f32 %v3445, %v81
  %v4085 = vmul.f32 %v3450, %v82
  %v4086 = vmul.f32 %v3455, %v83
  %v4087 = vmul.f32 %v3460, %v84
  %v4088 = vmul.f32 %v3465, %v85
  %v4089 = vmul.f32 %v3470, %v86
  %v4090 = vmul.f32 %v3475, %v87
  %v4091 = vmul.f32 %v3480, %v88
  %v4092 = vmul.f32 %v3485, %v89
  %v4093 = vmul.f32 %v3490, %v90
  %v4094 = vmul.f32 %v3495, %v91
  %v4095 = vmul.f32 %v3500, %v92
  %v4096 = vmul.f32 %v3505, %v93
  %v4097 = vmul.f32 %v3510, %v94
  %v4098 = vmul.f32 %v3515, %v95
  %v4099 = vmul.f32 %v3520, %v96
  %v4100 = vmul.f32 %v3525, %v97
  %v4101 = vmul.f32 %v3530, %v98
  %v4102 = vmul.f32 %v3535, %v99
  %v4103 = vmul.f32 %v3540, %v100
  %v4104 = vmul.f32 %v3545, %v101
  %v4105 = vmul.f32 %v3550, %v102
  %v4106 = vmul.f32 %v3555, %v103
  %v4107 = vmul.f32 %v3560, %v104
  %v4108 = vmul.f32 %v3565, %v105
  %v4109 = vmul.f32 %v3570, %v106
  %v4110 = vmul.f32 %v3575, %v107
  %v4111 = vmul.f32 %v3580, %v108
  %v4112 = vmul.f32 %v3585, %v109
  %v4113 = vmul.f32 %v3590, %v110
  %v4114 = vmul.f32 %v3595, %v111
  %v4115 = vmul.f32 %v3600, %v112
  %v4116 = vmul.f32 %v3605, %v113
  %v4117 = vmul.f32 %v3610, %v114
  %v4118 = vmul.f32 %v3615, %v115
  %v4119 = vmul.f32 %v3620, %v116
  %v4120 = vmul.f32 %v3625, %v117
  %v4121 = vmul.f32 %v3630, %v118
  %v4122 = vmul.f32 %v3635, %v119
  %v4123 = vmul.f32 %v3640, %v120
  %v4124 = vmul.f32 %v3645, %v121
  %v4125 = vmul.f32 %v3650, %v122
  %v4126 = vmul.f32 %v3655, %v123
  %v4127 = vmul.f32 %v3660, %v124
  %v4128 = vmul.f32 %v3665, %v125
  %v4129 = vmul.f32 %v3670, %v126
  %v4130 = vmul.f32 %v3675, %v127
  %v4131 = vmul.f32 %v3680, %v128
  %v4132 = vmul.f32 %v3685, %v129
  %v4133 = vmul.f32 %v3690, %v130
  %v4134 = vmul.f32 %v3695, %v131
  %v4135 = vmul.f32 %v3700, %v132
  %v4136 = vmul.f32 %v3705, %v133
  %v4137 = vmul.f32 %v3710, %v134
  %v4138 = vmul.f32 %v3715, %v135
  %v4139 = vmul.f32 %v3720, %v136
  %v4140 = vmul.f32 %v3725, %v137
  %v4141 = vmul.f32 %v3730, %v138
  %v4142 = vmul.f32 %v3735, %v139
  %v4143 = vmul.f32 %v3740, %v140
  %v4144 = vmul.f32 %v3745, %v141
  %v4145 = vmul.f32 %v3750, %v142
  %v4146 = vmul.f32 %v3755, %v143
  %v4147 = vmul.f32 %v3760, %v144
  %v4148 = vmul.f32 %v3765, %v145
  %v4149 = vmul.f32 %v3770, %v146
  %v4150 = vmul.f32 %v3775, %v147
  %v4151 = vmul.f32 %v3780, %v148
  %v4152 = vmul.f32 %v3785, %v149
  %v4153 = vmul.f32 %v3790, %v150
  %v4154 = vmul.f32 %v3795, %v151
  %v4155 = vmul.f32 %v3800, %v152
  %v4156 = vmul.f32 %v3805, %v153
  %v4157 = vmul.f32 %v3810, %v154
  %v4158 = vmul.f32 %v3815, %v155
  %v4159 = vmul.f32 %v3820, %v156
  %v4160 = vmul.f32 %v3825, %v157
  %v4161 = vmul.f32 %v3830, %v158
  %v4162 = vmul.f32 %v3835, %v159
  %v4163 = vmul.f32 %v3840, %v160
  %v4164 = vmul.f32 %v3845, %v161
  %v4165 = vmul.f32 %v3850, %v162
  %v4166 = vmul.f32 %v3855, %v163
  %v4167 = vmul.f32 %v3860, %v164
  %v4168 = vmul.f32 %v3865, %v165
  %v4169 = vmul.f32 %v3870, %v166
  %v4170 = vmul.f32 %v3875, %v167
  %v4171 = vmul.f32 %v3880, %v168
  %v4172 = vmul.f32 %v3885, %v169
  %v4173 = vmul.f32 %v3890, %v170
  %v4174 = vmul.f32 %v3895, %v171
  %v4175 = vmul.f32 %v3900, %v172
  %v4176 = vmul.f32 %v3905, %v173
  %v4177 = vmul.f32 %v3910, %v174
  %v4178 = vmul.f32 %v3915, %v175
  %v4179 = vmul.f32 %v3920, %v176
  %v4180 = vmul.f32 %v3925, %v177
  %v4181 = vmul.f32 %v3930, %v178
  %v4182 = vmul.f32 %v3935, %v179
  %v4183 = vmul.f32 %v3940, %v180
  %v4184 = vmul.f32 %v3945, %v181
  %v4185 = vmul.f32 %v3950, %v182
  %v4186 = vmul.f32 %v3955, %v183
  %v4187 = vmul.f32 %v3960, %v184
  %v4188 = vmul.f32 %v3965, %v185
  %v4189 = vmul.f32 %v3970, %v186
  %v4190 = vmul.f32 %v3975, %v187
  %v4191 = vmul.f32 %v3980, %v188
  %v4192 = vmul.f32 %v3985, %v189
  %v4193 = vmul.f32 %v3990, %v190
  %v4194 = vmul.f32 %v3995, %v191
  %v4195 = vmul.f32 %v4000, %v192
  %v4196 = vmul.f32 %v4005, %v193
  %v4197 = vmul.f32 %v4010, %v194
  %v4198 = vmul.f32 %v4015, %v195
  %v4199 = vmul.f32 %v4020, %v196
  %v4200 = vmul.f32 %v4025, %v197
  %4202 = vset.pattern.permute.xlu0 0
  %4203 = vperm.xlu0 %4202, %v2983
  %v4204 = vpop.permute.xlu0 %4203
  %4207 = vset.pattern.permute.xlu0 0
  %4208 = vperm.xlu0 %4207, %v2984
  %v4209 = vpop.permute.xlu0 %4208
  %4212 = vset.pattern.permute.xlu0 0
  %4213 = vperm.xlu0 %4212, %v2985
  %v4214 = vpop.permute.xlu0 %4213
  %4217 = vset.pattern.permute.xlu0 0
  %4218 = vperm.xlu0 %4217, %v2986
  %v4219 = vpop.permute.xlu0 %4218
  %4222 = vset.pattern.permute.xlu0 0
  %4223 = vperm.xlu0 %4222, %v2987
  %v4224 = vpop.permute.xlu0 %4223
  %4227 = vset.pattern.permute.xlu0 0
  %4228 = vperm.xlu0 %4227, %v2988
  %v4229 = vpop.permute.xlu0 %4228
  %4232 = vset.pattern.permute.xlu0 0
  %4233 = vperm.xlu0 %4232, %v2989
  %v4234 = vpop.permute.xlu0 %4233
  %4237 = vset.pattern.permute.xlu0 0
  %4238 = vperm.xlu0 %4237, %v2990
  %v4239 = vpop.permute.xlu0 %4238
  %4242 = vset.pattern.permute.xlu0 0
  %4243 = vperm.xlu0 %4242, %v2991
  %v4244 = vpop.permute.xlu0 %4243
  %4247 = vset.pattern.permute.xlu0 0
  %4248 = vperm.xlu0 %4247, %v2992
  %v4249 = vpop.permute.xlu0 %4248
  %4252 = vset.pattern.permute.xlu0 0
  %4253 = vperm.xlu0 %4252, %v2993
  %v4254 = vpop.permute.xlu0 %4253
  %4257 = vset.pattern.permute.xlu0 0
  %4258 = vperm.xlu0 %4257, %v2994
  %v4259 = vpop.permute.xlu0 %4258
  %4262 = vset.pattern.permute.xlu0 0
  %4263 = vperm.xlu0 %4262, %v2995
  %v4264 = vpop.permute.xlu0 %4263
  %4267 = vset.pattern.permute.xlu0 0
  %4268 = vperm.xlu0 %4267, %v2996
  %v4269 = vpop.permute.xlu0 %4268
  %4272 = vset.pattern.permute.xlu0 0
  %4273 = vperm.xlu0 %4272, %v2997
  %v4274 = vpop.permute.xlu0 %4273
  %4277 = vset.pattern.permute.xlu0 0
  %4278 = vperm.xlu0 %4277, %v2998
  %v4279 = vpop.permute.xlu0 %4278
  %4282 = vset.pattern.permute.xlu0 0
  %4283 = vperm.xlu0 %4282, %v2999
  %v4284 = vpop.permute.xlu0 %4283
  %4287 = vset.pattern.permute.xlu0 0
  %4288 = vperm.xlu0 %4287, %v3000
  %v4289 = vpop.permute.xlu0 %4288
  %4292 = vset.pattern.permute.xlu0 0
  %4293 = vperm.xlu0 %4292, %v3001
  %v4294 = vpop.permute.xlu0 %4293
  %4297 = vset.pattern.permute.xlu0 0
  %4298 = vperm.xlu0 %4297, %v3002
  %v4299 = vpop.permute.xlu0 %4298
  %4302 = vset.pattern.permute.xlu0 0
  %4303 = vperm.xlu0 %4302, %v3003
  %v4304 = vpop.permute.xlu0 %4303
  %4307 = vset.pattern.permute.xlu0 0
  %4308 = vperm.xlu0 %4307, %v3004
  %v4309 = vpop.permute.xlu0 %4308
  %4312 = vset.pattern.permute.xlu0 0
  %4313 = vperm.xlu0 %4312, %v3005
  %v4314 = vpop.permute.xlu0 %4313
  %4317 = vset.pattern.permute.xlu0 0
  %4318 = vperm.xlu0 %4317, %v3006
  %v4319 = vpop.permute.xlu0 %4318
  %4322 = vset.pattern.permute.xlu0 0
  %4323 = vperm.xlu0 %4322, %v3007
  %v4324 = vpop.permute.xlu0 %4323
  %4327 = vset.pattern.permute.xlu0 0
  %4328 = vperm.xlu0 %4327, %v3008
  %v4329 = vpop.permute.xlu0 %4328
  %4332 = vset.pattern.permute.xlu0 0
  %4333 = vperm.xlu0 %4332, %v3009
  %v4334 = vpop.permute.xlu0 %4333
  %4337 = vset.pattern.permute.xlu0 0
  %4338 = vperm.xlu0 %4337, %v3010
  %v4339 = vpop.permute.xlu0 %4338
  %4342 = vset.pattern.permute.xlu0 0
  %4343 = vperm.xlu0 %4342, %v3011
  %v4344 = vpop.permute.xlu0 %4343
  %4347 = vset.pattern.permute.xlu0 0
  %4348 = vperm.xlu0 %4347, %v3012
  %v4349 = vpop.permute.xlu0 %4348
  %4352 = vset.pattern.permute.xlu0 0
  %4353 = vperm.xlu0 %4352, %v3013
  %v4354 = vpop.permute.xlu0 %4353
  %4357 = vset.pattern.permute.xlu0 0
  %4358 = vperm.xlu0 %4357, %v3014
  %v4359 = vpop.permute.xlu0 %4358
  %4362 = vset.pattern.permute.xlu0 0
  %4363 = vperm.xlu0 %4362, %v3015
  %v4364 = vpop.permute.xlu0 %4363
  %4367 = vset.pattern.permute.xlu0 0
  %4368 = vperm.xlu0 %4367, %v3016
  %v4369 = vpop.permute.xlu0 %4368
  %4372 = vset.pattern.permute.xlu0 0
  %4373 = vperm.xlu0 %4372, %v3017
  %v4374 = vpop.permute.xlu0 %4373
  %4377 = vset.pattern.permute.xlu0 0
  %4378 = vperm.xlu0 %4377, %v3018
  %v4379 = vpop.permute.xlu0 %4378
  %4382 = vset.pattern.permute.xlu0 0
  %4383 = vperm.xlu0 %4382, %v3019
  %v4384 = vpop.permute.xlu0 %4383
  %4387 = vset.pattern.permute.xlu0 0
  %4388 = vperm.xlu0 %4387, %v3020
  %v4389 = vpop.permute.xlu0 %4388
  %4392 = vset.pattern.permute.xlu0 0
  %4393 = vperm.xlu0 %4392, %v3021
  %v4394 = vpop.permute.xlu0 %4393
  %4397 = vset.pattern.permute.xlu0 0
  %4398 = vperm.xlu0 %4397, %v3022
  %v4399 = vpop.permute.xlu0 %4398
  %4402 = vset.pattern.permute.xlu0 0
  %4403 = vperm.xlu0 %4402, %v3023
  %v4404 = vpop.permute.xlu0 %4403
  %4407 = vset.pattern.permute.xlu0 0
  %4408 = vperm.xlu0 %4407, %v3024
  %v4409 = vpop.permute.xlu0 %4408
  %4412 = vset.pattern.permute.xlu0 0
  %4413 = vperm.xlu0 %4412, %v3025
  %v4414 = vpop.permute.xlu0 %4413
  %4417 = vset.pattern.permute.xlu0 0
  %4418 = vperm.xlu0 %4417, %v3026
  %v4419 = vpop.permute.xlu0 %4418
  %4422 = vset.pattern.permute.xlu0 0
  %4423 = vperm.xlu0 %4422, %v3027
  %v4424 = vpop.permute.xlu0 %4423
  %4427 = vset.pattern.permute.xlu0 0
  %4428 = vperm.xlu0 %4427, %v3028
  %v4429 = vpop.permute.xlu0 %4428
  %4432 = vset.pattern.permute.xlu0 0
  %4433 = vperm.xlu0 %4432, %v3029
  %v4434 = vpop.permute.xlu0 %4433
  %4437 = vset.pattern.permute.xlu0 0
  %4438 = vperm.xlu0 %4437, %v3030
  %v4439 = vpop.permute.xlu0 %4438
  %4442 = vset.pattern.permute.xlu0 0
  %4443 = vperm.xlu0 %4442, %v3031
  %v4444 = vpop.permute.xlu0 %4443
  %4447 = vset.pattern.permute.xlu0 0
  %4448 = vperm.xlu0 %4447, %v3032
  %v4449 = vpop.permute.xlu0 %4448
  %4452 = vset.pattern.permute.xlu0 0
  %4453 = vperm.xlu0 %4452, %v3033
  %v4454 = vpop.permute.xlu0 %4453
  %4457 = vset.pattern.permute.xlu0 0
  %4458 = vperm.xlu0 %4457, %v3034
  %v4459 = vpop.permute.xlu0 %4458
  %4462 = vset.pattern.permute.xlu0 0
  %4463 = vperm.xlu0 %4462, %v3035
  %v4464 = vpop.permute.xlu0 %4463
  %4467 = vset.pattern.permute.xlu0 0
  %4468 = vperm.xlu0 %4467, %v3036
  %v4469 = vpop.permute.xlu0 %4468
  %4472 = vset.pattern.permute.xlu0 0
  %4473 = vperm.xlu0 %4472, %v3037
  %v4474 = vpop.permute.xlu0 %4473
  %4477 = vset.pattern.permute.xlu0 0
  %4478 = vperm.xlu0 %4477, %v3038
  %v4479 = vpop.permute.xlu0 %4478
  %4482 = vset.pattern.permute.xlu0 0
  %4483 = vperm.xlu0 %4482, %v3039
  %v4484 = vpop.permute.xlu0 %4483
  %4487 = vset.pattern.permute.xlu0 0
  %4488 = vperm.xlu0 %4487, %v3040
  %v4489 = vpop.permute.xlu0 %4488
  %4492 = vset.pattern.permute.xlu0 0
  %4493 = vperm.xlu0 %4492, %v3041
  %v4494 = vpop.permute.xlu0 %4493
  %4497 = vset.pattern.permute.xlu0 0
  %4498 = vperm.xlu0 %4497, %v3042
  %v4499 = vpop.permute.xlu0 %4498
  %4502 = vset.pattern.permute.xlu0 0
  %4503 = vperm.xlu0 %4502, %v3043
  %v4504 = vpop.permute.xlu0 %4503
  %4507 = vset.pattern.permute.xlu0 0
  %4508 = vperm.xlu0 %4507, %v3044
  %v4509 = vpop.permute.xlu0 %4508
  %4512 = vset.pattern.permute.xlu0 0
  %4513 = vperm.xlu0 %4512, %v3045
  %v4514 = vpop.permute.xlu0 %4513
  %4517 = vset.pattern.permute.xlu0 0
  %4518 = vperm.xlu0 %4517, %v3046
  %v4519 = vpop.permute.xlu0 %4518
  %4522 = vset.pattern.permute.xlu0 0
  %4523 = vperm.xlu0 %4522, %v3047
  %v4524 = vpop.permute.xlu0 %4523
  %4527 = vset.pattern.permute.xlu0 0
  %4528 = vperm.xlu0 %4527, %v3048
  %v4529 = vpop.permute.xlu0 %4528
  %4532 = vset.pattern.permute.xlu0 0
  %4533 = vperm.xlu0 %4532, %v3049
  %v4534 = vpop.permute.xlu0 %4533
  %4537 = vset.pattern.permute.xlu0 0
  %4538 = vperm.xlu0 %4537, %v3050
  %v4539 = vpop.permute.xlu0 %4538
  %4542 = vset.pattern.permute.xlu0 0
  %4543 = vperm.xlu0 %4542, %v3051
  %v4544 = vpop.permute.xlu0 %4543
  %4547 = vset.pattern.permute.xlu0 0
  %4548 = vperm.xlu0 %4547, %v3052
  %v4549 = vpop.permute.xlu0 %4548
  %4552 = vset.pattern.permute.xlu0 0
  %4553 = vperm.xlu0 %4552, %v3053
  %v4554 = vpop.permute.xlu0 %4553
  %4557 = vset.pattern.permute.xlu0 0
  %4558 = vperm.xlu0 %4557, %v3054
  %v4559 = vpop.permute.xlu0 %4558
  %4562 = vset.pattern.permute.xlu0 0
  %4563 = vperm.xlu0 %4562, %v3055
  %v4564 = vpop.permute.xlu0 %4563
  %4567 = vset.pattern.permute.xlu0 0
  %4568 = vperm.xlu0 %4567, %v3056
  %v4569 = vpop.permute.xlu0 %4568
  %4572 = vset.pattern.permute.xlu0 0
  %4573 = vperm.xlu0 %4572, %v3057
  %v4574 = vpop.permute.xlu0 %4573
  %4577 = vset.pattern.permute.xlu0 0
  %4578 = vperm.xlu0 %4577, %v3058
  %v4579 = vpop.permute.xlu0 %4578
  %4582 = vset.pattern.permute.xlu0 0
  %4583 = vperm.xlu0 %4582, %v3059
  %v4584 = vpop.permute.xlu0 %4583
  %4587 = vset.pattern.permute.xlu0 0
  %4588 = vperm.xlu0 %4587, %v3060
  %v4589 = vpop.permute.xlu0 %4588
  %4592 = vset.pattern.permute.xlu0 0
  %4593 = vperm.xlu0 %4592, %v3061
  %v4594 = vpop.permute.xlu0 %4593
  %4597 = vset.pattern.permute.xlu0 0
  %4598 = vperm.xlu0 %4597, %v3062
  %v4599 = vpop.permute.xlu0 %4598
  %4602 = vset.pattern.permute.xlu0 0
  %4603 = vperm.xlu0 %4602, %v3063
  %v4604 = vpop.permute.xlu0 %4603
  %4607 = vset.pattern.permute.xlu0 0
  %4608 = vperm.xlu0 %4607, %v3064
  %v4609 = vpop.permute.xlu0 %4608
  %4612 = vset.pattern.permute.xlu0 0
  %4613 = vperm.xlu0 %4612, %v3065
  %v4614 = vpop.permute.xlu0 %4613
  %4617 = vset.pattern.permute.xlu0 0
  %4618 = vperm.xlu0 %4617, %v3066
  %v4619 = vpop.permute.xlu0 %4618
  %4622 = vset.pattern.permute.xlu0 0
  %4623 = vperm.xlu0 %4622, %v3067
  %v4624 = vpop.permute.xlu0 %4623
  %4627 = vset.pattern.permute.xlu0 0
  %4628 = vperm.xlu0 %4627, %v3068
  %v4629 = vpop.permute.xlu0 %4628
  %4632 = vset.pattern.permute.xlu0 0
  %4633 = vperm.xlu0 %4632, %v3069
  %v4634 = vpop.permute.xlu0 %4633
  %4637 = vset.pattern.permute.xlu0 0
  %4638 = vperm.xlu0 %4637, %v3070
  %v4639 = vpop.permute.xlu0 %4638
  %4642 = vset.pattern.permute.xlu0 0
  %4643 = vperm.xlu0 %4642, %v3071
  %v4644 = vpop.permute.xlu0 %4643
  %4647 = vset.pattern.permute.xlu0 0
  %4648 = vperm.xlu0 %4647, %v3072
  %v4649 = vpop.permute.xlu0 %4648
  %4652 = vset.pattern.permute.xlu0 0
  %4653 = vperm.xlu0 %4652, %v3073
  %v4654 = vpop.permute.xlu0 %4653
  %4657 = vset.pattern.permute.xlu0 0
  %4658 = vperm.xlu0 %4657, %v3074
  %v4659 = vpop.permute.xlu0 %4658
  %4662 = vset.pattern.permute.xlu0 0
  %4663 = vperm.xlu0 %4662, %v3075
  %v4664 = vpop.permute.xlu0 %4663
  %4667 = vset.pattern.permute.xlu0 0
  %4668 = vperm.xlu0 %4667, %v3076
  %v4669 = vpop.permute.xlu0 %4668
  %4672 = vset.pattern.permute.xlu0 0
  %4673 = vperm.xlu0 %4672, %v3077
  %v4674 = vpop.permute.xlu0 %4673
  %4677 = vset.pattern.permute.xlu0 0
  %4678 = vperm.xlu0 %4677, %v3078
  %v4679 = vpop.permute.xlu0 %4678
  %4682 = vset.pattern.permute.xlu0 0
  %4683 = vperm.xlu0 %4682, %v3079
  %v4684 = vpop.permute.xlu0 %4683
  %4687 = vset.pattern.permute.xlu0 0
  %4688 = vperm.xlu0 %4687, %v3080
  %v4689 = vpop.permute.xlu0 %4688
  %4692 = vset.pattern.permute.xlu0 0
  %4693 = vperm.xlu0 %4692, %v3081
  %v4694 = vpop.permute.xlu0 %4693
  %4697 = vset.pattern.permute.xlu0 0
  %4698 = vperm.xlu0 %4697, %v3082
  %v4699 = vpop.permute.xlu0 %4698
  %4702 = vset.pattern.permute.xlu0 0
  %4703 = vperm.xlu0 %4702, %v3083
  %v4704 = vpop.permute.xlu0 %4703
  %4707 = vset.pattern.permute.xlu0 0
  %4708 = vperm.xlu0 %4707, %v3084
  %v4709 = vpop.permute.xlu0 %4708
  %4712 = vset.pattern.permute.xlu0 0
  %4713 = vperm.xlu0 %4712, %v3085
  %v4714 = vpop.permute.xlu0 %4713
  %4717 = vset.pattern.permute.xlu0 0
  %4718 = vperm.xlu0 %4717, %v3086
  %v4719 = vpop.permute.xlu0 %4718
  %4722 = vset.pattern.permute.xlu0 0
  %4723 = vperm.xlu0 %4722, %v3087
  %v4724 = vpop.permute.xlu0 %4723
  %4727 = vset.pattern.permute.xlu0 0
  %4728 = vperm.xlu0 %4727, %v3088
  %v4729 = vpop.permute.xlu0 %4728
  %4732 = vset.pattern.permute.xlu0 0
  %4733 = vperm.xlu0 %4732, %v3089
  %v4734 = vpop.permute.xlu0 %4733
  %4737 = vset.pattern.permute.xlu0 0
  %4738 = vperm.xlu0 %4737, %v3090
  %v4739 = vpop.permute.xlu0 %4738
  %4742 = vset.pattern.permute.xlu0 0
  %4743 = vperm.xlu0 %4742, %v3091
  %v4744 = vpop.permute.xlu0 %4743
  %4747 = vset.pattern.permute.xlu0 0
  %4748 = vperm.xlu0 %4747, %v3092
  %v4749 = vpop.permute.xlu0 %4748
  %4752 = vset.pattern.permute.xlu0 0
  %4753 = vperm.xlu0 %4752, %v3093
  %v4754 = vpop.permute.xlu0 %4753
  %4757 = vset.pattern.permute.xlu0 0
  %4758 = vperm.xlu0 %4757, %v3094
  %v4759 = vpop.permute.xlu0 %4758
  %4762 = vset.pattern.permute.xlu0 0
  %4763 = vperm.xlu0 %4762, %v3095
  %v4764 = vpop.permute.xlu0 %4763
  %4767 = vset.pattern.permute.xlu0 0
  %4768 = vperm.xlu0 %4767, %v3096
  %v4769 = vpop.permute.xlu0 %4768
  %4772 = vset.pattern.permute.xlu0 0
  %4773 = vperm.xlu0 %4772, %v3097
  %v4774 = vpop.permute.xlu0 %4773
  %4777 = vset.pattern.permute.xlu0 0
  %4778 = vperm.xlu0 %4777, %v3098
  %v4779 = vpop.permute.xlu0 %4778
  %4782 = vset.pattern.permute.xlu0 0
  %4783 = vperm.xlu0 %4782, %v3099
  %v4784 = vpop.permute.xlu0 %4783
  %4787 = vset.pattern.permute.xlu0 0
  %4788 = vperm.xlu0 %4787, %v3100
  %v4789 = vpop.permute.xlu0 %4788
  %4792 = vset.pattern.permute.xlu0 0
  %4793 = vperm.xlu0 %4792, %v3101
  %v4794 = vpop.permute.xlu0 %4793
  %4797 = vset.pattern.permute.xlu0 0
  %4798 = vperm.xlu0 %4797, %v3102
  %v4799 = vpop.permute.xlu0 %4798
  %4802 = vset.pattern.permute.xlu0 0
  %4803 = vperm.xlu0 %4802, %v3103
  %v4804 = vpop.permute.xlu0 %4803
  %4807 = vset.pattern.permute.xlu0 0
  %4808 = vperm.xlu0 %4807, %v3104
  %v4809 = vpop.permute.xlu0 %4808
  %4812 = vset.pattern.permute.xlu0 0
  %4813 = vperm.xlu0 %4812, %v3105
  %v4814 = vpop.permute.xlu0 %4813
  %4817 = vset.pattern.permute.xlu0 0
  %4818 = vperm.xlu0 %4817, %v3106
  %v4819 = vpop.permute.xlu0 %4818
  %4822 = vset.pattern.permute.xlu0 0
  %4823 = vperm.xlu0 %4822, %v3107
  %v4824 = vpop.permute.xlu0 %4823
  %4827 = vset.pattern.permute.xlu0 0
  %4828 = vperm.xlu0 %4827, %v3108
  %v4829 = vpop.permute.xlu0 %4828
  %4832 = vset.pattern.permute.xlu0 0
  %4833 = vperm.xlu0 %4832, %v3109
  %v4834 = vpop.permute.xlu0 %4833
  %4837 = vset.pattern.permute.xlu0 0
  %4838 = vperm.xlu0 %4837, %v3110
  %v4839 = vpop.permute.xlu0 %4838
  %4842 = vset.pattern.permute.xlu0 0
  %4843 = vperm.xlu0 %4842, %v3111
  %v4844 = vpop.permute.xlu0 %4843
  %4847 = vset.pattern.permute.xlu0 0
  %4848 = vperm.xlu0 %4847, %v3112
  %v4849 = vpop.permute.xlu0 %4848
  %4852 = vset.pattern.permute.xlu0 0
  %4853 = vperm.xlu0 %4852, %v3113
  %v4854 = vpop.permute.xlu0 %4853
  %4857 = vset.pattern.permute.xlu0 0
  %4858 = vperm.xlu0 %4857, %v3114
  %v4859 = vpop.permute.xlu0 %4858
  %4862 = vset.pattern.permute.xlu0 0
  %4863 = vperm.xlu0 %4862, %v3115
  %v4864 = vpop.permute.xlu0 %4863
  %4867 = vset.pattern.permute.xlu0 0
  %4868 = vperm.xlu0 %4867, %v3116
  %v4869 = vpop.permute.xlu0 %4868
  %4872 = vset.pattern.permute.xlu0 0
  %4873 = vperm.xlu0 %4872, %v3117
  %v4874 = vpop.permute.xlu0 %4873
  %4877 = vset.pattern.permute.xlu0 0
  %4878 = vperm.xlu0 %4877, %v3118
  %v4879 = vpop.permute.xlu0 %4878
  %4882 = vset.pattern.permute.xlu0 0
  %4883 = vperm.xlu0 %4882, %v3119
  %v4884 = vpop.permute.xlu0 %4883
  %4887 = vset.pattern.permute.xlu0 0
  %4888 = vperm.xlu0 %4887, %v3120
  %v4889 = vpop.permute.xlu0 %4888
  %4892 = vset.pattern.permute.xlu0 0
  %4893 = vperm.xlu0 %4892, %v3121
  %v4894 = vpop.permute.xlu0 %4893
  %4897 = vset.pattern.permute.xlu0 0
  %4898 = vperm.xlu0 %4897, %v3122
  %v4899 = vpop.permute.xlu0 %4898
  %4902 = vset.pattern.permute.xlu0 0
  %4903 = vperm.xlu0 %4902, %v3123
  %v4904 = vpop.permute.xlu0 %4903
  %4907 = vset.pattern.permute.xlu0 0
  %4908 = vperm.xlu0 %4907, %v3124
  %v4909 = vpop.permute.xlu0 %4908
  %4912 = vset.pattern.permute.xlu0 0
  %4913 = vperm.xlu0 %4912, %v3125
  %v4914 = vpop.permute.xlu0 %4913
  %4917 = vset.pattern.permute.xlu0 0
  %4918 = vperm.xlu0 %4917, %v3126
  %v4919 = vpop.permute.xlu0 %4918
  %4922 = vset.pattern.permute.xlu0 0
  %4923 = vperm.xlu0 %4922, %v3127
  %v4924 = vpop.permute.xlu0 %4923
  %4927 = vset.pattern.permute.xlu0 0
  %4928 = vperm.xlu0 %4927, %v3128
  %v4929 = vpop.permute.xlu0 %4928
  %4932 = vset.pattern.permute.xlu0 0
  %4933 = vperm.xlu0 %4932, %v3129
  %v4934 = vpop.permute.xlu0 %4933
  %4937 = vset.pattern.permute.xlu0 0
  %4938 = vperm.xlu0 %4937, %v3130
  %v4939 = vpop.permute.xlu0 %4938
  %4942 = vset.pattern.permute.xlu0 0
  %4943 = vperm.xlu0 %4942, %v3131
  %v4944 = vpop.permute.xlu0 %4943
  %4947 = vset.pattern.permute.xlu0 0
  %4948 = vperm.xlu0 %4947, %v3132
  %v4949 = vpop.permute.xlu0 %4948
  %4952 = vset.pattern.permute.xlu0 0
  %4953 = vperm.xlu0 %4952, %v3133
  %v4954 = vpop.permute.xlu0 %4953
  %4957 = vset.pattern.permute.xlu0 0
  %4958 = vperm.xlu0 %4957, %v3134
  %v4959 = vpop.permute.xlu0 %4958
  %4962 = vset.pattern.permute.xlu0 0
  %4963 = vperm.xlu0 %4962, %v3135
  %v4964 = vpop.permute.xlu0 %4963
  %4967 = vset.pattern.permute.xlu0 0
  %4968 = vperm.xlu0 %4967, %v3136
  %v4969 = vpop.permute.xlu0 %4968
  %4972 = vset.pattern.permute.xlu0 0
  %4973 = vperm.xlu0 %4972, %v3137
  %v4974 = vpop.permute.xlu0 %4973
  %4977 = vset.pattern.permute.xlu0 0
  %4978 = vperm.xlu0 %4977, %v3138
  %v4979 = vpop.permute.xlu0 %4978
  %4982 = vset.pattern.permute.xlu0 0
  %4983 = vperm.xlu0 %4982, %v3139
  %v4984 = vpop.permute.xlu0 %4983
  %4987 = vset.pattern.permute.xlu0 0
  %4988 = vperm.xlu0 %4987, %v3140
  %v4989 = vpop.permute.xlu0 %4988
  %4992 = vset.pattern.permute.xlu0 0
  %4993 = vperm.xlu0 %4992, %v3141
  %v4994 = vpop.permute.xlu0 %4993
  %4997 = vset.pattern.permute.xlu0 0
  %4998 = vperm.xlu0 %4997, %v3142
  %v4999 = vpop.permute.xlu0 %4998
  %5002 = vset.pattern.permute.xlu0 0
  %5003 = vperm.xlu0 %5002, %v3143
  %v5004 = vpop.permute.xlu0 %5003
  %5007 = vset.pattern.permute.xlu0 0
  %5008 = vperm.xlu0 %5007, %v3144
  %v5009 = vpop.permute.xlu0 %5008
  %5012 = vset.pattern.permute.xlu0 0
  %5013 = vperm.xlu0 %5012, %v3145
  %v5014 = vpop.permute.xlu0 %5013
  %5017 = vset.pattern.permute.xlu0 0
  %5018 = vperm.xlu0 %5017, %v3146
  %v5019 = vpop.permute.xlu0 %5018
  %5022 = vset.pattern.permute.xlu0 0
  %5023 = vperm.xlu0 %5022, %v3147
  %v5024 = vpop.permute.xlu0 %5023
  %5027 = vset.pattern.permute.xlu0 0
  %5028 = vperm.xlu0 %5027, %v3148
  %v5029 = vpop.permute.xlu0 %5028
  %5032 = vset.pattern.permute.xlu0 0
  %5033 = vperm.xlu0 %5032, %v3149
  %v5034 = vpop.permute.xlu0 %5033
  %5037 = vset.pattern.permute.xlu0 0
  %5038 = vperm.xlu0 %5037, %v3150
  %v5039 = vpop.permute.xlu0 %5038
  %5042 = vset.pattern.permute.xlu0 0
  %5043 = vperm.xlu0 %5042, %v3151
  %v5044 = vpop.permute.xlu0 %5043
  %5047 = vset.pattern.permute.xlu0 0
  %5048 = vperm.xlu0 %5047, %v3152
  %v5049 = vpop.permute.xlu0 %5048
  %5052 = vset.pattern.permute.xlu0 0
  %5053 = vperm.xlu0 %5052, %v3153
  %v5054 = vpop.permute.xlu0 %5053
  %5057 = vset.pattern.permute.xlu0 0
  %5058 = vperm.xlu0 %5057, %v3154
  %v5059 = vpop.permute.xlu0 %5058
  %5062 = vset.pattern.permute.xlu0 0
  %5063 = vperm.xlu0 %5062, %v3155
  %v5064 = vpop.permute.xlu0 %5063
  %5067 = vset.pattern.permute.xlu0 0
  %5068 = vperm.xlu0 %5067, %v3156
  %v5069 = vpop.permute.xlu0 %5068
  %v5071 = vadd.f32 %v4027, %v4204
  %v5072 = vadd.f32 %v4028, %v4209
  %v5073 = vadd.f32 %v4029, %v4214
  %v5074 = vadd.f32 %v4030, %v4219
  %v5075 = vadd.f32 %v4031, %v4224
  %v5076 = vadd.f32 %v4032, %v4229
  %v5077 = vadd.f32 %v4033, %v4234
  %v5078 = vadd.f32 %v4034, %v4239
  %v5079 = vadd.f32 %v4035, %v4244
  %v5080 = vadd.f32 %v4036, %v4249
  %v5081 = vadd.f32 %v4037, %v4254
  %v5082 = vadd.f32 %v4038, %v4259
  %v5083 = vadd.f32 %v4039, %v4264
  %v5084 = vadd.f32 %v4040, %v4269
  %v5085 = vadd.f32 %v4041, %v4274
  %v5086 = vadd.f32 %v4042, %v4279
  %v5087 = vadd.f32 %v4043, %v4284
  %v5088 = vadd.f32 %v4044, %v4289
  %v5089 = vadd.f32 %v4045, %v4294
  %v5090 = vadd.f32 %v4046, %v4299
  %v5091 = vadd.f32 %v4047, %v4304
  %v5092 = vadd.f32 %v4048, %v4309
  %v5093 = vadd.f32 %v4049, %v4314
  %v5094 = vadd.f32 %v4050, %v4319
  %v5095 = vadd.f32 %v4051, %v4324
  %v5096 = vadd.f32 %v4052, %v4329
  %v5097 = vadd.f32 %v4053, %v4334
  %v5098 = vadd.f32 %v4054, %v4339
  %v5099 = vadd.f32 %v4055, %v4344
  %v5100 = vadd.f32 %v4056, %v4349
  %v5101 = vadd.f32 %v4057, %v4354
  %v5102 = vadd.f32 %v4058, %v4359
  %v5103 = vadd.f32 %v4059, %v4364
  %v5104 = vadd.f32 %v4060, %v4369
  %v5105 = vadd.f32 %v4061, %v4374
  %v5106 = vadd.f32 %v4062, %v4379
  %v5107 = vadd.f32 %v4063, %v4384
  %v5108 = vadd.f32 %v4064, %v4389
  %v5109 = vadd.f32 %v4065, %v4394
  %v5110 = vadd.f32 %v4066, %v4399
  %v5111 = vadd.f32 %v4067, %v4404
  %v5112 = vadd.f32 %v4068, %v4409
  %v5113 = vadd.f32 %v4069, %v4414
  %v5114 = vadd.f32 %v4070, %v4419
  %v5115 = vadd.f32 %v4071, %v4424
  %v5116 = vadd.f32 %v4072, %v4429
  %v5117 = vadd.f32 %v4073, %v4434
  %v5118 = vadd.f32 %v4074, %v4439
  %v5119 = vadd.f32 %v4075, %v4444
  %v5120 = vadd.f32 %v4076, %v4449
  %v5121 = vadd.f32 %v4077, %v4454
  %v5122 = vadd.f32 %v4078, %v4459
  %v5123 = vadd.f32 %v4079, %v4464
  %v5124 = vadd.f32 %v4080, %v4469
  %v5125 = vadd.f32 %v4081, %v4474
  %v5126 = vadd.f32 %v4082, %v4479
  %v5127 = vadd.f32 %v4083, %v4484
  %v5128 = vadd.f32 %v4084, %v4489
  %v5129 = vadd.f32 %v4085, %v4494
  %v5130 = vadd.f32 %v4086, %v4499
  %v5131 = vadd.f32 %v4087, %v4504
  %v5132 = vadd.f32 %v4088, %v4509
  %v5133 = vadd.f32 %v4089, %v4514
  %v5134 = vadd.f32 %v4090, %v4519
  %v5135 = vadd.f32 %v4091, %v4524
  %v5136 = vadd.f32 %v4092, %v4529
  %v5137 = vadd.f32 %v4093, %v4534
  %v5138 = vadd.f32 %v4094, %v4539
  %v5139 = vadd.f32 %v4095, %v4544
  %v5140 = vadd.f32 %v4096, %v4549
  %v5141 = vadd.f32 %v4097, %v4554
  %v5142 = vadd.f32 %v4098, %v4559
  %v5143 = vadd.f32 %v4099, %v4564
  %v5144 = vadd.f32 %v4100, %v4569
  %v5145 = vadd.f32 %v4101, %v4574
  %v5146 = vadd.f32 %v4102, %v4579
  %v5147 = vadd.f32 %v4103, %v4584
  %v5148 = vadd.f32 %v4104, %v4589
  %v5149 = vadd.f32 %v4105, %v4594
  %v5150 = vadd.f32 %v4106, %v4599
  %v5151 = vadd.f32 %v4107, %v4604
  %v5152 = vadd.f32 %v4108, %v4609
  %v5153 = vadd.f32 %v4109, %v4614
  %v5154 = vadd.f32 %v4110, %v4619
  %v5155 = vadd.f32 %v4111, %v4624
  %v5156 = vadd.f32 %v4112, %v4629
  %v5157 = vadd.f32 %v4113, %v4634
  %v5158 = vadd.f32 %v4114, %v4639
  %v5159 = vadd.f32 %v4115, %v4644
  %v5160 = vadd.f32 %v4116, %v4649
  %v5161 = vadd.f32 %v4117, %v4654
  %v5162 = vadd.f32 %v4118, %v4659
  %v5163 = vadd.f32 %v4119, %v4664
  %v5164 = vadd.f32 %v4120, %v4669
  %v5165 = vadd.f32 %v4121, %v4674
  %v5166 = vadd.f32 %v4122, %v4679
  %v5167 = vadd.f32 %v4123, %v4684
  %v5168 = vadd.f32 %v4124, %v4689
  %v5169 = vadd.f32 %v4125, %v4694
  %v5170 = vadd.f32 %v4126, %v4699
  %v5171 = vadd.f32 %v4127, %v4704
  %v5172 = vadd.f32 %v4128, %v4709
  %v5173 = vadd.f32 %v4129, %v4714
  %v5174 = vadd.f32 %v4130, %v4719
  %v5175 = vadd.f32 %v4131, %v4724
  %v5176 = vadd.f32 %v4132, %v4729
  %v5177 = vadd.f32 %v4133, %v4734
  %v5178 = vadd.f32 %v4134, %v4739
  %v5179 = vadd.f32 %v4135, %v4744
  %v5180 = vadd.f32 %v4136, %v4749
  %v5181 = vadd.f32 %v4137, %v4754
  %v5182 = vadd.f32 %v4138, %v4759
  %v5183 = vadd.f32 %v4139, %v4764
  %v5184 = vadd.f32 %v4140, %v4769
  %v5185 = vadd.f32 %v4141, %v4774
  %v5186 = vadd.f32 %v4142, %v4779
  %v5187 = vadd.f32 %v4143, %v4784
  %v5188 = vadd.f32 %v4144, %v4789
  %v5189 = vadd.f32 %v4145, %v4794
  %v5190 = vadd.f32 %v4146, %v4799
  %v5191 = vadd.f32 %v4147, %v4804
  %v5192 = vadd.f32 %v4148, %v4809
  %v5193 = vadd.f32 %v4149, %v4814
  %v5194 = vadd.f32 %v4150, %v4819
  %v5195 = vadd.f32 %v4151, %v4824
  %v5196 = vadd.f32 %v4152, %v4829
  %v5197 = vadd.f32 %v4153, %v4834
  %v5198 = vadd.f32 %v4154, %v4839
  %v5199 = vadd.f32 %v4155, %v4844
  %v5200 = vadd.f32 %v4156, %v4849
  %v5201 = vadd.f32 %v4157, %v4854
  %v5202 = vadd.f32 %v4158, %v4859
  %v5203 = vadd.f32 %v4159, %v4864
  %v5204 = vadd.f32 %v4160, %v4869
  %v5205 = vadd.f32 %v4161, %v4874
  %v5206 = vadd.f32 %v4162, %v4879
  %v5207 = vadd.f32 %v4163, %v4884
  %v5208 = vadd.f32 %v4164, %v4889
  %v5209 = vadd.f32 %v4165, %v4894
  %v5210 = vadd.f32 %v4166, %v4899
  %v5211 = vadd.f32 %v4167, %v4904
  %v5212 = vadd.f32 %v4168, %v4909
  %v5213 = vadd.f32 %v4169, %v4914
  %v5214 = vadd.f32 %v4170, %v4919
  %v5215 = vadd.f32 %v4171, %v4924
  %v5216 = vadd.f32 %v4172, %v4929
  %v5217 = vadd.f32 %v4173, %v4934
  %v5218 = vadd.f32 %v4174, %v4939
  %v5219 = vadd.f32 %v4175, %v4944
  %v5220 = vadd.f32 %v4176, %v4949
  %v5221 = vadd.f32 %v4177, %v4954
  %v5222 = vadd.f32 %v4178, %v4959
  %v5223 = vadd.f32 %v4179, %v4964
  %v5224 = vadd.f32 %v4180, %v4969
  %v5225 = vadd.f32 %v4181, %v4974
  %v5226 = vadd.f32 %v4182, %v4979
  %v5227 = vadd.f32 %v4183, %v4984
  %v5228 = vadd.f32 %v4184, %v4989
  %v5229 = vadd.f32 %v4185, %v4994
  %v5230 = vadd.f32 %v4186, %v4999
  %v5231 = vadd.f32 %v4187, %v5004
  %v5232 = vadd.f32 %v4188, %v5009
  %v5233 = vadd.f32 %v4189, %v5014
  %v5234 = vadd.f32 %v4190, %v5019
  %v5235 = vadd.f32 %v4191, %v5024
  %v5236 = vadd.f32 %v4192, %v5029
  %v5237 = vadd.f32 %v4193, %v5034
  %v5238 = vadd.f32 %v4194, %v5039
  %v5239 = vadd.f32 %v4195, %v5044
  %v5240 = vadd.f32 %v4196, %v5049
  %v5241 = vadd.f32 %v4197, %v5054
  %v5242 = vadd.f32 %v4198, %v5059
  %v5243 = vadd.f32 %v4199, %v5064
  %v5244 = vadd.f32 %v4200, %v5069
  %v5245 = vmax.f32 %v5071, 0.0
  %v5246 = vmax.f32 %v5072, 0.0
  %v5247 = vmax.f32 %v5073, 0.0
  %v5248 = vmax.f32 %v5074, 0.0
  %v5249 = vmax.f32 %v5075, 0.0
  %v5250 = vmax.f32 %v5076, 0.0
  %v5251 = vmax.f32 %v5077, 0.0
  %v5252 = vmax.f32 %v5078, 0.0
  %v5253 = vmax.f32 %v5079, 0.0
  %v5254 = vmax.f32 %v5080, 0.0
  %v5255 = vmax.f32 %v5081, 0.0
  %v5256 = vmax.f32 %v5082, 0.0
  %v5257 = vmax.f32 %v5083, 0.0
  %v5258 = vmax.f32 %v5084, 0.0
  %v5259 = vmax.f32 %v5085, 0.0
  %v5260 = vmax.f32 %v5086, 0.0
  %v5261 = vmax.f32 %v5087, 0.0
  %v5262 = vmax.f32 %v5088, 0.0
  %v5263 = vmax.f32 %v5089, 0.0
  %v5264 = vmax.f32 %v5090, 0.0
  %v5265 = vmax.f32 %v5091, 0.0
  %v5266 = vmax.f32 %v5092, 0.0
  %v5267 = vmax.f32 %v5093, 0.0
  %v5268 = vmax.f32 %v5094, 0.0
  %v5269 = vmax.f32 %v5095, 0.0
  %v5270 = vmax.f32 %v5096, 0.0
  %v5271 = vmax.f32 %v5097, 0.0
  %v5272 = vmax.f32 %v5098, 0.0
  %v5273 = vmax.f32 %v5099, 0.0
  %v5274 = vmax.f32 %v5100, 0.0
  %v5275 = vmax.f32 %v5101, 0.0
  %v5276 = vmax.f32 %v5102, 0.0
  %v5277 = vmax.f32 %v5103, 0.0
  %v5278 = vmax.f32 %v5104, 0.0
  %v5279 = vmax.f32 %v5105, 0.0
  %v5280 = vmax.f32 %v5106, 0.0
  %v5281 = vmax.f32 %v5107, 0.0
  %v5282 = vmax.f32 %v5108, 0.0
  %v5283 = vmax.f32 %v5109, 0.0
  %v5284 = vmax.f32 %v5110, 0.0
  %v5285 = vmax.f32 %v5111, 0.0
  %v5286 = vmax.f32 %v5112, 0.0
  %v5287 = vmax.f32 %v5113, 0.0
  %v5288 = vmax.f32 %v5114, 0.0
  %v5289 = vmax.f32 %v5115, 0.0
  %v5290 = vmax.f32 %v5116, 0.0
  %v5291 = vmax.f32 %v5117, 0.0
  %v5292 = vmax.f32 %v5118, 0.0
  %v5293 = vmax.f32 %v5119, 0.0
  %v5294 = vmax.f32 %v5120, 0.0
  %v5295 = vmax.f32 %v5121, 0.0
  %v5296 = vmax.f32 %v5122, 0.0
  %v5297 = vmax.f32 %v5123, 0.0
  %v5298 = vmax.f32 %v5124, 0.0
  %v5299 = vmax.f32 %v5125, 0.0
  %v5300 = vmax.f32 %v5126, 0.0
  %v5301 = vmax.f32 %v5127, 0.0
  %v5302 = vmax.f32 %v5128, 0.0
  %v5303 = vmax.f32 %v5129, 0.0
  %v5304 = vmax.f32 %v5130, 0.0
  %v5305 = vmax.f32 %v5131, 0.0
  %v5306 = vmax.f32 %v5132, 0.0
  %v5307 = vmax.f32 %v5133, 0.0
  %v5308 = vmax.f32 %v5134, 0.0
  %v5309 = vmax.f32 %v5135, 0.0
  %v5310 = vmax.f32 %v5136, 0.0
  %v5311 = vmax.f32 %v5137, 0.0
  %v5312 = vmax.f32 %v5138, 0.0
  %v5313 = vmax.f32 %v5139, 0.0
  %v5314 = vmax.f32 %v5140, 0.0
  %v5315 = vmax.f32 %v5141, 0.0
  %v5316 = vmax.f32 %v5142, 0.0
  %v5317 = vmax.f32 %v5143, 0.0
  %v5318 = vmax.f32 %v5144, 0.0
  %v5319 = vmax.f32 %v5145, 0.0
  %v5320 = vmax.f32 %v5146, 0.0
  %v5321 = vmax.f32 %v5147, 0.0
  %v5322 = vmax.f32 %v5148, 0.0
  %v5323 = vmax.f32 %v5149, 0.0
  %v5324 = vmax.f32 %v5150, 0.0
  %v5325 = vmax.f32 %v5151, 0.0
  %v5326 = vmax.f32 %v5152, 0.0
  %v5327 = vmax.f32 %v5153, 0.0
  %v5328 = vmax.f32 %v5154, 0.0
  %v5329 = vmax.f32 %v5155, 0.0
  %v5330 = vmax.f32 %v5156, 0.0
  %v5331 = vmax.f32 %v5157, 0.0
  %v5332 = vmax.f32 %v5158, 0.0
  %v5333 = vmax.f32 %v5159, 0.0
  %v5334 = vmax.f32 %v5160, 0.0
  %v5335 = vmax.f32 %v5161, 0.0
  %v5336 = vmax.f32 %v5162, 0.0
  %v5337 = vmax.f32 %v5163, 0.0
  %v5338 = vmax.f32 %v5164, 0.0
  %v5339 = vmax.f32 %v5165, 0.0
  %v5340 = vmax.f32 %v5166, 0.0
  %v5341 = vmax.f32 %v5167, 0.0
  %v5342 = vmax.f32 %v5168, 0.0
  %v5343 = vmax.f32 %v5169, 0.0
  %v5344 = vmax.f32 %v5170, 0.0
  %v5345 = vmax.f32 %v5171, 0.0
  %v5346 = vmax.f32 %v5172, 0.0
  %v5347 = vmax.f32 %v5173, 0.0
  %v5348 = vmax.f32 %v5174, 0.0
  %v5349 = vmax.f32 %v5175, 0.0
  %v5350 = vmax.f32 %v5176, 0.0
  %v5351 = vmax.f32 %v5177, 0.0
  %v5352 = vmax.f32 %v5178, 0.0
  %v5353 = vmax.f32 %v5179, 0.0
  %v5354 = vmax.f32 %v5180, 0.0
  %v5355 = vmax.f32 %v5181, 0.0
  %v5356 = vmax.f32 %v5182, 0.0
  %v5357 = vmax.f32 %v5183, 0.0
  %v5358 = vmax.f32 %v5184, 0.0
  %v5359 = vmax.f32 %v5185, 0.0
  %v5360 = vmax.f32 %v5186, 0.0
  %v5361 = vmax.f32 %v5187, 0.0
  %v5362 = vmax.f32 %v5188, 0.0
  %v5363 = vmax.f32 %v5189, 0.0
  %v5364 = vmax.f32 %v5190, 0.0
  %v5365 = vmax.f32 %v5191, 0.0
  %v5366 = vmax.f32 %v5192, 0.0
  %v5367 = vmax.f32 %v5193, 0.0
  %v5368 = vmax.f32 %v5194, 0.0
  %v5369 = vmax.f32 %v5195, 0.0
  %v5370 = vmax.f32 %v5196, 0.0
  %v5371 = vmax.f32 %v5197, 0.0
  %v5372 = vmax.f32 %v5198, 0.0
  %v5373 = vmax.f32 %v5199, 0.0
  %v5374 = vmax.f32 %v5200, 0.0
  %v5375 = vmax.f32 %v5201, 0.0
  %v5376 = vmax.f32 %v5202, 0.0
  %v5377 = vmax.f32 %v5203, 0.0
  %v5378 = vmax.f32 %v5204, 0.0
  %v5379 = vmax.f32 %v5205, 0.0
  %v5380 = vmax.f32 %v5206, 0.0
  %v5381 = vmax.f32 %v5207, 0.0
  %v5382 = vmax.f32 %v5208, 0.0
  %v5383 = vmax.f32 %v5209, 0.0
  %v5384 = vmax.f32 %v5210, 0.0
  %v5385 = vmax.f32 %v5211, 0.0
  %v5386 = vmax.f32 %v5212, 0.0
  %v5387 = vmax.f32 %v5213, 0.0
  %v5388 = vmax.f32 %v5214, 0.0
  %v5389 = vmax.f32 %v5215, 0.0
  %v5390 = vmax.f32 %v5216, 0.0
  %v5391 = vmax.f32 %v5217, 0.0
  %v5392 = vmax.f32 %v5218, 0.0
  %v5393 = vmax.f32 %v5219, 0.0
  %v5394 = vmax.f32 %v5220, 0.0
  %v5395 = vmax.f32 %v5221, 0.0
  %v5396 = vmax.f32 %v5222, 0.0
  %v5397 = vmax.f32 %v5223, 0.0
  %v5398 = vmax.f32 %v5224, 0.0
  %v5399 = vmax.f32 %v5225, 0.0
  %v5400 = vmax.f32 %v5226, 0.0
  %v5401 = vmax.f32 %v5227, 0.0
  %v5402 = vmax.f32 %v5228, 0.0
  %v5403 = vmax.f32 %v5229, 0.0
  %v5404 = vmax.f32 %v5230, 0.0
  %v5405 = vmax.f32 %v5231, 0.0
  %v5406 = vmax.f32 %v5232, 0.0
  %v5407 = vmax.f32 %v5233, 0.0
  %v5408 = vmax.f32 %v5234, 0.0
  %v5409 = vmax.f32 %v5235, 0.0
  %v5410 = vmax.f32 %v5236, 0.0
  %v5411 = vmax.f32 %v5237, 0.0
  %v5412 = vmax.f32 %v5238, 0.0
  %v5413 = vmax.f32 %v5239, 0.0
  %v5414 = vmax.f32 %v5240, 0.0
  %v5415 = vmax.f32 %v5241, 0.0
  %v5416 = vmax.f32 %v5242, 0.0
  %v5417 = vmax.f32 %v5243, 0.0
  %v5418 = vmax.f32 %v5244, 0.0
  %v5419 = vld [vmem:[%s1] sm:$0xff]
  %v5420 = vld [vmem:[%s1 + $0x8] sm:$0xff]
  %v5421 = vld [vmem:[%s1 + $0x10] sm:$0xff]
  %v5422 = vld [vmem:[%s1 + $0x18] sm:$0xff]
  %v5423 = vld [vmem:[%s1 + $0x20] sm:$0xff]
  %v5424 = vld [vmem:[%s1 + $0x28] sm:$0xf]
  %v5425 = vld [vmem:[%s1 + $0x2c] sm:$0xff]
  %v5426 = vld [vmem:[%s1 + $0x34] sm:$0xff]
  %v5427 = vld [vmem:[%s1 + $0x3c] sm:$0xff]
  %v5428 = vld [vmem:[%s1 + $0x44] sm:$0xff]
  %v5429 = vld [vmem:[%s1 + $0x4c] sm:$0xff]
  %v5430 = vld [vmem:[%s1 + $0x54] sm:$0xf]
  %v5431 = vld [vmem:[%s1 + $0x58] sm:$0xff]
  %v5432 = vld [vmem:[%s1 + $0x60] sm:$0xff]
  %v5433 = vld [vmem:[%s1 + $0x68] sm:$0xff]
  %v5434 = vld [vmem:[%s1 + $0x70] sm:$0xff]
  %v5435 = vld [vmem:[%s1 + $0x78] sm:$0xff]
  %v5436 = vld [vmem:[%s1 + $0x80] sm:$0xf]
  %v5437 = vld [vmem:[%s1 + $0x84] sm:$0xff]
  %v5438 = vld [vmem:[%s1 + $0x8c] sm:$0xff]
  %v5439 = vld [vmem:[%s1 + $0x94] sm:$0xff]
  %v5440 = vld [vmem:[%s1 + $0x9c] sm:$0xff]
  %v5441 = vld [vmem:[%s1 + $0xa4] sm:$0xff]
  %v5442 = vld [vmem:[%s1 + $0xac] sm:$0xf]
  %v5443 = vld [vmem:[%s1 + $0xb0] sm:$0xff]
  %v5444 = vld [vmem:[%s1 + $0xb8] sm:$0xff]
  %v5445 = vld [vmem:[%s1 + $0xc0] sm:$0xff]
  %v5446 = vld [vmem:[%s1 + $0xc8] sm:$0xff]
  %v5447 = vld [vmem:[%s1 + $0xd0] sm:$0xff]
  %v5448 = vld [vmem:[%s1 + $0xd8] sm:$0xf]
  %v5449 = vld [vmem:[%s1 + $0xdc] sm:$0xff]
  %v5450 = vld [vmem:[%s1 + $0xe4] sm:$0xff]
  %v5451 = vld [vmem:[%s1 + $0xec] sm:$0xff]
  %v5452 = vld [vmem:[%s1 + $0xf4] sm:$0xff]
  %v5453 = vld [vmem:[%s1 + $0xfc] sm:$0xff]
  %v5454 = vld [vmem:[%s1 + $0x104] sm:$0xf]
  %v5455 = vld [vmem:[%s1 + $0x108] sm:$0xff]
  %v5456 = vld [vmem:[%s1 + $0x110] sm:$0xff]
  %v5457 = vld [vmem:[%s1 + $0x118] sm:$0xff]
  %v5458 = vld [vmem:[%s1 + $0x120] sm:$0xff]
  %v5459 = vld [vmem:[%s1 + $0x128] sm:$0xff]
  %v5460 = vld [vmem:[%s1 + $0x130] sm:$0xf]
  %v5461 = vld [vmem:[%s1 + $0x134] sm:$0xff]
  %v5462 = vld [vmem:[%s1 + $0x13c] sm:$0xff]
  %v5463 = vld [vmem:[%s1 + $0x144] sm:$0xff]
  %v5464 = vld [vmem:[%s1 + $0x14c] sm:$0xff]
  %v5465 = vld [vmem:[%s1 + $0x154] sm:$0xff]
  %v5466 = vld [vmem:[%s1 + $0x15c] sm:$0xf]
  %v5467 = vld [vmem:[%s1 + $0x160] sm:$0xff]
  %v5468 = vld [vmem:[%s1 + $0x168] sm:$0xff]
  %v5469 = vld [vmem:[%s1 + $0x170] sm:$0xff]
  %v5470 = vld [vmem:[%s1 + $0x178] sm:$0xff]
  %v5471 = vld [vmem:[%s1 + $0x180] sm:$0xff]
  %v5472 = vld [vmem:[%s1 + $0x188] sm:$0xf]
  %v5473 = vld [vmem:[%s1 + $0x18c] sm:$0xff]
  %v5474 = vld [vmem:[%s1 + $0x194] sm:$0xff]
  %v5475 = vld [vmem:[%s1 + $0x19c] sm:$0xff]
  %v5476 = vld [vmem:[%s1 + $0x1a4] sm:$0xff]
  %v5477 = vld [vmem:[%s1 + $0x1ac] sm:$0xff]
  %v5478 = vld [vmem:[%s1 + $0x1b4] sm:$0xf]
  %v5479 = vld [vmem:[%s1 + $0x1b8] sm:$0xff]
  %v5480 = vld [vmem:[%s1 + $0x1c0] sm:$0xff]
  %v5481 = vld [vmem:[%s1 + $0x1c8] sm:$0xff]
  %v5482 = vld [vmem:[%s1 + $0x1d0] sm:$0xff]
  %v5483 = vld [vmem:[%s1 + $0x1d8] sm:$0xff]
  %v5484 = vld [vmem:[%s1 + $0x1e0] sm:$0xf]
  %v5485 = vld [vmem:[%s1 + $0x1e4] sm:$0xff]
  %v5486 = vld [vmem:[%s1 + $0x1ec] sm:$0xff]
  %v5487 = vld [vmem:[%s1 + $0x1f4] sm:$0xff]
  %v5488 = vld [vmem:[%s1 + $0x1fc] sm:$0xff]
  %v5489 = vld [vmem:[%s1 + $0x204] sm:$0xff]
  %v5490 = vld [vmem:[%s1 + $0x20c] sm:$0xf]
  %v5491 = vld [vmem:[%s1 + $0x210] sm:$0xff]
  %v5492 = vld [vmem:[%s1 + $0x218] sm:$0xff]
  %v5493 = vld [vmem:[%s1 + $0x220] sm:$0xff]
  %v5494 = vld [vmem:[%s1 + $0x228] sm:$0xff]
  %v5495 = vld [vmem:[%s1 + $0x230] sm:$0xff]
  %v5496 = vld [vmem:[%s1 + $0x238] sm:$0xf]
  %v5497 = vld [vmem:[%s1 + $0x23c] sm:$0xff]
  %v5498 = vld [vmem:[%s1 + $0x244] sm:$0xff]
  %v5499 = vld [vmem:[%s1 + $0x24c] sm:$0xff]
  %v5500 = vld [vmem:[%s1 + $0x254] sm:$0xff]
  %v5501 = vld [vmem:[%s1 + $0x25c] sm:$0xff]
  %v5502 = vld [vmem:[%s1 + $0x264] sm:$0xf]
  %v5503 = vld [vmem:[%s1 + $0x268] sm:$0xff]
  %v5504 = vld [vmem:[%s1 + $0x270] sm:$0xff]
  %v5505 = vld [vmem:[%s1 + $0x278] sm:$0xff]
  %v5506 = vld [vmem:[%s1 + $0x280] sm:$0xff]
  %v5507 = vld [vmem:[%s1 + $0x288] sm:$0xff]
  %v5508 = vld [vmem:[%s1 + $0x290] sm:$0xf]
  %v5509 = vld [vmem:[%s1 + $0x294] sm:$0xff]
  %v5510 = vld [vmem:[%s1 + $0x29c] sm:$0xff]
  %v5511 = vld [vmem:[%s1 + $0x2a4] sm:$0xff]
  %v5512 = vld [vmem:[%s1 + $0x2ac] sm:$0xff]
  %v5513 = vld [vmem:[%s1 + $0x2b4] sm:$0xff]
  %v5514 = vld [vmem:[%s1 + $0x2bc] sm:$0xf]
  %v5515 = vld [vmem:[%s1 + $0x2c0] sm:$0xff]
  %v5516 = vld [vmem:[%s1 + $0x2c8] sm:$0xff]
  %v5517 = vld [vmem:[%s1 + $0x2d0] sm:$0xff]
  %v5518 = vld [vmem:[%s1 + $0x2d8] sm:$0xff]
  %v5519 = vld [vmem:[%s1 + $0x2e0] sm:$0xff]
  %v5520 = vld [vmem:[%s1 + $0x2e8] sm:$0xf]
  %v5521 = vld [vmem:[%s1 + $0x2ec] sm:$0xff]
  %v5522 = vld [vmem:[%s1 + $0x2f4] sm:$0xff]
  %v5523 = vld [vmem:[%s1 + $0x2fc] sm:$0xff]
  %v5524 = vld [vmem:[%s1 + $0x304] sm:$0xff]
  %v5525 = vld [vmem:[%s1 + $0x30c] sm:$0xff]
  %v5526 = vld [vmem:[%s1 + $0x314] sm:$0xf]
  %v5527 = vld [vmem:[%s1 + $0x318] sm:$0xff]
  %v5528 = vld [vmem:[%s1 + $0x320] sm:$0xff]
  %v5529 = vld [vmem:[%s1 + $0x328] sm:$0xff]
  %v5530 = vld [vmem:[%s1 + $0x330] sm:$0xff]
  %v5531 = vld [vmem:[%s1 + $0x338] sm:$0xff]
  %v5532 = vld [vmem:[%s1 + $0x340] sm:$0xf]
  %v5533 = vld [vmem:[%s1 + $0x344] sm:$0xff]
  %v5534 = vld [vmem:[%s1 + $0x34c] sm:$0xff]
  %v5535 = vld [vmem:[%s1 + $0x354] sm:$0xff]
  %v5536 = vld [vmem:[%s1 + $0x35c] sm:$0xff]
  %v5537 = vld [vmem:[%s1 + $0x364] sm:$0xff]
  %v5538 = vld [vmem:[%s1 + $0x36c] sm:$0xf]
  %v5539 = vld [vmem:[%s1 + $0x370] sm:$0xff]
  %v5540 = vld [vmem:[%s1 + $0x378] sm:$0xff]
  %v5541 = vld [vmem:[%s1 + $0x380] sm:$0xff]
  %v5542 = vld [vmem:[%s1 + $0x388] sm:$0xff]
  %v5543 = vld [vmem:[%s1 + $0x390] sm:$0xff]
  %v5544 = vld [vmem:[%s1 + $0x398] sm:$0xf]
  %v5545 = vld [vmem:[%s1 + $0x39c] sm:$0xff]
  %v5546 = vld [vmem:[%s1 + $0x3a4] sm:$0xff]
  %v5547 = vld [vmem:[%s1 + $0x3ac] sm:$0xff]
  %v5548 = vld [vmem:[%s1 + $0x3b4] sm:$0xff]
  %v5549 = vld [vmem:[%s1 + $0x3bc] sm:$0xff]
  %v5550 = vld [vmem:[%s1 + $0x3c4] sm:$0xf]
  %v5551 = vld [vmem:[%s1 + $0x3c8] sm:$0xff]
  %v5552 = vld [vmem:[%s1 + $0x3d0] sm:$0xff]
  %v5553 = vld [vmem:[%s1 + $0x3d8] sm:$0xff]
  %v5554 = vld [vmem:[%s1 + $0x3e0] sm:$0xff]
  %v5555 = vld [vmem:[%s1 + $0x3e8] sm:$0xff]
  %v5556 = vld [vmem:[%s1 + $0x3f0] sm:$0xf]
  %v5557 = vld [vmem:[%s1 + $0x3f4] sm:$0xff]
  %v5558 = vld [vmem:[%s1 + $0x3fc] sm:$0xff]
  %v5559 = vld [vmem:[%s1 + $0x404] sm:$0xff]
  %v5560 = vld [vmem:[%s1 + $0x40c] sm:$0xff]
  %v5561 = vld [vmem:[%s1 + $0x414] sm:$0xff]
  %v5562 = vld [vmem:[%s1 + $0x41c] sm:$0xf]
  %v5563 = vpack.c.bf16 %v5246, %v5245
  %v5564 = vpack.c.bf16 %v5248, %v5247
  %v5565 = vpack.c.bf16 %v5250, %v5249
  %v5566 = vpack.c.bf16 %v5252, %v5251
  %v5567 = vpack.c.bf16 %v5254, %v5253
  %v5568 = vpack.c.bf16 %v5256, %v5255
  %v5569 = vpack.c.bf16 %v5258, %v5257
  %v5570 = vpack.c.bf16 %v5260, %v5259
  %v5571 = vpack.c.bf16 %v5262, %v5261
  %v5572 = vpack.c.bf16 %v5264, %v5263
  %v5573 = vpack.c.bf16 %v5266, %v5265
  %v5574 = vpack.c.bf16 %v5268, %v5267
  %v5575 = vpack.c.bf16 %v5270, %v5269
  %v5576 = vpack.c.bf16 %v5272, %v5271
  %v5577 = vpack.c.bf16 %v5274, %v5273
  %v5578 = vpack.c.bf16 %v5276, %v5275
  %v5579 = vpack.c.bf16 %v5278, %v5277
  %v5580 = vpack.c.bf16 %v5280, %v5279
  %v5581 = vpack.c.bf16 %v5282, %v5281
  %v5582 = vpack.c.bf16 %v5284, %v5283
  %v5583 = vpack.c.bf16 %v5286, %v5285
  %v5584 = vpack.c.bf16 %v5288, %v5287
  %v5585 = vpack.c.bf16 %v5290, %v5289
  %v5586 = vpack.c.bf16 %v5292, %v5291
  %v5587 = vpack.c.bf16 %v5294, %v5293
  %v5588 = vpack.c.bf16 %v5296, %v5295
  %v5589 = vpack.c.bf16 %v5298, %v5297
  %v5590 = vpack.c.bf16 %v5300, %v5299
  %v5591 = vpack.c.bf16 %v5302, %v5301
  %v5592 = vpack.c.bf16 %v5304, %v5303
  %v5593 = vpack.c.bf16 %v5306, %v5305
  %v5594 = vpack.c.bf16 %v5308, %v5307
  %v5595 = vpack.c.bf16 %v5310, %v5309
  %v5596 = vpack.c.bf16 %v5312, %v5311
  %v5597 = vpack.c.bf16 %v5314, %v5313
  %v5598 = vpack.c.bf16 %v5316, %v5315
  %v5599 = vpack.c.bf16 %v5318, %v5317
  %v5600 = vpack.c.bf16 %v5320, %v5319
  %v5601 = vpack.c.bf16 %v5322, %v5321
  %v5602 = vpack.c.bf16 %v5324, %v5323
  %v5603 = vpack.c.bf16 %v5326, %v5325
  %v5604 = vpack.c.bf16 %v5328, %v5327
  %v5605 = vpack.c.bf16 %v5330, %v5329
  %v5606 = vpack.c.bf16 %v5332, %v5331
  %v5607 = vpack.c.bf16 %v5334, %v5333
  %v5608 = vpack.c.bf16 %v5336, %v5335
  %v5609 = vpack.c.bf16 %v5338, %v5337
  %v5610 = vpack.c.bf16 %v5340, %v5339
  %v5611 = vpack.c.bf16 %v5342, %v5341
  %v5612 = vpack.c.bf16 %v5344, %v5343
  %v5613 = vpack.c.bf16 %v5346, %v5345
  %v5614 = vpack.c.bf16 %v5348, %v5347
  %v5615 = vpack.c.bf16 %v5350, %v5349
  %v5616 = vpack.c.bf16 %v5352, %v5351
  %v5617 = vpack.c.bf16 %v5354, %v5353
  %v5618 = vpack.c.bf16 %v5356, %v5355
  %v5619 = vpack.c.bf16 %v5358, %v5357
  %v5620 = vpack.c.bf16 %v5360, %v5359
  %v5621 = vpack.c.bf16 %v5362, %v5361
  %v5622 = vpack.c.bf16 %v5364, %v5363
  %v5623 = vpack.c.bf16 %v5366, %v5365
  %v5624 = vpack.c.bf16 %v5368, %v5367
  %v5625 = vpack.c.bf16 %v5370, %v5369
  %v5626 = vpack.c.bf16 %v5372, %v5371
  %v5627 = vpack.c.bf16 %v5374, %v5373
  %v5628 = vpack.c.bf16 %v5376, %v5375
  %v5629 = vpack.c.bf16 %v5378, %v5377
  %v5630 = vpack.c.bf16 %v5380, %v5379
  %v5631 = vpack.c.bf16 %v5382, %v5381
  %v5632 = vpack.c.bf16 %v5384, %v5383
  %v5633 = vpack.c.bf16 %v5386, %v5385
  %v5634 = vpack.c.bf16 %v5388, %v5387
  %v5635 = vpack.c.bf16 %v5390, %v5389
  %v5636 = vpack.c.bf16 %v5392, %v5391
  %v5637 = vpack.c.bf16 %v5394, %v5393
  %v5638 = vpack.c.bf16 %v5396, %v5395
  %v5639 = vpack.c.bf16 %v5398, %v5397
  %v5640 = vpack.c.bf16 %v5400, %v5399
  %v5641 = vpack.c.bf16 %v5402, %v5401
  %v5642 = vpack.c.bf16 %v5404, %v5403
  %v5643 = vpack.c.bf16 %v5406, %v5405
  %v5644 = vpack.c.bf16 %v5408, %v5407
  %v5645 = vpack.c.bf16 %v5410, %v5409
  %v5646 = vpack.c.bf16 %v5412, %v5411
  %v5647 = vpack.c.bf16 %v5414, %v5413
  %v5648 = vpack.c.bf16 %v5416, %v5415
  %v5649 = vpack.c.bf16 %v5418, %v5417
  %v5794 = vunpack.c.l.b16 %v5419
  %v5795 = vunpack.c.h.b16 %v5419
  %v5796 = vunpack.c.l.b16 %v5420
  %v5797 = vunpack.c.h.b16 %v5420
  %v5798 = vunpack.c.l.b16 %v5421
  %v5799 = vunpack.c.h.b16 %v5421
  %v5800 = vunpack.c.l.b16 %v5422
  %v5801 = vunpack.c.h.b16 %v5422
  %v5802 = vunpack.c.l.b16 %v5423
  %v5803 = vunpack.c.h.b16 %v5423
  %v5804 = vunpack.c.l.b16 %v5424
  %v5805 = vunpack.c.l.b16 %v5425
  %v5806 = vunpack.c.h.b16 %v5425
  %v5807 = vunpack.c.l.b16 %v5426
  %v5808 = vunpack.c.h.b16 %v5426
  %v5809 = vunpack.c.l.b16 %v5427
  %v5810 = vunpack.c.h.b16 %v5427
  %v5811 = vunpack.c.l.b16 %v5428
  %v5812 = vunpack.c.h.b16 %v5428
  %v5813 = vunpack.c.l.b16 %v5429
  %v5814 = vunpack.c.h.b16 %v5429
  %v5815 = vunpack.c.l.b16 %v5430
  %v5816 = vunpack.c.l.b16 %v5431
  %v5817 = vunpack.c.h.b16 %v5431
  %v5818 = vunpack.c.l.b16 %v5432
  %v5819 = vunpack.c.h.b16 %v5432
  %v5820 = vunpack.c.l.b16 %v5433
  %v5821 = vunpack.c.h.b16 %v5433
  %v5822 = vunpack.c.l.b16 %v5434
  %v5823 = vunpack.c.h.b16 %v5434
  %v5824 = vunpack.c.l.b16 %v5435
  %v5825 = vunpack.c.h.b16 %v5435
  %v5826 = vunpack.c.l.b16 %v5436
  %v5827 = vunpack.c.l.b16 %v5437
  %v5828 = vunpack.c.h.b16 %v5437
  %v5829 = vunpack.c.l.b16 %v5438
  %v5830 = vunpack.c.h.b16 %v5438
  %v5831 = vunpack.c.l.b16 %v5439
  %v5832 = vunpack.c.h.b16 %v5439
  %v5833 = vunpack.c.l.b16 %v5440
  %v5834 = vunpack.c.h.b16 %v5440
  %v5835 = vunpack.c.l.b16 %v5441
  %v5836 = vunpack.c.h.b16 %v5441
  %v5837 = vunpack.c.l.b16 %v5442
  %v5838 = vunpack.c.l.b16 %v5443
  %v5839 = vunpack.c.h.b16 %v5443
  %v5840 = vunpack.c.l.b16 %v5444
  %v5841 = vunpack.c.h.b16 %v5444
  %v5842 = vunpack.c.l.b16 %v5445
  %v5843 = vunpack.c.h.b16 %v5445
  %v5844 = vunpack.c.l.b16 %v5446
  %v5845 = vunpack.c.h.b16 %v5446
  %v5846 = vunpack.c.l.b16 %v5447
  %v5847 = vunpack.c.h.b16 %v5447
  %v5848 = vunpack.c.l.b16 %v5448
  %v5849 = vunpack.c.l.b16 %v5449
  %v5850 = vunpack.c.h.b16 %v5449
  %v5851 = vunpack.c.l.b16 %v5450
  %v5852 = vunpack.c.h.b16 %v5450
  %v5853 = vunpack.c.l.b16 %v5451
  %v5854 = vunpack.c.h.b16 %v5451
  %v5855 = vunpack.c.l.b16 %v5452
  %v5856 = vunpack.c.h.b16 %v5452
  %v5857 = vunpack.c.l.b16 %v5453
  %v5858 = vunpack.c.h.b16 %v5453
  %v5859 = vunpack.c.l.b16 %v5454
  %v5860 = vunpack.c.l.b16 %v5455
  %v5861 = vunpack.c.h.b16 %v5455
  %v5862 = vunpack.c.l.b16 %v5456
  %v5863 = vunpack.c.h.b16 %v5456
  %v5864 = vunpack.c.l.b16 %v5457
  %v5865 = vunpack.c.h.b16 %v5457
  %v5866 = vunpack.c.l.b16 %v5458
  %v5867 = vunpack.c.h.b16 %v5458
  %v5868 = vunpack.c.l.b16 %v5459
  %v5869 = vunpack.c.h.b16 %v5459
  %v5870 = vunpack.c.l.b16 %v5460
  %v5871 = vunpack.c.l.b16 %v5461
  %v5872 = vunpack.c.h.b16 %v5461
  %v5873 = vunpack.c.l.b16 %v5462
  %v5874 = vunpack.c.h.b16 %v5462
  %v5875 = vunpack.c.l.b16 %v5463
  %v5876 = vunpack.c.h.b16 %v5463
  %v5877 = vunpack.c.l.b16 %v5464
  %v5878 = vunpack.c.h.b16 %v5464
  %v5879 = vunpack.c.l.b16 %v5465
  %v5880 = vunpack.c.h.b16 %v5465
  %v5881 = vunpack.c.l.b16 %v5466
  %v5882 = vunpack.c.l.b16 %v5467
  %v5883 = vunpack.c.h.b16 %v5467
  %v5884 = vunpack.c.l.b16 %v5468
  %v5885 = vunpack.c.h.b16 %v5468
  %v5886 = vunpack.c.l.b16 %v5469
  %v5887 = vunpack.c.h.b16 %v5469
  %v5888 = vunpack.c.l.b16 %v5470
  %v5889 = vunpack.c.h.b16 %v5470
  %v5890 = vunpack.c.l.b16 %v5471
  %v5891 = vunpack.c.h.b16 %v5471
  %v5892 = vunpack.c.l.b16 %v5472
  %v5893 = vunpack.c.l.b16 %v5473
  %v5894 = vunpack.c.h.b16 %v5473
  %v5895 = vunpack.c.l.b16 %v5474
  %v5896 = vunpack.c.h.b16 %v5474
  %v5897 = vunpack.c.l.b16 %v5475
  %v5898 = vunpack.c.h.b16 %v5475
  %v5899 = vunpack.c.l.b16 %v5476
  %v5900 = vunpack.c.h.b16 %v5476
  %v5901 = vunpack.c.l.b16 %v5477
  %v5902 = vunpack.c.h.b16 %v5477
  %v5903 = vunpack.c.l.b16 %v5478
  %v5904 = vunpack.c.l.b16 %v5479
  %v5905 = vunpack.c.h.b16 %v5479
  %v5906 = vunpack.c.l.b16 %v5480
  %v5907 = vunpack.c.h.b16 %v5480
  %v5908 = vunpack.c.l.b16 %v5481
  %v5909 = vunpack.c.h.b16 %v5481
  %v5910 = vunpack.c.l.b16 %v5482
  %v5911 = vunpack.c.h.b16 %v5482
  %v5912 = vunpack.c.l.b16 %v5483
  %v5913 = vunpack.c.h.b16 %v5483
  %v5914 = vunpack.c.l.b16 %v5484
  %v5915 = vunpack.c.l.b16 %v5485
  %v5916 = vunpack.c.h.b16 %v5485
  %v5917 = vunpack.c.l.b16 %v5486
  %v5918 = vunpack.c.h.b16 %v5486
  %v5919 = vunpack.c.l.b16 %v5487
  %v5920 = vunpack.c.h.b16 %v5487
  %v5921 = vunpack.c.l.b16 %v5488
  %v5922 = vunpack.c.h.b16 %v5488
  %v5923 = vunpack.c.l.b16 %v5489
  %v5924 = vunpack.c.h.b16 %v5489
  %v5925 = vunpack.c.l.b16 %v5490
  %v5926 = vunpack.c.l.b16 %v5491
  %v5927 = vunpack.c.h.b16 %v5491
  %v5928 = vunpack.c.l.b16 %v5492
  %v5929 = vunpack.c.h.b16 %v5492
  %v5930 = vunpack.c.l.b16 %v5493
  %v5931 = vunpack.c.h.b16 %v5493
  %v5932 = vunpack.c.l.b16 %v5494
  %v5933 = vunpack.c.h.b16 %v5494
  %v5934 = vunpack.c.l.b16 %v5495
  %v5935 = vunpack.c.h.b16 %v5495
  %v5936 = vunpack.c.l.b16 %v5496
  %v5937 = vunpack.c.l.b16 %v5497
  %v5938 = vunpack.c.h.b16 %v5497
  %v5939 = vunpack.c.l.b16 %v5498
  %v5940 = vunpack.c.h.b16 %v5498
  %v5941 = vunpack.c.l.b16 %v5499
  %v5942 = vunpack.c.h.b16 %v5499
  %v5943 = vunpack.c.l.b16 %v5500
  %v5944 = vunpack.c.h.b16 %v5500
  %v5945 = vunpack.c.l.b16 %v5501
  %v5946 = vunpack.c.h.b16 %v5501
  %v5947 = vunpack.c.l.b16 %v5502
  %v5948 = vunpack.c.l.b16 %v5503
  %v5949 = vunpack.c.h.b16 %v5503
  %v5950 = vunpack.c.l.b16 %v5504
  %v5951 = vunpack.c.h.b16 %v5504
  %v5952 = vunpack.c.l.b16 %v5505
  %v5953 = vunpack.c.h.b16 %v5505
  %v5954 = vunpack.c.l.b16 %v5506
  %v5955 = vunpack.c.h.b16 %v5506
  %v5956 = vunpack.c.l.b16 %v5507
  %v5957 = vunpack.c.h.b16 %v5507
  %v5958 = vunpack.c.l.b16 %v5508
  %v5959 = vunpack.c.l.b16 %v5509
  %v5960 = vunpack.c.h.b16 %v5509
  %v5961 = vunpack.c.l.b16 %v5510
  %v5962 = vunpack.c.h.b16 %v5510
  %v5963 = vunpack.c.l.b16 %v5511
  %v5964 = vunpack.c.h.b16 %v5511
  %v5965 = vunpack.c.l.b16 %v5512
  %v5966 = vunpack.c.h.b16 %v5512
  %v5967 = vunpack.c.l.b16 %v5513
  %v5968 = vunpack.c.h.b16 %v5513
  %v5969 = vunpack.c.l.b16 %v5514
  %v5970 = vunpack.c.l.b16 %v5515
  %v5971 = vunpack.c.h.b16 %v5515
  %v5972 = vunpack.c.l.b16 %v5516
  %v5973 = vunpack.c.h.b16 %v5516
  %v5974 = vunpack.c.l.b16 %v5517
  %v5975 = vunpack.c.h.b16 %v5517
  %v5976 = vunpack.c.l.b16 %v5518
  %v5977 = vunpack.c.h.b16 %v5518
  %v5978 = vunpack.c.l.b16 %v5519
  %v5979 = vunpack.c.h.b16 %v5519
  %v5980 = vunpack.c.l.b16 %v5520
  %v5981 = vunpack.c.l.b16 %v5521
  %v5982 = vunpack.c.h.b16 %v5521
  %v5983 = vunpack.c.l.b16 %v5522
  %v5984 = vunpack.c.h.b16 %v5522
  %v5985 = vunpack.c.l.b16 %v5523
  %v5986 = vunpack.c.h.b16 %v5523
  %v5987 = vunpack.c.l.b16 %v5524
  %v5988 = vunpack.c.h.b16 %v5524
  %v5989 = vunpack.c.l.b16 %v5525
  %v5990 = vunpack.c.h.b16 %v5525
  %v5991 = vunpack.c.l.b16 %v5526
  %v5992 = vunpack.c.l.b16 %v5527
  %v5993 = vunpack.c.h.b16 %v5527
  %v5994 = vunpack.c.l.b16 %v5528
  %v5995 = vunpack.c.h.b16 %v5528
  %v5996 = vunpack.c.l.b16 %v5529
  %v5997 = vunpack.c.h.b16 %v5529
  %v5998 = vunpack.c.l.b16 %v5530
  %v5999 = vunpack.c.h.b16 %v5530
  %v6000 = vunpack.c.l.b16 %v5531
  %v6001 = vunpack.c.h.b16 %v5531
  %v6002 = vunpack.c.l.b16 %v5532
  %v6003 = vunpack.c.l.b16 %v5533
  %v6004 = vunpack.c.h.b16 %v5533
  %v6005 = vunpack.c.l.b16 %v5534
  %v6006 = vunpack.c.h.b16 %v5534
  %v6007 = vunpack.c.l.b16 %v5535
  %v6008 = vunpack.c.h.b16 %v5535
  %v6009 = vunpack.c.l.b16 %v5536
  %v6010 = vunpack.c.h.b16 %v5536
  %v6011 = vunpack.c.l.b16 %v5537
  %v6012 = vunpack.c.h.b16 %v5537
  %v6013 = vunpack.c.l.b16 %v5538
  %v6014 = vunpack.c.l.b16 %v5539
  %v6015 = vunpack.c.h.b16 %v5539
  %v6016 = vunpack.c.l.b16 %v5540
  %v6017 = vunpack.c.h.b16 %v5540
  %v6018 = vunpack.c.l.b16 %v5541
  %v6019 = vunpack.c.h.b16 %v5541
  %v6020 = vunpack.c.l.b16 %v5542
  %v6021 = vunpack.c.h.b16 %v5542
  %v6022 = vunpack.c.l.b16 %v5543
  %v6023 = vunpack.c.h.b16 %v5543
  %v6024 = vunpack.c.l.b16 %v5544
  %v6025 = vunpack.c.l.b16 %v5545
  %v6026 = vunpack.c.h.b16 %v5545
  %v6027 = vunpack.c.l.b16 %v5546
  %v6028 = vunpack.c.h.b16 %v5546
  %v6029 = vunpack.c.l.b16 %v5547
  %v6030 = vunpack.c.h.b16 %v5547
  %v6031 = vunpack.c.l.b16 %v5548
  %v6032 = vunpack.c.h.b16 %v5548
  %v6033 = vunpack.c.l.b16 %v5549
  %v6034 = vunpack.c.h.b16 %v5549
  %v6035 = vunpack.c.l.b16 %v5550
  %v6036 = vunpack.c.l.b16 %v5551
  %v6037 = vunpack.c.h.b16 %v5551
  %v6038 = vunpack.c.l.b16 %v5552
  %v6039 = vunpack.c.h.b16 %v5552
  %v6040 = vunpack.c.l.b16 %v5553
  %v6041 = vunpack.c.h.b16 %v5553
  %v6042 = vunpack.c.l.b16 %v5554
  %v6043 = vunpack.c.h.b16 %v5554
  %v6044 = vunpack.c.l.b16 %v5555
  %v6045 = vunpack.c.h.b16 %v5555
  %v6046 = vunpack.c.l.b16 %v5556
  %v6047 = vunpack.c.l.b16 %v5557
  %v6048 = vunpack.c.h.b16 %v5557
  %v6049 = vunpack.c.l.b16 %v5558
  %v6050 = vunpack.c.h.b16 %v5558
  %v6051 = vunpack.c.l.b16 %v5559
  %v6052 = vunpack.c.h.b16 %v5559
  %v6053 = vunpack.c.l.b16 %v5560
  %v6054 = vunpack.c.h.b16 %v5560
  %v6055 = vunpack.c.l.b16 %v5561
  %v6056 = vunpack.c.h.b16 %v5561
  %v6057 = vunpack.c.l.b16 %v5562
  %v6058 = vpack.c.b16 %v5805, %v5794
  %v6059 = vpack.c.b16 %v5806, %v5795
  %v6060 = vpack.c.b16 %v5807, %v5796
  %v6061 = vpack.c.b16 %v5808, %v5797
  %v6062 = vpack.c.b16 %v5809, %v5798
  %v6063 = vpack.c.b16 %v5810, %v5799
  %v6064 = vpack.c.b16 %v5811, %v5800
  %v6065 = vpack.c.b16 %v5812, %v5801
  %v6066 = vpack.c.b16 %v5813, %v5802
  %v6067 = vpack.c.b16 %v5814, %v5803
  %v6068 = vpack.c.b16 %v5815, %v5804
  %v6069 = vpack.c.b16 %v5827, %v5816
  %v6070 = vpack.c.b16 %v5828, %v5817
  %v6071 = vpack.c.b16 %v5829, %v5818
  %v6072 = vpack.c.b16 %v5830, %v5819
  %v6073 = vpack.c.b16 %v5831, %v5820
  %v6074 = vpack.c.b16 %v5832, %v5821
  %v6075 = vpack.c.b16 %v5833, %v5822
  %v6076 = vpack.c.b16 %v5834, %v5823
  %v6077 = vpack.c.b16 %v5835, %v5824
  %v6078 = vpack.c.b16 %v5836, %v5825
  %v6079 = vpack.c.b16 %v5837, %v5826
  %v6080 = vpack.c.b16 %v5849, %v5838
  %v6081 = vpack.c.b16 %v5850, %v5839
  %v6082 = vpack.c.b16 %v5851, %v5840
  %v6083 = vpack.c.b16 %v5852, %v5841
  %v6084 = vpack.c.b16 %v5853, %v5842
  %v6085 = vpack.c.b16 %v5854, %v5843
  %v6086 = vpack.c.b16 %v5855, %v5844
  %v6087 = vpack.c.b16 %v5856, %v5845
  %v6088 = vpack.c.b16 %v5857, %v5846
  %v6089 = vpack.c.b16 %v5858, %v5847
  %v6090 = vpack.c.b16 %v5859, %v5848
  %v6091 = vpack.c.b16 %v5871, %v5860
  %v6092 = vpack.c.b16 %v5872, %v5861
  %v6093 = vpack.c.b16 %v5873, %v5862
  %v6094 = vpack.c.b16 %v5874, %v5863
  %v6095 = vpack.c.b16 %v5875, %v5864
  %v6096 = vpack.c.b16 %v5876, %v5865
  %v6097 = vpack.c.b16 %v5877, %v5866
  %v6098 = vpack.c.b16 %v5878, %v5867
  %v6099 = vpack.c.b16 %v5879, %v5868
  %v6100 = vpack.c.b16 %v5880, %v5869
  %v6101 = vpack.c.b16 %v5881, %v5870
  %v6102 = vpack.c.b16 %v5893, %v5882
  %v6103 = vpack.c.b16 %v5894, %v5883
  %v6104 = vpack.c.b16 %v5895, %v5884
  %v6105 = vpack.c.b16 %v5896, %v5885
  %v6106 = vpack.c.b16 %v5897, %v5886
  %v6107 = vpack.c.b16 %v5898, %v5887
  %v6108 = vpack.c.b16 %v5899, %v5888
  %v6109 = vpack.c.b16 %v5900, %v5889
  %v6110 = vpack.c.b16 %v5901, %v5890
  %v6111 = vpack.c.b16 %v5902, %v5891
  %v6112 = vpack.c.b16 %v5903, %v5892
  %v6113 = vpack.c.b16 %v5915, %v5904
  %v6114 = vpack.c.b16 %v5916, %v5905
  %v6115 = vpack.c.b16 %v5917, %v5906
  %v6116 = vpack.c.b16 %v5918, %v5907
  %v6117 = vpack.c.b16 %v5919, %v5908
  %v6118 = vpack.c.b16 %v5920, %v5909
  %v6119 = vpack.c.b16 %v5921, %v5910
  %v6120 = vpack.c.b16 %v5922, %v5911
  %v6121 = vpack.c.b16 %v5923, %v5912
  %v6122 = vpack.c.b16 %v5924, %v5913
  %v6123 = vpack.c.b16 %v5925, %v5914
  %v6124 = vpack.c.b16 %v5937, %v5926
  %v6125 = vpack.c.b16 %v5938, %v5927
  %v6126 = vpack.c.b16 %v5939, %v5928
  %v6127 = vpack.c.b16 %v5940, %v5929
  %v6128 = vpack.c.b16 %v5941, %v5930
  %v6129 = vpack.c.b16 %v5942, %v5931
  %v6130 = vpack.c.b16 %v5943, %v5932
  %v6131 = vpack.c.b16 %v5944, %v5933
  %v6132 = vpack.c.b16 %v5945, %v5934
  %v6133 = vpack.c.b16 %v5946, %v5935
  %v6134 = vpack.c.b16 %v5947, %v5936
  %v6135 = vpack.c.b16 %v5959, %v5948
  %v6136 = vpack.c.b16 %v5960, %v5949
  %v6137 = vpack.c.b16 %v5961, %v5950
  %v6138 = vpack.c.b16 %v5962, %v5951
  %v6139 = vpack.c.b16 %v5963, %v5952
  %v6140 = vpack.c.b16 %v5964, %v5953
  %v6141 = vpack.c.b16 %v5965, %v5954
  %v6142 = vpack.c.b16 %v5966, %v5955
  %v6143 = vpack.c.b16 %v5967, %v5956
  %v6144 = vpack.c.b16 %v5968, %v5957
  %v6145 = vpack.c.b16 %v5969, %v5958
  %v6146 = vpack.c.b16 %v5981, %v5970
  %v6147 = vpack.c.b16 %v5982, %v5971
  %v6148 = vpack.c.b16 %v5983, %v5972
  %v6149 = vpack.c.b16 %v5984, %v5973
  %v6150 = vpack.c.b16 %v5985, %v5974
  %v6151 = vpack.c.b16 %v5986, %v5975
  %v6152 = vpack.c.b16 %v5987, %v5976
  %v6153 = vpack.c.b16 %v5988, %v5977
  %v6154 = vpack.c.b16 %v5989, %v5978
  %v6155 = vpack.c.b16 %v5990, %v5979
  %v6156 = vpack.c.b16 %v5991, %v5980
  %v6157 = vpack.c.b16 %v6003, %v5992
  %v6158 = vpack.c.b16 %v6004, %v5993
  %v6159 = vpack.c.b16 %v6005, %v5994
  %v6160 = vpack.c.b16 %v6006, %v5995
  %v6161 = vpack.c.b16 %v6007, %v5996
  %v6162 = vpack.c.b16 %v6008, %v5997
  %v6163 = vpack.c.b16 %v6009, %v5998
  %v6164 = vpack.c.b16 %v6010, %v5999
  %v6165 = vpack.c.b16 %v6011, %v6000
  %v6166 = vpack.c.b16 %v6012, %v6001
  %v6167 = vpack.c.b16 %v6013, %v6002
  %v6168 = vpack.c.b16 %v6025, %v6014
  %v6169 = vpack.c.b16 %v6026, %v6015
  %v6170 = vpack.c.b16 %v6027, %v6016
  %v6171 = vpack.c.b16 %v6028, %v6017
  %v6172 = vpack.c.b16 %v6029, %v6018
  %v6173 = vpack.c.b16 %v6030, %v6019
  %v6174 = vpack.c.b16 %v6031, %v6020
  %v6175 = vpack.c.b16 %v6032, %v6021
  %v6176 = vpack.c.b16 %v6033, %v6022
  %v6177 = vpack.c.b16 %v6034, %v6023
  %v6178 = vpack.c.b16 %v6035, %v6024
  %v6179 = vpack.c.b16 %v6047, %v6036
  %v6180 = vpack.c.b16 %v6048, %v6037
  %v6181 = vpack.c.b16 %v6049, %v6038
  %v6182 = vpack.c.b16 %v6050, %v6039
  %v6183 = vpack.c.b16 %v6051, %v6040
  %v6184 = vpack.c.b16 %v6052, %v6041
  %v6185 = vpack.c.b16 %v6053, %v6042
  %v6186 = vpack.c.b16 %v6054, %v6043
  %v6187 = vpack.c.b16 %v6055, %v6044
  %v6188 = vpack.c.b16 %v6056, %v6045
  %v6189 = vpack.c.b16 %v6057, %v6046
  %vm6310 = vcmask 916480
  %v6312 = vsel %vm6310, %v6068, 0
  %v6315 = vsel %vm6310, %v6079, 0
  %v6318 = vsel %vm6310, %v6090, 0
  %v6321 = vsel %vm6310, %v6101, 0
  %v6324 = vsel %vm6310, %v6112, 0
  %v6327 = vsel %vm6310, %v6123, 0
  %v6330 = vsel %vm6310, %v6134, 0
  %v6333 = vsel %vm6310, %v6145, 0
  %v6336 = vsel %vm6310, %v6156, 0
  %v6339 = vsel %vm6310, %v6167, 0
  %v6342 = vsel %vm6310, %v6178, 0
  %v6345 = vsel %vm6310, %v6189, 0
  %6347 = vmatprep.subr.bf16.mxu0 0
  %6348 = vmatpush1.bf16.msra.mxu0 %v5570
  %6349 = vmatprep.subr.bf16.mxu0 0
  %6350 = vmatpush1.bf16.msra.mxu0 %v5569
  %6351 = vmatprep.subr.bf16.mxu0 0
  %6352 = vmatpush1.bf16.msra.mxu0 %v5568
  %6353 = vmatprep.subr.bf16.mxu0 0
  %6354 = vmatpush1.bf16.msra.mxu0 %v5567
  %6355 = vmatprep.subr.bf16.mxu0 0
  %6356 = vmatpush1.bf16.msra.mxu0 %v5566
  %6357 = vmatprep.subr.bf16.mxu0 0
  %6358 = vmatpush1.bf16.msra.mxu0 %v5565
  %6359 = vmatprep.subr.bf16.mxu0 0
  %6360 = vmatpush1.bf16.msra.mxu0 %v5564
  %6361 = vmatprep.subr.bf16.mxu0 0
  %6362 = vmatpush1.bf16.msra.mxu0 %v5563
  %6363 = vmatprep.subr.bf16.mxu0 0
  %6364 = vmatpush2.bf16.msra.mxu0 %v5578
  %6365 = vmatprep.subr.bf16.mxu0 0
  %6366 = vmatpush2.bf16.msra.mxu0 %v5577
  %6367 = vmatprep.subr.bf16.mxu0 0
  %6368 = vmatpush2.bf16.msra.mxu0 %v5576
  %6369 = vmatprep.subr.bf16.mxu0 0
  %6370 = vmatpush2.bf16.msra.mxu0 %v5575
  %6371 = vmatprep.subr.bf16.mxu0 0
  %6372 = vmatpush2.bf16.msra.mxu0 %v5574
  %6373 = vmatprep.subr.bf16.mxu0 0
  %6374 = vmatpush2.bf16.msra.mxu0 %v5573
  %6375 = vmatprep.subr.bf16.mxu0 0
  %6376 = vmatpush2.bf16.msra.mxu0 %v5572
  %6377 = vmatprep.subr.bf16.mxu0 0
  %6378 = vmatpush2.bf16.msra.mxu0 %v5571
  %6379 = vmatprep.mubr.bf16.mxu0 %v6059
  %6380 = vmatmul.mubr.bf16.gmra.mxu0 %v6058
  %v6381 = vpop.f32.mrf.mxu0
  %v6382 = vadd.f32 0.0, %v6381
  %v6383 = vpop.f32.mrf.mxu0
  %v6384 = vpop.f32.mrf.mxu0
  %v6385 = vadd.f32 0.0, %v6384
  %v6386 = vpop.f32.mrf.mxu0
  %6387 = vmatprep.mubr.bf16.mxu0 %v6070
  %6388 = vmatmul.mubr.bf16.gmra.mxu0 %v6069
  %v6389 = vpop.f32.mrf.mxu0
  %v6390 = vadd.f32 0.0, %v6389
  %v6391 = vpop.f32.mrf.mxu0
  %v6392 = vpop.f32.mrf.mxu0
  %v6393 = vadd.f32 0.0, %v6392
  %v6394 = vpop.f32.mrf.mxu0
  %6395 = vmatprep.mubr.bf16.mxu0 %v6081
  %6396 = vmatmul.mubr.bf16.gmra.mxu0 %v6080
  %v6397 = vpop.f32.mrf.mxu0
  %v6398 = vadd.f32 0.0, %v6397
  %v6399 = vpop.f32.mrf.mxu0
  %v6400 = vpop.f32.mrf.mxu0
  %v6401 = vadd.f32 0.0, %v6400
  %v6402 = vpop.f32.mrf.mxu0
  %6403 = vmatprep.mubr.bf16.mxu0 %v6092
  %6404 = vmatmul.mubr.bf16.gmra.mxu0 %v6091
  %v6405 = vpop.f32.mrf.mxu0
  %v6406 = vadd.f32 0.0, %v6405
  %v6407 = vpop.f32.mrf.mxu0
  %v6408 = vpop.f32.mrf.mxu0
  %v6409 = vadd.f32 0.0, %v6408
  %v6410 = vpop.f32.mrf.mxu0
  %6411 = vmatprep.mubr.bf16.mxu0 %v6103
  %6412 = vmatmul.mubr.bf16.gmra.mxu0 %v6102
  %v6413 = vpop.f32.mrf.mxu0
  %v6414 = vadd.f32 0.0, %v6413
  %v6415 = vpop.f32.mrf.mxu0
  %v6416 = vpop.f32.mrf.mxu0
  %v6417 = vadd.f32 0.0, %v6416
  %v6418 = vpop.f32.mrf.mxu0
  %6419 = vmatprep.mubr.bf16.mxu0 %v6114
  %6420 = vmatmul.mubr.bf16.gmra.mxu0 %v6113
  %v6421 = vpop.f32.mrf.mxu0
  %v6422 = vadd.f32 0.0, %v6421
  %v6423 = vpop.f32.mrf.mxu0
  %v6424 = vpop.f32.mrf.mxu0
  %v6425 = vadd.f32 0.0, %v6424
  %v6426 = vpop.f32.mrf.mxu0
  %6427 = vmatprep.mubr.bf16.mxu0 %v6125
  %6428 = vmatmul.mubr.bf16.gmra.mxu0 %v6124
  %v6429 = vpop.f32.mrf.mxu0
  %v6430 = vadd.f32 0.0, %v6429
  %v6431 = vpop.f32.mrf.mxu0
  %v6432 = vpop.f32.mrf.mxu0
  %v6433 = vadd.f32 0.0, %v6432
  %v6434 = vpop.f32.mrf.mxu0
  %6435 = vmatprep.mubr.bf16.mxu0 %v6136
  %6436 = vmatmul.mubr.bf16.gmra.mxu0 %v6135
  %v6437 = vpop.f32.mrf.mxu0
  %v6438 = vadd.f32 0.0, %v6437
  %v6439 = vpop.f32.mrf.mxu0
  %v6440 = vpop.f32.mrf.mxu0
  %v6441 = vadd.f32 0.0, %v6440
  %v6442 = vpop.f32.mrf.mxu0
  %6443 = vmatprep.mubr.bf16.mxu0 %v6147
  %6444 = vmatmul.mubr.bf16.gmra.mxu0 %v6146
  %v6445 = vpop.f32.mrf.mxu0
  %v6446 = vadd.f32 0.0, %v6445
  %v6447 = vpop.f32.mrf.mxu0
  %v6448 = vpop.f32.mrf.mxu0
  %v6449 = vadd.f32 0.0, %v6448
  %v6450 = vpop.f32.mrf.mxu0
  %6451 = vmatprep.mubr.bf16.mxu0 %v6158
  %6452 = vmatmul.mubr.bf16.gmra.mxu0 %v6157
  %v6453 = vpop.f32.mrf.mxu0
  %v6454 = vadd.f32 0.0, %v6453
  %v6455 = vpop.f32.mrf.mxu0
  %v6456 = vpop.f32.mrf.mxu0
  %v6457 = vadd.f32 0.0, %v6456
  %v6458 = vpop.f32.mrf.mxu0
  %6459 = vmatprep.mubr.bf16.mxu0 %v6169
  %6460 = vmatmul.mubr.bf16.gmra.mxu0 %v6168
  %v6461 = vpop.f32.mrf.mxu0
  %v6462 = vadd.f32 0.0, %v6461
  %v6463 = vpop.f32.mrf.mxu0
  %v6464 = vpop.f32.mrf.mxu0
  %v6465 = vadd.f32 0.0, %v6464
  %v6466 = vpop.f32.mrf.mxu0
  %6467 = vmatprep.mubr.bf16.mxu0 %v6180
  %6468 = vmatmul.mubr.bf16.gmra.mxu0 %v6179
  %v6469 = vpop.f32.mrf.mxu0
  %v6470 = vadd.f32 0.0, %v6469
  %v6471 = vpop.f32.mrf.mxu0
  %v6472 = vpop.f32.mrf.mxu0
  %v6473 = vadd.f32 0.0, %v6472
  %v6474 = vpop.f32.mrf.mxu0
  %6475 = vdwg.mxu0
  %6476 = vmatprep.subr.bf16.mxu0 0
  %6477 = vmatpush1.bf16.msra.mxu0 %v5586
  %6478 = vmatprep.subr.bf16.mxu0 0
  %6479 = vmatpush1.bf16.msra.mxu0 %v5585
  %6480 = vmatprep.subr.bf16.mxu0 0
  %6481 = vmatpush1.bf16.msra.mxu0 %v5584
  %6482 = vmatprep.subr.bf16.mxu0 0
  %6483 = vmatpush1.bf16.msra.mxu0 %v5583
  %6484 = vmatprep.subr.bf16.mxu0 0
  %6485 = vmatpush1.bf16.msra.mxu0 %v5582
  %6486 = vmatprep.subr.bf16.mxu0 0
  %6487 = vmatpush1.bf16.msra.mxu0 %v5581
  %6488 = vmatprep.subr.bf16.mxu0 0
  %6489 = vmatpush1.bf16.msra.mxu0 %v5580
  %6490 = vmatprep.subr.bf16.mxu0 0
  %6491 = vmatpush1.bf16.msra.mxu0 %v5579
  %6492 = vmatprep.subr.bf16.mxu0 0
  %6493 = vmatpush2.bf16.msra.mxu0 %v5594
  %6494 = vmatprep.subr.bf16.mxu0 0
  %6495 = vmatpush2.bf16.msra.mxu0 %v5593
  %6496 = vmatprep.subr.bf16.mxu0 0
  %6497 = vmatpush2.bf16.msra.mxu0 %v5592
  %6498 = vmatprep.subr.bf16.mxu0 0
  %6499 = vmatpush2.bf16.msra.mxu0 %v5591
  %6500 = vmatprep.subr.bf16.mxu0 0
  %6501 = vmatpush2.bf16.msra.mxu0 %v5590
  %6502 = vmatprep.subr.bf16.mxu0 0
  %6503 = vmatpush2.bf16.msra.mxu0 %v5589
  %6504 = vmatprep.subr.bf16.mxu0 0
  %6505 = vmatpush2.bf16.msra.mxu0 %v5588
  %6506 = vmatprep.subr.bf16.mxu0 0
  %6507 = vmatpush2.bf16.msra.mxu0 %v5587
  %6508 = vmatprep.mubr.bf16.mxu0 %v6061
  %6509 = vmatmul.mubr.bf16.gmra.mxu0 %v6060
  %v6510 = vpop.f32.mrf.mxu0
  %v6511 = vadd.f32 %v6382, %v6510
  %v6512 = vpop.f32.mrf.mxu0
  %v6513 = vpop.f32.mrf.mxu0
  %v6514 = vadd.f32 %v6385, %v6513
  %v6515 = vpop.f32.mrf.mxu0
  %6516 = vmatprep.mubr.bf16.mxu0 %v6072
  %6517 = vmatmul.mubr.bf16.gmra.mxu0 %v6071
  %v6518 = vpop.f32.mrf.mxu0
  %v6519 = vadd.f32 %v6390, %v6518
  %v6520 = vpop.f32.mrf.mxu0
  %v6521 = vpop.f32.mrf.mxu0
  %v6522 = vadd.f32 %v6393, %v6521
  %v6523 = vpop.f32.mrf.mxu0
  %6524 = vmatprep.mubr.bf16.mxu0 %v6083
  %6525 = vmatmul.mubr.bf16.gmra.mxu0 %v6082
  %v6526 = vpop.f32.mrf.mxu0
  %v6527 = vadd.f32 %v6398, %v6526
  %v6528 = vpop.f32.mrf.mxu0
  %v6529 = vpop.f32.mrf.mxu0
  %v6530 = vadd.f32 %v6401, %v6529
  %v6531 = vpop.f32.mrf.mxu0
  %6532 = vmatprep.mubr.bf16.mxu0 %v6094
  %6533 = vmatmul.mubr.bf16.gmra.mxu0 %v6093
  %v6534 = vpop.f32.mrf.mxu0
  %v6535 = vadd.f32 %v6406, %v6534
  %v6536 = vpop.f32.mrf.mxu0
  %v6537 = vpop.f32.mrf.mxu0
  %v6538 = vadd.f32 %v6409, %v6537
  %v6539 = vpop.f32.mrf.mxu0
  %6540 = vmatprep.mubr.bf16.mxu0 %v6105
  %6541 = vmatmul.mubr.bf16.gmra.mxu0 %v6104
  %v6542 = vpop.f32.mrf.mxu0
  %v6543 = vadd.f32 %v6414, %v6542
  %v6544 = vpop.f32.mrf.mxu0
  %v6545 = vpop.f32.mrf.mxu0
  %v6546 = vadd.f32 %v6417, %v6545
  %v6547 = vpop.f32.mrf.mxu0
  %6548 = vmatprep.mubr.bf16.mxu0 %v6116
  %6549 = vmatmul.mubr.bf16.gmra.mxu0 %v6115
  %v6550 = vpop.f32.mrf.mxu0
  %v6551 = vadd.f32 %v6422, %v6550
  %v6552 = vpop.f32.mrf.mxu0
  %v6553 = vpop.f32.mrf.mxu0
  %v6554 = vadd.f32 %v6425, %v6553
  %v6555 = vpop.f32.mrf.mxu0
  %6556 = vmatprep.mubr.bf16.mxu0 %v6127
  %6557 = vmatmul.mubr.bf16.gmra.mxu0 %v6126
  %v6558 = vpop.f32.mrf.mxu0
  %v6559 = vadd.f32 %v6430, %v6558
  %v6560 = vpop.f32.mrf.mxu0
  %v6561 = vpop.f32.mrf.mxu0
  %v6562 = vadd.f32 %v6433, %v6561
  %v6563 = vpop.f32.mrf.mxu0
  %6564 = vmatprep.mubr.bf16.mxu0 %v6138
  %6565 = vmatmul.mubr.bf16.gmra.mxu0 %v6137
  %v6566 = vpop.f32.mrf.mxu0
  %v6567 = vadd.f32 %v6438, %v6566
  %v6568 = vpop.f32.mrf.mxu0
  %v6569 = vpop.f32.mrf.mxu0
  %v6570 = vadd.f32 %v6441, %v6569
  %v6571 = vpop.f32.mrf.mxu0
  %6572 = vmatprep.mubr.bf16.mxu0 %v6149
  %6573 = vmatmul.mubr.bf16.gmra.mxu0 %v6148
  %v6574 = vpop.f32.mrf.mxu0
  %v6575 = vadd.f32 %v6446, %v6574
  %v6576 = vpop.f32.mrf.mxu0
  %v6577 = vpop.f32.mrf.mxu0
  %v6578 = vadd.f32 %v6449, %v6577
  %v6579 = vpop.f32.mrf.mxu0
  %6580 = vmatprep.mubr.bf16.mxu0 %v6160
  %6581 = vmatmul.mubr.bf16.gmra.mxu0 %v6159
  %v6582 = vpop.f32.mrf.mxu0
  %v6583 = vadd.f32 %v6454, %v6582
  %v6584 = vpop.f32.mrf.mxu0
  %v6585 = vpop.f32.mrf.mxu0
  %v6586 = vadd.f32 %v6457, %v6585
  %v6587 = vpop.f32.mrf.mxu0
  %6588 = vmatprep.mubr.bf16.mxu0 %v6171
  %6589 = vmatmul.mubr.bf16.gmra.mxu0 %v6170
  %v6590 = vpop.f32.mrf.mxu0
  %v6591 = vadd.f32 %v6462, %v6590
  %v6592 = vpop.f32.mrf.mxu0
  %v6593 = vpop.f32.mrf.mxu0
  %v6594 = vadd.f32 %v6465, %v6593
  %v6595 = vpop.f32.mrf.mxu0
  %6596 = vmatprep.mubr.bf16.mxu0 %v6182
  %6597 = vmatmul.mubr.bf16.gmra.mxu0 %v6181
  %v6598 = vpop.f32.mrf.mxu0
  %v6599 = vadd.f32 %v6470, %v6598
  %v6600 = vpop.f32.mrf.mxu0
  %v6601 = vpop.f32.mrf.mxu0
  %v6602 = vadd.f32 %v6473, %v6601
  %v6603 = vpop.f32.mrf.mxu0
  %6604 = vdwg.mxu0
  %6605 = vmatprep.subr.bf16.mxu0 0
  %6606 = vmatpush1.bf16.msra.mxu0 %v5602
  %6607 = vmatprep.subr.bf16.mxu0 0
  %6608 = vmatpush1.bf16.msra.mxu0 %v5601
  %6609 = vmatprep.subr.bf16.mxu0 0
  %6610 = vmatpush1.bf16.msra.mxu0 %v5600
  %6611 = vmatprep.subr.bf16.mxu0 0
  %6612 = vmatpush1.bf16.msra.mxu0 %v5599
  %6613 = vmatprep.subr.bf16.mxu0 0
  %6614 = vmatpush1.bf16.msra.mxu0 %v5598
  %6615 = vmatprep.subr.bf16.mxu0 0
  %6616 = vmatpush1.bf16.msra.mxu0 %v5597
  %6617 = vmatprep.subr.bf16.mxu0 0
  %6618 = vmatpush1.bf16.msra.mxu0 %v5596
  %6619 = vmatprep.subr.bf16.mxu0 0
  %6620 = vmatpush1.bf16.msra.mxu0 %v5595
  %6621 = vmatprep.subr.bf16.mxu0 0
  %6622 = vmatpush2.bf16.msra.mxu0 %v5610
  %6623 = vmatprep.subr.bf16.mxu0 0
  %6624 = vmatpush2.bf16.msra.mxu0 %v5609
  %6625 = vmatprep.subr.bf16.mxu0 0
  %6626 = vmatpush2.bf16.msra.mxu0 %v5608
  %6627 = vmatprep.subr.bf16.mxu0 0
  %6628 = vmatpush2.bf16.msra.mxu0 %v5607
  %6629 = vmatprep.subr.bf16.mxu0 0
  %6630 = vmatpush2.bf16.msra.mxu0 %v5606
  %6631 = vmatprep.subr.bf16.mxu0 0
  %6632 = vmatpush2.bf16.msra.mxu0 %v5605
  %6633 = vmatprep.subr.bf16.mxu0 0
  %6634 = vmatpush2.bf16.msra.mxu0 %v5604
  %6635 = vmatprep.subr.bf16.mxu0 0
  %6636 = vmatpush2.bf16.msra.mxu0 %v5603
  %6637 = vmatprep.mubr.bf16.mxu0 %v6063
  %6638 = vmatmul.mubr.bf16.gmra.mxu0 %v6062
  %v6639 = vpop.f32.mrf.mxu0
  %v6640 = vadd.f32 %v6511, %v6639
  %v6641 = vpop.f32.mrf.mxu0
  %v6642 = vpop.f32.mrf.mxu0
  %v6643 = vadd.f32 %v6514, %v6642
  %v6644 = vpop.f32.mrf.mxu0
  %6645 = vmatprep.mubr.bf16.mxu0 %v6074
  %6646 = vmatmul.mubr.bf16.gmra.mxu0 %v6073
  %v6647 = vpop.f32.mrf.mxu0
  %v6648 = vadd.f32 %v6519, %v6647
  %v6649 = vpop.f32.mrf.mxu0
  %v6650 = vpop.f32.mrf.mxu0
  %v6651 = vadd.f32 %v6522, %v6650
  %v6652 = vpop.f32.mrf.mxu0
  %6653 = vmatprep.mubr.bf16.mxu0 %v6085
  %6654 = vmatmul.mubr.bf16.gmra.mxu0 %v6084
  %v6655 = vpop.f32.mrf.mxu0
  %v6656 = vadd.f32 %v6527, %v6655
  %v6657 = vpop.f32.mrf.mxu0
  %v6658 = vpop.f32.mrf.mxu0
  %v6659 = vadd.f32 %v6530, %v6658
  %v6660 = vpop.f32.mrf.mxu0
  %6661 = vmatprep.mubr.bf16.mxu0 %v6096
  %6662 = vmatmul.mubr.bf16.gmra.mxu0 %v6095
  %v6663 = vpop.f32.mrf.mxu0
  %v6664 = vadd.f32 %v6535, %v6663
  %v6665 = vpop.f32.mrf.mxu0
  %v6666 = vpop.f32.mrf.mxu0
  %v6667 = vadd.f32 %v6538, %v6666
  %v6668 = vpop.f32.mrf.mxu0
  %6669 = vmatprep.mubr.bf16.mxu0 %v6107
  %6670 = vmatmul.mubr.bf16.gmra.mxu0 %v6106
  %v6671 = vpop.f32.mrf.mxu0
  %v6672 = vadd.f32 %v6543, %v6671
  %v6673 = vpop.f32.mrf.mxu0
  %v6674 = vpop.f32.mrf.mxu0
  %v6675 = vadd.f32 %v6546, %v6674
  %v6676 = vpop.f32.mrf.mxu0
  %6677 = vmatprep.mubr.bf16.mxu0 %v6118
  %6678 = vmatmul.mubr.bf16.gmra.mxu0 %v6117
  %v6679 = vpop.f32.mrf.mxu0
  %v6680 = vadd.f32 %v6551, %v6679
  %v6681 = vpop.f32.mrf.mxu0
  %v6682 = vpop.f32.mrf.mxu0
  %v6683 = vadd.f32 %v6554, %v6682
  %v6684 = vpop.f32.mrf.mxu0
  %6685 = vmatprep.mubr.bf16.mxu0 %v6129
  %6686 = vmatmul.mubr.bf16.gmra.mxu0 %v6128
  %v6687 = vpop.f32.mrf.mxu0
  %v6688 = vadd.f32 %v6559, %v6687
  %v6689 = vpop.f32.mrf.mxu0
  %v6690 = vpop.f32.mrf.mxu0
  %v6691 = vadd.f32 %v6562, %v6690
  %v6692 = vpop.f32.mrf.mxu0
  %6693 = vmatprep.mubr.bf16.mxu0 %v6140
  %6694 = vmatmul.mubr.bf16.gmra.mxu0 %v6139
  %v6695 = vpop.f32.mrf.mxu0
  %v6696 = vadd.f32 %v6567, %v6695
  %v6697 = vpop.f32.mrf.mxu0
  %v6698 = vpop.f32.mrf.mxu0
  %v6699 = vadd.f32 %v6570, %v6698
  %v6700 = vpop.f32.mrf.mxu0
  %6701 = vmatprep.mubr.bf16.mxu0 %v6151
  %6702 = vmatmul.mubr.bf16.gmra.mxu0 %v6150
  %v6703 = vpop.f32.mrf.mxu0
  %v6704 = vadd.f32 %v6575, %v6703
  %v6705 = vpop.f32.mrf.mxu0
  %v6706 = vpop.f32.mrf.mxu0
  %v6707 = vadd.f32 %v6578, %v6706
  %v6708 = vpop.f32.mrf.mxu0
  %6709 = vmatprep.mubr.bf16.mxu0 %v6162
  %6710 = vmatmul.mubr.bf16.gmra.mxu0 %v6161
  %v6711 = vpop.f32.mrf.mxu0
  %v6712 = vadd.f32 %v6583, %v6711
  %v6713 = vpop.f32.mrf.mxu0
  %v6714 = vpop.f32.mrf.mxu0
  %v6715 = vadd.f32 %v6586, %v6714
  %v6716 = vpop.f32.mrf.mxu0
  %6717 = vmatprep.mubr.bf16.mxu0 %v6173
  %6718 = vmatmul.mubr.bf16.gmra.mxu0 %v6172
  %v6719 = vpop.f32.mrf.mxu0
  %v6720 = vadd.f32 %v6591, %v6719
  %v6721 = vpop.f32.mrf.mxu0
  %v6722 = vpop.f32.mrf.mxu0
  %v6723 = vadd.f32 %v6594, %v6722
  %v6724 = vpop.f32.mrf.mxu0
  %6725 = vmatprep.mubr.bf16.mxu0 %v6184
  %6726 = vmatmul.mubr.bf16.gmra.mxu0 %v6183
  %v6727 = vpop.f32.mrf.mxu0
  %v6728 = vadd.f32 %v6599, %v6727
  %v6729 = vpop.f32.mrf.mxu0
  %v6730 = vpop.f32.mrf.mxu0
  %v6731 = vadd.f32 %v6602, %v6730
  %v6732 = vpop.f32.mrf.mxu0
  %6733 = vdwg.mxu0
  %6734 = vmatprep.subr.bf16.mxu0 0
  %6735 = vmatpush1.bf16.msra.mxu0 %v5618
  %6736 = vmatprep.subr.bf16.mxu0 0
  %6737 = vmatpush1.bf16.msra.mxu0 %v5617
  %6738 = vmatprep.subr.bf16.mxu0 0
  %6739 = vmatpush1.bf16.msra.mxu0 %v5616
  %6740 = vmatprep.subr.bf16.mxu0 0
  %6741 = vmatpush1.bf16.msra.mxu0 %v5615
  %6742 = vmatprep.subr.bf16.mxu0 0
  %6743 = vmatpush1.bf16.msra.mxu0 %v5614
  %6744 = vmatprep.subr.bf16.mxu0 0
  %6745 = vmatpush1.bf16.msra.mxu0 %v5613
  %6746 = vmatprep.subr.bf16.mxu0 0
  %6747 = vmatpush1.bf16.msra.mxu0 %v5612
  %6748 = vmatprep.subr.bf16.mxu0 0
  %6749 = vmatpush1.bf16.msra.mxu0 %v5611
  %6750 = vmatprep.subr.bf16.mxu0 0
  %6751 = vmatpush2.bf16.msra.mxu0 %v5626
  %6752 = vmatprep.subr.bf16.mxu0 0
  %6753 = vmatpush2.bf16.msra.mxu0 %v5625
  %6754 = vmatprep.subr.bf16.mxu0 0
  %6755 = vmatpush2.bf16.msra.mxu0 %v5624
  %6756 = vmatprep.subr.bf16.mxu0 0
  %6757 = vmatpush2.bf16.msra.mxu0 %v5623
  %6758 = vmatprep.subr.bf16.mxu0 0
  %6759 = vmatpush2.bf16.msra.mxu0 %v5622
  %6760 = vmatprep.subr.bf16.mxu0 0
  %6761 = vmatpush2.bf16.msra.mxu0 %v5621
  %6762 = vmatprep.subr.bf16.mxu0 0
  %6763 = vmatpush2.bf16.msra.mxu0 %v5620
  %6764 = vmatprep.subr.bf16.mxu0 0
  %6765 = vmatpush2.bf16.msra.mxu0 %v5619
  %6766 = vmatprep.mubr.bf16.mxu0 %v6065
  %6767 = vmatmul.mubr.bf16.gmra.mxu0 %v6064
  %v6768 = vpop.f32.mrf.mxu0
  %v6769 = vadd.f32 %v6640, %v6768
  %v6770 = vpop.f32.mrf.mxu0
  %v6771 = vpop.f32.mrf.mxu0
  %v6772 = vadd.f32 %v6643, %v6771
  %v6773 = vpop.f32.mrf.mxu0
  %6774 = vmatprep.mubr.bf16.mxu0 %v6076
  %6775 = vmatmul.mubr.bf16.gmra.mxu0 %v6075
  %v6776 = vpop.f32.mrf.mxu0
  %v6777 = vadd.f32 %v6648, %v6776
  %v6778 = vpop.f32.mrf.mxu0
  %v6779 = vpop.f32.mrf.mxu0
  %v6780 = vadd.f32 %v6651, %v6779
  %v6781 = vpop.f32.mrf.mxu0
  %6782 = vmatprep.mubr.bf16.mxu0 %v6087
  %6783 = vmatmul.mubr.bf16.gmra.mxu0 %v6086
  %v6784 = vpop.f32.mrf.mxu0
  %v6785 = vadd.f32 %v6656, %v6784
  %v6786 = vpop.f32.mrf.mxu0
  %v6787 = vpop.f32.mrf.mxu0
  %v6788 = vadd.f32 %v6659, %v6787
  %v6789 = vpop.f32.mrf.mxu0
  %6790 = vmatprep.mubr.bf16.mxu0 %v6098
  %6791 = vmatmul.mubr.bf16.gmra.mxu0 %v6097
  %v6792 = vpop.f32.mrf.mxu0
  %v6793 = vadd.f32 %v6664, %v6792
  %v6794 = vpop.f32.mrf.mxu0
  %v6795 = vpop.f32.mrf.mxu0
  %v6796 = vadd.f32 %v6667, %v6795
  %v6797 = vpop.f32.mrf.mxu0
  %6798 = vmatprep.mubr.bf16.mxu0 %v6109
  %6799 = vmatmul.mubr.bf16.gmra.mxu0 %v6108
  %v6800 = vpop.f32.mrf.mxu0
  %v6801 = vadd.f32 %v6672, %v6800
  %v6802 = vpop.f32.mrf.mxu0
  %v6803 = vpop.f32.mrf.mxu0
  %v6804 = vadd.f32 %v6675, %v6803
  %v6805 = vpop.f32.mrf.mxu0
  %6806 = vmatprep.mubr.bf16.mxu0 %v6120
  %6807 = vmatmul.mubr.bf16.gmra.mxu0 %v6119
  %v6808 = vpop.f32.mrf.mxu0
  %v6809 = vadd.f32 %v6680, %v6808
  %v6810 = vpop.f32.mrf.mxu0
  %v6811 = vpop.f32.mrf.mxu0
  %v6812 = vadd.f32 %v6683, %v6811
  %v6813 = vpop.f32.mrf.mxu0
  %6814 = vmatprep.mubr.bf16.mxu0 %v6131
  %6815 = vmatmul.mubr.bf16.gmra.mxu0 %v6130
  %v6816 = vpop.f32.mrf.mxu0
  %v6817 = vadd.f32 %v6688, %v6816
  %v6818 = vpop.f32.mrf.mxu0
  %v6819 = vpop.f32.mrf.mxu0
  %v6820 = vadd.f32 %v6691, %v6819
  %v6821 = vpop.f32.mrf.mxu0
  %6822 = vmatprep.mubr.bf16.mxu0 %v6142
  %6823 = vmatmul.mubr.bf16.gmra.mxu0 %v6141
  %v6824 = vpop.f32.mrf.mxu0
  %v6825 = vadd.f32 %v6696, %v6824
  %v6826 = vpop.f32.mrf.mxu0
  %v6827 = vpop.f32.mrf.mxu0
  %v6828 = vadd.f32 %v6699, %v6827
  %v6829 = vpop.f32.mrf.mxu0
  %6830 = vmatprep.mubr.bf16.mxu0 %v6153
  %6831 = vmatmul.mubr.bf16.gmra.mxu0 %v6152
  %v6832 = vpop.f32.mrf.mxu0
  %v6833 = vadd.f32 %v6704, %v6832
  %v6834 = vpop.f32.mrf.mxu0
  %v6835 = vpop.f32.mrf.mxu0
  %v6836 = vadd.f32 %v6707, %v6835
  %v6837 = vpop.f32.mrf.mxu0
  %6838 = vmatprep.mubr.bf16.mxu0 %v6164
  %6839 = vmatmul.mubr.bf16.gmra.mxu0 %v6163
  %v6840 = vpop.f32.mrf.mxu0
  %v6841 = vadd.f32 %v6712, %v6840
  %v6842 = vpop.f32.mrf.mxu0
  %v6843 = vpop.f32.mrf.mxu0
  %v6844 = vadd.f32 %v6715, %v6843
  %v6845 = vpop.f32.mrf.mxu0
  %6846 = vmatprep.mubr.bf16.mxu0 %v6175
  %6847 = vmatmul.mubr.bf16.gmra.mxu0 %v6174
  %v6848 = vpop.f32.mrf.mxu0
  %v6849 = vadd.f32 %v6720, %v6848
  %v6850 = vpop.f32.mrf.mxu0
  %v6851 = vpop.f32.mrf.mxu0
  %v6852 = vadd.f32 %v6723, %v6851
  %v6853 = vpop.f32.mrf.mxu0
  %6854 = vmatprep.mubr.bf16.mxu0 %v6186
  %6855 = vmatmul.mubr.bf16.gmra.mxu0 %v6185
  %v6856 = vpop.f32.mrf.mxu0
  %v6857 = vadd.f32 %v6728, %v6856
  %v6858 = vpop.f32.mrf.mxu0
  %v6859 = vpop.f32.mrf.mxu0
  %v6860 = vadd.f32 %v6731, %v6859
  %v6861 = vpop.f32.mrf.mxu0
  %6862 = vdwg.mxu0
  %6863 = vmatprep.subr.bf16.mxu0 0
  %6864 = vmatpush1.bf16.msra.mxu0 %v5634
  %6865 = vmatprep.subr.bf16.mxu0 0
  %6866 = vmatpush1.bf16.msra.mxu0 %v5633
  %6867 = vmatprep.subr.bf16.mxu0 0
  %6868 = vmatpush1.bf16.msra.mxu0 %v5632
  %6869 = vmatprep.subr.bf16.mxu0 0
  %6870 = vmatpush1.bf16.msra.mxu0 %v5631
  %6871 = vmatprep.subr.bf16.mxu0 0
  %6872 = vmatpush1.bf16.msra.mxu0 %v5630
  %6873 = vmatprep.subr.bf16.mxu0 0
  %6874 = vmatpush1.bf16.msra.mxu0 %v5629
  %6875 = vmatprep.subr.bf16.mxu0 0
  %6876 = vmatpush1.bf16.msra.mxu0 %v5628
  %6877 = vmatprep.subr.bf16.mxu0 0
  %6878 = vmatpush1.bf16.msra.mxu0 %v5627
  %6879 = vmatprep.subr.bf16.mxu0 0
  %6880 = vmatpush2.bf16.msra.mxu0 %v5642
  %6881 = vmatprep.subr.bf16.mxu0 0
  %6882 = vmatpush2.bf16.msra.mxu0 %v5641
  %6883 = vmatprep.subr.bf16.mxu0 0
  %6884 = vmatpush2.bf16.msra.mxu0 %v5640
  %6885 = vmatprep.subr.bf16.mxu0 0
  %6886 = vmatpush2.bf16.msra.mxu0 %v5639
  %6887 = vmatprep.subr.bf16.mxu0 0
  %6888 = vmatpush2.bf16.msra.mxu0 %v5638
  %6889 = vmatprep.subr.bf16.mxu0 0
  %6890 = vmatpush2.bf16.msra.mxu0 %v5637
  %6891 = vmatprep.subr.bf16.mxu0 0
  %6892 = vmatpush2.bf16.msra.mxu0 %v5636
  %6893 = vmatprep.subr.bf16.mxu0 0
  %6894 = vmatpush2.bf16.msra.mxu0 %v5635
  %6895 = vmatprep.mubr.bf16.mxu0 %v6067
  %6896 = vmatmul.mubr.bf16.gmra.mxu0 %v6066
  %v6897 = vpop.f32.mrf.mxu0
  %v6898 = vadd.f32 %v6769, %v6897
  %v6899 = vpop.f32.mrf.mxu0
  %v6900 = vpop.f32.mrf.mxu0
  %v6901 = vadd.f32 %v6772, %v6900
  %v6902 = vpop.f32.mrf.mxu0
  %6903 = vmatprep.mubr.bf16.mxu0 %v6078
  %6904 = vmatmul.mubr.bf16.gmra.mxu0 %v6077
  %v6905 = vpop.f32.mrf.mxu0
  %v6906 = vadd.f32 %v6777, %v6905
  %v6907 = vpop.f32.mrf.mxu0
  %v6908 = vpop.f32.mrf.mxu0
  %v6909 = vadd.f32 %v6780, %v6908
  %v6910 = vpop.f32.mrf.mxu0
  %6911 = vmatprep.mubr.bf16.mxu0 %v6089
  %6912 = vmatmul.mubr.bf16.gmra.mxu0 %v6088
  %v6913 = vpop.f32.mrf.mxu0
  %v6914 = vadd.f32 %v6785, %v6913
  %v6915 = vpop.f32.mrf.mxu0
  %v6916 = vpop.f32.mrf.mxu0
  %v6917 = vadd.f32 %v6788, %v6916
  %v6918 = vpop.f32.mrf.mxu0
  %6919 = vmatprep.mubr.bf16.mxu0 %v6100
  %6920 = vmatmul.mubr.bf16.gmra.mxu0 %v6099
  %v6921 = vpop.f32.mrf.mxu0
  %v6922 = vadd.f32 %v6793, %v6921
  %v6923 = vpop.f32.mrf.mxu0
  %v6924 = vpop.f32.mrf.mxu0
  %v6925 = vadd.f32 %v6796, %v6924
  %v6926 = vpop.f32.mrf.mxu0
  %6927 = vmatprep.mubr.bf16.mxu0 %v6111
  %6928 = vmatmul.mubr.bf16.gmra.mxu0 %v6110
  %v6929 = vpop.f32.mrf.mxu0
  %v6930 = vadd.f32 %v6801, %v6929
  %v6931 = vpop.f32.mrf.mxu0
  %v6932 = vpop.f32.mrf.mxu0
  %v6933 = vadd.f32 %v6804, %v6932
  %v6934 = vpop.f32.mrf.mxu0
  %6935 = vmatprep.mubr.bf16.mxu0 %v6122
  %6936 = vmatmul.mubr.bf16.gmra.mxu0 %v6121
  %v6937 = vpop.f32.mrf.mxu0
  %v6938 = vadd.f32 %v6809, %v6937
  %v6939 = vpop.f32.mrf.mxu0
  %v6940 = vpop.f32.mrf.mxu0
  %v6941 = vadd.f32 %v6812, %v6940
  %v6942 = vpop.f32.mrf.mxu0
  %6943 = vmatprep.mubr.bf16.mxu0 %v6133
  %6944 = vmatmul.mubr.bf16.gmra.mxu0 %v6132
  %v6945 = vpop.f32.mrf.mxu0
  %v6946 = vadd.f32 %v6817, %v6945
  %v6947 = vpop.f32.mrf.mxu0
  %v6948 = vpop.f32.mrf.mxu0
  %v6949 = vadd.f32 %v6820, %v6948
  %v6950 = vpop.f32.mrf.mxu0
  %6951 = vmatprep.mubr.bf16.mxu0 %v6144
  %6952 = vmatmul.mubr.bf16.gmra.mxu0 %v6143
  %v6953 = vpop.f32.mrf.mxu0
  %v6954 = vadd.f32 %v6825, %v6953
  %v6955 = vpop.f32.mrf.mxu0
  %v6956 = vpop.f32.mrf.mxu0
  %v6957 = vadd.f32 %v6828, %v6956
  %v6958 = vpop.f32.mrf.mxu0
  %6959 = vmatprep.mubr.bf16.mxu0 %v6155
  %6960 = vmatmul.mubr.bf16.gmra.mxu0 %v6154
  %v6961 = vpop.f32.mrf.mxu0
  %v6962 = vadd.f32 %v6833, %v6961
  %v6963 = vpop.f32.mrf.mxu0
  %v6964 = vpop.f32.mrf.mxu0
  %v6965 = vadd.f32 %v6836, %v6964
  %v6966 = vpop.f32.mrf.mxu0
  %6967 = vmatprep.mubr.bf16.mxu0 %v6166
  %6968 = vmatmul.mubr.bf16.gmra.mxu0 %v6165
  %v6969 = vpop.f32.mrf.mxu0
  %v6970 = vadd.f32 %v6841, %v6969
  %v6971 = vpop.f32.mrf.mxu0
  %v6972 = vpop.f32.mrf.mxu0
  %v6973 = vadd.f32 %v6844, %v6972
  %v6974 = vpop.f32.mrf.mxu0
  %6975 = vmatprep.mubr.bf16.mxu0 %v6177
  %6976 = vmatmul.mubr.bf16.gmra.mxu0 %v6176
  %v6977 = vpop.f32.mrf.mxu0
  %v6978 = vadd.f32 %v6849, %v6977
  %v6979 = vpop.f32.mrf.mxu0
  %v6980 = vpop.f32.mrf.mxu0
  %v6981 = vadd.f32 %v6852, %v6980
  %v6982 = vpop.f32.mrf.mxu0
  %6983 = vmatprep.mubr.bf16.mxu0 %v6188
  %6984 = vmatmul.mubr.bf16.gmra.mxu0 %v6187
  %v6985 = vpop.f32.mrf.mxu0
  %v6986 = vadd.f32 %v6857, %v6985
  %v6987 = vpop.f32.mrf.mxu0
  %v6988 = vpop.f32.mrf.mxu0
  %v6989 = vadd.f32 %v6860, %v6988
  %v6990 = vpop.f32.mrf.mxu0
  %6991 = vdwg.mxu0
  %6992 = vmatprep.subr.bf16.mxu0 0
  %6993 = vmatpush1.bf16.msra.mxu0 0
  %6994 = vmatprep.subr.bf16.mxu0 0
  %6995 = vmatpush1.bf16.msra.mxu0 %v5649
  %6996 = vmatprep.subr.bf16.mxu0 0
  %6997 = vmatpush1.bf16.msra.mxu0 %v5648
  %6998 = vmatprep.subr.bf16.mxu0 0
  %6999 = vmatpush1.bf16.msra.mxu0 %v5647
  %7000 = vmatprep.subr.bf16.mxu0 0
  %7001 = vmatpush1.bf16.msra.mxu0 %v5646
  %7002 = vmatprep.subr.bf16.mxu0 0
  %7003 = vmatpush1.bf16.msra.mxu0 %v5645
  %7004 = vmatprep.subr.bf16.mxu0 0
  %7005 = vmatpush1.bf16.msra.mxu0 %v5644
  %7006 = vmatprep.subr.bf16.mxu0 0
  %7007 = vmatpush1.bf16.msra.mxu0 %v5643
  %7008 = vmatprep.subr.bf16.mxu0 0
  %7009 = vmatpush2.bf16.msra.mxu0 0
  %7010 = vmatprep.subr.bf16.mxu0 0
  %7011 = vmatpush2.bf16.msra.mxu0 0
  %7012 = vmatprep.subr.bf16.mxu0 0
  %7013 = vmatpush2.bf16.msra.mxu0 0
  %7014 = vmatprep.subr.bf16.mxu0 0
  %7015 = vmatpush2.bf16.msra.mxu0 0
  %7016 = vmatprep.subr.bf16.mxu0 0
  %7017 = vmatpush2.bf16.msra.mxu0 0
  %7018 = vmatprep.subr.bf16.mxu0 0
  %7019 = vmatpush2.bf16.msra.mxu0 0
  %7020 = vmatprep.subr.bf16.mxu0 0
  %7021 = vmatpush2.bf16.msra.mxu0 0
  %7022 = vmatprep.subr.bf16.mxu0 0
  %7023 = vmatpush2.bf16.msra.mxu0 0
  %7024 = vmatprep.mubr.bf16.mxu0 0
  %7025 = vmatmul.mubr.bf16.gmra.mxu0 %v6312
  %v7026 = vpop.f32.mrf.mxu0
  %v7027 = vadd.f32 %v6898, %v7026
  %v7028 = vpop.f32.mrf.mxu0
  %v7029 = vpop.f32.mrf.mxu0
  %v7030 = vadd.f32 %v6901, %v7029
  %v7031 = vpop.f32.mrf.mxu0
  %7032 = vmatprep.mubr.bf16.mxu0 0
  %7033 = vmatmul.mubr.bf16.gmra.mxu0 %v6315
  %v7034 = vpop.f32.mrf.mxu0
  %v7035 = vadd.f32 %v6906, %v7034
  %v7036 = vpop.f32.mrf.mxu0
  %v7037 = vpop.f32.mrf.mxu0
  %v7038 = vadd.f32 %v6909, %v7037
  %v7039 = vpop.f32.mrf.mxu0
  %7040 = vmatprep.mubr.bf16.mxu0 0
  %7041 = vmatmul.mubr.bf16.gmra.mxu0 %v6318
  %v7042 = vpop.f32.mrf.mxu0
  %v7043 = vadd.f32 %v6914, %v7042
  %v7044 = vpop.f32.mrf.mxu0
  %v7045 = vpop.f32.mrf.mxu0
  %v7046 = vadd.f32 %v6917, %v7045
  %v7047 = vpop.f32.mrf.mxu0
  %7048 = vmatprep.mubr.bf16.mxu0 0
  %7049 = vmatmul.mubr.bf16.gmra.mxu0 %v6321
  %v7050 = vpop.f32.mrf.mxu0
  %v7051 = vadd.f32 %v6922, %v7050
  %v7052 = vpop.f32.mrf.mxu0
  %v7053 = vpop.f32.mrf.mxu0
  %v7054 = vadd.f32 %v6925, %v7053
  %v7055 = vpop.f32.mrf.mxu0
  %7056 = vmatprep.mubr.bf16.mxu0 0
  %7057 = vmatmul.mubr.bf16.gmra.mxu0 %v6324
  %v7058 = vpop.f32.mrf.mxu0
  %v7059 = vadd.f32 %v6930, %v7058
  %v7060 = vpop.f32.mrf.mxu0
  %v7061 = vpop.f32.mrf.mxu0
  %v7062 = vadd.f32 %v6933, %v7061
  %v7063 = vpop.f32.mrf.mxu0
  %7064 = vmatprep.mubr.bf16.mxu0 0
  %7065 = vmatmul.mubr.bf16.gmra.mxu0 %v6327
  %v7066 = vpop.f32.mrf.mxu0
  %v7067 = vadd.f32 %v6938, %v7066
  %v7068 = vpop.f32.mrf.mxu0
  %v7069 = vpop.f32.mrf.mxu0
  %v7070 = vadd.f32 %v6941, %v7069
  %v7071 = vpop.f32.mrf.mxu0
  %7072 = vmatprep.mubr.bf16.mxu0 0
  %7073 = vmatmul.mubr.bf16.gmra.mxu0 %v6330
  %v7074 = vpop.f32.mrf.mxu0
  %v7075 = vadd.f32 %v6946, %v7074
  %v7076 = vpop.f32.mrf.mxu0
  %v7077 = vpop.f32.mrf.mxu0
  %v7078 = vadd.f32 %v6949, %v7077
  %v7079 = vpop.f32.mrf.mxu0
  %7080 = vmatprep.mubr.bf16.mxu0 0
  %7081 = vmatmul.mubr.bf16.gmra.mxu0 %v6333
  %v7082 = vpop.f32.mrf.mxu0
  %v7083 = vadd.f32 %v6954, %v7082
  %v7084 = vpop.f32.mrf.mxu0
  %v7085 = vpop.f32.mrf.mxu0
  %v7086 = vadd.f32 %v6957, %v7085
  %v7087 = vpop.f32.mrf.mxu0
  %7088 = vmatprep.mubr.bf16.mxu0 0
  %7089 = vmatmul.mubr.bf16.gmra.mxu0 %v6336
  %v7090 = vpop.f32.mrf.mxu0
  %v7091 = vadd.f32 %v6962, %v7090
  %v7092 = vpop.f32.mrf.mxu0
  %v7093 = vpop.f32.mrf.mxu0
  %v7094 = vadd.f32 %v6965, %v7093
  %v7095 = vpop.f32.mrf.mxu0
  %7096 = vmatprep.mubr.bf16.mxu0 0
  %7097 = vmatmul.mubr.bf16.gmra.mxu0 %v6339
  %v7098 = vpop.f32.mrf.mxu0
  %v7099 = vadd.f32 %v6970, %v7098
  %v7100 = vpop.f32.mrf.mxu0
  %v7101 = vpop.f32.mrf.mxu0
  %v7102 = vadd.f32 %v6973, %v7101
  %v7103 = vpop.f32.mrf.mxu0
  %7104 = vmatprep.mubr.bf16.mxu0 0
  %7105 = vmatmul.mubr.bf16.gmra.mxu0 %v6342
  %v7106 = vpop.f32.mrf.mxu0
  %v7107 = vadd.f32 %v6978, %v7106
  %v7108 = vpop.f32.mrf.mxu0
  %v7109 = vpop.f32.mrf.mxu0
  %v7110 = vadd.f32 %v6981, %v7109
  %v7111 = vpop.f32.mrf.mxu0
  %7112 = vmatprep.mubr.bf16.mxu0 0
  %7113 = vmatmul.mubr.bf16.gmra.mxu0 %v6345
  %v7114 = vpop.f32.mrf.mxu0
  %v7115 = vadd.f32 %v6986, %v7114
  %v7116 = vpop.f32.mrf.mxu0
  %v7117 = vpop.f32.mrf.mxu0
  %v7118 = vadd.f32 %v6989, %v7117
  %v7119 = vpop.f32.mrf.mxu0
  %7120 = vdwg.mxu0
  %v7121 = vsel %vm198, %v7027, 0.0
  %7122 = vadd.xlane.f32.xlu0 %v7121
  %v7123 = vpop.xlane.xlu0 %7122
  %v7124 = vsel %vm198, %v7030, 0.0
  %7125 = vadd.xlane.f32.xlu0 %v7124
  %v7126 = vpop.xlane.xlu0 %7125
  %v7127 = vsel %vm198, %v7035, 0.0
  %7128 = vadd.xlane.f32.xlu0 %v7127
  %v7129 = vpop.xlane.xlu0 %7128
  %v7130 = vsel %vm198, %v7038, 0.0
  %7131 = vadd.xlane.f32.xlu0 %v7130
  %v7132 = vpop.xlane.xlu0 %7131
  %v7133 = vsel %vm198, %v7043, 0.0
  %7134 = vadd.xlane.f32.xlu0 %v7133
  %v7135 = vpop.xlane.xlu0 %7134
  %v7136 = vsel %vm198, %v7046, 0.0
  %7137 = vadd.xlane.f32.xlu0 %v7136
  %v7138 = vpop.xlane.xlu0 %7137
  %v7139 = vsel %vm198, %v7051, 0.0
  %7140 = vadd.xlane.f32.xlu0 %v7139
  %v7141 = vpop.xlane.xlu0 %7140
  %v7142 = vsel %vm198, %v7054, 0.0
  %7143 = vadd.xlane.f32.xlu0 %v7142
  %v7144 = vpop.xlane.xlu0 %7143
  %v7145 = vsel %vm198, %v7059, 0.0
  %7146 = vadd.xlane.f32.xlu0 %v7145
  %v7147 = vpop.xlane.xlu0 %7146
  %v7148 = vsel %vm198, %v7062, 0.0
  %7149 = vadd.xlane.f32.xlu0 %v7148
  %v7150 = vpop.xlane.xlu0 %7149
  %v7151 = vsel %vm198, %v7067, 0.0
  %7152 = vadd.xlane.f32.xlu0 %v7151
  %v7153 = vpop.xlane.xlu0 %7152
  %v7154 = vsel %vm198, %v7070, 0.0
  %7155 = vadd.xlane.f32.xlu0 %v7154
  %v7156 = vpop.xlane.xlu0 %7155
  %v7157 = vsel %vm198, %v7075, 0.0
  %7158 = vadd.xlane.f32.xlu0 %v7157
  %v7159 = vpop.xlane.xlu0 %7158
  %v7160 = vsel %vm198, %v7078, 0.0
  %7161 = vadd.xlane.f32.xlu0 %v7160
  %v7162 = vpop.xlane.xlu0 %7161
  %v7163 = vsel %vm198, %v7083, 0.0
  %7164 = vadd.xlane.f32.xlu0 %v7163
  %v7165 = vpop.xlane.xlu0 %7164
  %v7166 = vsel %vm198, %v7086, 0.0
  %7167 = vadd.xlane.f32.xlu0 %v7166
  %v7168 = vpop.xlane.xlu0 %7167
  %v7169 = vsel %vm198, %v7091, 0.0
  %7170 = vadd.xlane.f32.xlu0 %v7169
  %v7171 = vpop.xlane.xlu0 %7170
  %v7172 = vsel %vm198, %v7094, 0.0
  %7173 = vadd.xlane.f32.xlu0 %v7172
  %v7174 = vpop.xlane.xlu0 %7173
  %v7175 = vsel %vm198, %v7099, 0.0
  %7176 = vadd.xlane.f32.xlu0 %v7175
  %v7177 = vpop.xlane.xlu0 %7176
  %v7178 = vsel %vm198, %v7102, 0.0
  %7179 = vadd.xlane.f32.xlu0 %v7178
  %v7180 = vpop.xlane.xlu0 %7179
  %v7181 = vsel %vm198, %v7107, 0.0
  %7182 = vadd.xlane.f32.xlu0 %v7181
  %v7183 = vpop.xlane.xlu0 %7182
  %v7184 = vsel %vm198, %v7110, 0.0
  %7185 = vadd.xlane.f32.xlu0 %v7184
  %v7186 = vpop.xlane.xlu0 %7185
  %v7187 = vsel %vm198, %v7115, 0.0
  %7188 = vadd.xlane.f32.xlu0 %v7187
  %v7189 = vpop.xlane.xlu0 %7188
  %v7190 = vsel %vm198, %v7118, 0.0
  %7191 = vadd.xlane.f32.xlu0 %v7190
  %v7192 = vpop.xlane.xlu0 %7191
  %v7193 = vmul.f32 %v7123, 0.020408163
  %v7194 = vmul.f32 %v7126, 0.020408163
  %v7195 = vmul.f32 %v7129, 0.020408163
  %v7196 = vmul.f32 %v7132, 0.020408163
  %v7197 = vmul.f32 %v7135, 0.020408163
  %v7198 = vmul.f32 %v7138, 0.020408163
  %v7199 = vmul.f32 %v7141, 0.020408163
  %v7200 = vmul.f32 %v7144, 0.020408163
  %v7201 = vmul.f32 %v7147, 0.020408163
  %v7202 = vmul.f32 %v7150, 0.020408163
  %v7203 = vmul.f32 %v7153, 0.020408163
  %v7204 = vmul.f32 %v7156, 0.020408163
  %v7205 = vmul.f32 %v7159, 0.020408163
  %v7206 = vmul.f32 %v7162, 0.020408163
  %v7207 = vmul.f32 %v7165, 0.020408163
  %v7208 = vmul.f32 %v7168, 0.020408163
  %v7209 = vmul.f32 %v7171, 0.020408163
  %v7210 = vmul.f32 %v7174, 0.020408163
  %v7211 = vmul.f32 %v7177, 0.020408163
  %v7212 = vmul.f32 %v7180, 0.020408163
  %v7213 = vmul.f32 %v7183, 0.020408163
  %v7214 = vmul.f32 %v7186, 0.020408163
  %v7215 = vmul.f32 %v7189, 0.020408163
  %v7216 = vmul.f32 %v7192, 0.020408163
  %v7217 = vsub.f32 %v7027, %v7193
  %v7218 = vsub.f32 %v7030, %v7194
  %v7219 = vsub.f32 %v7035, %v7195
  %v7220 = vsub.f32 %v7038, %v7196
  %v7221 = vsub.f32 %v7043, %v7197
  %v7222 = vsub.f32 %v7046, %v7198
  %v7223 = vsub.f32 %v7051, %v7199
  %v7224 = vsub.f32 %v7054, %v7200
  %v7225 = vsub.f32 %v7059, %v7201
  %v7226 = vsub.f32 %v7062, %v7202
  %v7227 = vsub.f32 %v7067, %v7203
  %v7228 = vsub.f32 %v7070, %v7204
  %v7229 = vsub.f32 %v7075, %v7205
  %v7230 = vsub.f32 %v7078, %v7206
  %v7231 = vsub.f32 %v7083, %v7207
  %v7232 = vsub.f32 %v7086, %v7208
  %v7233 = vsub.f32 %v7091, %v7209
  %v7234 = vsub.f32 %v7094, %v7210
  %v7235 = vsub.f32 %v7099, %v7211
  %v7236 = vsub.f32 %v7102, %v7212
  %v7237 = vsub.f32 %v7107, %v7213
  %v7238 = vsub.f32 %v7110, %v7214
  %v7239 = vsub.f32 %v7115, %v7215
  %v7240 = vsub.f32 %v7118, %v7216
  %v7241 = vmul.f32 %v7217, %v7217
  %v7242 = vmul.f32 %v7218, %v7218
  %v7243 = vmul.f32 %v7219, %v7219
  %v7244 = vmul.f32 %v7220, %v7220
  %v7245 = vmul.f32 %v7221, %v7221
  %v7246 = vmul.f32 %v7222, %v7222
  %v7247 = vmul.f32 %v7223, %v7223
  %v7248 = vmul.f32 %v7224, %v7224
  %v7249 = vmul.f32 %v7225, %v7225
  %v7250 = vmul.f32 %v7226, %v7226
  %v7251 = vmul.f32 %v7227, %v7227
  %v7252 = vmul.f32 %v7228, %v7228
  %v7253 = vmul.f32 %v7229, %v7229
  %v7254 = vmul.f32 %v7230, %v7230
  %v7255 = vmul.f32 %v7231, %v7231
  %v7256 = vmul.f32 %v7232, %v7232
  %v7257 = vmul.f32 %v7233, %v7233
  %v7258 = vmul.f32 %v7234, %v7234
  %v7259 = vmul.f32 %v7235, %v7235
  %v7260 = vmul.f32 %v7236, %v7236
  %v7261 = vmul.f32 %v7237, %v7237
  %v7262 = vmul.f32 %v7238, %v7238
  %v7263 = vmul.f32 %v7239, %v7239
  %v7264 = vmul.f32 %v7240, %v7240
  %v7265 = vsel %vm198, %v7241, 0.0
  %7266 = vadd.xlane.f32.xlu0 %v7265
  %v7267 = vpop.xlane.xlu0 %7266
  %v7268 = vsel %vm198, %v7242, 0.0
  %7269 = vadd.xlane.f32.xlu0 %v7268
  %v7270 = vpop.xlane.xlu0 %7269
  %v7271 = vsel %vm198, %v7243, 0.0
  %7272 = vadd.xlane.f32.xlu0 %v7271
  %v7273 = vpop.xlane.xlu0 %7272
  %v7274 = vsel %vm198, %v7244, 0.0
  %7275 = vadd.xlane.f32.xlu0 %v7274
  %v7276 = vpop.xlane.xlu0 %7275
  %v7277 = vsel %vm198, %v7245, 0.0
  %7278 = vadd.xlane.f32.xlu0 %v7277
  %v7279 = vpop.xlane.xlu0 %7278
  %v7280 = vsel %vm198, %v7246, 0.0
  %7281 = vadd.xlane.f32.xlu0 %v7280
  %v7282 = vpop.xlane.xlu0 %7281
  %v7283 = vsel %vm198, %v7247, 0.0
  %7284 = vadd.xlane.f32.xlu0 %v7283
  %v7285 = vpop.xlane.xlu0 %7284
  %v7286 = vsel %vm198, %v7248, 0.0
  %7287 = vadd.xlane.f32.xlu0 %v7286
  %v7288 = vpop.xlane.xlu0 %7287
  %v7289 = vsel %vm198, %v7249, 0.0
  %7290 = vadd.xlane.f32.xlu0 %v7289
  %v7291 = vpop.xlane.xlu0 %7290
  %v7292 = vsel %vm198, %v7250, 0.0
  %7293 = vadd.xlane.f32.xlu0 %v7292
  %v7294 = vpop.xlane.xlu0 %7293
  %v7295 = vsel %vm198, %v7251, 0.0
  %7296 = vadd.xlane.f32.xlu0 %v7295
  %v7297 = vpop.xlane.xlu0 %7296
  %v7298 = vsel %vm198, %v7252, 0.0
  %7299 = vadd.xlane.f32.xlu0 %v7298
  %v7300 = vpop.xlane.xlu0 %7299
  %v7301 = vsel %vm198, %v7253, 0.0
  %7302 = vadd.xlane.f32.xlu0 %v7301
  %v7303 = vpop.xlane.xlu0 %7302
  %v7304 = vsel %vm198, %v7254, 0.0
  %7305 = vadd.xlane.f32.xlu0 %v7304
  %v7306 = vpop.xlane.xlu0 %7305
  %v7307 = vsel %vm198, %v7255, 0.0
  %7308 = vadd.xlane.f32.xlu0 %v7307
  %v7309 = vpop.xlane.xlu0 %7308
  %v7310 = vsel %vm198, %v7256, 0.0
  %7311 = vadd.xlane.f32.xlu0 %v7310
  %v7312 = vpop.xlane.xlu0 %7311
  %v7313 = vsel %vm198, %v7257, 0.0
  %7314 = vadd.xlane.f32.xlu0 %v7313
  %v7315 = vpop.xlane.xlu0 %7314
  %v7316 = vsel %vm198, %v7258, 0.0
  %7317 = vadd.xlane.f32.xlu0 %v7316
  %v7318 = vpop.xlane.xlu0 %7317
  %v7319 = vsel %vm198, %v7259, 0.0
  %7320 = vadd.xlane.f32.xlu0 %v7319
  %v7321 = vpop.xlane.xlu0 %7320
  %v7322 = vsel %vm198, %v7260, 0.0
  %7323 = vadd.xlane.f32.xlu0 %v7322
  %v7324 = vpop.xlane.xlu0 %7323
  %v7325 = vsel %vm198, %v7261, 0.0
  %7326 = vadd.xlane.f32.xlu0 %v7325
  %v7327 = vpop.xlane.xlu0 %7326
  %v7328 = vsel %vm198, %v7262, 0.0
  %7329 = vadd.xlane.f32.xlu0 %v7328
  %v7330 = vpop.xlane.xlu0 %7329
  %v7331 = vsel %vm198, %v7263, 0.0
  %7332 = vadd.xlane.f32.xlu0 %v7331
  %v7333 = vpop.xlane.xlu0 %7332
  %v7334 = vsel %vm198, %v7264, 0.0
  %7335 = vadd.xlane.f32.xlu0 %v7334
  %v7336 = vpop.xlane.xlu0 %7335
  %v7337 = vmul.f32 %v7267, 0.020408163
  %v7338 = vmul.f32 %v7270, 0.020408163
  %v7339 = vmul.f32 %v7273, 0.020408163
  %v7340 = vmul.f32 %v7276, 0.020408163
  %v7341 = vmul.f32 %v7279, 0.020408163
  %v7342 = vmul.f32 %v7282, 0.020408163
  %v7343 = vmul.f32 %v7285, 0.020408163
  %v7344 = vmul.f32 %v7288, 0.020408163
  %v7345 = vmul.f32 %v7291, 0.020408163
  %v7346 = vmul.f32 %v7294, 0.020408163
  %v7347 = vmul.f32 %v7297, 0.020408163
  %v7348 = vmul.f32 %v7300, 0.020408163
  %v7349 = vmul.f32 %v7303, 0.020408163
  %v7350 = vmul.f32 %v7306, 0.020408163
  %v7351 = vmul.f32 %v7309, 0.020408163
  %v7352 = vmul.f32 %v7312, 0.020408163
  %v7353 = vmul.f32 %v7315, 0.020408163
  %v7354 = vmul.f32 %v7318, 0.020408163
  %v7355 = vmul.f32 %v7321, 0.020408163
  %v7356 = vmul.f32 %v7324, 0.020408163
  %v7357 = vmul.f32 %v7327, 0.020408163
  %v7358 = vmul.f32 %v7330, 0.020408163
  %v7359 = vmul.f32 %v7333, 0.020408163
  %v7360 = vmul.f32 %v7336, 0.020408163
  %v7361 = vld [vmem:[%s4] sm:$0xff]
  %v7362 = vld [vmem:[%s4 + $0x8] sm:$0xff]
  %v7363 = vld [vmem:[%s4 + $0x10] sm:$0xff]
  %v7364 = vld [vmem:[%s4 + $0x18] sm:$0xff]
  %v7365 = vld [vmem:[%s4 + $0x20] sm:$0xff]
  %v7366 = vld [vmem:[%s4 + $0x28] sm:$0xff]
  %v7367 = vld [vmem:[%s4 + $0x30] sm:$0xff]
  %v7368 = vld [vmem:[%s4 + $0x38] sm:$0xff]
  %v7369 = vld [vmem:[%s4 + $0x40] sm:$0xff]
  %v7370 = vld [vmem:[%s4 + $0x48] sm:$0xff]
  %v7371 = vld [vmem:[%s4 + $0x50] sm:$0xff]
  %v7372 = vld [vmem:[%s4 + $0x58] sm:$0xff]
  %v7373 = vld [vmem:[%s4 + $0x60] sm:$0xff]
  %v7374 = vld [vmem:[%s4 + $0x68] sm:$0xff]
  %v7375 = vld [vmem:[%s4 + $0x70] sm:$0xff]
  %v7376 = vld [vmem:[%s4 + $0x78] sm:$0xff]
  %v7377 = vld [vmem:[%s4 + $0x80] sm:$0xff]
  %v7378 = vld [vmem:[%s4 + $0x88] sm:$0xff]
  %v7379 = vld [vmem:[%s4 + $0x90] sm:$0xff]
  %v7380 = vld [vmem:[%s4 + $0x98] sm:$0xff]
  %v7381 = vld [vmem:[%s4 + $0xa0] sm:$0xff]
  %v7382 = vld [vmem:[%s4 + $0xa8] sm:$0xff]
  %v7383 = vld [vmem:[%s4 + $0xb0] sm:$0xff]
  %v7384 = vld [vmem:[%s4 + $0xb8] sm:$0xff]
  %v7385 = vadd.f32 %v7337, 1e-05
  %v7386 = vadd.f32 %v7338, 1e-05
  %v7387 = vadd.f32 %v7339, 1e-05
  %v7388 = vadd.f32 %v7340, 1e-05
  %v7389 = vadd.f32 %v7341, 1e-05
  %v7390 = vadd.f32 %v7342, 1e-05
  %v7391 = vadd.f32 %v7343, 1e-05
  %v7392 = vadd.f32 %v7344, 1e-05
  %v7393 = vadd.f32 %v7345, 1e-05
  %v7394 = vadd.f32 %v7346, 1e-05
  %v7395 = vadd.f32 %v7347, 1e-05
  %v7396 = vadd.f32 %v7348, 1e-05
  %v7397 = vadd.f32 %v7349, 1e-05
  %v7398 = vadd.f32 %v7350, 1e-05
  %v7399 = vadd.f32 %v7351, 1e-05
  %v7400 = vadd.f32 %v7352, 1e-05
  %v7401 = vadd.f32 %v7353, 1e-05
  %v7402 = vadd.f32 %v7354, 1e-05
  %v7403 = vadd.f32 %v7355, 1e-05
  %v7404 = vadd.f32 %v7356, 1e-05
  %v7405 = vadd.f32 %v7357, 1e-05
  %v7406 = vadd.f32 %v7358, 1e-05
  %v7407 = vadd.f32 %v7359, 1e-05
  %v7408 = vadd.f32 %v7360, 1e-05
  %v7409 = vrsqrt.pop %v7385
  %v7410 = vrsqrt.pop %v7386
  %v7411 = vrsqrt.pop %v7387
  %v7412 = vrsqrt.pop %v7388
  %v7413 = vrsqrt.pop %v7389
  %v7414 = vrsqrt.pop %v7390
  %v7415 = vrsqrt.pop %v7391
  %v7416 = vrsqrt.pop %v7392
  %v7417 = vrsqrt.pop %v7393
  %v7418 = vrsqrt.pop %v7394
  %v7419 = vrsqrt.pop %v7395
  %v7420 = vrsqrt.pop %v7396
  %v7421 = vrsqrt.pop %v7397
  %v7422 = vrsqrt.pop %v7398
  %v7423 = vrsqrt.pop %v7399
  %v7424 = vrsqrt.pop %v7400
  %v7425 = vrsqrt.pop %v7401
  %v7426 = vrsqrt.pop %v7402
  %v7427 = vrsqrt.pop %v7403
  %v7428 = vrsqrt.pop %v7404
  %v7429 = vrsqrt.pop %v7405
  %v7430 = vrsqrt.pop %v7406
  %v7431 = vrsqrt.pop %v7407
  %v7432 = vrsqrt.pop %v7408
  %v7433 = vmul.f32 %v7361, %v7409
  %v7434 = vmul.f32 %v7362, %v7410
  %v7435 = vmul.f32 %v7363, %v7411
  %v7436 = vmul.f32 %v7364, %v7412
  %v7437 = vmul.f32 %v7365, %v7413
  %v7438 = vmul.f32 %v7366, %v7414
  %v7439 = vmul.f32 %v7367, %v7415
  %v7440 = vmul.f32 %v7368, %v7416
  %v7441 = vmul.f32 %v7369, %v7417
  %v7442 = vmul.f32 %v7370, %v7418
  %v7443 = vmul.f32 %v7371, %v7419
  %v7444 = vmul.f32 %v7372, %v7420
  %v7445 = vmul.f32 %v7373, %v7421
  %v7446 = vmul.f32 %v7374, %v7422
  %v7447 = vmul.f32 %v7375, %v7423
  %v7448 = vmul.f32 %v7376, %v7424
  %v7449 = vmul.f32 %v7377, %v7425
  %v7450 = vmul.f32 %v7378, %v7426
  %v7451 = vmul.f32 %v7379, %v7427
  %v7452 = vmul.f32 %v7380, %v7428
  %v7453 = vmul.f32 %v7381, %v7429
  %v7454 = vmul.f32 %v7382, %v7430
  %v7455 = vmul.f32 %v7383, %v7431
  %v7456 = vmul.f32 %v7384, %v7432
  %v7457 = vld [vmem:[%s5] sm:$0xff]
  %v7458 = vld [vmem:[%s5 + $0x8] sm:$0xff]
  %v7459 = vld [vmem:[%s5 + $0x10] sm:$0xff]
  %v7460 = vld [vmem:[%s5 + $0x18] sm:$0xff]
  %v7461 = vld [vmem:[%s5 + $0x20] sm:$0xff]
  %v7462 = vld [vmem:[%s5 + $0x28] sm:$0xff]
  %v7463 = vld [vmem:[%s5 + $0x30] sm:$0xff]
  %v7464 = vld [vmem:[%s5 + $0x38] sm:$0xff]
  %v7465 = vld [vmem:[%s5 + $0x40] sm:$0xff]
  %v7466 = vld [vmem:[%s5 + $0x48] sm:$0xff]
  %v7467 = vld [vmem:[%s5 + $0x50] sm:$0xff]
  %v7468 = vld [vmem:[%s5 + $0x58] sm:$0xff]
  %v7469 = vld [vmem:[%s5 + $0x60] sm:$0xff]
  %v7470 = vld [vmem:[%s5 + $0x68] sm:$0xff]
  %v7471 = vld [vmem:[%s5 + $0x70] sm:$0xff]
  %v7472 = vld [vmem:[%s5 + $0x78] sm:$0xff]
  %v7473 = vld [vmem:[%s5 + $0x80] sm:$0xff]
  %v7474 = vld [vmem:[%s5 + $0x88] sm:$0xff]
  %v7475 = vld [vmem:[%s5 + $0x90] sm:$0xff]
  %v7476 = vld [vmem:[%s5 + $0x98] sm:$0xff]
  %v7477 = vld [vmem:[%s5 + $0xa0] sm:$0xff]
  %v7478 = vld [vmem:[%s5 + $0xa8] sm:$0xff]
  %v7479 = vld [vmem:[%s5 + $0xb0] sm:$0xff]
  %v7480 = vld [vmem:[%s5 + $0xb8] sm:$0xff]
  %v7481 = vmul.f32 %v7433, %v7193
  %v7482 = vmul.f32 %v7434, %v7194
  %v7483 = vmul.f32 %v7435, %v7195
  %v7484 = vmul.f32 %v7436, %v7196
  %v7485 = vmul.f32 %v7437, %v7197
  %v7486 = vmul.f32 %v7438, %v7198
  %v7487 = vmul.f32 %v7439, %v7199
  %v7488 = vmul.f32 %v7440, %v7200
  %v7489 = vmul.f32 %v7441, %v7201
  %v7490 = vmul.f32 %v7442, %v7202
  %v7491 = vmul.f32 %v7443, %v7203
  %v7492 = vmul.f32 %v7444, %v7204
  %v7493 = vmul.f32 %v7445, %v7205
  %v7494 = vmul.f32 %v7446, %v7206
  %v7495 = vmul.f32 %v7447, %v7207
  %v7496 = vmul.f32 %v7448, %v7208
  %v7497 = vmul.f32 %v7449, %v7209
  %v7498 = vmul.f32 %v7450, %v7210
  %v7499 = vmul.f32 %v7451, %v7211
  %v7500 = vmul.f32 %v7452, %v7212
  %v7501 = vmul.f32 %v7453, %v7213
  %v7502 = vmul.f32 %v7454, %v7214
  %v7503 = vmul.f32 %v7455, %v7215
  %v7504 = vmul.f32 %v7456, %v7216
  %v7505 = vsub.f32 %v7457, %v7481
  %v7506 = vsub.f32 %v7458, %v7482
  %v7507 = vsub.f32 %v7459, %v7483
  %v7508 = vsub.f32 %v7460, %v7484
  %v7509 = vsub.f32 %v7461, %v7485
  %v7510 = vsub.f32 %v7462, %v7486
  %v7511 = vsub.f32 %v7463, %v7487
  %v7512 = vsub.f32 %v7464, %v7488
  %v7513 = vsub.f32 %v7465, %v7489
  %v7514 = vsub.f32 %v7466, %v7490
  %v7515 = vsub.f32 %v7467, %v7491
  %v7516 = vsub.f32 %v7468, %v7492
  %v7517 = vsub.f32 %v7469, %v7493
  %v7518 = vsub.f32 %v7470, %v7494
  %v7519 = vsub.f32 %v7471, %v7495
  %v7520 = vsub.f32 %v7472, %v7496
  %v7521 = vsub.f32 %v7473, %v7497
  %v7522 = vsub.f32 %v7474, %v7498
  %v7523 = vsub.f32 %v7475, %v7499
  %v7524 = vsub.f32 %v7476, %v7500
  %v7525 = vsub.f32 %v7477, %v7501
  %v7526 = vsub.f32 %v7478, %v7502
  %v7527 = vsub.f32 %v7479, %v7503
  %v7528 = vsub.f32 %v7480, %v7504
  %7530 = vset.pattern.permute.xlu0 0
  %7531 = vperm.xlu0 %7530, %v7433
  %v7532 = vpop.permute.xlu0 %7531
  %7535 = vset.pattern.permute.xlu0 0
  %7536 = vperm.xlu0 %7535, %v7434
  %v7537 = vpop.permute.xlu0 %7536
  %7540 = vset.pattern.permute.xlu0 0
  %7541 = vperm.xlu0 %7540, %v7435
  %v7542 = vpop.permute.xlu0 %7541
  %7545 = vset.pattern.permute.xlu0 0
  %7546 = vperm.xlu0 %7545, %v7436
  %v7547 = vpop.permute.xlu0 %7546
  %7550 = vset.pattern.permute.xlu0 0
  %7551 = vperm.xlu0 %7550, %v7437
  %v7552 = vpop.permute.xlu0 %7551
  %7555 = vset.pattern.permute.xlu0 0
  %7556 = vperm.xlu0 %7555, %v7438
  %v7557 = vpop.permute.xlu0 %7556
  %7560 = vset.pattern.permute.xlu0 0
  %7561 = vperm.xlu0 %7560, %v7439
  %v7562 = vpop.permute.xlu0 %7561
  %7565 = vset.pattern.permute.xlu0 0
  %7566 = vperm.xlu0 %7565, %v7440
  %v7567 = vpop.permute.xlu0 %7566
  %7570 = vset.pattern.permute.xlu0 0
  %7571 = vperm.xlu0 %7570, %v7441
  %v7572 = vpop.permute.xlu0 %7571
  %7575 = vset.pattern.permute.xlu0 0
  %7576 = vperm.xlu0 %7575, %v7442
  %v7577 = vpop.permute.xlu0 %7576
  %7580 = vset.pattern.permute.xlu0 0
  %7581 = vperm.xlu0 %7580, %v7443
  %v7582 = vpop.permute.xlu0 %7581
  %7585 = vset.pattern.permute.xlu0 0
  %7586 = vperm.xlu0 %7585, %v7444
  %v7587 = vpop.permute.xlu0 %7586
  %7590 = vset.pattern.permute.xlu0 0
  %7591 = vperm.xlu0 %7590, %v7445
  %v7592 = vpop.permute.xlu0 %7591
  %7595 = vset.pattern.permute.xlu0 0
  %7596 = vperm.xlu0 %7595, %v7446
  %v7597 = vpop.permute.xlu0 %7596
  %7600 = vset.pattern.permute.xlu0 0
  %7601 = vperm.xlu0 %7600, %v7447
  %v7602 = vpop.permute.xlu0 %7601
  %7605 = vset.pattern.permute.xlu0 0
  %7606 = vperm.xlu0 %7605, %v7448
  %v7607 = vpop.permute.xlu0 %7606
  %7610 = vset.pattern.permute.xlu0 0
  %7611 = vperm.xlu0 %7610, %v7449
  %v7612 = vpop.permute.xlu0 %7611
  %7615 = vset.pattern.permute.xlu0 0
  %7616 = vperm.xlu0 %7615, %v7450
  %v7617 = vpop.permute.xlu0 %7616
  %7620 = vset.pattern.permute.xlu0 0
  %7621 = vperm.xlu0 %7620, %v7451
  %v7622 = vpop.permute.xlu0 %7621
  %7625 = vset.pattern.permute.xlu0 0
  %7626 = vperm.xlu0 %7625, %v7452
  %v7627 = vpop.permute.xlu0 %7626
  %7630 = vset.pattern.permute.xlu0 0
  %7631 = vperm.xlu0 %7630, %v7453
  %v7632 = vpop.permute.xlu0 %7631
  %7635 = vset.pattern.permute.xlu0 0
  %7636 = vperm.xlu0 %7635, %v7454
  %v7637 = vpop.permute.xlu0 %7636
  %7640 = vset.pattern.permute.xlu0 0
  %7641 = vperm.xlu0 %7640, %v7455
  %v7642 = vpop.permute.xlu0 %7641
  %7645 = vset.pattern.permute.xlu0 0
  %7646 = vperm.xlu0 %7645, %v7456
  %v7647 = vpop.permute.xlu0 %7646
  %v7649 = vmul.f32 %v7532, %v7027
  %v7650 = vmul.f32 %v7537, %v7030
  %v7651 = vmul.f32 %v7542, %v7035
  %v7652 = vmul.f32 %v7547, %v7038
  %v7653 = vmul.f32 %v7552, %v7043
  %v7654 = vmul.f32 %v7557, %v7046
  %v7655 = vmul.f32 %v7562, %v7051
  %v7656 = vmul.f32 %v7567, %v7054
  %v7657 = vmul.f32 %v7572, %v7059
  %v7658 = vmul.f32 %v7577, %v7062
  %v7659 = vmul.f32 %v7582, %v7067
  %v7660 = vmul.f32 %v7587, %v7070
  %v7661 = vmul.f32 %v7592, %v7075
  %v7662 = vmul.f32 %v7597, %v7078
  %v7663 = vmul.f32 %v7602, %v7083
  %v7664 = vmul.f32 %v7607, %v7086
  %v7665 = vmul.f32 %v7612, %v7091
  %v7666 = vmul.f32 %v7617, %v7094
  %v7667 = vmul.f32 %v7622, %v7099
  %v7668 = vmul.f32 %v7627, %v7102
  %v7669 = vmul.f32 %v7632, %v7107
  %v7670 = vmul.f32 %v7637, %v7110
  %v7671 = vmul.f32 %v7642, %v7115
  %v7672 = vmul.f32 %v7647, %v7118
  %7674 = vset.pattern.permute.xlu0 0
  %7675 = vperm.xlu0 %7674, %v7505
  %v7676 = vpop.permute.xlu0 %7675
  %7679 = vset.pattern.permute.xlu0 0
  %7680 = vperm.xlu0 %7679, %v7506
  %v7681 = vpop.permute.xlu0 %7680
  %7684 = vset.pattern.permute.xlu0 0
  %7685 = vperm.xlu0 %7684, %v7507
  %v7686 = vpop.permute.xlu0 %7685
  %7689 = vset.pattern.permute.xlu0 0
  %7690 = vperm.xlu0 %7689, %v7508
  %v7691 = vpop.permute.xlu0 %7690
  %7694 = vset.pattern.permute.xlu0 0
  %7695 = vperm.xlu0 %7694, %v7509
  %v7696 = vpop.permute.xlu0 %7695
  %7699 = vset.pattern.permute.xlu0 0
  %7700 = vperm.xlu0 %7699, %v7510
  %v7701 = vpop.permute.xlu0 %7700
  %7704 = vset.pattern.permute.xlu0 0
  %7705 = vperm.xlu0 %7704, %v7511
  %v7706 = vpop.permute.xlu0 %7705
  %7709 = vset.pattern.permute.xlu0 0
  %7710 = vperm.xlu0 %7709, %v7512
  %v7711 = vpop.permute.xlu0 %7710
  %7714 = vset.pattern.permute.xlu0 0
  %7715 = vperm.xlu0 %7714, %v7513
  %v7716 = vpop.permute.xlu0 %7715
  %7719 = vset.pattern.permute.xlu0 0
  %7720 = vperm.xlu0 %7719, %v7514
  %v7721 = vpop.permute.xlu0 %7720
  %7724 = vset.pattern.permute.xlu0 0
  %7725 = vperm.xlu0 %7724, %v7515
  %v7726 = vpop.permute.xlu0 %7725
  %7729 = vset.pattern.permute.xlu0 0
  %7730 = vperm.xlu0 %7729, %v7516
  %v7731 = vpop.permute.xlu0 %7730
  %7734 = vset.pattern.permute.xlu0 0
  %7735 = vperm.xlu0 %7734, %v7517
  %v7736 = vpop.permute.xlu0 %7735
  %7739 = vset.pattern.permute.xlu0 0
  %7740 = vperm.xlu0 %7739, %v7518
  %v7741 = vpop.permute.xlu0 %7740
  %7744 = vset.pattern.permute.xlu0 0
  %7745 = vperm.xlu0 %7744, %v7519
  %v7746 = vpop.permute.xlu0 %7745
  %7749 = vset.pattern.permute.xlu0 0
  %7750 = vperm.xlu0 %7749, %v7520
  %v7751 = vpop.permute.xlu0 %7750
  %7754 = vset.pattern.permute.xlu0 0
  %7755 = vperm.xlu0 %7754, %v7521
  %v7756 = vpop.permute.xlu0 %7755
  %7759 = vset.pattern.permute.xlu0 0
  %7760 = vperm.xlu0 %7759, %v7522
  %v7761 = vpop.permute.xlu0 %7760
  %7764 = vset.pattern.permute.xlu0 0
  %7765 = vperm.xlu0 %7764, %v7523
  %v7766 = vpop.permute.xlu0 %7765
  %7769 = vset.pattern.permute.xlu0 0
  %7770 = vperm.xlu0 %7769, %v7524
  %v7771 = vpop.permute.xlu0 %7770
  %7774 = vset.pattern.permute.xlu0 0
  %7775 = vperm.xlu0 %7774, %v7525
  %v7776 = vpop.permute.xlu0 %7775
  %7779 = vset.pattern.permute.xlu0 0
  %7780 = vperm.xlu0 %7779, %v7526
  %v7781 = vpop.permute.xlu0 %7780
  %7784 = vset.pattern.permute.xlu0 0
  %7785 = vperm.xlu0 %7784, %v7527
  %v7786 = vpop.permute.xlu0 %7785
  %7789 = vset.pattern.permute.xlu0 0
  %7790 = vperm.xlu0 %7789, %v7528
  %v7791 = vpop.permute.xlu0 %7790
  %v7793 = vadd.f32 %v7649, %v7676
  %v7794 = vadd.f32 %v7650, %v7681
  %v7795 = vadd.f32 %v7651, %v7686
  %v7796 = vadd.f32 %v7652, %v7691
  %v7797 = vadd.f32 %v7653, %v7696
  %v7798 = vadd.f32 %v7654, %v7701
  %v7799 = vadd.f32 %v7655, %v7706
  %v7800 = vadd.f32 %v7656, %v7711
  %v7801 = vadd.f32 %v7657, %v7716
  %v7802 = vadd.f32 %v7658, %v7721
  %v7803 = vadd.f32 %v7659, %v7726
  %v7804 = vadd.f32 %v7660, %v7731
  %v7805 = vadd.f32 %v7661, %v7736
  %v7806 = vadd.f32 %v7662, %v7741
  %v7807 = vadd.f32 %v7663, %v7746
  %v7808 = vadd.f32 %v7664, %v7751
  %v7809 = vadd.f32 %v7665, %v7756
  %v7810 = vadd.f32 %v7666, %v7761
  %v7811 = vadd.f32 %v7667, %v7766
  %v7812 = vadd.f32 %v7668, %v7771
  %v7813 = vadd.f32 %v7669, %v7776
  %v7814 = vadd.f32 %v7670, %v7781
  %v7815 = vadd.f32 %v7671, %v7786
  %v7816 = vadd.f32 %v7672, %v7791
  %v7817 = vmax.f32 %v7793, 0.0
  %v7818 = vmax.f32 %v7794, 0.0
  %v7819 = vmax.f32 %v7795, 0.0
  %v7820 = vmax.f32 %v7796, 0.0
  %v7821 = vmax.f32 %v7797, 0.0
  %v7822 = vmax.f32 %v7798, 0.0
  %v7823 = vmax.f32 %v7799, 0.0
  %v7824 = vmax.f32 %v7800, 0.0
  %v7825 = vmax.f32 %v7801, 0.0
  %v7826 = vmax.f32 %v7802, 0.0
  %v7827 = vmax.f32 %v7803, 0.0
  %v7828 = vmax.f32 %v7804, 0.0
  %v7829 = vmax.f32 %v7805, 0.0
  %v7830 = vmax.f32 %v7806, 0.0
  %v7831 = vmax.f32 %v7807, 0.0
  %v7832 = vmax.f32 %v7808, 0.0
  %v7833 = vmax.f32 %v7809, 0.0
  %v7834 = vmax.f32 %v7810, 0.0
  %v7835 = vmax.f32 %v7811, 0.0
  %v7836 = vmax.f32 %v7812, 0.0
  %v7837 = vmax.f32 %v7813, 0.0
  %v7838 = vmax.f32 %v7814, 0.0
  %v7839 = vmax.f32 %v7815, 0.0
  %v7840 = vmax.f32 %v7816, 0.0
  %7841 = vst.msk [vmem:[%s6] sm:$0xff] %vm198, %v7817
  %7842 = vst.msk [vmem:[%s6 + $0x8] sm:$0xff] %vm198, %v7818
  %7843 = vst.msk [vmem:[%s6 + $0x10] sm:$0xff] %vm198, %v7819
  %7844 = vst.msk [vmem:[%s6 + $0x18] sm:$0xff] %vm198, %v7820
  %7845 = vst.msk [vmem:[%s6 + $0x20] sm:$0xff] %vm198, %v7821
  %7846 = vst.msk [vmem:[%s6 + $0x28] sm:$0xff] %vm198, %v7822
  %7847 = vst.msk [vmem:[%s6 + $0x30] sm:$0xff] %vm198, %v7823
  %7848 = vst.msk [vmem:[%s6 + $0x38] sm:$0xff] %vm198, %v7824
  %7849 = vst.msk [vmem:[%s6 + $0x40] sm:$0xff] %vm198, %v7825
  %7850 = vst.msk [vmem:[%s6 + $0x48] sm:$0xff] %vm198, %v7826
  %7851 = vst.msk [vmem:[%s6 + $0x50] sm:$0xff] %vm198, %v7827
  %7852 = vst.msk [vmem:[%s6 + $0x58] sm:$0xff] %vm198, %v7828
  %7853 = vst.msk [vmem:[%s6 + $0x60] sm:$0xff] %vm198, %v7829
  %7854 = vst.msk [vmem:[%s6 + $0x68] sm:$0xff] %vm198, %v7830
  %7855 = vst.msk [vmem:[%s6 + $0x70] sm:$0xff] %vm198, %v7831
  %7856 = vst.msk [vmem:[%s6 + $0x78] sm:$0xff] %vm198, %v7832
  %7857 = vst.msk [vmem:[%s6 + $0x80] sm:$0xff] %vm198, %v7833
  %7858 = vst.msk [vmem:[%s6 + $0x88] sm:$0xff] %vm198, %v7834
  %7859 = vst.msk [vmem:[%s6 + $0x90] sm:$0xff] %vm198, %v7835
  %7860 = vst.msk [vmem:[%s6 + $0x98] sm:$0xff] %vm198, %v7836
  %7861 = vst.msk [vmem:[%s6 + $0xa0] sm:$0xff] %vm198, %v7837
  %7862 = vst.msk [vmem:[%s6 + $0xa8] sm:$0xff] %vm198, %v7838
  %7863 = vst.msk [vmem:[%s6 + $0xb0] sm:$0xff] %vm198, %v7839
  %7864 = vst.msk [vmem:[%s6 + $0xb8] sm:$0xff] %vm198, %v7840
  // Predicated region
  $region26: #{bn_relu_conv1x1_bn_relu.1} parent=0 // pred_check
    _
  $region27: #{bn_relu_conv1x1_bn_relu.1} parent=0 // pred_check_branch
    %7866 = sbr.rel (0) target = $region29
  $region28: #{bn_relu_conv1x1_bn_relu.1} parent=0 // pred_region
    _
  $region29: #{bn_relu_conv1x1_bn_relu.1} parent=0 // pred_fallthru
    _
  // Predicated region
  $region30: #{bn_relu_conv1x1_bn_relu.1} parent=0 // pred_check
    _
  $region31: #{bn_relu_conv1x1_bn_relu.1} parent=0 // pred_check_branch
    %7868 = sbr.rel (0) target = $region33
  $region32: #{bn_relu_conv1x1_bn_relu.1} parent=0 // pred_region
    _
  $region33: #{bn_relu_conv1x1_bn_relu.1} parent=0 // pred_fallthru
    _

</llo_original>
